<compile_context>
chip_gen: v6e
topology: v6e:2x2x1
jax: 0.10.0
libtpu: 0.0.40
codegen_flags: <defaults>
</compile_context>

<pallas_src>
import jax
import jax.numpy as jnp
from jax import lax
from jax.experimental import pallas as pl
from jax.experimental.pallas import tpu as pltpu


def _convblock_kernel(x_ref, wdw_ref, bdw_ref, lnw_ref, lnb_ref,
                      w1_ref, b1_ref, gg_ref, gb_ref, w2_ref, b2_ref,
                      o_ref, xpad_ref):
    """Fused ConvBlock forward for one batch element (NHWC in VMEM).

    x_ref   : (H, W, C)        input image (also the residual)
    wdw_ref : (7, 7, C)        depthwise conv weights (tap-major, channel last)
    bdw_ref : (1, C)           depthwise conv bias
    lnw_ref : (W, C)           LayerNorm weight, pre-broadcast along C (affine runs along W)
    lnb_ref : (W, C)           LayerNorm bias,   pre-broadcast along C
    w1_ref  : (C, F)           pwconv1 weight (1x1 conv as matmul), F = hidden = 2*dim
    b1_ref  : (1, F)           pwconv1 bias
    gg_ref  : (1, F)           GRN gamma
    gb_ref  : (1, F)           GRN beta
    w2_ref  : (F, C)           pwconv2 weight
    b2_ref  : (1, C)           pwconv2 bias
    o_ref   : (H, W, C)        output
    xpad_ref: (H+6, W+6, C)    VMEM scratch — halo-padded input (no HBM pad op)
    """
    H, W, C = x_ref.shape
    F = w1_ref.shape[1]
    HW = H * W

    # ---- Stage 0: build the 3-pixel halo in VMEM (replaces jnp.pad in HBM) ----
    xpad_ref[...] = jnp.zeros_like(xpad_ref)
    xpad_ref[3:3 + H, 3:3 + W, :] = x_ref[...]

    # ---- Stage 1: 7x7 depthwise conv (per-channel -> pure VPU, 49 shifted taps) ----
    acc = jnp.zeros((H, W, C), dtype=jnp.float32)
    for kh in range(7):
        for kw in range(7):
            tap = wdw_ref[kh, kw, :]                              # (C,) lane vector
            acc = acc + xpad_ref[kh:kh + H, kw:kw + W, :] * tap   # lane broadcast
    y = acc + bdw_ref[...]                                        # (1, C) broadcast

    # ---- Stage 2: LayerNorm(dim) — literal PyTorch semantics: normalize the W axis ----
    mu = jnp.mean(y, axis=1, keepdims=True)                       # (H, 1, C)
    var = jnp.mean(jnp.square(y - mu), axis=1, keepdims=True)     # biased variance
    yn = (y - mu) * lax.rsqrt(var + 1e-5)
    yn = yn * lnw_ref[...] + lnb_ref[...]                         # (W, C) broadcast over H

    # ---- Stage 3: pwconv1 (1x1 conv) as ONE dense matmul, M = H*W ----
    yf = yn.reshape(HW, C)
    z = jnp.dot(yf, w1_ref[...], preferred_element_type=jnp.float32) + b1_ref[...]

    # ---- Stage 4: GRN (channel-first semantics, computed channels-last) ----
    gx = jnp.sqrt(jnp.sum(z * z, axis=0, keepdims=True))          # (1, F): L2 over spatial
    nx = gx / (jnp.mean(gx, axis=1, keepdims=True) + 1e-6)        # divide by channel mean
    z = gg_ref[...] * (z * nx) + gb_ref[...] + z

    # ---- Stage 5: pwconv2 (1x1 conv) + residual, single store ----
    o = jnp.dot(z, w2_ref[...], preferred_element_type=jnp.float32) + b2_ref[...]
    o_ref[...] = (o.reshape(H, W, C) + x_ref[...]).astype(o_ref.dtype)


def convblock_forward(x_nchw, params):
    """ConvBlock forward. x: (B, dim, H, W) NCHW f32; params in PyTorch layouts.

    Required param layouts (PyTorch):
      dw_w: (dim, 1, 7, 7)   dw_b: (dim,)
      ln_w: (dim,)           ln_b: (dim,)
      w1:   (hidden, dim, 1, 1)   b1: (hidden,)
      grn_g:(hidden,)        grn_b:(hidden,)
      w2:   (dim, hidden, 1, 1)   b2: (dim,)
    """
    B, C, H, W = x_nchw.shape
    F = params['w1'].shape[0]
    # Literal nn.LayerNorm(dim) on an NCHW tensor normalizes the last (W) axis -> needs W == dim.
    assert W == C, "nn.LayerNorm(dim) on NCHW requires W == dim (literal module semantics)"

    # Layout plumbing (tiny, done once outside the kernel).
    x_nhwc = jnp.transpose(x_nchw, (0, 2, 3, 1)).astype(jnp.float32)         # (B, H, W, C)
    wdw = jnp.transpose(params['dw_w'][:, 0], (1, 2, 0)).astype(jnp.float32)  # (7, 7, C)
    bdw = params['dw_b'].reshape(1, C).astype(jnp.float32)
    lnw = jnp.broadcast_to(params['ln_w'].astype(jnp.float32)[:, None], (W, C))
    lnb = jnp.broadcast_to(params['ln_b'].astype(jnp.float32)[:, None], (W, C))
    w1 = params['w1'][:, :, 0, 0].T.astype(jnp.float32)                      # (C, F)
    b1 = params['b1'].reshape(1, F).astype(jnp.float32)
    gg = params['grn_g'].reshape(1, F).astype(jnp.float32)
    gb = params['grn_b'].reshape(1, F).astype(jnp.float32)
    w2 = params['w2'][:, :, 0, 0].T.astype(jnp.float32)                      # (F, C)
    b2 = params['b2'].reshape(1, C).astype(jnp.float32)

    out_nhwc = pl.pallas_call(
        _convblock_kernel,
        out_shape=jax.ShapeDtypeStruct((B, H, W, C), jnp.float32),
        grid_spec=pltpu.PrefetchScalarGridSpec(
            num_scalar_prefetch=0,
            grid=(B,),
            in_specs=[
                pl.BlockSpec((pl.Squeezed(), H, W, C), lambda b: (b, 0, 0, 0)),
                pl.BlockSpec((7, 7, C), lambda b: (0, 0, 0)),
                pl.BlockSpec((1, C), lambda b: (0, 0)),
                pl.BlockSpec((W, C), lambda b: (0, 0)),
                pl.BlockSpec((W, C), lambda b: (0, 0)),
                pl.BlockSpec((C, F), lambda b: (0, 0)),
                pl.BlockSpec((1, F), lambda b: (0, 0)),
                pl.BlockSpec((1, F), lambda b: (0, 0)),
                pl.BlockSpec((1, F), lambda b: (0, 0)),
                pl.BlockSpec((F, C), lambda b: (0, 0)),
                pl.BlockSpec((1, C), lambda b: (0, 0)),
            ],
            out_specs=pl.BlockSpec((pl.Squeezed(), H, W, C),
                                   lambda b: (b, 0, 0, 0)),
            scratch_shapes=[pltpu.VMEM((H + 6, W + 6, C), jnp.float32)],
        ),
        compiler_params=pltpu.CompilerParams(
            dimension_semantics=("parallel",)),
    )(x_nhwc, wdw, bdw, lnw, lnb, w1, b1, gg, gb, w2, b2)

    return jnp.transpose(out_nhwc, (0, 3, 1, 2))


def convblock_ref(x, p):
    """Pure-JAX reference replicating the PyTorch module exactly (NCHW)."""
    C = x.shape[1]
    hp = lax.Precision.HIGHEST
    # depthwise 7x7 conv, padding 3, groups=C
    y = lax.conv_general_dilated(
        x, p['dw_w'], window_strides=(1, 1), padding=((3, 3), (3, 3)),
        dimension_numbers=("NCHW", "OIHW", "NCHW"),
        feature_group_count=C, precision=hp) + p['dw_b'][None, :, None, None]
    # nn.LayerNorm(dim) applied to NCHW -> normalizes last axis (W), affine along W
    mu = jnp.mean(y, axis=-1, keepdims=True)
    var = jnp.mean(jnp.square(y - mu), axis=-1, keepdims=True)
    y = (y - mu) / jnp.sqrt(var + 1e-5) * p['ln_w'] + p['ln_b']
    # pwconv1
    z = jnp.einsum('oi,bihw->bohw', p['w1'][:, :, 0, 0], y,
                   precision=hp) + p['b1'][None, :, None, None]
    # GRN (channel-first)
    gx = jnp.sqrt(jnp.sum(z * z, axis=(2, 3), keepdims=True))
    nx = gx / (jnp.mean(gx, axis=1, keepdims=True) + 1e-6)
    z = p['grn_g'].reshape(1, -1, 1, 1) * (z * nx) + p['grn_b'].reshape(1, -1, 1, 1) + z
    # pwconv2 + residual
    o = jnp.einsum('oi,bihw->bohw', p['w2'][:, :, 0, 0], z,
                   precision=hp) + p['b2'][None, :, None, None]
    return x + o


if __name__ == "__main__":
    # ConvBlock(dim=16, expansion_factor=2): hidden = 32. Spatial 16x16 (W == dim, see NOTE above).
    B, dim, H, W = 2, 16, 16, 16
    F = 2 * dim

    key = jax.random.PRNGKey(0)
    ks = jax.random.split(key, 11)
    params = {
        'dw_w': jax.random.normal(ks[0], (dim, 1, 7, 7), jnp.float32) * 0.1,
        'dw_b': jax.random.normal(ks[1], (dim,), jnp.float32) * 0.1,
        'ln_w': 1.0 + jax.random.normal(ks[2], (dim,), jnp.float32) * 0.1,
        'ln_b': jax.random.normal(ks[3], (dim,), jnp.float32) * 0.1,
        'w1': jax.random.normal(ks[4], (F, dim, 1, 1), jnp.float32) * 0.1,
        'b1': jax.random.normal(ks[5], (F,), jnp.float32) * 0.1,
        'grn_g': jax.random.normal(ks[6], (F,), jnp.float32) * 0.1,
        'grn_b': jax.random.normal(ks[7], (F,), jnp.float32) * 0.1,
        'w2': jax.random.normal(ks[8], (dim, F, 1, 1), jnp.float32) * 0.1,
        'b2': jax.random.normal(ks[9], (dim,), jnp.float32) * 0.1,
    }
    x = jax.random.normal(ks[10], (B, dim, H, W), jnp.float32)

    out = convblock_forward(x, params)
    out = jax.block_until_ready(out)
    assert out.shape == (B, dim, H, W), out.shape

    ref = convblock_ref(x, params)
    max_err = float(jnp.max(jnp.abs(out - ref)))
    assert jnp.allclose(out, ref, atol=1e-3, rtol=1e-3), max_err

    print("KERNEL_OK")
</pallas_src>

<mosaic_0001>
module attributes {stable_mosaic.version = 11 : i64} {
  func.func @_convblock_kernel(%arg0: i32, %arg1: memref<1x16x16x16xf32, #tpu.memory_space<vmem>>, %arg2: memref<7x7x16xf32, #tpu.memory_space<vmem>>, %arg3: memref<1x16xf32, #tpu.memory_space<vmem>>, %arg4: memref<16x16xf32, #tpu.memory_space<vmem>>, %arg5: memref<16x16xf32, #tpu.memory_space<vmem>>, %arg6: memref<16x32xf32, #tpu.memory_space<vmem>>, %arg7: memref<1x32xf32, #tpu.memory_space<vmem>>, %arg8: memref<1x32xf32, #tpu.memory_space<vmem>>, %arg9: memref<1x32xf32, #tpu.memory_space<vmem>>, %arg10: memref<32x16xf32, #tpu.memory_space<vmem>>, %arg11: memref<1x16xf32, #tpu.memory_space<vmem>>, %arg12: memref<1x16x16x16xf32, #tpu.memory_space<vmem>>, %arg13: memref<22x22x16xf32, #tpu.memory_space<vmem>>) attributes {dimension_semantics = [#tpu.dimension_semantics<parallel>], iteration_bounds = array<i64: 2>, scalar_prefetch = 0 : i64, scratch_operands = 1 : i64, tpu.core_type = #tpu.core_type<tc>, window_params = [{transform_indices = @transform_0, window_bounds = array<i64: 1, 16, 16, 16>}, {pipeline_mode = #tpu.pipeline_mode<synchronous>, transform_indices = @transform_1, window_bounds = array<i64: 7, 7, 16>}, {pipeline_mode = #tpu.pipeline_mode<synchronous>, transform_indices = @transform_2, window_bounds = array<i64: 1, 16>}, {pipeline_mode = #tpu.pipeline_mode<synchronous>, transform_indices = @transform_3, window_bounds = array<i64: 16, 16>}, {pipeline_mode = #tpu.pipeline_mode<synchronous>, transform_indices = @transform_4, window_bounds = array<i64: 16, 16>}, {pipeline_mode = #tpu.pipeline_mode<synchronous>, transform_indices = @transform_5, window_bounds = array<i64: 16, 32>}, {pipeline_mode = #tpu.pipeline_mode<synchronous>, transform_indices = @transform_6, window_bounds = array<i64: 1, 32>}, {pipeline_mode = #tpu.pipeline_mode<synchronous>, transform_indices = @transform_7, window_bounds = array<i64: 1, 32>}, {pipeline_mode = #tpu.pipeline_mode<synchronous>, transform_indices = @transform_8, window_bounds = array<i64: 1, 32>}, {pipeline_mode = #tpu.pipeline_mode<synchronous>, transform_indices = @transform_9, window_bounds = array<i64: 32, 16>}, {pipeline_mode = #tpu.pipeline_mode<synchronous>, transform_indices = @transform_10, window_bounds = array<i64: 1, 16>}, {transform_indices = @transform_11, window_bounds = array<i64: 1, 16, 16, 16>}]} {
    %cst = arith.constant 0.000000e+00 : f32
    %0 = vector.broadcast %cst : f32 to vector<22x22x16xf32>
    %c0 = arith.constant 0 : index
    %c0_0 = arith.constant 0 : index
    %c0_1 = arith.constant 0 : index
    %1 = vector.load %arg13[%c0, %c0_0, %c0_1] : memref<22x22x16xf32, #tpu.memory_space<vmem>>, vector<22x22x16xf32>
    tpu.vector_store %arg13[%c0, %c0_0, %c0_1], %0 {strides = array<i32>} : memref<22x22x16xf32, #tpu.memory_space<vmem>>, vector<22x22x16xf32>,
    %c0_2 = arith.constant 0 : index
    %c0_3 = arith.constant 0 : index
    %c0_4 = arith.constant 0 : index
    %c0_5 = arith.constant 0 : index
    %2 = vector.load %arg1[%c0_2, %c0_3, %c0_4, %c0_5] : memref<1x16x16x16xf32, #tpu.memory_space<vmem>>, vector<1x16x16x16xf32>
    %3 = vector.shape_cast %2 : vector<1x16x16x16xf32> to vector<16x16x16xf32>
    %c3 = arith.constant 3 : index
    %c3_6 = arith.constant 3 : index
    %c0_7 = arith.constant 0 : index
    %4 = vector.load %arg13[%c3, %c3_6, %c0_7] : memref<22x22x16xf32, #tpu.memory_space<vmem>>, vector<16x16x16xf32>
    tpu.vector_store %arg13[%c3, %c3_6, %c0_7], %3 {strides = array<i32>} : memref<22x22x16xf32, #tpu.memory_space<vmem>>, vector<16x16x16xf32>,
    %cst_8 = arith.constant 0.000000e+00 : f32
    %5 = vector.broadcast %cst_8 : f32 to vector<16x16x16xf32>
    %c0_9 = arith.constant 0 : index
    %c0_10 = arith.constant 0 : index
    %c0_11 = arith.constant 0 : index
    %6 = vector.load %arg2[%c0_9, %c0_10, %c0_11] : memref<7x7x16xf32, #tpu.memory_space<vmem>>, vector<1x1x16xf32>
    %7 = vector.shape_cast %6 : vector<1x1x16xf32> to vector<16xf32>
    %c0_12 = arith.constant 0 : index
    %c0_13 = arith.constant 0 : index
    %c0_14 = arith.constant 0 : index
    %8 = vector.load %arg13[%c0_12, %c0_13, %c0_14] : memref<22x22x16xf32, #tpu.memory_space<vmem>>, vector<16x16x16xf32>
    %9 = vector.shape_cast %7 : vector<16xf32> to vector<1x1x16xf32>
    %10 = vector.broadcast %9 : vector<1x1x16xf32> to vector<16x16x16xf32>
    %11 = arith.mulf %8, %10 : vector<16x16x16xf32>
    %12 = arith.addf %5, %11 : vector<16x16x16xf32>
    %c0_15 = arith.constant 0 : index
    %c1 = arith.constant 1 : index
    %c0_16 = arith.constant 0 : index
    %13 = vector.load %arg2[%c0_15, %c1, %c0_16] : memref<7x7x16xf32, #tpu.memory_space<vmem>>, vector<1x1x16xf32>
    %14 = vector.shape_cast %13 : vector<1x1x16xf32> to vector<16xf32>
    %c0_17 = arith.constant 0 : index
    %c1_18 = arith.constant 1 : index
    %c0_19 = arith.constant 0 : index
    %15 = vector.load %arg13[%c0_17, %c1_18, %c0_19] : memref<22x22x16xf32, #tpu.memory_space<vmem>>, vector<16x16x16xf32>
    %16 = vector.shape_cast %14 : vector<16xf32> to vector<1x1x16xf32>
    %17 = vector.broadcast %16 : vector<1x1x16xf32> to vector<16x16x16xf32>
    %18 = arith.mulf %15, %17 : vector<16x16x16xf32>
    %19 = arith.addf %12, %18 : vector<16x16x16xf32>
    %c0_20 = arith.constant 0 : index
    %c2 = arith.constant 2 : index
    %c0_21 = arith.constant 0 : index
    %20 = vector.load %arg2[%c0_20, %c2, %c0_21] : memref<7x7x16xf32, #tpu.memory_space<vmem>>, vector<1x1x16xf32>
    %21 = vector.shape_cast %20 : vector<1x1x16xf32> to vector<16xf32>
    %c0_22 = arith.constant 0 : index
    %c2_23 = arith.constant 2 : index
    %c0_24 = arith.constant 0 : index
    %22 = vector.load %arg13[%c0_22, %c2_23, %c0_24] : memref<22x22x16xf32, #tpu.memory_space<vmem>>, vector<16x16x16xf32>
    %23 = vector.shape_cast %21 : vector<16xf32> to vector<1x1x16xf32>
    %24 = vector.broadcast %23 : vector<1x1x16xf32> to vector<16x16x16xf32>
    %25 = arith.mulf %22, %24 : vector<16x16x16xf32>
    %26 = arith.addf %19, %25 : vector<16x16x16xf32>
    %c0_25 = arith.constant 0 : index
    %c3_26 = arith.constant 3 : index
    %c0_27 = arith.constant 0 : index
    %27 = vector.load %arg2[%c0_25, %c3_26, %c0_27] : memref<7x7x16xf32, #tpu.memory_space<vmem>>, vector<1x1x16xf32>
    %28 = vector.shape_cast %27 : vector<1x1x16xf32> to vector<16xf32>
    %c0_28 = arith.constant 0 : index
    %c3_29 = arith.constant 3 : index
    %c0_30 = arith.constant 0 : index
    %29 = vector.load %arg13[%c0_28, %c3_29, %c0_30] : memref<22x22x16xf32, #tpu.memory_space<vmem>>, vector<16x16x16xf32>
    %30 = vector.shape_cast %28 : vector<16xf32> to vector<1x1x16xf32>
    %31 = vector.broadcast %30 : vector<1x1x16xf32> to vector<16x16x16xf32>
    %32 = arith.mulf %29, %31 : vector<16x16x16xf32>
    %33 = arith.addf %26, %32 : vector<16x16x16xf32>
    %c0_31 = arith.constant 0 : index
    %c4 = arith.constant 4 : index
    %c0_32 = arith.constant 0 : index
    %34 = vector.load %arg2[%c0_31, %c4, %c0_32] : memref<7x7x16xf32, #tpu.memory_space<vmem>>, vector<1x1x16xf32>
    %35 = vector.shape_cast %34 : vector<1x1x16xf32> to vector<16xf32>
    %c0_33 = arith.constant 0 : index
    %c4_34 = arith.constant 4 : index
    %c0_35 = arith.constant 0 : index
    %36 = vector.load %arg13[%c0_33, %c4_34, %c0_35] : memref<22x22x16xf32, #tpu.memory_space<vmem>>, vector<16x16x16xf32>
    %37 = vector.shape_cast %35 : vector<16xf32> to vector<1x1x16xf32>
    %38 = vector.broadcast %37 : vector<1x1x16xf32> to vector<16x16x16xf32>
    %39 = arith.mulf %36, %38 : vector<16x16x16xf32>
    %40 = arith.addf %33, %39 : vector<16x16x16xf32>
    %c0_36 = arith.constant 0 : index
    %c5 = arith.constant 5 : index
    %c0_37 = arith.constant 0 : index
    %41 = vector.load %arg2[%c0_36, %c5, %c0_37] : memref<7x7x16xf32, #tpu.memory_space<vmem>>, vector<1x1x16xf32>
    %42 = vector.shape_cast %41 : vector<1x1x16xf32> to vector<16xf32>
    %c0_38 = arith.constant 0 : index
    %c5_39 = arith.constant 5 : index
    %c0_40 = arith.constant 0 : index
    %43 = vector.load %arg13[%c0_38, %c5_39, %c0_40] : memref<22x22x16xf32, #tpu.memory_space<vmem>>, vector<16x16x16xf32>
    %44 = vector.shape_cast %42 : vector<16xf32> to vector<1x1x16xf32>
    %45 = vector.broadcast %44 : vector<1x1x16xf32> to vector<16x16x16xf32>
    %46 = arith.mulf %43, %45 : vector<16x16x16xf32>
    %47 = arith.addf %40, %46 : vector<16x16x16xf32>
    %c0_41 = arith.constant 0 : index
    %c6 = arith.constant 6 : index
    %c0_42 = arith.constant 0 : index
    %48 = vector.load %arg2[%c0_41, %c6, %c0_42] : memref<7x7x16xf32, #tpu.memory_space<vmem>>, vector<1x1x16xf32>
    %49 = vector.shape_cast %48 : vector<1x1x16xf32> to vector<16xf32>
    %c0_43 = arith.constant 0 : index
    %c6_44 = arith.constant 6 : index
    %c0_45 = arith.constant 0 : index
    %50 = vector.load %arg13[%c0_43, %c6_44, %c0_45] : memref<22x22x16xf32, #tpu.memory_space<vmem>>, vector<16x16x16xf32>
    %51 = vector.shape_cast %49 : vector<16xf32> to vector<1x1x16xf32>
    %52 = vector.broadcast %51 : vector<1x1x16xf32> to vector<16x16x16xf32>
    %53 = arith.mulf %50, %52 : vector<16x16x16xf32>
    %54 = arith.addf %47, %53 : vector<16x16x16xf32>
    %c1_46 = arith.constant 1 : index
    %c0_47 = arith.constant 0 : index
    %c0_48 = arith.constant 0 : index
    %55 = vector.load %arg2[%c1_46, %c0_47, %c0_48] : memref<7x7x16xf32, #tpu.memory_space<vmem>>, vector<1x1x16xf32>
    %56 = vector.shape_cast %55 : vector<1x1x16xf32> to vector<16xf32>
    %c1_49 = arith.constant 1 : index
    %c0_50 = arith.constant 0 : index
    %c0_51 = arith.constant 0 : index
    %57 = vector.load %arg13[%c1_49, %c0_50, %c0_51] : memref<22x22x16xf32, #tpu.memory_space<vmem>>, vector<16x16x16xf32>
    %58 = vector.shape_cast %56 : vector<16xf32> to vector<1x1x16xf32>
    %59 = vector.broadcast %58 : vector<1x1x16xf32> to vector<16x16x16xf32>
    %60 = arith.mulf %57, %59 : vector<16x16x16xf32>
    %61 = arith.addf %54, %60 : vector<16x16x16xf32>
    %c1_52 = arith.constant 1 : index
    %c1_53 = arith.constant 1 : index
    %c0_54 = arith.constant 0 : index
    %62 = vector.load %arg2[%c1_52, %c1_53, %c0_54] : memref<7x7x16xf32, #tpu.memory_space<vmem>>, vector<1x1x16xf32>
    %63 = vector.shape_cast %62 : vector<1x1x16xf32> to vector<16xf32>
    %c1_55 = arith.constant 1 : index
    %c1_56 = arith.constant 1 : index
    %c0_57 = arith.constant 0 : index
    %64 = vector.load %arg13[%c1_55, %c1_56, %c0_57] : memref<22x22x16xf32, #tpu.memory_space<vmem>>, vector<16x16x16xf32>
    %65 = vector.shape_cast %63 : vector<16xf32> to vector<1x1x16xf32>
    %66 = vector.broadcast %65 : vector<1x1x16xf32> to vector<16x16x16xf32>
    %67 = arith.mulf %64, %66 : vector<16x16x16xf32>
    %68 = arith.addf %61, %67 : vector<16x16x16xf32>
    %c1_58 = arith.constant 1 : index
    %c2_59 = arith.constant 2 : index
    %c0_60 = arith.constant 0 : index
    %69 = vector.load %arg2[%c1_58, %c2_59, %c0_60] : memref<7x7x16xf32, #tpu.memory_space<vmem>>, vector<1x1x16xf32>
    %70 = vector.shape_cast %69 : vector<1x1x16xf32> to vector<16xf32>
    %c1_61 = arith.constant 1 : index
    %c2_62 = arith.constant 2 : index
    %c0_63 = arith.constant 0 : index
    %71 = vector.load %arg13[%c1_61, %c2_62, %c0_63] : memref<22x22x16xf32, #tpu.memory_space<vmem>>, vector<16x16x16xf32>
    %72 = vector.shape_cast %70 : vector<16xf32> to vector<1x1x16xf32>
    %73 = vector.broadcast %72 : vector<1x1x16xf32> to vector<16x16x16xf32>
    %74 = arith.mulf %71, %73 : vector<16x16x16xf32>
    %75 = arith.addf %68, %74 : vector<16x16x16xf32>
    %c1_64 = arith.constant 1 : index
    %c3_65 = arith.constant 3 : index
    %c0_66 = arith.constant 0 : index
    %76 = vector.load %arg2[%c1_64, %c3_65, %c0_66] : memref<7x7x16xf32, #tpu.memory_space<vmem>>, vector<1x1x16xf32>
    %77 = vector.shape_cast %76 : vector<1x1x16xf32> to vector<16xf32>
    %c1_67 = arith.constant 1 : index
    %c3_68 = arith.constant 3 : index
    %c0_69 = arith.constant 0 : index
    %78 = vector.load %arg13[%c1_67, %c3_68, %c0_69] : memref<22x22x16xf32, #tpu.memory_space<vmem>>, vector<16x16x16xf32>
    %79 = vector.shape_cast %77 : vector<16xf32> to vector<1x1x16xf32>
    %80 = vector.broadcast %79 : vector<1x1x16xf32> to vector<16x16x16xf32>
    %81 = arith.mulf %78, %80 : vector<16x16x16xf32>
    %82 = arith.addf %75, %81 : vector<16x16x16xf32>
    %c1_70 = arith.constant 1 : index
    %c4_71 = arith.constant 4 : index
    %c0_72 = arith.constant 0 : index
    %83 = vector.load %arg2[%c1_70, %c4_71, %c0_72] : memref<7x7x16xf32, #tpu.memory_space<vmem>>, vector<1x1x16xf32>
    %84 = vector.shape_cast %83 : vector<1x1x16xf32> to vector<16xf32>
    %c1_73 = arith.constant 1 : index
    %c4_74 = arith.constant 4 : index
    %c0_75 = arith.constant 0 : index
    %85 = vector.load %arg13[%c1_73, %c4_74, %c0_75] : memref<22x22x16xf32, #tpu.memory_space<vmem>>, vector<16x16x16xf32>
    %86 = vector.shape_cast %84 : vector<16xf32> to vector<1x1x16xf32>
    %87 = vector.broadcast %86 : vector<1x1x16xf32> to vector<16x16x16xf32>
    %88 = arith.mulf %85, %87 : vector<16x16x16xf32>
    %89 = arith.addf %82, %88 : vector<16x16x16xf32>
    %c1_76 = arith.constant 1 : index
    %c5_77 = arith.constant 5 : index
    %c0_78 = arith.constant 0 : index
    %90 = vector.load %arg2[%c1_76, %c5_77, %c0_78] : memref<7x7x16xf32, #tpu.memory_space<vmem>>, vector<1x1x16xf32>
    %91 = vector.shape_cast %90 : vector<1x1x16xf32> to vector<16xf32>
    %c1_79 = arith.constant 1 : index
    %c5_80 = arith.constant 5 : index
    %c0_81 = arith.constant 0 : index
    %92 = vector.load %arg13[%c1_79, %c5_80, %c0_81] : memref<22x22x16xf32, #tpu.memory_space<vmem>>, vector<16x16x16xf32>
    %93 = vector.shape_cast %91 : vector<16xf32> to vector<1x1x16xf32>
    %94 = vector.broadcast %93 : vector<1x1x16xf32> to vector<16x16x16xf32>
    %95 = arith.mulf %92, %94 : vector<16x16x16xf32>
    %96 = arith.addf %89, %95 : vector<16x16x16xf32>
    %c1_82 = arith.constant 1 : index
    %c6_83 = arith.constant 6 : index
    %c0_84 = arith.constant 0 : index
    %97 = vector.load %arg2[%c1_82, %c6_83, %c0_84] : memref<7x7x16xf32, #tpu.memory_space<vmem>>, vector<1x1x16xf32>
    %98 = vector.shape_cast %97 : vector<1x1x16xf32> to vector<16xf32>
    %c1_85 = arith.constant 1 : index
    %c6_86 = arith.constant 6 : index
    %c0_87 = arith.constant 0 : index
    %99 = vector.load %arg13[%c1_85, %c6_86, %c0_87] : memref<22x22x16xf32, #tpu.memory_space<vmem>>, vector<16x16x16xf32>
    %100 = vector.shape_cast %98 : vector<16xf32> to vector<1x1x16xf32>
    %101 = vector.broadcast %100 : vector<1x1x16xf32> to vector<16x16x16xf32>
    %102 = arith.mulf %99, %101 : vector<16x16x16xf32>
    %103 = arith.addf %96, %102 : vector<16x16x16xf32>
    %c2_88 = arith.constant 2 : index
    %c0_89 = arith.constant 0 : index
    %c0_90 = arith.constant 0 : index
    %104 = vector.load %arg2[%c2_88, %c0_89, %c0_90] : memref<7x7x16xf32, #tpu.memory_space<vmem>>, vector<1x1x16xf32>
    %105 = vector.shape_cast %104 : vector<1x1x16xf32> to vector<16xf32>
    %c2_91 = arith.constant 2 : index
    %c0_92 = arith.constant 0 : index
    %c0_93 = arith.constant 0 : index
    %106 = vector.load %arg13[%c2_91, %c0_92, %c0_93] : memref<22x22x16xf32, #tpu.memory_space<vmem>>, vector<16x16x16xf32>
    %107 = vector.shape_cast %105 : vector<16xf32> to vector<1x1x16xf32>
    %108 = vector.broadcast %107 : vector<1x1x16xf32> to vector<16x16x16xf32>
    %109 = arith.mulf %106, %108 : vector<16x16x16xf32>
    %110 = arith.addf %103, %109 : vector<16x16x16xf32>
    %c2_94 = arith.constant 2 : index
    %c1_95 = arith.constant 1 : index
    %c0_96 = arith.constant 0 : index
    %111 = vector.load %arg2[%c2_94, %c1_95, %c0_96] : memref<7x7x16xf32, #tpu.memory_space<vmem>>, vector<1x1x16xf32>
    %112 = vector.shape_cast %111 : vector<1x1x16xf32> to vector<16xf32>
    %c2_97 = arith.constant 2 : index
    %c1_98 = arith.constant 1 : index
    %c0_99 = arith.constant 0 : index
    %113 = vector.load %arg13[%c2_97, %c1_98, %c0_99] : memref<22x22x16xf32, #tpu.memory_space<vmem>>, vector<16x16x16xf32>
    %114 = vector.shape_cast %112 : vector<16xf32> to vector<1x1x16xf32>
    %115 = vector.broadcast %114 : vector<1x1x16xf32> to vector<16x16x16xf32>
    %116 = arith.mulf %113, %115 : vector<16x16x16xf32>
    %117 = arith.addf %110, %116 : vector<16x16x16xf32>
    %c2_100 = arith.constant 2 : index
    %c2_101 = arith.constant 2 : index
    %c0_102 = arith.constant 0 : index
    %118 = vector.load %arg2[%c2_100, %c2_101, %c0_102] : memref<7x7x16xf32, #tpu.memory_space<vmem>>, vector<1x1x16xf32>
    %119 = vector.shape_cast %118 : vector<1x1x16xf32> to vector<16xf32>
    %c2_103 = arith.constant 2 : index
    %c2_104 = arith.constant 2 : index
    %c0_105 = arith.constant 0 : index
    %120 = vector.load %arg13[%c2_103, %c2_104, %c0_105] : memref<22x22x16xf32, #tpu.memory_space<vmem>>, vector<16x16x16xf32>
    %121 = vector.shape_cast %119 : vector<16xf32> to vector<1x1x16xf32>
    %122 = vector.broadcast %121 : vector<1x1x16xf32> to vector<16x16x16xf32>
    %123 = arith.mulf %120, %122 : vector<16x16x16xf32>
    %124 = arith.addf %117, %123 : vector<16x16x16xf32>
    %c2_106 = arith.constant 2 : index
    %c3_107 = arith.constant 3 : index
    %c0_108 = arith.constant 0 : index
    %125 = vector.load %arg2[%c2_106, %c3_107, %c0_108] : memref<7x7x16xf32, #tpu.memory_space<vmem>>, vector<1x1x16xf32>
    %126 = vector.shape_cast %125 : vector<1x1x16xf32> to vector<16xf32>
    %c2_109 = arith.constant 2 : index
    %c3_110 = arith.constant 3 : index
    %c0_111 = arith.constant 0 : index
    %127 = vector.load %arg13[%c2_109, %c3_110, %c0_111] : memref<22x22x16xf32, #tpu.memory_space<vmem>>, vector<16x16x16xf32>
    %128 = vector.shape_cast %126 : vector<16xf32> to vector<1x1x16xf32>
    %129 = vector.broadcast %128 : vector<1x1x16xf32> to vector<16x16x16xf32>
    %130 = arith.mulf %127, %129 : vector<16x16x16xf32>
    %131 = arith.addf %124, %130 : vector<16x16x16xf32>
    %c2_112 = arith.constant 2 : index
    %c4_113 = arith.constant 4 : index
    %c0_114 = arith.constant 0 : index
    %132 = vector.load %arg2[%c2_112, %c4_113, %c0_114] : memref<7x7x16xf32, #tpu.memory_space<vmem>>, vector<1x1x16xf32>
    %133 = vector.shape_cast %132 : vector<1x1x16xf32> to vector<16xf32>
    %c2_115 = arith.constant 2 : index
    %c4_116 = arith.constant 4 : index
    %c0_117 = arith.constant 0 : index
    %134 = vector.load %arg13[%c2_115, %c4_116, %c0_117] : memref<22x22x16xf32, #tpu.memory_space<vmem>>, vector<16x16x16xf32>
    %135 = vector.shape_cast %133 : vector<16xf32> to vector<1x1x16xf32>
    %136 = vector.broadcast %135 : vector<1x1x16xf32> to vector<16x16x16xf32>
    %137 = arith.mulf %134, %136 : vector<16x16x16xf32>
    %138 = arith.addf %131, %137 : vector<16x16x16xf32>
    %c2_118 = arith.constant 2 : index
    %c5_119 = arith.constant 5 : index
    %c0_120 = arith.constant 0 : index
    %139 = vector.load %arg2[%c2_118, %c5_119, %c0_120] : memref<7x7x16xf32, #tpu.memory_space<vmem>>, vector<1x1x16xf32>
    %140 = vector.shape_cast %139 : vector<1x1x16xf32> to vector<16xf32>
    %c2_121 = arith.constant 2 : index
    %c5_122 = arith.constant 5 : index
    %c0_123 = arith.constant 0 : index
    %141 = vector.load %arg13[%c2_121, %c5_122, %c0_123] : memref<22x22x16xf32, #tpu.memory_space<vmem>>, vector<16x16x16xf32>
    %142 = vector.shape_cast %140 : vector<16xf32> to vector<1x1x16xf32>
    %143 = vector.broadcast %142 : vector<1x1x16xf32> to vector<16x16x16xf32>
    %144 = arith.mulf %141, %143 : vector<16x16x16xf32>
    %145 = arith.addf %138, %144 : vector<16x16x16xf32>
    %c2_124 = arith.constant 2 : index
    %c6_125 = arith.constant 6 : index
    %c0_126 = arith.constant 0 : index
    %146 = vector.load %arg2[%c2_124, %c6_125, %c0_126] : memref<7x7x16xf32, #tpu.memory_space<vmem>>, vector<1x1x16xf32>
    %147 = vector.shape_cast %146 : vector<1x1x16xf32> to vector<16xf32>
    %c2_127 = arith.constant 2 : index
    %c6_128 = arith.constant 6 : index
    %c0_129 = arith.constant 0 : index
    %148 = vector.load %arg13[%c2_127, %c6_128, %c0_129] : memref<22x22x16xf32, #tpu.memory_space<vmem>>, vector<16x16x16xf32>
    %149 = vector.shape_cast %147 : vector<16xf32> to vector<1x1x16xf32>
    %150 = vector.broadcast %149 : vector<1x1x16xf32> to vector<16x16x16xf32>
    %151 = arith.mulf %148, %150 : vector<16x16x16xf32>
    %152 = arith.addf %145, %151 : vector<16x16x16xf32>
    %c3_130 = arith.constant 3 : index
    %c0_131 = arith.constant 0 : index
    %c0_132 = arith.constant 0 : index
    %153 = vector.load %arg2[%c3_130, %c0_131, %c0_132] : memref<7x7x16xf32, #tpu.memory_space<vmem>>, vector<1x1x16xf32>
    %154 = vector.shape_cast %153 : vector<1x1x16xf32> to vector<16xf32>
    %c3_133 = arith.constant 3 : index
    %c0_134 = arith.constant 0 : index
    %c0_135 = arith.constant 0 : index
    %155 = vector.load %arg13[%c3_133, %c0_134, %c0_135] : memref<22x22x16xf32, #tpu.memory_space<vmem>>, vector<16x16x16xf32>
    %156 = vector.shape_cast %154 : vector<16xf32> to vector<1x1x16xf32>
    %157 = vector.broadcast %156 : vector<1x1x16xf32> to vector<16x16x16xf32>
    %158 = arith.mulf %155, %157 : vector<16x16x16xf32>
    %159 = arith.addf %152, %158 : vector<16x16x16xf32>
    %c3_136 = arith.constant 3 : index
    %c1_137 = arith.constant 1 : index
    %c0_138 = arith.constant 0 : index
    %160 = vector.load %arg2[%c3_136, %c1_137, %c0_138] : memref<7x7x16xf32, #tpu.memory_space<vmem>>, vector<1x1x16xf32>
    %161 = vector.shape_cast %160 : vector<1x1x16xf32> to vector<16xf32>
    %c3_139 = arith.constant 3 : index
    %c1_140 = arith.constant 1 : index
    %c0_141 = arith.constant 0 : index
    %162 = vector.load %arg13[%c3_139, %c1_140, %c0_141] : memref<22x22x16xf32, #tpu.memory_space<vmem>>, vector<16x16x16xf32>
    %163 = vector.shape_cast %161 : vector<16xf32> to vector<1x1x16xf32>
    %164 = vector.broadcast %163 : vector<1x1x16xf32> to vector<16x16x16xf32>
    %165 = arith.mulf %162, %164 : vector<16x16x16xf32>
    %166 = arith.addf %159, %165 : vector<16x16x16xf32>
    %c3_142 = arith.constant 3 : index
    %c2_143 = arith.constant 2 : index
    %c0_144 = arith.constant 0 : index
    %167 = vector.load %arg2[%c3_142, %c2_143, %c0_144] : memref<7x7x16xf32, #tpu.memory_space<vmem>>, vector<1x1x16xf32>
    %168 = vector.shape_cast %167 : vector<1x1x16xf32> to vector<16xf32>
    %c3_145 = arith.constant 3 : index
    %c2_146 = arith.constant 2 : index
    %c0_147 = arith.constant 0 : index
    %169 = vector.load %arg13[%c3_145, %c2_146, %c0_147] : memref<22x22x16xf32, #tpu.memory_space<vmem>>, vector<16x16x16xf32>
    %170 = vector.shape_cast %168 : vector<16xf32> to vector<1x1x16xf32>
    %171 = vector.broadcast %170 : vector<1x1x16xf32> to vector<16x16x16xf32>
    %172 = arith.mulf %169, %171 : vector<16x16x16xf32>
    %173 = arith.addf %166, %172 : vector<16x16x16xf32>
    %c3_148 = arith.constant 3 : index
    %c3_149 = arith.constant 3 : index
    %c0_150 = arith.constant 0 : index
    %174 = vector.load %arg2[%c3_148, %c3_149, %c0_150] : memref<7x7x16xf32, #tpu.memory_space<vmem>>, vector<1x1x16xf32>
    %175 = vector.shape_cast %174 : vector<1x1x16xf32> to vector<16xf32>
    %c3_151 = arith.constant 3 : index
    %c3_152 = arith.constant 3 : index
    %c0_153 = arith.constant 0 : index
    %176 = vector.load %arg13[%c3_151, %c3_152, %c0_153] : memref<22x22x16xf32, #tpu.memory_space<vmem>>, vector<16x16x16xf32>
    %177 = vector.shape_cast %175 : vector<16xf32> to vector<1x1x16xf32>
    %178 = vector.broadcast %177 : vector<1x1x16xf32> to vector<16x16x16xf32>
    %179 = arith.mulf %176, %178 : vector<16x16x16xf32>
    %180 = arith.addf %173, %179 : vector<16x16x16xf32>
    %c3_154 = arith.constant 3 : index
    %c4_155 = arith.constant 4 : index
    %c0_156 = arith.constant 0 : index
    %181 = vector.load %arg2[%c3_154, %c4_155, %c0_156] : memref<7x7x16xf32, #tpu.memory_space<vmem>>, vector<1x1x16xf32>
    %182 = vector.shape_cast %181 : vector<1x1x16xf32> to vector<16xf32>
    %c3_157 = arith.constant 3 : index
    %c4_158 = arith.constant 4 : index
    %c0_159 = arith.constant 0 : index
    %183 = vector.load %arg13[%c3_157, %c4_158, %c0_159] : memref<22x22x16xf32, #tpu.memory_space<vmem>>, vector<16x16x16xf32>
    %184 = vector.shape_cast %182 : vector<16xf32> to vector<1x1x16xf32>
    %185 = vector.broadcast %184 : vector<1x1x16xf32> to vector<16x16x16xf32>
    %186 = arith.mulf %183, %185 : vector<16x16x16xf32>
    %187 = arith.addf %180, %186 : vector<16x16x16xf32>
    %c3_160 = arith.constant 3 : index
    %c5_161 = arith.constant 5 : index
    %c0_162 = arith.constant 0 : index
    %188 = vector.load %arg2[%c3_160, %c5_161, %c0_162] : memref<7x7x16xf32, #tpu.memory_space<vmem>>, vector<1x1x16xf32>
    %189 = vector.shape_cast %188 : vector<1x1x16xf32> to vector<16xf32>
    %c3_163 = arith.constant 3 : index
    %c5_164 = arith.constant 5 : index
    %c0_165 = arith.constant 0 : index
    %190 = vector.load %arg13[%c3_163, %c5_164, %c0_165] : memref<22x22x16xf32, #tpu.memory_space<vmem>>, vector<16x16x16xf32>
    %191 = vector.shape_cast %189 : vector<16xf32> to vector<1x1x16xf32>
    %192 = vector.broadcast %191 : vector<1x1x16xf32> to vector<16x16x16xf32>
    %193 = arith.mulf %190, %192 : vector<16x16x16xf32>
    %194 = arith.addf %187, %193 : vector<16x16x16xf32>
    %c3_166 = arith.constant 3 : index
    %c6_167 = arith.constant 6 : index
    %c0_168 = arith.constant 0 : index
    %195 = vector.load %arg2[%c3_166, %c6_167, %c0_168] : memref<7x7x16xf32, #tpu.memory_space<vmem>>, vector<1x1x16xf32>
    %196 = vector.shape_cast %195 : vector<1x1x16xf32> to vector<16xf32>
    %c3_169 = arith.constant 3 : index
    %c6_170 = arith.constant 6 : index
    %c0_171 = arith.constant 0 : index
    %197 = vector.load %arg13[%c3_169, %c6_170, %c0_171] : memref<22x22x16xf32, #tpu.memory_space<vmem>>, vector<16x16x16xf32>
    %198 = vector.shape_cast %196 : vector<16xf32> to vector<1x1x16xf32>
    %199 = vector.broadcast %198 : vector<1x1x16xf32> to vector<16x16x16xf32>
    %200 = arith.mulf %197, %199 : vector<16x16x16xf32>
    %201 = arith.addf %194, %200 : vector<16x16x16xf32>
    %c4_172 = arith.constant 4 : index
    %c0_173 = arith.constant 0 : index
    %c0_174 = arith.constant 0 : index
    %202 = vector.load %arg2[%c4_172, %c0_173, %c0_174] : memref<7x7x16xf32, #tpu.memory_space<vmem>>, vector<1x1x16xf32>
    %203 = vector.shape_cast %202 : vector<1x1x16xf32> to vector<16xf32>
    %c4_175 = arith.constant 4 : index
    %c0_176 = arith.constant 0 : index
    %c0_177 = arith.constant 0 : index
    %204 = vector.load %arg13[%c4_175, %c0_176, %c0_177] : memref<22x22x16xf32, #tpu.memory_space<vmem>>, vector<16x16x16xf32>
    %205 = vector.shape_cast %203 : vector<16xf32> to vector<1x1x16xf32>
    %206 = vector.broadcast %205 : vector<1x1x16xf32> to vector<16x16x16xf32>
    %207 = arith.mulf %204, %206 : vector<16x16x16xf32>
    %208 = arith.addf %201, %207 : vector<16x16x16xf32>
    %c4_178 = arith.constant 4 : index
    %c1_179 = arith.constant 1 : index
    %c0_180 = arith.constant 0 : index
    %209 = vector.load %arg2[%c4_178, %c1_179, %c0_180] : memref<7x7x16xf32, #tpu.memory_space<vmem>>, vector<1x1x16xf32>
    %210 = vector.shape_cast %209 : vector<1x1x16xf32> to vector<16xf32>
    %c4_181 = arith.constant 4 : index
    %c1_182 = arith.constant 1 : index
    %c0_183 = arith.constant 0 : index
    %211 = vector.load %arg13[%c4_181, %c1_182, %c0_183] : memref<22x22x16xf32, #tpu.memory_space<vmem>>, vector<16x16x16xf32>
    %212 = vector.shape_cast %210 : vector<16xf32> to vector<1x1x16xf32>
    %213 = vector.broadcast %212 : vector<1x1x16xf32> to vector<16x16x16xf32>
    %214 = arith.mulf %211, %213 : vector<16x16x16xf32>
    %215 = arith.addf %208, %214 : vector<16x16x16xf32>
    %c4_184 = arith.constant 4 : index
    %c2_185 = arith.constant 2 : index
    %c0_186 = arith.constant 0 : index
    %216 = vector.load %arg2[%c4_184, %c2_185, %c0_186] : memref<7x7x16xf32, #tpu.memory_space<vmem>>, vector<1x1x16xf32>
    %217 = vector.shape_cast %216 : vector<1x1x16xf32> to vector<16xf32>
    %c4_187 = arith.constant 4 : index
    %c2_188 = arith.constant 2 : index
    %c0_189 = arith.constant 0 : index
    %218 = vector.load %arg13[%c4_187, %c2_188, %c0_189] : memref<22x22x16xf32, #tpu.memory_space<vmem>>, vector<16x16x16xf32>
    %219 = vector.shape_cast %217 : vector<16xf32> to vector<1x1x16xf32>
    %220 = vector.broadcast %219 : vector<1x1x16xf32> to vector<16x16x16xf32>
    %221 = arith.mulf %218, %220 : vector<16x16x16xf32>
    %222 = arith.addf %215, %221 : vector<16x16x16xf32>
    %c4_190 = arith.constant 4 : index
    %c3_191 = arith.constant 3 : index
    %c0_192 = arith.constant 0 : index
    %223 = vector.load %arg2[%c4_190, %c3_191, %c0_192] : memref<7x7x16xf32, #tpu.memory_space<vmem>>, vector<1x1x16xf32>
    %224 = vector.shape_cast %223 : vector<1x1x16xf32> to vector<16xf32>
    %c4_193 = arith.constant 4 : index
    %c3_194 = arith.constant 3 : index
    %c0_195 = arith.constant 0 : index
    %225 = vector.load %arg13[%c4_193, %c3_194, %c0_195] : memref<22x22x16xf32, #tpu.memory_space<vmem>>, vector<16x16x16xf32>
    %226 = vector.shape_cast %224 : vector<16xf32> to vector<1x1x16xf32>
    %227 = vector.broadcast %226 : vector<1x1x16xf32> to vector<16x16x16xf32>
    %228 = arith.mulf %225, %227 : vector<16x16x16xf32>
    %229 = arith.addf %222, %228 : vector<16x16x16xf32>
    %c4_196 = arith.constant 4 : index
    %c4_197 = arith.constant 4 : index
    %c0_198 = arith.constant 0 : index
    %230 = vector.load %arg2[%c4_196, %c4_197, %c0_198] : memref<7x7x16xf32, #tpu.memory_space<vmem>>, vector<1x1x16xf32>
    %231 = vector.shape_cast %230 : vector<1x1x16xf32> to vector<16xf32>
    %c4_199 = arith.constant 4 : index
    %c4_200 = arith.constant 4 : index
    %c0_201 = arith.constant 0 : index
    %232 = vector.load %arg13[%c4_199, %c4_200, %c0_201] : memref<22x22x16xf32, #tpu.memory_space<vmem>>, vector<16x16x16xf32>
    %233 = vector.shape_cast %231 : vector<16xf32> to vector<1x1x16xf32>
    %234 = vector.broadcast %233 : vector<1x1x16xf32> to vector<16x16x16xf32>
    %235 = arith.mulf %232, %234 : vector<16x16x16xf32>
    %236 = arith.addf %229, %235 : vector<16x16x16xf32>
    %c4_202 = arith.constant 4 : index
    %c5_203 = arith.constant 5 : index
    %c0_204 = arith.constant 0 : index
    %237 = vector.load %arg2[%c4_202, %c5_203, %c0_204] : memref<7x7x16xf32, #tpu.memory_space<vmem>>, vector<1x1x16xf32>
    %238 = vector.shape_cast %237 : vector<1x1x16xf32> to vector<16xf32>
    %c4_205 = arith.constant 4 : index
    %c5_206 = arith.constant 5 : index
    %c0_207 = arith.constant 0 : index
    %239 = vector.load %arg13[%c4_205, %c5_206, %c0_207] : memref<22x22x16xf32, #tpu.memory_space<vmem>>, vector<16x16x16xf32>
    %240 = vector.shape_cast %238 : vector<16xf32> to vector<1x1x16xf32>
    %241 = vector.broadcast %240 : vector<1x1x16xf32> to vector<16x16x16xf32>
    %242 = arith.mulf %239, %241 : vector<16x16x16xf32>
    %243 = arith.addf %236, %242 : vector<16x16x16xf32>
    %c4_208 = arith.constant 4 : index
    %c6_209 = arith.constant 6 : index
    %c0_210 = arith.constant 0 : index
    %244 = vector.load %arg2[%c4_208, %c6_209, %c0_210] : memref<7x7x16xf32, #tpu.memory_space<vmem>>, vector<1x1x16xf32>
    %245 = vector.shape_cast %244 : vector<1x1x16xf32> to vector<16xf32>
    %c4_211 = arith.constant 4 : index
    %c6_212 = arith.constant 6 : index
    %c0_213 = arith.constant 0 : index
    %246 = vector.load %arg13[%c4_211, %c6_212, %c0_213] : memref<22x22x16xf32, #tpu.memory_space<vmem>>, vector<16x16x16xf32>
    %247 = vector.shape_cast %245 : vector<16xf32> to vector<1x1x16xf32>
    %248 = vector.broadcast %247 : vector<1x1x16xf32> to vector<16x16x16xf32>
    %249 = arith.mulf %246, %248 : vector<16x16x16xf32>
    %250 = arith.addf %243, %249 : vector<16x16x16xf32>
    %c5_214 = arith.constant 5 : index
    %c0_215 = arith.constant 0 : index
    %c0_216 = arith.constant 0 : index
    %251 = vector.load %arg2[%c5_214, %c0_215, %c0_216] : memref<7x7x16xf32, #tpu.memory_space<vmem>>, vector<1x1x16xf32>
    %252 = vector.shape_cast %251 : vector<1x1x16xf32> to vector<16xf32>
    %c5_217 = arith.constant 5 : index
    %c0_218 = arith.constant 0 : index
    %c0_219 = arith.constant 0 : index
    %253 = vector.load %arg13[%c5_217, %c0_218, %c0_219] : memref<22x22x16xf32, #tpu.memory_space<vmem>>, vector<16x16x16xf32>
    %254 = vector.shape_cast %252 : vector<16xf32> to vector<1x1x16xf32>
    %255 = vector.broadcast %254 : vector<1x1x16xf32> to vector<16x16x16xf32>
    %256 = arith.mulf %253, %255 : vector<16x16x16xf32>
    %257 = arith.addf %250, %256 : vector<16x16x16xf32>
    %c5_220 = arith.constant 5 : index
    %c1_221 = arith.constant 1 : index
    %c0_222 = arith.constant 0 : index
    %258 = vector.load %arg2[%c5_220, %c1_221, %c0_222] : memref<7x7x16xf32, #tpu.memory_space<vmem>>, vector<1x1x16xf32>
    %259 = vector.shape_cast %258 : vector<1x1x16xf32> to vector<16xf32>
    %c5_223 = arith.constant 5 : index
    %c1_224 = arith.constant 1 : index
    %c0_225 = arith.constant 0 : index
    %260 = vector.load %arg13[%c5_223, %c1_224, %c0_225] : memref<22x22x16xf32, #tpu.memory_space<vmem>>, vector<16x16x16xf32>
    %261 = vector.shape_cast %259 : vector<16xf32> to vector<1x1x16xf32>
    %262 = vector.broadcast %261 : vector<1x1x16xf32> to vector<16x16x16xf32>
    %263 = arith.mulf %260, %262 : vector<16x16x16xf32>
    %264 = arith.addf %257, %263 : vector<16x16x16xf32>
    %c5_226 = arith.constant 5 : index
    %c2_227 = arith.constant 2 : index
    %c0_228 = arith.constant 0 : index
    %265 = vector.load %arg2[%c5_226, %c2_227, %c0_228] : memref<7x7x16xf32, #tpu.memory_space<vmem>>, vector<1x1x16xf32>
    %266 = vector.shape_cast %265 : vector<1x1x16xf32> to vector<16xf32>
    %c5_229 = arith.constant 5 : index
    %c2_230 = arith.constant 2 : index
    %c0_231 = arith.constant 0 : index
    %267 = vector.load %arg13[%c5_229, %c2_230, %c0_231] : memref<22x22x16xf32, #tpu.memory_space<vmem>>, vector<16x16x16xf32>
    %268 = vector.shape_cast %266 : vector<16xf32> to vector<1x1x16xf32>
    %269 = vector.broadcast %268 : vector<1x1x16xf32> to vector<16x16x16xf32>
    %270 = arith.mulf %267, %269 : vector<16x16x16xf32>
    %271 = arith.addf %264, %270 : vector<16x16x16xf32>
    %c5_232 = arith.constant 5 : index
    %c3_233 = arith.constant 3 : index
    %c0_234 = arith.constant 0 : index
    %272 = vector.load %arg2[%c5_232, %c3_233, %c0_234] : memref<7x7x16xf32, #tpu.memory_space<vmem>>, vector<1x1x16xf32>
    %273 = vector.shape_cast %272 : vector<1x1x16xf32> to vector<16xf32>
    %c5_235 = arith.constant 5 : index
    %c3_236 = arith.constant 3 : index
    %c0_237 = arith.constant 0 : index
    %274 = vector.load %arg13[%c5_235, %c3_236, %c0_237] : memref<22x22x16xf32, #tpu.memory_space<vmem>>, vector<16x16x16xf32>
    %275 = vector.shape_cast %273 : vector<16xf32> to vector<1x1x16xf32>
    %276 = vector.broadcast %275 : vector<1x1x16xf32> to vector<16x16x16xf32>
    %277 = arith.mulf %274, %276 : vector<16x16x16xf32>
    %278 = arith.addf %271, %277 : vector<16x16x16xf32>
    %c5_238 = arith.constant 5 : index
    %c4_239 = arith.constant 4 : index
    %c0_240 = arith.constant 0 : index
    %279 = vector.load %arg2[%c5_238, %c4_239, %c0_240] : memref<7x7x16xf32, #tpu.memory_space<vmem>>, vector<1x1x16xf32>
    %280 = vector.shape_cast %279 : vector<1x1x16xf32> to vector<16xf32>
    %c5_241 = arith.constant 5 : index
    %c4_242 = arith.constant 4 : index
    %c0_243 = arith.constant 0 : index
    %281 = vector.load %arg13[%c5_241, %c4_242, %c0_243] : memref<22x22x16xf32, #tpu.memory_space<vmem>>, vector<16x16x16xf32>
    %282 = vector.shape_cast %280 : vector<16xf32> to vector<1x1x16xf32>
    %283 = vector.broadcast %282 : vector<1x1x16xf32> to vector<16x16x16xf32>
    %284 = arith.mulf %281, %283 : vector<16x16x16xf32>
    %285 = arith.addf %278, %284 : vector<16x16x16xf32>
    %c5_244 = arith.constant 5 : index
    %c5_245 = arith.constant 5 : index
    %c0_246 = arith.constant 0 : index
    %286 = vector.load %arg2[%c5_244, %c5_245, %c0_246] : memref<7x7x16xf32, #tpu.memory_space<vmem>>, vector<1x1x16xf32>
    %287 = vector.shape_cast %286 : vector<1x1x16xf32> to vector<16xf32>
    %c5_247 = arith.constant 5 : index
    %c5_248 = arith.constant 5 : index
    %c0_249 = arith.constant 0 : index
    %288 = vector.load %arg13[%c5_247, %c5_248, %c0_249] : memref<22x22x16xf32, #tpu.memory_space<vmem>>, vector<16x16x16xf32>
    %289 = vector.shape_cast %287 : vector<16xf32> to vector<1x1x16xf32>
    %290 = vector.broadcast %289 : vector<1x1x16xf32> to vector<16x16x16xf32>
    %291 = arith.mulf %288, %290 : vector<16x16x16xf32>
    %292 = arith.addf %285, %291 : vector<16x16x16xf32>
    %c5_250 = arith.constant 5 : index
    %c6_251 = arith.constant 6 : index
    %c0_252 = arith.constant 0 : index
    %293 = vector.load %arg2[%c5_250, %c6_251, %c0_252] : memref<7x7x16xf32, #tpu.memory_space<vmem>>, vector<1x1x16xf32>
    %294 = vector.shape_cast %293 : vector<1x1x16xf32> to vector<16xf32>
    %c5_253 = arith.constant 5 : index
    %c6_254 = arith.constant 6 : index
    %c0_255 = arith.constant 0 : index
    %295 = vector.load %arg13[%c5_253, %c6_254, %c0_255] : memref<22x22x16xf32, #tpu.memory_space<vmem>>, vector<16x16x16xf32>
    %296 = vector.shape_cast %294 : vector<16xf32> to vector<1x1x16xf32>
    %297 = vector.broadcast %296 : vector<1x1x16xf32> to vector<16x16x16xf32>
    %298 = arith.mulf %295, %297 : vector<16x16x16xf32>
    %299 = arith.addf %292, %298 : vector<16x16x16xf32>
    %c6_256 = arith.constant 6 : index
    %c0_257 = arith.constant 0 : index
    %c0_258 = arith.constant 0 : index
    %300 = vector.load %arg2[%c6_256, %c0_257, %c0_258] : memref<7x7x16xf32, #tpu.memory_space<vmem>>, vector<1x1x16xf32>
    %301 = vector.shape_cast %300 : vector<1x1x16xf32> to vector<16xf32>
    %c6_259 = arith.constant 6 : index
    %c0_260 = arith.constant 0 : index
    %c0_261 = arith.constant 0 : index
    %302 = vector.load %arg13[%c6_259, %c0_260, %c0_261] : memref<22x22x16xf32, #tpu.memory_space<vmem>>, vector<16x16x16xf32>
    %303 = vector.shape_cast %301 : vector<16xf32> to vector<1x1x16xf32>
    %304 = vector.broadcast %303 : vector<1x1x16xf32> to vector<16x16x16xf32>
    %305 = arith.mulf %302, %304 : vector<16x16x16xf32>
    %306 = arith.addf %299, %305 : vector<16x16x16xf32>
    %c6_262 = arith.constant 6 : index
    %c1_263 = arith.constant 1 : index
    %c0_264 = arith.constant 0 : index
    %307 = vector.load %arg2[%c6_262, %c1_263, %c0_264] : memref<7x7x16xf32, #tpu.memory_space<vmem>>, vector<1x1x16xf32>
    %308 = vector.shape_cast %307 : vector<1x1x16xf32> to vector<16xf32>
    %c6_265 = arith.constant 6 : index
    %c1_266 = arith.constant 1 : index
    %c0_267 = arith.constant 0 : index
    %309 = vector.load %arg13[%c6_265, %c1_266, %c0_267] : memref<22x22x16xf32, #tpu.memory_space<vmem>>, vector<16x16x16xf32>
    %310 = vector.shape_cast %308 : vector<16xf32> to vector<1x1x16xf32>
    %311 = vector.broadcast %310 : vector<1x1x16xf32> to vector<16x16x16xf32>
    %312 = arith.mulf %309, %311 : vector<16x16x16xf32>
    %313 = arith.addf %306, %312 : vector<16x16x16xf32>
    %c6_268 = arith.constant 6 : index
    %c2_269 = arith.constant 2 : index
    %c0_270 = arith.constant 0 : index
    %314 = vector.load %arg2[%c6_268, %c2_269, %c0_270] : memref<7x7x16xf32, #tpu.memory_space<vmem>>, vector<1x1x16xf32>
    %315 = vector.shape_cast %314 : vector<1x1x16xf32> to vector<16xf32>
    %c6_271 = arith.constant 6 : index
    %c2_272 = arith.constant 2 : index
    %c0_273 = arith.constant 0 : index
    %316 = vector.load %arg13[%c6_271, %c2_272, %c0_273] : memref<22x22x16xf32, #tpu.memory_space<vmem>>, vector<16x16x16xf32>
    %317 = vector.shape_cast %315 : vector<16xf32> to vector<1x1x16xf32>
    %318 = vector.broadcast %317 : vector<1x1x16xf32> to vector<16x16x16xf32>
    %319 = arith.mulf %316, %318 : vector<16x16x16xf32>
    %320 = arith.addf %313, %319 : vector<16x16x16xf32>
    %c6_274 = arith.constant 6 : index
    %c3_275 = arith.constant 3 : index
    %c0_276 = arith.constant 0 : index
    %321 = vector.load %arg2[%c6_274, %c3_275, %c0_276] : memref<7x7x16xf32, #tpu.memory_space<vmem>>, vector<1x1x16xf32>
    %322 = vector.shape_cast %321 : vector<1x1x16xf32> to vector<16xf32>
    %c6_277 = arith.constant 6 : index
    %c3_278 = arith.constant 3 : index
    %c0_279 = arith.constant 0 : index
    %323 = vector.load %arg13[%c6_277, %c3_278, %c0_279] : memref<22x22x16xf32, #tpu.memory_space<vmem>>, vector<16x16x16xf32>
    %324 = vector.shape_cast %322 : vector<16xf32> to vector<1x1x16xf32>
    %325 = vector.broadcast %324 : vector<1x1x16xf32> to vector<16x16x16xf32>
    %326 = arith.mulf %323, %325 : vector<16x16x16xf32>
    %327 = arith.addf %320, %326 : vector<16x16x16xf32>
    %c6_280 = arith.constant 6 : index
    %c4_281 = arith.constant 4 : index
    %c0_282 = arith.constant 0 : index
    %328 = vector.load %arg2[%c6_280, %c4_281, %c0_282] : memref<7x7x16xf32, #tpu.memory_space<vmem>>, vector<1x1x16xf32>
    %329 = vector.shape_cast %328 : vector<1x1x16xf32> to vector<16xf32>
    %c6_283 = arith.constant 6 : index
    %c4_284 = arith.constant 4 : index
    %c0_285 = arith.constant 0 : index
    %330 = vector.load %arg13[%c6_283, %c4_284, %c0_285] : memref<22x22x16xf32, #tpu.memory_space<vmem>>, vector<16x16x16xf32>
    %331 = vector.shape_cast %329 : vector<16xf32> to vector<1x1x16xf32>
    %332 = vector.broadcast %331 : vector<1x1x16xf32> to vector<16x16x16xf32>
    %333 = arith.mulf %330, %332 : vector<16x16x16xf32>
    %334 = arith.addf %327, %333 : vector<16x16x16xf32>
    %c6_286 = arith.constant 6 : index
    %c5_287 = arith.constant 5 : index
    %c0_288 = arith.constant 0 : index
    %335 = vector.load %arg2[%c6_286, %c5_287, %c0_288] : memref<7x7x16xf32, #tpu.memory_space<vmem>>, vector<1x1x16xf32>
    %336 = vector.shape_cast %335 : vector<1x1x16xf32> to vector<16xf32>
    %c6_289 = arith.constant 6 : index
    %c5_290 = arith.constant 5 : index
    %c0_291 = arith.constant 0 : index
    %337 = vector.load %arg13[%c6_289, %c5_290, %c0_291] : memref<22x22x16xf32, #tpu.memory_space<vmem>>, vector<16x16x16xf32>
    %338 = vector.shape_cast %336 : vector<16xf32> to vector<1x1x16xf32>
    %339 = vector.broadcast %338 : vector<1x1x16xf32> to vector<16x16x16xf32>
    %340 = arith.mulf %337, %339 : vector<16x16x16xf32>
    %341 = arith.addf %334, %340 : vector<16x16x16xf32>
    %c6_292 = arith.constant 6 : index
    %c6_293 = arith.constant 6 : index
    %c0_294 = arith.constant 0 : index
    %342 = vector.load %arg2[%c6_292, %c6_293, %c0_294] : memref<7x7x16xf32, #tpu.memory_space<vmem>>, vector<1x1x16xf32>
    %343 = vector.shape_cast %342 : vector<1x1x16xf32> to vector<16xf32>
    %c6_295 = arith.constant 6 : index
    %c6_296 = arith.constant 6 : index
    %c0_297 = arith.constant 0 : index
    %344 = vector.load %arg13[%c6_295, %c6_296, %c0_297] : memref<22x22x16xf32, #tpu.memory_space<vmem>>, vector<16x16x16xf32>
    %345 = vector.shape_cast %343 : vector<16xf32> to vector<1x1x16xf32>
    %346 = vector.broadcast %345 : vector<1x1x16xf32> to vector<16x16x16xf32>
    %347 = arith.mulf %344, %346 : vector<16x16x16xf32>
    %348 = arith.addf %341, %347 : vector<16x16x16xf32>
    %c0_298 = arith.constant 0 : index
    %c0_299 = arith.constant 0 : index
    %349 = vector.load %arg3[%c0_298, %c0_299] : memref<1x16xf32, #tpu.memory_space<vmem>>, vector<1x16xf32>
    %350 = vector.shape_cast %349 : vector<1x16xf32> to vector<1x1x16xf32>
    %351 = vector.broadcast %350 : vector<1x1x16xf32> to vector<16x16x16xf32>
    %352 = arith.addf %348, %351 : vector<16x16x16xf32>
    %cst_300 = arith.constant dense<0.000000e+00> : vector<16x16xf32>
    %353 = vector.multi_reduction <add>, %352, %cst_300 [1] : vector<16x16x16xf32> to vector<16x16xf32>
    %354 = vector.shape_cast %353 : vector<16x16xf32> to vector<16x1x16xf32>
    %cst_301 = arith.constant 1.600000e+01 : f32
    %355 = vector.broadcast %cst_301 : f32 to vector<16x1x16xf32>
    %356 = arith.divf %354, %355 : vector<16x1x16xf32>
    %357 = vector.broadcast %356 : vector<16x1x16xf32> to vector<16x16x16xf32>
    %358 = arith.subf %352, %357 : vector<16x16x16xf32>
    %359 = arith.mulf %358, %358 : vector<16x16x16xf32>
    %cst_302 = arith.constant dense<0.000000e+00> : vector<16x16xf32>
    %360 = vector.multi_reduction <add>, %359, %cst_302 [1] : vector<16x16x16xf32> to vector<16x16xf32>
    %361 = vector.shape_cast %360 : vector<16x16xf32> to vector<16x1x16xf32>
    %cst_303 = arith.constant 1.600000e+01 : f32
    %362 = vector.broadcast %cst_303 : f32 to vector<16x1x16xf32>
    %363 = arith.divf %361, %362 : vector<16x1x16xf32>
    %364 = vector.broadcast %356 : vector<16x1x16xf32> to vector<16x16x16xf32>
    %365 = arith.subf %352, %364 : vector<16x16x16xf32>
    %cst_304 = arith.constant 9.99999974E-6 : f32
    %366 = vector.broadcast %cst_304 : f32 to vector<16x1x16xf32>
    %367 = arith.addf %363, %366 : vector<16x1x16xf32>
    %368 = math.rsqrt %367 : vector<16x1x16xf32>
    %369 = vector.broadcast %368 : vector<16x1x16xf32> to vector<16x16x16xf32>
    %370 = arith.mulf %365, %369 : vector<16x16x16xf32>
    %c0_305 = arith.constant 0 : index
    %c0_306 = arith.constant 0 : index
    %371 = vector.load %arg4[%c0_305, %c0_306] : memref<16x16xf32, #tpu.memory_space<vmem>>, vector<16x16xf32>
    %372 = vector.shape_cast %371 : vector<16x16xf32> to vector<1x16x16xf32>
    %373 = vector.broadcast %372 : vector<1x16x16xf32> to vector<16x16x16xf32>
    %374 = arith.mulf %370, %373 : vector<16x16x16xf32>
    %c0_307 = arith.constant 0 : index
    %c0_308 = arith.constant 0 : index
    %375 = vector.load %arg5[%c0_307, %c0_308] : memref<16x16xf32, #tpu.memory_space<vmem>>, vector<16x16xf32>
    %376 = vector.shape_cast %375 : vector<16x16xf32> to vector<1x16x16xf32>
    %377 = vector.broadcast %376 : vector<1x16x16xf32> to vector<16x16x16xf32>
    %378 = arith.addf %374, %377 : vector<16x16x16xf32>
    %379 = vector.shape_cast %378 : vector<16x16x16xf32> to vector<256x16xf32>
    %c0_309 = arith.constant 0 : index
    %c0_310 = arith.constant 0 : index
    %380 = vector.load %arg6[%c0_309, %c0_310] : memref<16x32xf32, #tpu.memory_space<vmem>>, vector<16x32xf32>
    %cst_311 = arith.constant dense<0.000000e+00> : vector<256x32xf32>
    %381 = tpu.matmul %379, %380, %cst_311 {dimension_numbers = #tpu.dot_dimension_numbers<[1], [0], [0], [1], [0, 0, 1, 1], [], []>} : vector<256x16xf32>, vector<16x32xf32>, vector<256x32xf32> -> vector<256x32xf32>
    %c0_312 = arith.constant 0 : index
    %c0_313 = arith.constant 0 : index
    %382 = vector.load %arg7[%c0_312, %c0_313] : memref<1x32xf32, #tpu.memory_space<vmem>>, vector<1x32xf32>
    %383 = vector.broadcast %382 : vector<1x32xf32> to vector<256x32xf32>
    %384 = arith.addf %381, %383 : vector<256x32xf32>
    %385 = arith.mulf %384, %384 : vector<256x32xf32>
    %cst_314 = arith.constant dense<0.000000e+00> : vector<32xf32>
    %386 = vector.multi_reduction <add>, %385, %cst_314 [0] : vector<256x32xf32> to vector<32xf32>
    %387 = vector.shape_cast %386 : vector<32xf32> to vector<1x32xf32>
    %388 = math.sqrt %387 : vector<1x32xf32>
    %cst_315 = arith.constant dense<0.000000e+00> : vector<1xf32>
    %389 = vector.multi_reduction <add>, %388, %cst_315 [1] : vector<1x32xf32> to vector<1xf32>
    %390 = vector.shape_cast %389 : vector<1xf32> to vector<1x1xf32>
    %cst_316 = arith.constant 3.200000e+01 : f32
    %391 = vector.broadcast %cst_316 : f32 to vector<1x1xf32>
    %392 = arith.divf %390, %391 : vector<1x1xf32>
    %cst_317 = arith.constant 9.99999997E-7 : f32
    %393 = vector.broadcast %cst_317 : f32 to vector<1x1xf32>
    %394 = arith.addf %392, %393 : vector<1x1xf32>
    %395 = vector.broadcast %394 : vector<1x1xf32> to vector<1x32xf32>
    %396 = arith.divf %388, %395 : vector<1x32xf32>
    %c0_318 = arith.constant 0 : index
    %c0_319 = arith.constant 0 : index
    %397 = vector.load %arg8[%c0_318, %c0_319] : memref<1x32xf32, #tpu.memory_space<vmem>>, vector<1x32xf32>
    %398 = vector.broadcast %396 : vector<1x32xf32> to vector<256x32xf32>
    %399 = arith.mulf %384, %398 : vector<256x32xf32>
    %400 = vector.broadcast %397 : vector<1x32xf32> to vector<256x32xf32>
    %401 = arith.mulf %400, %399 : vector<256x32xf32>
    %c0_320 = arith.constant 0 : index
    %c0_321 = arith.constant 0 : index
    %402 = vector.load %arg9[%c0_320, %c0_321] : memref<1x32xf32, #tpu.memory_space<vmem>>, vector<1x32xf32>
    %403 = vector.broadcast %402 : vector<1x32xf32> to vector<256x32xf32>
    %404 = arith.addf %401, %403 : vector<256x32xf32>
    %405 = arith.addf %404, %384 : vector<256x32xf32>
    %c0_322 = arith.constant 0 : index
    %c0_323 = arith.constant 0 : index
    %406 = vector.load %arg10[%c0_322, %c0_323] : memref<32x16xf32, #tpu.memory_space<vmem>>, vector<32x16xf32>
    %cst_324 = arith.constant dense<0.000000e+00> : vector<256x16xf32>
    %407 = tpu.matmul %405, %406, %cst_324 {dimension_numbers = #tpu.dot_dimension_numbers<[1], [0], [0], [1], [0, 0, 1, 1], [], []>} : vector<256x32xf32>, vector<32x16xf32>, vector<256x16xf32> -> vector<256x16xf32>
    %c0_325 = arith.constant 0 : index
    %c0_326 = arith.constant 0 : index
    %408 = vector.load %arg11[%c0_325, %c0_326] : memref<1x16xf32, #tpu.memory_space<vmem>>, vector<1x16xf32>
    %409 = vector.broadcast %408 : vector<1x16xf32> to vector<256x16xf32>
    %410 = arith.addf %407, %409 : vector<256x16xf32>
    %411 = vector.shape_cast %410 : vector<256x16xf32> to vector<16x16x16xf32>
    %c0_327 = arith.constant 0 : index
    %c0_328 = arith.constant 0 : index
    %c0_329 = arith.constant 0 : index
    %c0_330 = arith.constant 0 : index
    %412 = vector.load %arg1[%c0_327, %c0_328, %c0_329, %c0_330] : memref<1x16x16x16xf32, #tpu.memory_space<vmem>>, vector<1x16x16x16xf32>
    %413 = vector.shape_cast %412 : vector<1x16x16x16xf32> to vector<16x16x16xf32>
    %414 = arith.addf %411, %413 : vector<16x16x16xf32>
    %c0_331 = arith.constant 0 : index
    %c0_332 = arith.constant 0 : index
    %c0_333 = arith.constant 0 : index
    %c0_334 = arith.constant 0 : index
    %415 = vector.load %arg12[%c0_331, %c0_332, %c0_333, %c0_334] : memref<1x16x16x16xf32, #tpu.memory_space<vmem>>, vector<1x16x16x16xf32>
    %416 = vector.shape_cast %415 : vector<1x16x16x16xf32> to vector<16x16x16xf32>
    %417 = vector.shape_cast %414 : vector<16x16x16xf32> to vector<1x16x16x16xf32>
    tpu.vector_store %arg12[%c0_331, %c0_332, %c0_333, %c0_334], %417 {strides = array<i32>} : memref<1x16x16x16xf32, #tpu.memory_space<vmem>>, vector<1x16x16x16xf32>,
    return
  }
  func.func @transform_0(%arg0: i32) -> (i32, i32, i32, i32) {
    %c0_i32 = arith.constant 0 : i32
    %c0_i32_0 = arith.constant 0 : i32
    %c0_i32_1 = arith.constant 0 : i32
    %c0_i32_2 = arith.constant 0 : i32
    return %arg0, %c0_i32, %c0_i32_0, %c0_i32_1 : i32, i32, i32, i32
  }
  func.func @transform_1(%arg0: i32) -> (i32, i32, i32) {
    %c0_i32 = arith.constant 0 : i32
    %c0_i32_0 = arith.constant 0 : i32
    %c0_i32_1 = arith.constant 0 : i32
    %c0_i32_2 = arith.constant 0 : i32
    return %c0_i32, %c0_i32_0, %c0_i32_1 : i32, i32, i32
  }
  func.func @transform_2(%arg0: i32) -> (i32, i32) {
    %c0_i32 = arith.constant 0 : i32
    %c0_i32_0 = arith.constant 0 : i32
    %c0_i32_1 = arith.constant 0 : i32
    return %c0_i32, %c0_i32_0 : i32, i32
  }
  func.func @transform_3(%arg0: i32) -> (i32, i32) {
    %c0_i32 = arith.constant 0 : i32
    %c0_i32_0 = arith.constant 0 : i32
    %c0_i32_1 = arith.constant 0 : i32
    return %c0_i32, %c0_i32_0 : i32, i32
  }
  func.func @transform_4(%arg0: i32) -> (i32, i32) {
    %c0_i32 = arith.constant 0 : i32
    %c0_i32_0 = arith.constant 0 : i32
    %c0_i32_1 = arith.constant 0 : i32
    return %c0_i32, %c0_i32_0 : i32, i32
  }
  func.func @transform_5(%arg0: i32) -> (i32, i32) {
    %c0_i32 = arith.constant 0 : i32
    %c0_i32_0 = arith.constant 0 : i32
    %c0_i32_1 = arith.constant 0 : i32
    return %c0_i32, %c0_i32_0 : i32, i32
  }
  func.func @transform_6(%arg0: i32) -> (i32, i32) {
    %c0_i32 = arith.constant 0 : i32
    %c0_i32_0 = arith.constant 0 : i32
    %c0_i32_1 = arith.constant 0 : i32
    return %c0_i32, %c0_i32_0 : i32, i32
  }
  func.func @transform_7(%arg0: i32) -> (i32, i32) {
    %c0_i32 = arith.constant 0 : i32
    %c0_i32_0 = arith.constant 0 : i32
    %c0_i32_1 = arith.constant 0 : i32
    return %c0_i32, %c0_i32_0 : i32, i32
  }
  func.func @transform_8(%arg0: i32) -> (i32, i32) {
    %c0_i32 = arith.constant 0 : i32
    %c0_i32_0 = arith.constant 0 : i32
    %c0_i32_1 = arith.constant 0 : i32
    return %c0_i32, %c0_i32_0 : i32, i32
  }
  func.func @transform_9(%arg0: i32) -> (i32, i32) {
    %c0_i32 = arith.constant 0 : i32
    %c0_i32_0 = arith.constant 0 : i32
    %c0_i32_1 = arith.constant 0 : i32
    return %c0_i32, %c0_i32_0 : i32, i32
  }
  func.func @transform_10(%arg0: i32) -> (i32, i32) {
    %c0_i32 = arith.constant 0 : i32
    %c0_i32_0 = arith.constant 0 : i32
    %c0_i32_1 = arith.constant 0 : i32
    return %c0_i32, %c0_i32_0 : i32, i32
  }
  func.func @transform_11(%arg0: i32) -> (i32, i32, i32, i32) {
    %c0_i32 = arith.constant 0 : i32
    %c0_i32_0 = arith.constant 0 : i32
    %c0_i32_1 = arith.constant 0 : i32
    %c0_i32_2 = arith.constant 0 : i32
    return %arg0, %c0_i32, %c0_i32_0, %c0_i32_1 : i32, i32, i32, i32
  }
}

</mosaic_0001>

<llo_original>
// kernel: tpu_custom_call.1
$region0: #{tpu_custom_call.1}
  #allocation0 [shape = 'u32[]', space=smem, size = 0x4, offset = 0x4, fixed_abs, tag = 'smem constant byte address 0x4 - core index']
  #allocation1 [shape = 'u32[144,128]{1,0:T(1,128)}', space=vmem, size = 0x12000, scoped, tag = 'internal scratch']
  #allocation2 [shape = 'f32[22,22,16]{2,1,0:T(8,128)}', space=vmem, size = 0x42000, scoped, tag = 'scratch operand']
  %s0 = inlined_call_operand.hbm [shape: f32[2,16,16,16], index: 0, kind: input, shape index: {}]
  %s1 = inlined_call_operand.hbm [shape: f32[7,7,16], index: 1, kind: input, shape index: {}]
  %s2 = inlined_call_operand.hbm [shape: f32[1,16], index: 2, kind: input, shape index: {}]
  %s3 = inlined_call_operand.vmem [shape: f32[16,16], index: 3, kind: input, shape index: {}]
  %s4 = inlined_call_operand.vmem [shape: f32[16,16], index: 4, kind: input, shape index: {}]
  %s5 = inlined_call_operand.vmem [shape: f32[16,32], index: 5, kind: input, shape index: {}]
  %s6 = inlined_call_operand.hbm [shape: f32[1,32], index: 6, kind: input, shape index: {}]
  %s7 = inlined_call_operand.hbm [shape: f32[1,32], index: 7, kind: input, shape index: {}]
  %s8 = inlined_call_operand.hbm [shape: f32[1,32], index: 8, kind: input, shape index: {}]
  %s9 = inlined_call_operand.vmem [shape: f32[32,16], index: 9, kind: input, shape index: {}]
  %s10 = inlined_call_operand.vmem [shape: f32[1,16], index: 10, kind: input, shape index: {}]
  %s11 = inlined_call_operand.hbm [shape: f32[2,16,16,16], index: 11, kind: output, shape index: {}]
  %s12 = sld [smem:[#allocation0]]
  $region101: #{tpu_custom_call.1} parent=0
    _
  %s14 = ssub.s32 1, %s12
  %s15 = scalar_select 0, %s14, %s12
  $region1: #{tpu_custom_call.1} parent=0
    #allocation3 [shape = 'u8[262144]{0}', space=vmem, size = 0x40000, scoped, tag = 'input window, operand 0']
    #allocation4 [shape = 's32[2]{0}', space=sflag, size = 0x8, scoped, tag = 'scoped memory for tpu_custom_call.1']
    #allocation5 [shape = 's32[2]{0}', space=sflag, size = 0x8, scoped, tag = 'scoped memory for tpu_custom_call.1']
    #allocation6 [shape = 'u8[28672]{0}', space=vmem, size = 0x7000, scoped, tag = 'input window, operand 1, single buffered']
    #allocation7 [shape = 's32[1]{0}', space=sflag, size = 0x4, scoped, tag = 'scoped memory for tpu_custom_call.1']
    #allocation8 [shape = 'u8[512]{0}', space=vmem, size = 0x400, scoped, tag = 'input window, operand 2, single buffered']
    #allocation9 [shape = 'u8[512]{0}', space=vmem, size = 0x400, scoped, tag = 'input window, operand 6, single buffered']
    #allocation10 [shape = 's32[1]{0}', space=sflag, size = 0x4, scoped, tag = 'scoped memory for tpu_custom_call.1']
    #allocation11 [shape = 'u8[512]{0}', space=vmem, size = 0x400, scoped, tag = 'input window, operand 7, single buffered']
    #allocation12 [shape = 'u8[512]{0}', space=vmem, size = 0x400, scoped, tag = 'input window, operand 8, single buffered']
    #allocation13 [shape = 's32[1]{0}', space=sflag, size = 0x4, scoped, tag = 'scoped memory for tpu_custom_call.1']
    #allocation14 [shape = 'u8[262144]{0}', space=vmem, size = 0x40000, scoped, tag = 'output window, operand 0']
    %16 = vsyncpa [#allocation4], 0
    %s17 = scalar_lea.sflag [#allocation4], 1
    %18 = vsyncpa %s17, 0
    %19 = vsyncpa [#allocation7], 0
    %20 = vsyncpa [#allocation10], 0
    %21 = vsyncpa [#allocation13], 0
    %22 = vsyncpa [#allocation5], 0
    %s23 = scalar_lea.sflag [#allocation5], 1
    %24 = vsyncpa %s23, 0
    loop: start=0, step=1, limit=4
    $region2: #{tpu_custom_call.1} parent=1 // loop_pre_header
      _
    $region3: #{tpu_custom_call.1} parent=1 // loop_header
      %s26 = sphi 0, %s30
      %p27 = scmp.ge.s32.totalorder %s26, 4
      %s36 = sphi 0, %s38
      %s39 = sphi 0, %s36
      %s40 = sphi 0, %s39
      %s56 = sphi 0, %s40
      %s60 = sphi 0, %s60
      %s62 = sphi 0, %s60
      %s63 = sphi 0, %s62
      %s77 = sphi 0, %s63
      %s81 = sphi 0, %s81
      %s83 = sphi 0, %s81
      %s84 = sphi 0, %s83
      %s98 = sphi 0, %s84
      %s102 = sphi 0, %s102
      %s104 = sphi 0, %s102
      %s105 = sphi 0, %s104
      %s119 = sphi 0, %s105
      %s123 = sphi 0, %s123
      %s125 = sphi 0, %s123
      %s126 = sphi 0, %s125
      %s140 = sphi 0, %s126
      %s144 = sphi 0, %s144
      %s146 = sphi 0, %s144
      %s147 = sphi 0, %s146
      %s161 = sphi 0, %s147
      %s165 = sphi 0, %s165
      %s167 = sphi 0, %s165
      %s168 = sphi 0, %s167
      %s182 = sphi 0, %s168
      %s186 = sphi 0, %s186
      %s188 = sphi 0, %s186
      %s189 = sphi 0, %s188
      %s203 = sphi 0, %s189
      %s207 = sphi 0, %s207
      %s209 = sphi 0, %s207
      %s210 = sphi 0, %s209
      %s224 = sphi 0, %s210
      %s228 = sphi 0, %s228
      %s230 = sphi 0, %s228
      %s231 = sphi 0, %s230
      %s245 = sphi 0, %s231
      %s249 = sphi 0, %s249
      %s251 = sphi 0, %s249
      %s252 = sphi 0, %s251
      %s266 = sphi 0, %s252
      %s272 = sphi 0, %s274
      %s275 = sphi 0, %s272
      %s276 = sphi 0, %s275
      %s292 = sphi 0, %s276
    $region4: #{tpu_custom_call.1} parent=1 // loop_header_branch
      %29 = sbr.rel (%p27) target = $region8
    $region5: #{tpu_custom_call.1} parent=1 // loop_body
      %s31 = ssub.s32 %s26, 1
      %s32 = ssub.s32 %s26, 2
      %s33 = sadd.s32 %s26, 1
      %s34 = ssub.s32 %s26, %s33
      %p35 = scmp.eq.s32.totalorder %s34, 0
      %s37 = sadd.s32 %s36, 1
      %s38 = scalar_select %p35, %s36, %s37
      %p41 = pneg %p35
      %p42 = scmp.eq.s32.totalorder %s26, 1
      %p43 = por %p41, %p42
      %p44 = scmp.ne.s32.totalorder %s36, %s39
      %p45 = scmp.eq.s32.totalorder %s26, 0
      %p46 = por %p44, %p45
      %p47 = scmp.ne.s32.totalorder %s36, %s39
      %p48 = scmp.eq.s32.totalorder %s31, 1
      %p49 = por %p47, %p48
      %p50 = scmp.ne.s32.totalorder %s39, %s40
      %p51 = scmp.eq.s32.totalorder %s31, 0
      %p52 = por %p50, %p51
      %p53 = scmp.ne.s32.totalorder %s39, %s40
      %p54 = scmp.eq.s32.totalorder %s32, 1
      %p55 = por %p53, %p54
      %p57 = scmp.ne.s32.totalorder %s40, %s56
      %p58 = scmp.eq.s32.totalorder %s32, 0
      %p59 = por %p57, %p58
      %s61 = sadd.s32 %s60, 1
      %p64 = scmp.eq.s32.totalorder %s26, 1
      %p65 = scmp.ne.s32.totalorder %s60, %s62
      %p66 = scmp.eq.s32.totalorder %s26, 0
      %p67 = por %p65, %p66
      %p68 = scmp.ne.s32.totalorder %s60, %s62
      %p69 = scmp.eq.s32.totalorder %s31, 1
      %p70 = por %p68, %p69
      %p71 = scmp.ne.s32.totalorder %s62, %s63
      %p72 = scmp.eq.s32.totalorder %s31, 0
      %p73 = por %p71, %p72
      %p74 = scmp.ne.s32.totalorder %s62, %s63
      %p75 = scmp.eq.s32.totalorder %s32, 1
      %p76 = por %p74, %p75
      %p78 = scmp.ne.s32.totalorder %s63, %s77
      %p79 = scmp.eq.s32.totalorder %s32, 0
      %p80 = por %p78, %p79
      %s82 = sadd.s32 %s81, 1
      %p85 = scmp.eq.s32.totalorder %s26, 1
      %p86 = scmp.ne.s32.totalorder %s81, %s83
      %p87 = scmp.eq.s32.totalorder %s26, 0
      %p88 = por %p86, %p87
      %p89 = scmp.ne.s32.totalorder %s81, %s83
      %p90 = scmp.eq.s32.totalorder %s31, 1
      %p91 = por %p89, %p90
      %p92 = scmp.ne.s32.totalorder %s83, %s84
      %p93 = scmp.eq.s32.totalorder %s31, 0
      %p94 = por %p92, %p93
      %p95 = scmp.ne.s32.totalorder %s83, %s84
      %p96 = scmp.eq.s32.totalorder %s32, 1
      %p97 = por %p95, %p96
      %p99 = scmp.ne.s32.totalorder %s84, %s98
      %p100 = scmp.eq.s32.totalorder %s32, 0
      %p101 = por %p99, %p100
      %s103 = sadd.s32 %s102, 1
      %p106 = scmp.eq.s32.totalorder %s26, 1
      %p107 = scmp.ne.s32.totalorder %s102, %s104
      %p108 = scmp.eq.s32.totalorder %s26, 0
      %p109 = por %p107, %p108
      %p110 = scmp.ne.s32.totalorder %s102, %s104
      %p111 = scmp.eq.s32.totalorder %s31, 1
      %p112 = por %p110, %p111
      %p113 = scmp.ne.s32.totalorder %s104, %s105
      %p114 = scmp.eq.s32.totalorder %s31, 0
      %p115 = por %p113, %p114
      %p116 = scmp.ne.s32.totalorder %s104, %s105
      %p117 = scmp.eq.s32.totalorder %s32, 1
      %p118 = por %p116, %p117
      %p120 = scmp.ne.s32.totalorder %s105, %s119
      %p121 = scmp.eq.s32.totalorder %s32, 0
      %p122 = por %p120, %p121
      %s124 = sadd.s32 %s123, 1
      %p127 = scmp.eq.s32.totalorder %s26, 1
      %p128 = scmp.ne.s32.totalorder %s123, %s125
      %p129 = scmp.eq.s32.totalorder %s26, 0
      %p130 = por %p128, %p129
      %p131 = scmp.ne.s32.totalorder %s123, %s125
      %p132 = scmp.eq.s32.totalorder %s31, 1
      %p133 = por %p131, %p132
      %p134 = scmp.ne.s32.totalorder %s125, %s126
      %p135 = scmp.eq.s32.totalorder %s31, 0
      %p136 = por %p134, %p135
      %p137 = scmp.ne.s32.totalorder %s125, %s126
      %p138 = scmp.eq.s32.totalorder %s32, 1
      %p139 = por %p137, %p138
      %p141 = scmp.ne.s32.totalorder %s126, %s140
      %p142 = scmp.eq.s32.totalorder %s32, 0
      %p143 = por %p141, %p142
      %s145 = sadd.s32 %s144, 1
      %p148 = scmp.eq.s32.totalorder %s26, 1
      %p149 = scmp.ne.s32.totalorder %s144, %s146
      %p150 = scmp.eq.s32.totalorder %s26, 0
      %p151 = por %p149, %p150
      %p152 = scmp.ne.s32.totalorder %s144, %s146
      %p153 = scmp.eq.s32.totalorder %s31, 1
      %p154 = por %p152, %p153
      %p155 = scmp.ne.s32.totalorder %s146, %s147
      %p156 = scmp.eq.s32.totalorder %s31, 0
      %p157 = por %p155, %p156
      %p158 = scmp.ne.s32.totalorder %s146, %s147
      %p159 = scmp.eq.s32.totalorder %s32, 1
      %p160 = por %p158, %p159
      %p162 = scmp.ne.s32.totalorder %s147, %s161
      %p163 = scmp.eq.s32.totalorder %s32, 0
      %p164 = por %p162, %p163
      %s166 = sadd.s32 %s165, 1
      %p169 = scmp.eq.s32.totalorder %s26, 1
      %p170 = scmp.ne.s32.totalorder %s165, %s167
      %p171 = scmp.eq.s32.totalorder %s26, 0
      %p172 = por %p170, %p171
      %p173 = scmp.ne.s32.totalorder %s165, %s167
      %p174 = scmp.eq.s32.totalorder %s31, 1
      %p175 = por %p173, %p174
      %p176 = scmp.ne.s32.totalorder %s167, %s168
      %p177 = scmp.eq.s32.totalorder %s31, 0
      %p178 = por %p176, %p177
      %p179 = scmp.ne.s32.totalorder %s167, %s168
      %p180 = scmp.eq.s32.totalorder %s32, 1
      %p181 = por %p179, %p180
      %p183 = scmp.ne.s32.totalorder %s168, %s182
      %p184 = scmp.eq.s32.totalorder %s32, 0
      %p185 = por %p183, %p184
      %s187 = sadd.s32 %s186, 1
      %p190 = scmp.eq.s32.totalorder %s26, 1
      %p191 = scmp.ne.s32.totalorder %s186, %s188
      %p192 = scmp.eq.s32.totalorder %s26, 0
      %p193 = por %p191, %p192
      %p194 = scmp.ne.s32.totalorder %s186, %s188
      %p195 = scmp.eq.s32.totalorder %s31, 1
      %p196 = por %p194, %p195
      %p197 = scmp.ne.s32.totalorder %s188, %s189
      %p198 = scmp.eq.s32.totalorder %s31, 0
      %p199 = por %p197, %p198
      %p200 = scmp.ne.s32.totalorder %s188, %s189
      %p201 = scmp.eq.s32.totalorder %s32, 1
      %p202 = por %p200, %p201
      %p204 = scmp.ne.s32.totalorder %s189, %s203
      %p205 = scmp.eq.s32.totalorder %s32, 0
      %p206 = por %p204, %p205
      %s208 = sadd.s32 %s207, 1
      %p211 = scmp.eq.s32.totalorder %s26, 1
      %p212 = scmp.ne.s32.totalorder %s207, %s209
      %p213 = scmp.eq.s32.totalorder %s26, 0
      %p214 = por %p212, %p213
      %p215 = scmp.ne.s32.totalorder %s207, %s209
      %p216 = scmp.eq.s32.totalorder %s31, 1
      %p217 = por %p215, %p216
      %p218 = scmp.ne.s32.totalorder %s209, %s210
      %p219 = scmp.eq.s32.totalorder %s31, 0
      %p220 = por %p218, %p219
      %p221 = scmp.ne.s32.totalorder %s209, %s210
      %p222 = scmp.eq.s32.totalorder %s32, 1
      %p223 = por %p221, %p222
      %p225 = scmp.ne.s32.totalorder %s210, %s224
      %p226 = scmp.eq.s32.totalorder %s32, 0
      %p227 = por %p225, %p226
      %s229 = sadd.s32 %s228, 1
      %p232 = scmp.eq.s32.totalorder %s26, 1
      %p233 = scmp.ne.s32.totalorder %s228, %s230
      %p234 = scmp.eq.s32.totalorder %s26, 0
      %p235 = por %p233, %p234
      %p236 = scmp.ne.s32.totalorder %s228, %s230
      %p237 = scmp.eq.s32.totalorder %s31, 1
      %p238 = por %p236, %p237
      %p239 = scmp.ne.s32.totalorder %s230, %s231
      %p240 = scmp.eq.s32.totalorder %s31, 0
      %p241 = por %p239, %p240
      %p242 = scmp.ne.s32.totalorder %s230, %s231
      %p243 = scmp.eq.s32.totalorder %s32, 1
      %p244 = por %p242, %p243
      %p246 = scmp.ne.s32.totalorder %s231, %s245
      %p247 = scmp.eq.s32.totalorder %s32, 0
      %p248 = por %p246, %p247
      %s250 = sadd.s32 %s249, 1
      %p253 = scmp.eq.s32.totalorder %s26, 1
      %p254 = scmp.ne.s32.totalorder %s249, %s251
      %p255 = scmp.eq.s32.totalorder %s26, 0
      %p256 = por %p254, %p255
      %p257 = scmp.ne.s32.totalorder %s249, %s251
      %p258 = scmp.eq.s32.totalorder %s31, 1
      %p259 = por %p257, %p258
      %p260 = scmp.ne.s32.totalorder %s251, %s252
      %p261 = scmp.eq.s32.totalorder %s31, 0
      %p262 = por %p260, %p261
      %p263 = scmp.ne.s32.totalorder %s251, %s252
      %p264 = scmp.eq.s32.totalorder %s32, 1
      %p265 = por %p263, %p264
      %p267 = scmp.ne.s32.totalorder %s252, %s266
      %p268 = scmp.eq.s32.totalorder %s32, 0
      %p269 = por %p267, %p268
      %s270 = ssub.s32 %s26, %s33
      %p271 = scmp.eq.s32.totalorder %s270, 0
      %s273 = sadd.s32 %s272, 1
      %s274 = scalar_select %p271, %s272, %s273
      %p277 = pneg %p271
      %p278 = scmp.eq.s32.totalorder %s26, 1
      %p279 = por %p277, %p278
      %p280 = scmp.ne.s32.totalorder %s272, %s275
      %p281 = scmp.eq.s32.totalorder %s26, 0
      %p282 = por %p280, %p281
      %p283 = scmp.ne.s32.totalorder %s272, %s275
      %p284 = scmp.eq.s32.totalorder %s31, 1
      %p285 = por %p283, %p284
      %p286 = scmp.ne.s32.totalorder %s275, %s276
      %p287 = scmp.eq.s32.totalorder %s31, 0
      %p288 = por %p286, %p287
      %p289 = scmp.ne.s32.totalorder %s275, %s276
      %p290 = scmp.eq.s32.totalorder %s32, 1
      %p291 = por %p289, %p290
      %p293 = scmp.ne.s32.totalorder %s276, %s292
      %p294 = scmp.eq.s32.totalorder %s32, 0
      %p295 = por %p293, %p294
      %p296 = scmp.le.s32.totalorder 1, %s26
      %p297 = scmp.lt.s32.totalorder %s26, 3
      %p298 = pnand %p296, %p297
      %p299 = pneg %p298
      // Predicated region
      $region9: #{tpu_custom_call.1} parent=5 // pred_check
        _
      $region10: #{tpu_custom_call.1} parent=5 // pred_check_branch
        %301 = sbr.rel (%p298) target = $region12
      $region11: #{tpu_custom_call.1} parent=5 // pred_region
        %s302 = ssub.s32 %s26, 1
        // Predicated region
        $region13: #{tpu_custom_call.1} parent=11 // pred_check
          %p303 = pneg %p73
        $region14: #{tpu_custom_call.1} parent=11 // pred_check_branch
          %305 = sbr.rel (%p303) target = $region16
        $region15: #{tpu_custom_call.1} parent=11 // pred_region
          %s307 = ssub.s32 896, 896
          %308 = vsyncadd [#allocation7], %s307
          %s309 = sshll.u32 [#allocation6], 4
          %s310 = int_to_ptr.vmem [resolvable:$true] %s309
          %315 = dma.hbm_to_vmem [thread:$0]  %s1, 896, %s310, [#allocation7], 128, 128, 8
        $region16: #{tpu_custom_call.1} parent=11 // pred_fallthru
          _
        // Predicated region
        $region17: #{tpu_custom_call.1} parent=11 // pred_check
          %p316 = pneg %p94
        $region18: #{tpu_custom_call.1} parent=11 // pred_check_branch
          %318 = sbr.rel (%p316) target = $region20
        $region19: #{tpu_custom_call.1} parent=11 // pred_region
          %s320 = ssub.s32 16, 16
          %321 = vsyncadd [#allocation7], %s320
          %s323 = sshll.u32 [#allocation8], 4
          %s324 = int_to_ptr.vmem [resolvable:$true] %s323
          %326 = dma.hbm_to_vmem [thread:$0]  %s2, 16, %s324, [#allocation7]
        $region20: #{tpu_custom_call.1} parent=11 // pred_fallthru
          _
        // Predicated region
        $region21: #{tpu_custom_call.1} parent=11 // pred_check
          %p327 = pneg %p115
        $region22: #{tpu_custom_call.1} parent=11 // pred_check_branch
          %329 = sbr.rel (%p327) target = $region24
        $region23: #{tpu_custom_call.1} parent=11 // pred_region
          _
        $region24: #{tpu_custom_call.1} parent=11 // pred_fallthru
          _
        // Predicated region
        $region25: #{tpu_custom_call.1} parent=11 // pred_check
          %p330 = pneg %p136
        $region26: #{tpu_custom_call.1} parent=11 // pred_check_branch
          %332 = sbr.rel (%p330) target = $region28
        $region27: #{tpu_custom_call.1} parent=11 // pred_region
          _
        $region28: #{tpu_custom_call.1} parent=11 // pred_fallthru
          _
        // Predicated region
        $region29: #{tpu_custom_call.1} parent=11 // pred_check
          %p333 = pneg %p157
        $region30: #{tpu_custom_call.1} parent=11 // pred_check_branch
          %335 = sbr.rel (%p333) target = $region32
        $region31: #{tpu_custom_call.1} parent=11 // pred_region
          _
        $region32: #{tpu_custom_call.1} parent=11 // pred_fallthru
          _
        // Predicated region
        $region33: #{tpu_custom_call.1} parent=11 // pred_check
          %p336 = pneg %p178
        $region34: #{tpu_custom_call.1} parent=11 // pred_check_branch
          %338 = sbr.rel (%p336) target = $region36
        $region35: #{tpu_custom_call.1} parent=11 // pred_region
          %s340 = ssub.s32 16, 16
          %341 = vsyncadd [#allocation10], %s340
          %s343 = sshll.u32 [#allocation9], 4
          %s344 = int_to_ptr.vmem [resolvable:$true] %s343
          %346 = dma.hbm_to_vmem [thread:$0]  %s6, 16, %s344, [#allocation10]
        $region36: #{tpu_custom_call.1} parent=11 // pred_fallthru
          _
        // Predicated region
        $region37: #{tpu_custom_call.1} parent=11 // pred_check
          %p347 = pneg %p199
        $region38: #{tpu_custom_call.1} parent=11 // pred_check_branch
          %349 = sbr.rel (%p347) target = $region40
        $region39: #{tpu_custom_call.1} parent=11 // pred_region
          %s351 = ssub.s32 16, 16
          %352 = vsyncadd [#allocation10], %s351
          %s354 = sshll.u32 [#allocation11], 4
          %s355 = int_to_ptr.vmem [resolvable:$true] %s354
          %357 = dma.hbm_to_vmem [thread:$0]  %s7, 16, %s355, [#allocation10]
        $region40: #{tpu_custom_call.1} parent=11 // pred_fallthru
          _
        // Predicated region
        $region41: #{tpu_custom_call.1} parent=11 // pred_check
          %p358 = pneg %p220
        $region42: #{tpu_custom_call.1} parent=11 // pred_check_branch
          %360 = sbr.rel (%p358) target = $region44
        $region43: #{tpu_custom_call.1} parent=11 // pred_region
          %s362 = ssub.s32 16, 16
          %363 = vsyncadd [#allocation13], %s362
          %s365 = sshll.u32 [#allocation12], 4
          %s366 = int_to_ptr.vmem [resolvable:$true] %s365
          %368 = dma.hbm_to_vmem [thread:$0]  %s8, 16, %s366, [#allocation13]
        $region44: #{tpu_custom_call.1} parent=11 // pred_fallthru
          _
        // Predicated region
        $region45: #{tpu_custom_call.1} parent=11 // pred_check
          %p369 = pneg %p241
        $region46: #{tpu_custom_call.1} parent=11 // pred_check_branch
          %371 = sbr.rel (%p369) target = $region48
        $region47: #{tpu_custom_call.1} parent=11 // pred_region
          _
        $region48: #{tpu_custom_call.1} parent=11 // pred_fallthru
          _
        // Predicated region
        $region49: #{tpu_custom_call.1} parent=11 // pred_check
          %p372 = pneg %p262
        $region50: #{tpu_custom_call.1} parent=11 // pred_check_branch
          %374 = sbr.rel (%p372) target = $region52
        $region51: #{tpu_custom_call.1} parent=11 // pred_region
          _
        $region52: #{tpu_custom_call.1} parent=11 // pred_fallthru
          _
      $region12: #{tpu_custom_call.1} parent=5 // pred_fallthru
        _
      %p375 = scmp.lt.s32.totalorder %s26, 2
      // Predicated region
      $region53: #{tpu_custom_call.1} parent=5 // pred_check
        %p376 = pneg %p375
      $region54: #{tpu_custom_call.1} parent=5 // pred_check_branch
        %378 = sbr.rel (%p376) target = $region56
      $region55: #{tpu_custom_call.1} parent=5 // pred_region
        // Predicated region
        $region57: #{tpu_custom_call.1} parent=55 // pred_check
          %p379 = pneg %p46
        $region58: #{tpu_custom_call.1} parent=55 // pred_check_branch
          %381 = sbr.rel (%p379) target = $region60
        $region59: #{tpu_custom_call.1} parent=55 // pred_region
          %s382 = sand.u32 %s36, 1
          %s383 = scalar_lea.sflag [#allocation4], %s382
          %s384 = sand.u32 %s36, 1
          %s385 = smul.addr %s384, 256
          %s386 = scalar_lea.vmem [#allocation3], %s385
          %s388 = ssub.s32 4096, 4096
          %389 = vsyncadd %s383, %s388
          %s390 = smul.addr %s26, 32
          %s391 = smul.addr %s390, 128
          %s392 = scalar_lea.hbm %s0, %s391
          %s393 = sshll.u32 %s386, 4
          %s394 = int_to_ptr.vmem [resolvable:$true] %s393
          %399 = dma.hbm_to_vmem [thread:$0]  %s392, 4096, %s394, %s383, 128, 128, 8
        $region60: #{tpu_custom_call.1} parent=55 // pred_fallthru
          _
      $region56: #{tpu_custom_call.1} parent=5 // pred_fallthru
        _
      %p400 = scmp.le.s32.totalorder 1, %s26
      %p401 = scmp.lt.s32.totalorder %s26, 3
      %p402 = pnand %p400, %p401
      %p403 = pneg %p402
      // Predicated region
      $region61: #{tpu_custom_call.1} parent=5 // pred_check
        _
      $region62: #{tpu_custom_call.1} parent=5 // pred_check_branch
        %405 = sbr.rel (%p402) target = $region64
      $region63: #{tpu_custom_call.1} parent=5 // pred_region
        %s406 = ssub.s32 %s26, 1
        %s407 = sand.u32 %s39, 1
        %s408 = scalar_lea.sflag [#allocation4], %s407
        %s409 = sand.u32 %s39, 1
        %s410 = smul.addr %s409, 256
        %s411 = scalar_lea.vmem [#allocation3], %s410
        // Predicated region
        $region65: #{tpu_custom_call.1} parent=63 // pred_check
          %p412 = pneg %p52
        $region66: #{tpu_custom_call.1} parent=63 // pred_check_branch
          %414 = sbr.rel (%p412) target = $region68
        $region67: #{tpu_custom_call.1} parent=63 // pred_region
          %415 = dma.done %s408, 4096
        $region68: #{tpu_custom_call.1} parent=63 // pred_fallthru
          _
        // Predicated region
        $region69: #{tpu_custom_call.1} parent=63 // pred_check
          %p416 = pneg %p73
        $region70: #{tpu_custom_call.1} parent=63 // pred_check_branch
          %418 = sbr.rel (%p416) target = $region72
        $region71: #{tpu_custom_call.1} parent=63 // pred_region
          %419 = dma.done [#allocation7], 896
        $region72: #{tpu_custom_call.1} parent=63 // pred_fallthru
          _
        // Predicated region
        $region73: #{tpu_custom_call.1} parent=63 // pred_check
          %p420 = pneg %p94
        $region74: #{tpu_custom_call.1} parent=63 // pred_check_branch
          %422 = sbr.rel (%p420) target = $region76
        $region75: #{tpu_custom_call.1} parent=63 // pred_region
          %423 = dma.done [#allocation7], 16
        $region76: #{tpu_custom_call.1} parent=63 // pred_fallthru
          _
        // Predicated region
        $region77: #{tpu_custom_call.1} parent=63 // pred_check
          %p424 = pneg %p178
        $region78: #{tpu_custom_call.1} parent=63 // pred_check_branch
          %426 = sbr.rel (%p424) target = $region80
        $region79: #{tpu_custom_call.1} parent=63 // pred_region
          %427 = dma.done [#allocation10], 16
        $region80: #{tpu_custom_call.1} parent=63 // pred_fallthru
          _
        // Predicated region
        $region81: #{tpu_custom_call.1} parent=63 // pred_check
          %p428 = pneg %p199
        $region82: #{tpu_custom_call.1} parent=63 // pred_check_branch
          %430 = sbr.rel (%p428) target = $region84
        $region83: #{tpu_custom_call.1} parent=63 // pred_region
          %431 = dma.done [#allocation10], 16
        $region84: #{tpu_custom_call.1} parent=63 // pred_fallthru
          _
        // Predicated region
        $region85: #{tpu_custom_call.1} parent=63 // pred_check
          %p432 = pneg %p220
        $region86: #{tpu_custom_call.1} parent=63 // pred_check_branch
          %434 = sbr.rel (%p432) target = $region88
        $region87: #{tpu_custom_call.1} parent=63 // pred_region
          %435 = dma.done [#allocation13], 16
        $region88: #{tpu_custom_call.1} parent=63 // pred_fallthru
          _
        %s436 = sand.u32 %s39, 1
        %s437 = scalar_lea.sflag [#allocation4], %s436
        %s438 = sand.u32 %s39, 1
        %s439 = smul.addr %s438, 256
        %s440 = scalar_lea.vmem [#allocation3], %s439
        %p441 = pneg %p52
        %p442 = pneg %p49
        %p443 = pneg %p73
        %p444 = pneg %p70
        %p445 = pneg %p94
        %p446 = pneg %p91
        %p447 = pneg %p115
        %p448 = pneg %p112
        %p449 = pneg %p136
        %p450 = pneg %p133
        %p451 = pneg %p157
        %p452 = pneg %p154
        %p453 = pneg %p178
        %p454 = pneg %p175
        %p455 = pneg %p199
        %p456 = pneg %p196
        %p457 = pneg %p220
        %p458 = pneg %p217
        %p459 = pneg %p241
        %p460 = pneg %p238
        %p461 = pneg %p262
        %p462 = pneg %p259
        %p463 = pneg %p288
        %p464 = pneg %p285
        %s465 = sand.u32 %s275, 1
        %s466 = scalar_lea.sflag [#allocation5], %s465
        %s467 = sand.u32 %s275, 1
        %s468 = smul.addr %s467, 256
        %s469 = scalar_lea.vmem [#allocation14], %s468
        %vm470 = vcmask 130048
        %471 = vst.msk [vmem:[#allocation2] sm:$0xff] %vm470, 0.0
        %472 = vst.msk [vmem:[#allocation2 + $0x8] sm:$0xff] %vm470, 0.0
        %vm473 = vcmask 128000
        %474 = vst.msk [vmem:[#allocation2 + $0x10] sm:$0x3f] %vm473, 0.0
        %475 = vst.msk [vmem:[#allocation2 + $0x18] sm:$0xff] %vm470, 0.0
        %476 = vst.msk [vmem:[#allocation2 + $0x20] sm:$0xff] %vm470, 0.0
        %477 = vst.msk [vmem:[#allocation2 + $0x28] sm:$0x3f] %vm473, 0.0
        %478 = vst.msk [vmem:[#allocation2 + $0x30] sm:$0xff] %vm470, 0.0
        %479 = vst.msk [vmem:[#allocation2 + $0x38] sm:$0xff] %vm470, 0.0
        %480 = vst.msk [vmem:[#allocation2 + $0x40] sm:$0x3f] %vm473, 0.0
        %481 = vst.msk [vmem:[#allocation2 + $0x48] sm:$0xff] %vm470, 0.0
        %482 = vst.msk [vmem:[#allocation2 + $0x50] sm:$0xff] %vm470, 0.0
        %483 = vst.msk [vmem:[#allocation2 + $0x58] sm:$0x3f] %vm473, 0.0
        %484 = vst.msk [vmem:[#allocation2 + $0x60] sm:$0xff] %vm470, 0.0
        %485 = vst.msk [vmem:[#allocation2 + $0x68] sm:$0xff] %vm470, 0.0
        %486 = vst.msk [vmem:[#allocation2 + $0x70] sm:$0x3f] %vm473, 0.0
        %487 = vst.msk [vmem:[#allocation2 + $0x78] sm:$0xff] %vm470, 0.0
        %488 = vst.msk [vmem:[#allocation2 + $0x80] sm:$0xff] %vm470, 0.0
        %489 = vst.msk [vmem:[#allocation2 + $0x88] sm:$0x3f] %vm473, 0.0
        %490 = vst.msk [vmem:[#allocation2 + $0x90] sm:$0xff] %vm470, 0.0
        %491 = vst.msk [vmem:[#allocation2 + $0x98] sm:$0xff] %vm470, 0.0
        %492 = vst.msk [vmem:[#allocation2 + $0xa0] sm:$0x3f] %vm473, 0.0
        %493 = vst.msk [vmem:[#allocation2 + $0xa8] sm:$0xff] %vm470, 0.0
        %494 = vst.msk [vmem:[#allocation2 + $0xb0] sm:$0xff] %vm470, 0.0
        %495 = vst.msk [vmem:[#allocation2 + $0xb8] sm:$0x3f] %vm473, 0.0
        %496 = vst.msk [vmem:[#allocation2 + $0xc0] sm:$0xff] %vm470, 0.0
        %497 = vst.msk [vmem:[#allocation2 + $0xc8] sm:$0xff] %vm470, 0.0
        %498 = vst.msk [vmem:[#allocation2 + $0xd0] sm:$0x3f] %vm473, 0.0
        %499 = vst.msk [vmem:[#allocation2 + $0xd8] sm:$0xff] %vm470, 0.0
        %500 = vst.msk [vmem:[#allocation2 + $0xe0] sm:$0xff] %vm470, 0.0
        %501 = vst.msk [vmem:[#allocation2 + $0xe8] sm:$0x3f] %vm473, 0.0
        %502 = vst.msk [vmem:[#allocation2 + $0xf0] sm:$0xff] %vm470, 0.0
        %503 = vst.msk [vmem:[#allocation2 + $0xf8] sm:$0xff] %vm470, 0.0
        %504 = vst.msk [vmem:[#allocation2 + $0x100] sm:$0x3f] %vm473, 0.0
        %505 = vst.msk [vmem:[#allocation2 + $0x108] sm:$0xff] %vm470, 0.0
        %506 = vst.msk [vmem:[#allocation2 + $0x110] sm:$0xff] %vm470, 0.0
        %507 = vst.msk [vmem:[#allocation2 + $0x118] sm:$0x3f] %vm473, 0.0
        %508 = vst.msk [vmem:[#allocation2 + $0x120] sm:$0xff] %vm470, 0.0
        %509 = vst.msk [vmem:[#allocation2 + $0x128] sm:$0xff] %vm470, 0.0
        %510 = vst.msk [vmem:[#allocation2 + $0x130] sm:$0x3f] %vm473, 0.0
        %511 = vst.msk [vmem:[#allocation2 + $0x138] sm:$0xff] %vm470, 0.0
        %512 = vst.msk [vmem:[#allocation2 + $0x140] sm:$0xff] %vm470, 0.0
        %513 = vst.msk [vmem:[#allocation2 + $0x148] sm:$0x3f] %vm473, 0.0
        %514 = vst.msk [vmem:[#allocation2 + $0x150] sm:$0xff] %vm470, 0.0
        %515 = vst.msk [vmem:[#allocation2 + $0x158] sm:$0xff] %vm470, 0.0
        %516 = vst.msk [vmem:[#allocation2 + $0x160] sm:$0x3f] %vm473, 0.0
        %517 = vst.msk [vmem:[#allocation2 + $0x168] sm:$0xff] %vm470, 0.0
        %518 = vst.msk [vmem:[#allocation2 + $0x170] sm:$0xff] %vm470, 0.0
        %519 = vst.msk [vmem:[#allocation2 + $0x178] sm:$0x3f] %vm473, 0.0
        %520 = vst.msk [vmem:[#allocation2 + $0x180] sm:$0xff] %vm470, 0.0
        %521 = vst.msk [vmem:[#allocation2 + $0x188] sm:$0xff] %vm470, 0.0
        %522 = vst.msk [vmem:[#allocation2 + $0x190] sm:$0x3f] %vm473, 0.0
        %523 = vst.msk [vmem:[#allocation2 + $0x198] sm:$0xff] %vm470, 0.0
        %524 = vst.msk [vmem:[#allocation2 + $0x1a0] sm:$0xff] %vm470, 0.0
        %525 = vst.msk [vmem:[#allocation2 + $0x1a8] sm:$0x3f] %vm473, 0.0
        %526 = vst.msk [vmem:[#allocation2 + $0x1b0] sm:$0xff] %vm470, 0.0
        %527 = vst.msk [vmem:[#allocation2 + $0x1b8] sm:$0xff] %vm470, 0.0
        %528 = vst.msk [vmem:[#allocation2 + $0x1c0] sm:$0x3f] %vm473, 0.0
        %529 = vst.msk [vmem:[#allocation2 + $0x1c8] sm:$0xff] %vm470, 0.0
        %530 = vst.msk [vmem:[#allocation2 + $0x1d0] sm:$0xff] %vm470, 0.0
        %531 = vst.msk [vmem:[#allocation2 + $0x1d8] sm:$0x3f] %vm473, 0.0
        %532 = vst.msk [vmem:[#allocation2 + $0x1e0] sm:$0xff] %vm470, 0.0
        %533 = vst.msk [vmem:[#allocation2 + $0x1e8] sm:$0xff] %vm470, 0.0
        %534 = vst.msk [vmem:[#allocation2 + $0x1f0] sm:$0x3f] %vm473, 0.0
        %535 = vst.msk [vmem:[#allocation2 + $0x1f8] sm:$0xff] %vm470, 0.0
        %536 = vst.msk [vmem:[#allocation2 + $0x200] sm:$0xff] %vm470, 0.0
        %537 = vst.msk [vmem:[#allocation2 + $0x208] sm:$0x3f] %vm473, 0.0
        %v538 = vld [vmem:[%s411] sm:$0xff]
        %v539 = vld [vmem:[%s411 + $0x8] sm:$0xff]
        %v540 = vld [vmem:[%s411 + $0x10] sm:$0xff]
        %v541 = vld [vmem:[%s411 + $0x18] sm:$0xff]
        %v542 = vld [vmem:[%s411 + $0x20] sm:$0xff]
        %v543 = vld [vmem:[%s411 + $0x28] sm:$0xff]
        %v544 = vld [vmem:[%s411 + $0x30] sm:$0xff]
        %v545 = vld [vmem:[%s411 + $0x38] sm:$0xff]
        %v546 = vld [vmem:[%s411 + $0x40] sm:$0xff]
        %v547 = vld [vmem:[%s411 + $0x48] sm:$0xff]
        %v548 = vld [vmem:[%s411 + $0x50] sm:$0xff]
        %v549 = vld [vmem:[%s411 + $0x58] sm:$0xff]
        %v550 = vld [vmem:[%s411 + $0x60] sm:$0xff]
        %v551 = vld [vmem:[%s411 + $0x68] sm:$0xff]
        %v552 = vld [vmem:[%s411 + $0x70] sm:$0xff]
        %v553 = vld [vmem:[%s411 + $0x78] sm:$0xff]
        %v554 = vld [vmem:[%s411 + $0x80] sm:$0xff]
        %v555 = vld [vmem:[%s411 + $0x88] sm:$0xff]
        %v556 = vld [vmem:[%s411 + $0x90] sm:$0xff]
        %v557 = vld [vmem:[%s411 + $0x98] sm:$0xff]
        %v558 = vld [vmem:[%s411 + $0xa0] sm:$0xff]
        %v559 = vld [vmem:[%s411 + $0xa8] sm:$0xff]
        %v560 = vld [vmem:[%s411 + $0xb0] sm:$0xff]
        %v561 = vld [vmem:[%s411 + $0xb8] sm:$0xff]
        %v562 = vld [vmem:[%s411 + $0xc0] sm:$0xff]
        %v563 = vld [vmem:[%s411 + $0xc8] sm:$0xff]
        %v564 = vld [vmem:[%s411 + $0xd0] sm:$0xff]
        %v565 = vld [vmem:[%s411 + $0xd8] sm:$0xff]
        %v566 = vld [vmem:[%s411 + $0xe0] sm:$0xff]
        %v567 = vld [vmem:[%s411 + $0xe8] sm:$0xff]
        %v568 = vld [vmem:[%s411 + $0xf0] sm:$0xff]
        %v569 = vld [vmem:[%s411 + $0xf8] sm:$0xff]
        %s570 = scalar_lea.vmem [#allocation2], 72
        %571 = vst.msk [vmem:[%s570 + $0x3] sm:$0xff] %vm470, %v538
        %572 = vst.msk [vmem:[%s570 + $0xb] sm:$0xff] %vm470, %v539
        %573 = vst.msk [vmem:[%s570 + $0x1b] sm:$0xff] %vm470, %v540
        %574 = vst.msk [vmem:[%s570 + $0x23] sm:$0xff] %vm470, %v541
        %575 = vst.msk [vmem:[%s570 + $0x33] sm:$0xff] %vm470, %v542
        %576 = vst.msk [vmem:[%s570 + $0x3b] sm:$0xff] %vm470, %v543
        %577 = vst.msk [vmem:[%s570 + $0x4b] sm:$0xff] %vm470, %v544
        %578 = vst.msk [vmem:[%s570 + $0x53] sm:$0xff] %vm470, %v545
        %579 = vst.msk [vmem:[%s570 + $0x63] sm:$0xff] %vm470, %v546
        %580 = vst.msk [vmem:[%s570 + $0x6b] sm:$0xff] %vm470, %v547
        %581 = vst.msk [vmem:[%s570 + $0x7b] sm:$0xff] %vm470, %v548
        %582 = vst.msk [vmem:[%s570 + $0x83] sm:$0xff] %vm470, %v549
        %583 = vst.msk [vmem:[%s570 + $0x93] sm:$0xff] %vm470, %v550
        %584 = vst.msk [vmem:[%s570 + $0x9b] sm:$0xff] %vm470, %v551
        %585 = vst.msk [vmem:[%s570 + $0xab] sm:$0xff] %vm470, %v552
        %586 = vst.msk [vmem:[%s570 + $0xb3] sm:$0xff] %vm470, %v553
        %587 = vst.msk [vmem:[%s570 + $0xc3] sm:$0xff] %vm470, %v554
        %588 = vst.msk [vmem:[%s570 + $0xcb] sm:$0xff] %vm470, %v555
        %589 = vst.msk [vmem:[%s570 + $0xdb] sm:$0xff] %vm470, %v556
        %590 = vst.msk [vmem:[%s570 + $0xe3] sm:$0xff] %vm470, %v557
        %591 = vst.msk [vmem:[%s570 + $0xf3] sm:$0xff] %vm470, %v558
        %592 = vst.msk [vmem:[%s570 + $0xfb] sm:$0xff] %vm470, %v559
        %593 = vst.msk [vmem:[%s570 + $0x10b] sm:$0xff] %vm470, %v560
        %594 = vst.msk [vmem:[%s570 + $0x113] sm:$0xff] %vm470, %v561
        %595 = vst.msk [vmem:[%s570 + $0x123] sm:$0xff] %vm470, %v562
        %596 = vst.msk [vmem:[%s570 + $0x12b] sm:$0xff] %vm470, %v563
        %597 = vst.msk [vmem:[%s570 + $0x13b] sm:$0xff] %vm470, %v564
        %598 = vst.msk [vmem:[%s570 + $0x143] sm:$0xff] %vm470, %v565
        %599 = vst.msk [vmem:[%s570 + $0x153] sm:$0xff] %vm470, %v566
        %600 = vst.msk [vmem:[%s570 + $0x15b] sm:$0xff] %vm470, %v567
        %601 = vst.msk [vmem:[%s570 + $0x16b] sm:$0xff] %vm470, %v568
        %602 = vst.msk [vmem:[%s570 + $0x173] sm:$0xff] %vm470, %v569
        %v603 = vld [vmem:[#allocation6] sm:$0x1]
        %v604 = vld [vmem:[#allocation2] sm:$0xff]
        %v605 = vld [vmem:[#allocation2 + $0x8] sm:$0xff]
        %v606 = vld [vmem:[#allocation2 + $0x18] sm:$0xff]
        %v607 = vld [vmem:[#allocation2 + $0x20] sm:$0xff]
        %v608 = vld [vmem:[#allocation2 + $0x30] sm:$0xff]
        %v609 = vld [vmem:[#allocation2 + $0x38] sm:$0xff]
        %v610 = vld [vmem:[#allocation2 + $0x48] sm:$0xff]
        %v611 = vld [vmem:[#allocation2 + $0x50] sm:$0xff]
        %v612 = vld [vmem:[#allocation2 + $0x60] sm:$0xff]
        %v613 = vld [vmem:[#allocation2 + $0x68] sm:$0xff]
        %v614 = vld [vmem:[#allocation2 + $0x78] sm:$0xff]
        %v615 = vld [vmem:[#allocation2 + $0x80] sm:$0xff]
        %v616 = vld [vmem:[#allocation2 + $0x90] sm:$0xff]
        %v617 = vld [vmem:[#allocation2 + $0x98] sm:$0xff]
        %v618 = vld [vmem:[#allocation2 + $0xa8] sm:$0xff]
        %v619 = vld [vmem:[#allocation2 + $0xb0] sm:$0xff]
        %v620 = vld [vmem:[#allocation2 + $0xc0] sm:$0xff]
        %v621 = vld [vmem:[#allocation2 + $0xc8] sm:$0xff]
        %v622 = vld [vmem:[#allocation2 + $0xd8] sm:$0xff]
        %v623 = vld [vmem:[#allocation2 + $0xe0] sm:$0xff]
        %v624 = vld [vmem:[#allocation2 + $0xf0] sm:$0xff]
        %v625 = vld [vmem:[#allocation2 + $0xf8] sm:$0xff]
        %v626 = vld [vmem:[#allocation2 + $0x108] sm:$0xff]
        %v627 = vld [vmem:[#allocation2 + $0x110] sm:$0xff]
        %v628 = vld [vmem:[#allocation2 + $0x120] sm:$0xff]
        %v629 = vld [vmem:[#allocation2 + $0x128] sm:$0xff]
        %v630 = vld [vmem:[#allocation2 + $0x138] sm:$0xff]
        %v631 = vld [vmem:[#allocation2 + $0x140] sm:$0xff]
        %v632 = vld [vmem:[#allocation2 + $0x150] sm:$0xff]
        %v633 = vld [vmem:[#allocation2 + $0x158] sm:$0xff]
        %v634 = vld [vmem:[#allocation2 + $0x168] sm:$0xff]
        %v635 = vld [vmem:[#allocation2 + $0x170] sm:$0xff]
        %v636 = vlaneseq
        %v637 = vshrl.u32 %v636, 7
        %v638 = vsub.s32 0, %v637
        %v639 = vrot.slane %v603, %v638
        %v640 = vmul.f32 %v604, %v639
        %v641 = vmul.f32 %v605, %v639
        %v642 = vmul.f32 %v606, %v639
        %v643 = vmul.f32 %v607, %v639
        %v644 = vmul.f32 %v608, %v639
        %v645 = vmul.f32 %v609, %v639
        %v646 = vmul.f32 %v610, %v639
        %v647 = vmul.f32 %v611, %v639
        %v648 = vmul.f32 %v612, %v639
        %v649 = vmul.f32 %v613, %v639
        %v650 = vmul.f32 %v614, %v639
        %v651 = vmul.f32 %v615, %v639
        %v652 = vmul.f32 %v616, %v639
        %v653 = vmul.f32 %v617, %v639
        %v654 = vmul.f32 %v618, %v639
        %v655 = vmul.f32 %v619, %v639
        %v656 = vmul.f32 %v620, %v639
        %v657 = vmul.f32 %v621, %v639
        %v658 = vmul.f32 %v622, %v639
        %v659 = vmul.f32 %v623, %v639
        %v660 = vmul.f32 %v624, %v639
        %v661 = vmul.f32 %v625, %v639
        %v662 = vmul.f32 %v626, %v639
        %v663 = vmul.f32 %v627, %v639
        %v664 = vmul.f32 %v628, %v639
        %v665 = vmul.f32 %v629, %v639
        %v666 = vmul.f32 %v630, %v639
        %v667 = vmul.f32 %v631, %v639
        %v668 = vmul.f32 %v632, %v639
        %v669 = vmul.f32 %v633, %v639
        %v670 = vmul.f32 %v634, %v639
        %v671 = vmul.f32 %v635, %v639
        %v672 = vadd.f32 %v640, 0.0
        %v673 = vadd.f32 %v641, 0.0
        %v674 = vadd.f32 %v642, 0.0
        %v675 = vadd.f32 %v643, 0.0
        %v676 = vadd.f32 %v644, 0.0
        %v677 = vadd.f32 %v645, 0.0
        %v678 = vadd.f32 %v646, 0.0
        %v679 = vadd.f32 %v647, 0.0
        %v680 = vadd.f32 %v648, 0.0
        %v681 = vadd.f32 %v649, 0.0
        %v682 = vadd.f32 %v650, 0.0
        %v683 = vadd.f32 %v651, 0.0
        %v684 = vadd.f32 %v652, 0.0
        %v685 = vadd.f32 %v653, 0.0
        %v686 = vadd.f32 %v654, 0.0
        %v687 = vadd.f32 %v655, 0.0
        %v688 = vadd.f32 %v656, 0.0
        %v689 = vadd.f32 %v657, 0.0
        %v690 = vadd.f32 %v658, 0.0
        %v691 = vadd.f32 %v659, 0.0
        %v692 = vadd.f32 %v660, 0.0
        %v693 = vadd.f32 %v661, 0.0
        %v694 = vadd.f32 %v662, 0.0
        %v695 = vadd.f32 %v663, 0.0
        %v696 = vadd.f32 %v664, 0.0
        %v697 = vadd.f32 %v665, 0.0
        %v698 = vadd.f32 %v666, 0.0
        %v699 = vadd.f32 %v667, 0.0
        %v700 = vadd.f32 %v668, 0.0
        %v701 = vadd.f32 %v669, 0.0
        %v702 = vadd.f32 %v670, 0.0
        %v703 = vadd.f32 %v671, 0.0
        %v704 = vld [vmem:[#allocation6 + $0x1] sm:$0x1]
        %v705 = vld [vmem:[#allocation2 + $0x1] sm:$0xff]
        %v706 = vld [vmem:[#allocation2 + $0x9] sm:$0xff]
        %v707 = vld [vmem:[#allocation2 + $0x19] sm:$0xff]
        %v708 = vld [vmem:[#allocation2 + $0x21] sm:$0xff]
        %v709 = vld [vmem:[#allocation2 + $0x31] sm:$0xff]
        %v710 = vld [vmem:[#allocation2 + $0x39] sm:$0xff]
        %v711 = vld [vmem:[#allocation2 + $0x49] sm:$0xff]
        %v712 = vld [vmem:[#allocation2 + $0x51] sm:$0xff]
        %v713 = vld [vmem:[#allocation2 + $0x61] sm:$0xff]
        %v714 = vld [vmem:[#allocation2 + $0x69] sm:$0xff]
        %v715 = vld [vmem:[#allocation2 + $0x79] sm:$0xff]
        %v716 = vld [vmem:[#allocation2 + $0x81] sm:$0xff]
        %v717 = vld [vmem:[#allocation2 + $0x91] sm:$0xff]
        %v718 = vld [vmem:[#allocation2 + $0x99] sm:$0xff]
        %v719 = vld [vmem:[#allocation2 + $0xa9] sm:$0xff]
        %v720 = vld [vmem:[#allocation2 + $0xb1] sm:$0xff]
        %v721 = vld [vmem:[#allocation2 + $0xc1] sm:$0xff]
        %v722 = vld [vmem:[#allocation2 + $0xc9] sm:$0xff]
        %v723 = vld [vmem:[#allocation2 + $0xd9] sm:$0xff]
        %v724 = vld [vmem:[#allocation2 + $0xe1] sm:$0xff]
        %v725 = vld [vmem:[#allocation2 + $0xf1] sm:$0xff]
        %v726 = vld [vmem:[#allocation2 + $0xf9] sm:$0xff]
        %v727 = vld [vmem:[#allocation2 + $0x109] sm:$0xff]
        %v728 = vld [vmem:[#allocation2 + $0x111] sm:$0xff]
        %v729 = vld [vmem:[#allocation2 + $0x121] sm:$0xff]
        %v730 = vld [vmem:[#allocation2 + $0x129] sm:$0xff]
        %v731 = vld [vmem:[#allocation2 + $0x139] sm:$0xff]
        %v732 = vld [vmem:[#allocation2 + $0x141] sm:$0xff]
        %v733 = vld [vmem:[#allocation2 + $0x151] sm:$0xff]
        %v734 = vld [vmem:[#allocation2 + $0x159] sm:$0xff]
        %v735 = vld [vmem:[#allocation2 + $0x169] sm:$0xff]
        %v736 = vld [vmem:[#allocation2 + $0x171] sm:$0xff]
        %v737 = vlaneseq
        %v738 = vshrl.u32 %v737, 7
        %v739 = vsub.s32 0, %v738
        %v740 = vrot.slane %v704, %v739
        %v741 = vmul.f32 %v705, %v740
        %v742 = vmul.f32 %v706, %v740
        %v743 = vmul.f32 %v707, %v740
        %v744 = vmul.f32 %v708, %v740
        %v745 = vmul.f32 %v709, %v740
        %v746 = vmul.f32 %v710, %v740
        %v747 = vmul.f32 %v711, %v740
        %v748 = vmul.f32 %v712, %v740
        %v749 = vmul.f32 %v713, %v740
        %v750 = vmul.f32 %v714, %v740
        %v751 = vmul.f32 %v715, %v740
        %v752 = vmul.f32 %v716, %v740
        %v753 = vmul.f32 %v717, %v740
        %v754 = vmul.f32 %v718, %v740
        %v755 = vmul.f32 %v719, %v740
        %v756 = vmul.f32 %v720, %v740
        %v757 = vmul.f32 %v721, %v740
        %v758 = vmul.f32 %v722, %v740
        %v759 = vmul.f32 %v723, %v740
        %v760 = vmul.f32 %v724, %v740
        %v761 = vmul.f32 %v725, %v740
        %v762 = vmul.f32 %v726, %v740
        %v763 = vmul.f32 %v727, %v740
        %v764 = vmul.f32 %v728, %v740
        %v765 = vmul.f32 %v729, %v740
        %v766 = vmul.f32 %v730, %v740
        %v767 = vmul.f32 %v731, %v740
        %v768 = vmul.f32 %v732, %v740
        %v769 = vmul.f32 %v733, %v740
        %v770 = vmul.f32 %v734, %v740
        %v771 = vmul.f32 %v735, %v740
        %v772 = vmul.f32 %v736, %v740
        %v773 = vadd.f32 %v672, %v741
        %v774 = vadd.f32 %v673, %v742
        %v775 = vadd.f32 %v674, %v743
        %v776 = vadd.f32 %v675, %v744
        %v777 = vadd.f32 %v676, %v745
        %v778 = vadd.f32 %v677, %v746
        %v779 = vadd.f32 %v678, %v747
        %v780 = vadd.f32 %v679, %v748
        %v781 = vadd.f32 %v680, %v749
        %v782 = vadd.f32 %v681, %v750
        %v783 = vadd.f32 %v682, %v751
        %v784 = vadd.f32 %v683, %v752
        %v785 = vadd.f32 %v684, %v753
        %v786 = vadd.f32 %v685, %v754
        %v787 = vadd.f32 %v686, %v755
        %v788 = vadd.f32 %v687, %v756
        %v789 = vadd.f32 %v688, %v757
        %v790 = vadd.f32 %v689, %v758
        %v791 = vadd.f32 %v690, %v759
        %v792 = vadd.f32 %v691, %v760
        %v793 = vadd.f32 %v692, %v761
        %v794 = vadd.f32 %v693, %v762
        %v795 = vadd.f32 %v694, %v763
        %v796 = vadd.f32 %v695, %v764
        %v797 = vadd.f32 %v696, %v765
        %v798 = vadd.f32 %v697, %v766
        %v799 = vadd.f32 %v698, %v767
        %v800 = vadd.f32 %v699, %v768
        %v801 = vadd.f32 %v700, %v769
        %v802 = vadd.f32 %v701, %v770
        %v803 = vadd.f32 %v702, %v771
        %v804 = vadd.f32 %v703, %v772
        %v805 = vld [vmem:[#allocation6 + $0x2] sm:$0x1]
        %v806 = vld [vmem:[#allocation2 + $0x2] sm:$0xff]
        %v807 = vld [vmem:[#allocation2 + $0xa] sm:$0xff]
        %v808 = vld [vmem:[#allocation2 + $0x1a] sm:$0xff]
        %v809 = vld [vmem:[#allocation2 + $0x22] sm:$0xff]
        %v810 = vld [vmem:[#allocation2 + $0x32] sm:$0xff]
        %v811 = vld [vmem:[#allocation2 + $0x3a] sm:$0xff]
        %v812 = vld [vmem:[#allocation2 + $0x4a] sm:$0xff]
        %v813 = vld [vmem:[#allocation2 + $0x52] sm:$0xff]
        %v814 = vld [vmem:[#allocation2 + $0x62] sm:$0xff]
        %v815 = vld [vmem:[#allocation2 + $0x6a] sm:$0xff]
        %v816 = vld [vmem:[#allocation2 + $0x7a] sm:$0xff]
        %v817 = vld [vmem:[#allocation2 + $0x82] sm:$0xff]
        %v818 = vld [vmem:[#allocation2 + $0x92] sm:$0xff]
        %v819 = vld [vmem:[#allocation2 + $0x9a] sm:$0xff]
        %v820 = vld [vmem:[#allocation2 + $0xaa] sm:$0xff]
        %v821 = vld [vmem:[#allocation2 + $0xb2] sm:$0xff]
        %v822 = vld [vmem:[#allocation2 + $0xc2] sm:$0xff]
        %v823 = vld [vmem:[#allocation2 + $0xca] sm:$0xff]
        %v824 = vld [vmem:[#allocation2 + $0xda] sm:$0xff]
        %v825 = vld [vmem:[#allocation2 + $0xe2] sm:$0xff]
        %v826 = vld [vmem:[#allocation2 + $0xf2] sm:$0xff]
        %v827 = vld [vmem:[#allocation2 + $0xfa] sm:$0xff]
        %v828 = vld [vmem:[#allocation2 + $0x10a] sm:$0xff]
        %v829 = vld [vmem:[#allocation2 + $0x112] sm:$0xff]
        %v830 = vld [vmem:[#allocation2 + $0x122] sm:$0xff]
        %v831 = vld [vmem:[#allocation2 + $0x12a] sm:$0xff]
        %v832 = vld [vmem:[#allocation2 + $0x13a] sm:$0xff]
        %v833 = vld [vmem:[#allocation2 + $0x142] sm:$0xff]
        %v834 = vld [vmem:[#allocation2 + $0x152] sm:$0xff]
        %v835 = vld [vmem:[#allocation2 + $0x15a] sm:$0xff]
        %v836 = vld [vmem:[#allocation2 + $0x16a] sm:$0xff]
        %v837 = vld [vmem:[#allocation2 + $0x172] sm:$0xff]
        %v838 = vlaneseq
        %v839 = vshrl.u32 %v838, 7
        %v840 = vsub.s32 0, %v839
        %v841 = vrot.slane %v805, %v840
        %v842 = vmul.f32 %v806, %v841
        %v843 = vmul.f32 %v807, %v841
        %v844 = vmul.f32 %v808, %v841
        %v845 = vmul.f32 %v809, %v841
        %v846 = vmul.f32 %v810, %v841
        %v847 = vmul.f32 %v811, %v841
        %v848 = vmul.f32 %v812, %v841
        %v849 = vmul.f32 %v813, %v841
        %v850 = vmul.f32 %v814, %v841
        %v851 = vmul.f32 %v815, %v841
        %v852 = vmul.f32 %v816, %v841
        %v853 = vmul.f32 %v817, %v841
        %v854 = vmul.f32 %v818, %v841
        %v855 = vmul.f32 %v819, %v841
        %v856 = vmul.f32 %v820, %v841
        %v857 = vmul.f32 %v821, %v841
        %v858 = vmul.f32 %v822, %v841
        %v859 = vmul.f32 %v823, %v841
        %v860 = vmul.f32 %v824, %v841
        %v861 = vmul.f32 %v825, %v841
        %v862 = vmul.f32 %v826, %v841
        %v863 = vmul.f32 %v827, %v841
        %v864 = vmul.f32 %v828, %v841
        %v865 = vmul.f32 %v829, %v841
        %v866 = vmul.f32 %v830, %v841
        %v867 = vmul.f32 %v831, %v841
        %v868 = vmul.f32 %v832, %v841
        %v869 = vmul.f32 %v833, %v841
        %v870 = vmul.f32 %v834, %v841
        %v871 = vmul.f32 %v835, %v841
        %v872 = vmul.f32 %v836, %v841
        %v873 = vmul.f32 %v837, %v841
        %v874 = vadd.f32 %v773, %v842
        %v875 = vadd.f32 %v774, %v843
        %v876 = vadd.f32 %v775, %v844
        %v877 = vadd.f32 %v776, %v845
        %v878 = vadd.f32 %v777, %v846
        %v879 = vadd.f32 %v778, %v847
        %v880 = vadd.f32 %v779, %v848
        %v881 = vadd.f32 %v780, %v849
        %v882 = vadd.f32 %v781, %v850
        %v883 = vadd.f32 %v782, %v851
        %v884 = vadd.f32 %v783, %v852
        %v885 = vadd.f32 %v784, %v853
        %v886 = vadd.f32 %v785, %v854
        %v887 = vadd.f32 %v786, %v855
        %v888 = vadd.f32 %v787, %v856
        %v889 = vadd.f32 %v788, %v857
        %v890 = vadd.f32 %v789, %v858
        %v891 = vadd.f32 %v790, %v859
        %v892 = vadd.f32 %v791, %v860
        %v893 = vadd.f32 %v792, %v861
        %v894 = vadd.f32 %v793, %v862
        %v895 = vadd.f32 %v794, %v863
        %v896 = vadd.f32 %v795, %v864
        %v897 = vadd.f32 %v796, %v865
        %v898 = vadd.f32 %v797, %v866
        %v899 = vadd.f32 %v798, %v867
        %v900 = vadd.f32 %v799, %v868
        %v901 = vadd.f32 %v800, %v869
        %v902 = vadd.f32 %v801, %v870
        %v903 = vadd.f32 %v802, %v871
        %v904 = vadd.f32 %v803, %v872
        %v905 = vadd.f32 %v804, %v873
        %v906 = vld [vmem:[#allocation6 + $0x3] sm:$0x1]
        %v907 = vld [vmem:[#allocation2 + $0x3] sm:$0xff]
        %v908 = vld [vmem:[#allocation2 + $0xb] sm:$0xff]
        %v909 = vld [vmem:[#allocation2 + $0x1b] sm:$0xff]
        %v910 = vld [vmem:[#allocation2 + $0x23] sm:$0xff]
        %v911 = vld [vmem:[#allocation2 + $0x33] sm:$0xff]
        %v912 = vld [vmem:[#allocation2 + $0x3b] sm:$0xff]
        %v913 = vld [vmem:[#allocation2 + $0x4b] sm:$0xff]
        %v914 = vld [vmem:[#allocation2 + $0x53] sm:$0xff]
        %v915 = vld [vmem:[#allocation2 + $0x63] sm:$0xff]
        %v916 = vld [vmem:[#allocation2 + $0x6b] sm:$0xff]
        %v917 = vld [vmem:[#allocation2 + $0x7b] sm:$0xff]
        %v918 = vld [vmem:[#allocation2 + $0x83] sm:$0xff]
        %v919 = vld [vmem:[#allocation2 + $0x93] sm:$0xff]
        %v920 = vld [vmem:[#allocation2 + $0x9b] sm:$0xff]
        %v921 = vld [vmem:[#allocation2 + $0xab] sm:$0xff]
        %v922 = vld [vmem:[#allocation2 + $0xb3] sm:$0xff]
        %v923 = vld [vmem:[#allocation2 + $0xc3] sm:$0xff]
        %v924 = vld [vmem:[#allocation2 + $0xcb] sm:$0xff]
        %v925 = vld [vmem:[#allocation2 + $0xdb] sm:$0xff]
        %v926 = vld [vmem:[#allocation2 + $0xe3] sm:$0xff]
        %v927 = vld [vmem:[#allocation2 + $0xf3] sm:$0xff]
        %v928 = vld [vmem:[#allocation2 + $0xfb] sm:$0xff]
        %v929 = vld [vmem:[#allocation2 + $0x10b] sm:$0xff]
        %v930 = vld [vmem:[#allocation2 + $0x113] sm:$0xff]
        %v931 = vld [vmem:[#allocation2 + $0x123] sm:$0xff]
        %v932 = vld [vmem:[#allocation2 + $0x12b] sm:$0xff]
        %v933 = vld [vmem:[#allocation2 + $0x13b] sm:$0xff]
        %v934 = vld [vmem:[#allocation2 + $0x143] sm:$0xff]
        %v935 = vld [vmem:[#allocation2 + $0x153] sm:$0xff]
        %v936 = vld [vmem:[#allocation2 + $0x15b] sm:$0xff]
        %v937 = vld [vmem:[#allocation2 + $0x16b] sm:$0xff]
        %v938 = vld [vmem:[#allocation2 + $0x173] sm:$0xff]
        %v939 = vlaneseq
        %v940 = vshrl.u32 %v939, 7
        %v941 = vsub.s32 0, %v940
        %v942 = vrot.slane %v906, %v941
        %v943 = vmul.f32 %v907, %v942
        %v944 = vmul.f32 %v908, %v942
        %v945 = vmul.f32 %v909, %v942
        %v946 = vmul.f32 %v910, %v942
        %v947 = vmul.f32 %v911, %v942
        %v948 = vmul.f32 %v912, %v942
        %v949 = vmul.f32 %v913, %v942
        %v950 = vmul.f32 %v914, %v942
        %v951 = vmul.f32 %v915, %v942
        %v952 = vmul.f32 %v916, %v942
        %v953 = vmul.f32 %v917, %v942
        %v954 = vmul.f32 %v918, %v942
        %v955 = vmul.f32 %v919, %v942
        %v956 = vmul.f32 %v920, %v942
        %v957 = vmul.f32 %v921, %v942
        %v958 = vmul.f32 %v922, %v942
        %v959 = vmul.f32 %v923, %v942
        %v960 = vmul.f32 %v924, %v942
        %v961 = vmul.f32 %v925, %v942
        %v962 = vmul.f32 %v926, %v942
        %v963 = vmul.f32 %v927, %v942
        %v964 = vmul.f32 %v928, %v942
        %v965 = vmul.f32 %v929, %v942
        %v966 = vmul.f32 %v930, %v942
        %v967 = vmul.f32 %v931, %v942
        %v968 = vmul.f32 %v932, %v942
        %v969 = vmul.f32 %v933, %v942
        %v970 = vmul.f32 %v934, %v942
        %v971 = vmul.f32 %v935, %v942
        %v972 = vmul.f32 %v936, %v942
        %v973 = vmul.f32 %v937, %v942
        %v974 = vmul.f32 %v938, %v942
        %v975 = vadd.f32 %v874, %v943
        %v976 = vadd.f32 %v875, %v944
        %v977 = vadd.f32 %v876, %v945
        %v978 = vadd.f32 %v877, %v946
        %v979 = vadd.f32 %v878, %v947
        %v980 = vadd.f32 %v879, %v948
        %v981 = vadd.f32 %v880, %v949
        %v982 = vadd.f32 %v881, %v950
        %v983 = vadd.f32 %v882, %v951
        %v984 = vadd.f32 %v883, %v952
        %v985 = vadd.f32 %v884, %v953
        %v986 = vadd.f32 %v885, %v954
        %v987 = vadd.f32 %v886, %v955
        %v988 = vadd.f32 %v887, %v956
        %v989 = vadd.f32 %v888, %v957
        %v990 = vadd.f32 %v889, %v958
        %v991 = vadd.f32 %v890, %v959
        %v992 = vadd.f32 %v891, %v960
        %v993 = vadd.f32 %v892, %v961
        %v994 = vadd.f32 %v893, %v962
        %v995 = vadd.f32 %v894, %v963
        %v996 = vadd.f32 %v895, %v964
        %v997 = vadd.f32 %v896, %v965
        %v998 = vadd.f32 %v897, %v966
        %v999 = vadd.f32 %v898, %v967
        %v1000 = vadd.f32 %v899, %v968
        %v1001 = vadd.f32 %v900, %v969
        %v1002 = vadd.f32 %v901, %v970
        %v1003 = vadd.f32 %v902, %v971
        %v1004 = vadd.f32 %v903, %v972
        %v1005 = vadd.f32 %v904, %v973
        %v1006 = vadd.f32 %v905, %v974
        %v1007 = vld [vmem:[#allocation6 + $0x4] sm:$0x1]
        %v1008 = vld [vmem:[#allocation2 + $0x4] sm:$0xff]
        %v1009 = vld [vmem:[#allocation2 + $0xc] sm:$0xff]
        %v1010 = vld [vmem:[#allocation2 + $0x1c] sm:$0xff]
        %v1011 = vld [vmem:[#allocation2 + $0x24] sm:$0xff]
        %v1012 = vld [vmem:[#allocation2 + $0x34] sm:$0xff]
        %v1013 = vld [vmem:[#allocation2 + $0x3c] sm:$0xff]
        %v1014 = vld [vmem:[#allocation2 + $0x4c] sm:$0xff]
        %v1015 = vld [vmem:[#allocation2 + $0x54] sm:$0xff]
        %v1016 = vld [vmem:[#allocation2 + $0x64] sm:$0xff]
        %v1017 = vld [vmem:[#allocation2 + $0x6c] sm:$0xff]
        %v1018 = vld [vmem:[#allocation2 + $0x7c] sm:$0xff]
        %v1019 = vld [vmem:[#allocation2 + $0x84] sm:$0xff]
        %v1020 = vld [vmem:[#allocation2 + $0x94] sm:$0xff]
        %v1021 = vld [vmem:[#allocation2 + $0x9c] sm:$0xff]
        %v1022 = vld [vmem:[#allocation2 + $0xac] sm:$0xff]
        %v1023 = vld [vmem:[#allocation2 + $0xb4] sm:$0xff]
        %v1024 = vld [vmem:[#allocation2 + $0xc4] sm:$0xff]
        %v1025 = vld [vmem:[#allocation2 + $0xcc] sm:$0xff]
        %v1026 = vld [vmem:[#allocation2 + $0xdc] sm:$0xff]
        %v1027 = vld [vmem:[#allocation2 + $0xe4] sm:$0xff]
        %v1028 = vld [vmem:[#allocation2 + $0xf4] sm:$0xff]
        %v1029 = vld [vmem:[#allocation2 + $0xfc] sm:$0xff]
        %v1030 = vld [vmem:[#allocation2 + $0x10c] sm:$0xff]
        %v1031 = vld [vmem:[#allocation2 + $0x114] sm:$0xff]
        %v1032 = vld [vmem:[#allocation2 + $0x124] sm:$0xff]
        %v1033 = vld [vmem:[#allocation2 + $0x12c] sm:$0xff]
        %v1034 = vld [vmem:[#allocation2 + $0x13c] sm:$0xff]
        %v1035 = vld [vmem:[#allocation2 + $0x144] sm:$0xff]
        %v1036 = vld [vmem:[#allocation2 + $0x154] sm:$0xff]
        %v1037 = vld [vmem:[#allocation2 + $0x15c] sm:$0xff]
        %v1038 = vld [vmem:[#allocation2 + $0x16c] sm:$0xff]
        %v1039 = vld [vmem:[#allocation2 + $0x174] sm:$0xff]
        %v1040 = vlaneseq
        %v1041 = vshrl.u32 %v1040, 7
        %v1042 = vsub.s32 0, %v1041
        %v1043 = vrot.slane %v1007, %v1042
        %v1044 = vmul.f32 %v1008, %v1043
        %v1045 = vmul.f32 %v1009, %v1043
        %v1046 = vmul.f32 %v1010, %v1043
        %v1047 = vmul.f32 %v1011, %v1043
        %v1048 = vmul.f32 %v1012, %v1043
        %v1049 = vmul.f32 %v1013, %v1043
        %v1050 = vmul.f32 %v1014, %v1043
        %v1051 = vmul.f32 %v1015, %v1043
        %v1052 = vmul.f32 %v1016, %v1043
        %v1053 = vmul.f32 %v1017, %v1043
        %v1054 = vmul.f32 %v1018, %v1043
        %v1055 = vmul.f32 %v1019, %v1043
        %v1056 = vmul.f32 %v1020, %v1043
        %v1057 = vmul.f32 %v1021, %v1043
        %v1058 = vmul.f32 %v1022, %v1043
        %v1059 = vmul.f32 %v1023, %v1043
        %v1060 = vmul.f32 %v1024, %v1043
        %v1061 = vmul.f32 %v1025, %v1043
        %v1062 = vmul.f32 %v1026, %v1043
        %v1063 = vmul.f32 %v1027, %v1043
        %v1064 = vmul.f32 %v1028, %v1043
        %v1065 = vmul.f32 %v1029, %v1043
        %v1066 = vmul.f32 %v1030, %v1043
        %v1067 = vmul.f32 %v1031, %v1043
        %v1068 = vmul.f32 %v1032, %v1043
        %v1069 = vmul.f32 %v1033, %v1043
        %v1070 = vmul.f32 %v1034, %v1043
        %v1071 = vmul.f32 %v1035, %v1043
        %v1072 = vmul.f32 %v1036, %v1043
        %v1073 = vmul.f32 %v1037, %v1043
        %v1074 = vmul.f32 %v1038, %v1043
        %v1075 = vmul.f32 %v1039, %v1043
        %v1076 = vadd.f32 %v975, %v1044
        %v1077 = vadd.f32 %v976, %v1045
        %v1078 = vadd.f32 %v977, %v1046
        %v1079 = vadd.f32 %v978, %v1047
        %v1080 = vadd.f32 %v979, %v1048
        %v1081 = vadd.f32 %v980, %v1049
        %v1082 = vadd.f32 %v981, %v1050
        %v1083 = vadd.f32 %v982, %v1051
        %v1084 = vadd.f32 %v983, %v1052
        %v1085 = vadd.f32 %v984, %v1053
        %v1086 = vadd.f32 %v985, %v1054
        %v1087 = vadd.f32 %v986, %v1055
        %v1088 = vadd.f32 %v987, %v1056
        %v1089 = vadd.f32 %v988, %v1057
        %v1090 = vadd.f32 %v989, %v1058
        %v1091 = vadd.f32 %v990, %v1059
        %v1092 = vadd.f32 %v991, %v1060
        %v1093 = vadd.f32 %v992, %v1061
        %v1094 = vadd.f32 %v993, %v1062
        %v1095 = vadd.f32 %v994, %v1063
        %v1096 = vadd.f32 %v995, %v1064
        %v1097 = vadd.f32 %v996, %v1065
        %v1098 = vadd.f32 %v997, %v1066
        %v1099 = vadd.f32 %v998, %v1067
        %v1100 = vadd.f32 %v999, %v1068
        %v1101 = vadd.f32 %v1000, %v1069
        %v1102 = vadd.f32 %v1001, %v1070
        %v1103 = vadd.f32 %v1002, %v1071
        %v1104 = vadd.f32 %v1003, %v1072
        %v1105 = vadd.f32 %v1004, %v1073
        %v1106 = vadd.f32 %v1005, %v1074
        %v1107 = vadd.f32 %v1006, %v1075
        %v1108 = vld [vmem:[#allocation6 + $0x5] sm:$0x1]
        %v1109 = vld [vmem:[#allocation2 + $0x5] sm:$0xff]
        %v1110 = vld [vmem:[#allocation2 + $0xd] sm:$0xff]
        %v1111 = vld [vmem:[#allocation2 + $0x1d] sm:$0xff]
        %v1112 = vld [vmem:[#allocation2 + $0x25] sm:$0xff]
        %v1113 = vld [vmem:[#allocation2 + $0x35] sm:$0xff]
        %v1114 = vld [vmem:[#allocation2 + $0x3d] sm:$0xff]
        %v1115 = vld [vmem:[#allocation2 + $0x4d] sm:$0xff]
        %v1116 = vld [vmem:[#allocation2 + $0x55] sm:$0xff]
        %v1117 = vld [vmem:[#allocation2 + $0x65] sm:$0xff]
        %v1118 = vld [vmem:[#allocation2 + $0x6d] sm:$0xff]
        %v1119 = vld [vmem:[#allocation2 + $0x7d] sm:$0xff]
        %v1120 = vld [vmem:[#allocation2 + $0x85] sm:$0xff]
        %v1121 = vld [vmem:[#allocation2 + $0x95] sm:$0xff]
        %v1122 = vld [vmem:[#allocation2 + $0x9d] sm:$0xff]
        %v1123 = vld [vmem:[#allocation2 + $0xad] sm:$0xff]
        %v1124 = vld [vmem:[#allocation2 + $0xb5] sm:$0xff]
        %v1125 = vld [vmem:[#allocation2 + $0xc5] sm:$0xff]
        %v1126 = vld [vmem:[#allocation2 + $0xcd] sm:$0xff]
        %v1127 = vld [vmem:[#allocation2 + $0xdd] sm:$0xff]
        %v1128 = vld [vmem:[#allocation2 + $0xe5] sm:$0xff]
        %v1129 = vld [vmem:[#allocation2 + $0xf5] sm:$0xff]
        %v1130 = vld [vmem:[#allocation2 + $0xfd] sm:$0xff]
        %v1131 = vld [vmem:[#allocation2 + $0x10d] sm:$0xff]
        %v1132 = vld [vmem:[#allocation2 + $0x115] sm:$0xff]
        %v1133 = vld [vmem:[#allocation2 + $0x125] sm:$0xff]
        %v1134 = vld [vmem:[#allocation2 + $0x12d] sm:$0xff]
        %v1135 = vld [vmem:[#allocation2 + $0x13d] sm:$0xff]
        %v1136 = vld [vmem:[#allocation2 + $0x145] sm:$0xff]
        %v1137 = vld [vmem:[#allocation2 + $0x155] sm:$0xff]
        %v1138 = vld [vmem:[#allocation2 + $0x15d] sm:$0xff]
        %v1139 = vld [vmem:[#allocation2 + $0x16d] sm:$0xff]
        %v1140 = vld [vmem:[#allocation2 + $0x175] sm:$0xff]
        %v1141 = vlaneseq
        %v1142 = vshrl.u32 %v1141, 7
        %v1143 = vsub.s32 0, %v1142
        %v1144 = vrot.slane %v1108, %v1143
        %v1145 = vmul.f32 %v1109, %v1144
        %v1146 = vmul.f32 %v1110, %v1144
        %v1147 = vmul.f32 %v1111, %v1144
        %v1148 = vmul.f32 %v1112, %v1144
        %v1149 = vmul.f32 %v1113, %v1144
        %v1150 = vmul.f32 %v1114, %v1144
        %v1151 = vmul.f32 %v1115, %v1144
        %v1152 = vmul.f32 %v1116, %v1144
        %v1153 = vmul.f32 %v1117, %v1144
        %v1154 = vmul.f32 %v1118, %v1144
        %v1155 = vmul.f32 %v1119, %v1144
        %v1156 = vmul.f32 %v1120, %v1144
        %v1157 = vmul.f32 %v1121, %v1144
        %v1158 = vmul.f32 %v1122, %v1144
        %v1159 = vmul.f32 %v1123, %v1144
        %v1160 = vmul.f32 %v1124, %v1144
        %v1161 = vmul.f32 %v1125, %v1144
        %v1162 = vmul.f32 %v1126, %v1144
        %v1163 = vmul.f32 %v1127, %v1144
        %v1164 = vmul.f32 %v1128, %v1144
        %v1165 = vmul.f32 %v1129, %v1144
        %v1166 = vmul.f32 %v1130, %v1144
        %v1167 = vmul.f32 %v1131, %v1144
        %v1168 = vmul.f32 %v1132, %v1144
        %v1169 = vmul.f32 %v1133, %v1144
        %v1170 = vmul.f32 %v1134, %v1144
        %v1171 = vmul.f32 %v1135, %v1144
        %v1172 = vmul.f32 %v1136, %v1144
        %v1173 = vmul.f32 %v1137, %v1144
        %v1174 = vmul.f32 %v1138, %v1144
        %v1175 = vmul.f32 %v1139, %v1144
        %v1176 = vmul.f32 %v1140, %v1144
        %v1177 = vadd.f32 %v1076, %v1145
        %v1178 = vadd.f32 %v1077, %v1146
        %v1179 = vadd.f32 %v1078, %v1147
        %v1180 = vadd.f32 %v1079, %v1148
        %v1181 = vadd.f32 %v1080, %v1149
        %v1182 = vadd.f32 %v1081, %v1150
        %v1183 = vadd.f32 %v1082, %v1151
        %v1184 = vadd.f32 %v1083, %v1152
        %v1185 = vadd.f32 %v1084, %v1153
        %v1186 = vadd.f32 %v1085, %v1154
        %v1187 = vadd.f32 %v1086, %v1155
        %v1188 = vadd.f32 %v1087, %v1156
        %v1189 = vadd.f32 %v1088, %v1157
        %v1190 = vadd.f32 %v1089, %v1158
        %v1191 = vadd.f32 %v1090, %v1159
        %v1192 = vadd.f32 %v1091, %v1160
        %v1193 = vadd.f32 %v1092, %v1161
        %v1194 = vadd.f32 %v1093, %v1162
        %v1195 = vadd.f32 %v1094, %v1163
        %v1196 = vadd.f32 %v1095, %v1164
        %v1197 = vadd.f32 %v1096, %v1165
        %v1198 = vadd.f32 %v1097, %v1166
        %v1199 = vadd.f32 %v1098, %v1167
        %v1200 = vadd.f32 %v1099, %v1168
        %v1201 = vadd.f32 %v1100, %v1169
        %v1202 = vadd.f32 %v1101, %v1170
        %v1203 = vadd.f32 %v1102, %v1171
        %v1204 = vadd.f32 %v1103, %v1172
        %v1205 = vadd.f32 %v1104, %v1173
        %v1206 = vadd.f32 %v1105, %v1174
        %v1207 = vadd.f32 %v1106, %v1175
        %v1208 = vadd.f32 %v1107, %v1176
        %v1209 = vld [vmem:[#allocation6 + $0x6] sm:$0x1]
        %v1210 = vld [vmem:[#allocation2 + $0x6] sm:$0xff]
        %v1211 = vld [vmem:[#allocation2 + $0xe] sm:$0xff]
        %v1212 = vld [vmem:[#allocation2 + $0x1e] sm:$0xff]
        %v1213 = vld [vmem:[#allocation2 + $0x26] sm:$0xff]
        %v1214 = vld [vmem:[#allocation2 + $0x36] sm:$0xff]
        %v1215 = vld [vmem:[#allocation2 + $0x3e] sm:$0xff]
        %v1216 = vld [vmem:[#allocation2 + $0x4e] sm:$0xff]
        %v1217 = vld [vmem:[#allocation2 + $0x56] sm:$0xff]
        %v1218 = vld [vmem:[#allocation2 + $0x66] sm:$0xff]
        %v1219 = vld [vmem:[#allocation2 + $0x6e] sm:$0xff]
        %v1220 = vld [vmem:[#allocation2 + $0x7e] sm:$0xff]
        %v1221 = vld [vmem:[#allocation2 + $0x86] sm:$0xff]
        %v1222 = vld [vmem:[#allocation2 + $0x96] sm:$0xff]
        %v1223 = vld [vmem:[#allocation2 + $0x9e] sm:$0xff]
        %v1224 = vld [vmem:[#allocation2 + $0xae] sm:$0xff]
        %v1225 = vld [vmem:[#allocation2 + $0xb6] sm:$0xff]
        %v1226 = vld [vmem:[#allocation2 + $0xc6] sm:$0xff]
        %v1227 = vld [vmem:[#allocation2 + $0xce] sm:$0xff]
        %v1228 = vld [vmem:[#allocation2 + $0xde] sm:$0xff]
        %v1229 = vld [vmem:[#allocation2 + $0xe6] sm:$0xff]
        %v1230 = vld [vmem:[#allocation2 + $0xf6] sm:$0xff]
        %v1231 = vld [vmem:[#allocation2 + $0xfe] sm:$0xff]
        %v1232 = vld [vmem:[#allocation2 + $0x10e] sm:$0xff]
        %v1233 = vld [vmem:[#allocation2 + $0x116] sm:$0xff]
        %v1234 = vld [vmem:[#allocation2 + $0x126] sm:$0xff]
        %v1235 = vld [vmem:[#allocation2 + $0x12e] sm:$0xff]
        %v1236 = vld [vmem:[#allocation2 + $0x13e] sm:$0xff]
        %v1237 = vld [vmem:[#allocation2 + $0x146] sm:$0xff]
        %v1238 = vld [vmem:[#allocation2 + $0x156] sm:$0xff]
        %v1239 = vld [vmem:[#allocation2 + $0x15e] sm:$0xff]
        %v1240 = vld [vmem:[#allocation2 + $0x16e] sm:$0xff]
        %v1241 = vld [vmem:[#allocation2 + $0x176] sm:$0xff]
        %v1242 = vlaneseq
        %v1243 = vshrl.u32 %v1242, 7
        %v1244 = vsub.s32 0, %v1243
        %v1245 = vrot.slane %v1209, %v1244
        %v1246 = vmul.f32 %v1210, %v1245
        %v1247 = vmul.f32 %v1211, %v1245
        %v1248 = vmul.f32 %v1212, %v1245
        %v1249 = vmul.f32 %v1213, %v1245
        %v1250 = vmul.f32 %v1214, %v1245
        %v1251 = vmul.f32 %v1215, %v1245
        %v1252 = vmul.f32 %v1216, %v1245
        %v1253 = vmul.f32 %v1217, %v1245
        %v1254 = vmul.f32 %v1218, %v1245
        %v1255 = vmul.f32 %v1219, %v1245
        %v1256 = vmul.f32 %v1220, %v1245
        %v1257 = vmul.f32 %v1221, %v1245
        %v1258 = vmul.f32 %v1222, %v1245
        %v1259 = vmul.f32 %v1223, %v1245
        %v1260 = vmul.f32 %v1224, %v1245
        %v1261 = vmul.f32 %v1225, %v1245
        %v1262 = vmul.f32 %v1226, %v1245
        %v1263 = vmul.f32 %v1227, %v1245
        %v1264 = vmul.f32 %v1228, %v1245
        %v1265 = vmul.f32 %v1229, %v1245
        %v1266 = vmul.f32 %v1230, %v1245
        %v1267 = vmul.f32 %v1231, %v1245
        %v1268 = vmul.f32 %v1232, %v1245
        %v1269 = vmul.f32 %v1233, %v1245
        %v1270 = vmul.f32 %v1234, %v1245
        %v1271 = vmul.f32 %v1235, %v1245
        %v1272 = vmul.f32 %v1236, %v1245
        %v1273 = vmul.f32 %v1237, %v1245
        %v1274 = vmul.f32 %v1238, %v1245
        %v1275 = vmul.f32 %v1239, %v1245
        %v1276 = vmul.f32 %v1240, %v1245
        %v1277 = vmul.f32 %v1241, %v1245
        %v1278 = vadd.f32 %v1177, %v1246
        %v1279 = vadd.f32 %v1178, %v1247
        %v1280 = vadd.f32 %v1179, %v1248
        %v1281 = vadd.f32 %v1180, %v1249
        %v1282 = vadd.f32 %v1181, %v1250
        %v1283 = vadd.f32 %v1182, %v1251
        %v1284 = vadd.f32 %v1183, %v1252
        %v1285 = vadd.f32 %v1184, %v1253
        %v1286 = vadd.f32 %v1185, %v1254
        %v1287 = vadd.f32 %v1186, %v1255
        %v1288 = vadd.f32 %v1187, %v1256
        %v1289 = vadd.f32 %v1188, %v1257
        %v1290 = vadd.f32 %v1189, %v1258
        %v1291 = vadd.f32 %v1190, %v1259
        %v1292 = vadd.f32 %v1191, %v1260
        %v1293 = vadd.f32 %v1192, %v1261
        %v1294 = vadd.f32 %v1193, %v1262
        %v1295 = vadd.f32 %v1194, %v1263
        %v1296 = vadd.f32 %v1195, %v1264
        %v1297 = vadd.f32 %v1196, %v1265
        %v1298 = vadd.f32 %v1197, %v1266
        %v1299 = vadd.f32 %v1198, %v1267
        %v1300 = vadd.f32 %v1199, %v1268
        %v1301 = vadd.f32 %v1200, %v1269
        %v1302 = vadd.f32 %v1201, %v1270
        %v1303 = vadd.f32 %v1202, %v1271
        %v1304 = vadd.f32 %v1203, %v1272
        %v1305 = vadd.f32 %v1204, %v1273
        %v1306 = vadd.f32 %v1205, %v1274
        %v1307 = vadd.f32 %v1206, %v1275
        %v1308 = vadd.f32 %v1207, %v1276
        %v1309 = vadd.f32 %v1208, %v1277
        %s1310 = scalar_lea.vmem [#allocation6], 8
        %v1311 = vld [vmem:[%s1310] sm:$0x1]
        %s1312 = scalar_lea.vmem [#allocation2], 24
        %v1313 = vld [vmem:[%s1312] sm:$0xff]
        %v1314 = vld [vmem:[%s1312 + $0x8] sm:$0xff]
        %v1315 = vld [vmem:[%s1312 + $0x18] sm:$0xff]
        %v1316 = vld [vmem:[%s1312 + $0x20] sm:$0xff]
        %v1317 = vld [vmem:[%s1312 + $0x30] sm:$0xff]
        %v1318 = vld [vmem:[%s1312 + $0x38] sm:$0xff]
        %v1319 = vld [vmem:[%s1312 + $0x48] sm:$0xff]
        %v1320 = vld [vmem:[%s1312 + $0x50] sm:$0xff]
        %v1321 = vld [vmem:[%s1312 + $0x60] sm:$0xff]
        %v1322 = vld [vmem:[%s1312 + $0x68] sm:$0xff]
        %v1323 = vld [vmem:[%s1312 + $0x78] sm:$0xff]
        %v1324 = vld [vmem:[%s1312 + $0x80] sm:$0xff]
        %v1325 = vld [vmem:[%s1312 + $0x90] sm:$0xff]
        %v1326 = vld [vmem:[%s1312 + $0x98] sm:$0xff]
        %v1327 = vld [vmem:[%s1312 + $0xa8] sm:$0xff]
        %v1328 = vld [vmem:[%s1312 + $0xb0] sm:$0xff]
        %v1329 = vld [vmem:[%s1312 + $0xc0] sm:$0xff]
        %v1330 = vld [vmem:[%s1312 + $0xc8] sm:$0xff]
        %v1331 = vld [vmem:[%s1312 + $0xd8] sm:$0xff]
        %v1332 = vld [vmem:[%s1312 + $0xe0] sm:$0xff]
        %v1333 = vld [vmem:[%s1312 + $0xf0] sm:$0xff]
        %v1334 = vld [vmem:[%s1312 + $0xf8] sm:$0xff]
        %v1335 = vld [vmem:[%s1312 + $0x108] sm:$0xff]
        %v1336 = vld [vmem:[%s1312 + $0x110] sm:$0xff]
        %v1337 = vld [vmem:[%s1312 + $0x120] sm:$0xff]
        %v1338 = vld [vmem:[%s1312 + $0x128] sm:$0xff]
        %v1339 = vld [vmem:[%s1312 + $0x138] sm:$0xff]
        %v1340 = vld [vmem:[%s1312 + $0x140] sm:$0xff]
        %v1341 = vld [vmem:[%s1312 + $0x150] sm:$0xff]
        %v1342 = vld [vmem:[%s1312 + $0x158] sm:$0xff]
        %v1343 = vld [vmem:[%s1312 + $0x168] sm:$0xff]
        %v1344 = vld [vmem:[%s1312 + $0x170] sm:$0xff]
        %v1345 = vlaneseq
        %v1346 = vshrl.u32 %v1345, 7
        %v1347 = vsub.s32 0, %v1346
        %v1348 = vrot.slane %v1311, %v1347
        %v1349 = vmul.f32 %v1313, %v1348
        %v1350 = vmul.f32 %v1314, %v1348
        %v1351 = vmul.f32 %v1315, %v1348
        %v1352 = vmul.f32 %v1316, %v1348
        %v1353 = vmul.f32 %v1317, %v1348
        %v1354 = vmul.f32 %v1318, %v1348
        %v1355 = vmul.f32 %v1319, %v1348
        %v1356 = vmul.f32 %v1320, %v1348
        %v1357 = vmul.f32 %v1321, %v1348
        %v1358 = vmul.f32 %v1322, %v1348
        %v1359 = vmul.f32 %v1323, %v1348
        %v1360 = vmul.f32 %v1324, %v1348
        %v1361 = vmul.f32 %v1325, %v1348
        %v1362 = vmul.f32 %v1326, %v1348
        %v1363 = vmul.f32 %v1327, %v1348
        %v1364 = vmul.f32 %v1328, %v1348
        %v1365 = vmul.f32 %v1329, %v1348
        %v1366 = vmul.f32 %v1330, %v1348
        %v1367 = vmul.f32 %v1331, %v1348
        %v1368 = vmul.f32 %v1332, %v1348
        %v1369 = vmul.f32 %v1333, %v1348
        %v1370 = vmul.f32 %v1334, %v1348
        %v1371 = vmul.f32 %v1335, %v1348
        %v1372 = vmul.f32 %v1336, %v1348
        %v1373 = vmul.f32 %v1337, %v1348
        %v1374 = vmul.f32 %v1338, %v1348
        %v1375 = vmul.f32 %v1339, %v1348
        %v1376 = vmul.f32 %v1340, %v1348
        %v1377 = vmul.f32 %v1341, %v1348
        %v1378 = vmul.f32 %v1342, %v1348
        %v1379 = vmul.f32 %v1343, %v1348
        %v1380 = vmul.f32 %v1344, %v1348
        %v1381 = vadd.f32 %v1278, %v1349
        %v1382 = vadd.f32 %v1279, %v1350
        %v1383 = vadd.f32 %v1280, %v1351
        %v1384 = vadd.f32 %v1281, %v1352
        %v1385 = vadd.f32 %v1282, %v1353
        %v1386 = vadd.f32 %v1283, %v1354
        %v1387 = vadd.f32 %v1284, %v1355
        %v1388 = vadd.f32 %v1285, %v1356
        %v1389 = vadd.f32 %v1286, %v1357
        %v1390 = vadd.f32 %v1287, %v1358
        %v1391 = vadd.f32 %v1288, %v1359
        %v1392 = vadd.f32 %v1289, %v1360
        %v1393 = vadd.f32 %v1290, %v1361
        %v1394 = vadd.f32 %v1291, %v1362
        %v1395 = vadd.f32 %v1292, %v1363
        %v1396 = vadd.f32 %v1293, %v1364
        %v1397 = vadd.f32 %v1294, %v1365
        %v1398 = vadd.f32 %v1295, %v1366
        %v1399 = vadd.f32 %v1296, %v1367
        %v1400 = vadd.f32 %v1297, %v1368
        %v1401 = vadd.f32 %v1298, %v1369
        %v1402 = vadd.f32 %v1299, %v1370
        %v1403 = vadd.f32 %v1300, %v1371
        %v1404 = vadd.f32 %v1301, %v1372
        %v1405 = vadd.f32 %v1302, %v1373
        %v1406 = vadd.f32 %v1303, %v1374
        %v1407 = vadd.f32 %v1304, %v1375
        %v1408 = vadd.f32 %v1305, %v1376
        %v1409 = vadd.f32 %v1306, %v1377
        %v1410 = vadd.f32 %v1307, %v1378
        %v1411 = vadd.f32 %v1308, %v1379
        %v1412 = vadd.f32 %v1309, %v1380
        %v1413 = vld [vmem:[%s1310 + $0x1] sm:$0x1]
        %v1414 = vld [vmem:[%s1312 + $0x1] sm:$0xff]
        %v1415 = vld [vmem:[%s1312 + $0x9] sm:$0xff]
        %v1416 = vld [vmem:[%s1312 + $0x19] sm:$0xff]
        %v1417 = vld [vmem:[%s1312 + $0x21] sm:$0xff]
        %v1418 = vld [vmem:[%s1312 + $0x31] sm:$0xff]
        %v1419 = vld [vmem:[%s1312 + $0x39] sm:$0xff]
        %v1420 = vld [vmem:[%s1312 + $0x49] sm:$0xff]
        %v1421 = vld [vmem:[%s1312 + $0x51] sm:$0xff]
        %v1422 = vld [vmem:[%s1312 + $0x61] sm:$0xff]
        %v1423 = vld [vmem:[%s1312 + $0x69] sm:$0xff]
        %v1424 = vld [vmem:[%s1312 + $0x79] sm:$0xff]
        %v1425 = vld [vmem:[%s1312 + $0x81] sm:$0xff]
        %v1426 = vld [vmem:[%s1312 + $0x91] sm:$0xff]
        %v1427 = vld [vmem:[%s1312 + $0x99] sm:$0xff]
        %v1428 = vld [vmem:[%s1312 + $0xa9] sm:$0xff]
        %v1429 = vld [vmem:[%s1312 + $0xb1] sm:$0xff]
        %v1430 = vld [vmem:[%s1312 + $0xc1] sm:$0xff]
        %v1431 = vld [vmem:[%s1312 + $0xc9] sm:$0xff]
        %v1432 = vld [vmem:[%s1312 + $0xd9] sm:$0xff]
        %v1433 = vld [vmem:[%s1312 + $0xe1] sm:$0xff]
        %v1434 = vld [vmem:[%s1312 + $0xf1] sm:$0xff]
        %v1435 = vld [vmem:[%s1312 + $0xf9] sm:$0xff]
        %v1436 = vld [vmem:[%s1312 + $0x109] sm:$0xff]
        %v1437 = vld [vmem:[%s1312 + $0x111] sm:$0xff]
        %v1438 = vld [vmem:[%s1312 + $0x121] sm:$0xff]
        %v1439 = vld [vmem:[%s1312 + $0x129] sm:$0xff]
        %v1440 = vld [vmem:[%s1312 + $0x139] sm:$0xff]
        %v1441 = vld [vmem:[%s1312 + $0x141] sm:$0xff]
        %v1442 = vld [vmem:[%s1312 + $0x151] sm:$0xff]
        %v1443 = vld [vmem:[%s1312 + $0x159] sm:$0xff]
        %v1444 = vld [vmem:[%s1312 + $0x169] sm:$0xff]
        %v1445 = vld [vmem:[%s1312 + $0x171] sm:$0xff]
        %v1446 = vlaneseq
        %v1447 = vshrl.u32 %v1446, 7
        %v1448 = vsub.s32 0, %v1447
        %v1449 = vrot.slane %v1413, %v1448
        %v1450 = vmul.f32 %v1414, %v1449
        %v1451 = vmul.f32 %v1415, %v1449
        %v1452 = vmul.f32 %v1416, %v1449
        %v1453 = vmul.f32 %v1417, %v1449
        %v1454 = vmul.f32 %v1418, %v1449
        %v1455 = vmul.f32 %v1419, %v1449
        %v1456 = vmul.f32 %v1420, %v1449
        %v1457 = vmul.f32 %v1421, %v1449
        %v1458 = vmul.f32 %v1422, %v1449
        %v1459 = vmul.f32 %v1423, %v1449
        %v1460 = vmul.f32 %v1424, %v1449
        %v1461 = vmul.f32 %v1425, %v1449
        %v1462 = vmul.f32 %v1426, %v1449
        %v1463 = vmul.f32 %v1427, %v1449
        %v1464 = vmul.f32 %v1428, %v1449
        %v1465 = vmul.f32 %v1429, %v1449
        %v1466 = vmul.f32 %v1430, %v1449
        %v1467 = vmul.f32 %v1431, %v1449
        %v1468 = vmul.f32 %v1432, %v1449
        %v1469 = vmul.f32 %v1433, %v1449
        %v1470 = vmul.f32 %v1434, %v1449
        %v1471 = vmul.f32 %v1435, %v1449
        %v1472 = vmul.f32 %v1436, %v1449
        %v1473 = vmul.f32 %v1437, %v1449
        %v1474 = vmul.f32 %v1438, %v1449
        %v1475 = vmul.f32 %v1439, %v1449
        %v1476 = vmul.f32 %v1440, %v1449
        %v1477 = vmul.f32 %v1441, %v1449
        %v1478 = vmul.f32 %v1442, %v1449
        %v1479 = vmul.f32 %v1443, %v1449
        %v1480 = vmul.f32 %v1444, %v1449
        %v1481 = vmul.f32 %v1445, %v1449
        %v1482 = vadd.f32 %v1381, %v1450
        %v1483 = vadd.f32 %v1382, %v1451
        %v1484 = vadd.f32 %v1383, %v1452
        %v1485 = vadd.f32 %v1384, %v1453
        %v1486 = vadd.f32 %v1385, %v1454
        %v1487 = vadd.f32 %v1386, %v1455
        %v1488 = vadd.f32 %v1387, %v1456
        %v1489 = vadd.f32 %v1388, %v1457
        %v1490 = vadd.f32 %v1389, %v1458
        %v1491 = vadd.f32 %v1390, %v1459
        %v1492 = vadd.f32 %v1391, %v1460
        %v1493 = vadd.f32 %v1392, %v1461
        %v1494 = vadd.f32 %v1393, %v1462
        %v1495 = vadd.f32 %v1394, %v1463
        %v1496 = vadd.f32 %v1395, %v1464
        %v1497 = vadd.f32 %v1396, %v1465
        %v1498 = vadd.f32 %v1397, %v1466
        %v1499 = vadd.f32 %v1398, %v1467
        %v1500 = vadd.f32 %v1399, %v1468
        %v1501 = vadd.f32 %v1400, %v1469
        %v1502 = vadd.f32 %v1401, %v1470
        %v1503 = vadd.f32 %v1402, %v1471
        %v1504 = vadd.f32 %v1403, %v1472
        %v1505 = vadd.f32 %v1404, %v1473
        %v1506 = vadd.f32 %v1405, %v1474
        %v1507 = vadd.f32 %v1406, %v1475
        %v1508 = vadd.f32 %v1407, %v1476
        %v1509 = vadd.f32 %v1408, %v1477
        %v1510 = vadd.f32 %v1409, %v1478
        %v1511 = vadd.f32 %v1410, %v1479
        %v1512 = vadd.f32 %v1411, %v1480
        %v1513 = vadd.f32 %v1412, %v1481
        %v1514 = vld [vmem:[%s1310 + $0x2] sm:$0x1]
        %v1515 = vld [vmem:[%s1312 + $0x2] sm:$0xff]
        %v1516 = vld [vmem:[%s1312 + $0xa] sm:$0xff]
        %v1517 = vld [vmem:[%s1312 + $0x1a] sm:$0xff]
        %v1518 = vld [vmem:[%s1312 + $0x22] sm:$0xff]
        %v1519 = vld [vmem:[%s1312 + $0x32] sm:$0xff]
        %v1520 = vld [vmem:[%s1312 + $0x3a] sm:$0xff]
        %v1521 = vld [vmem:[%s1312 + $0x4a] sm:$0xff]
        %v1522 = vld [vmem:[%s1312 + $0x52] sm:$0xff]
        %v1523 = vld [vmem:[%s1312 + $0x62] sm:$0xff]
        %v1524 = vld [vmem:[%s1312 + $0x6a] sm:$0xff]
        %v1525 = vld [vmem:[%s1312 + $0x7a] sm:$0xff]
        %v1526 = vld [vmem:[%s1312 + $0x82] sm:$0xff]
        %v1527 = vld [vmem:[%s1312 + $0x92] sm:$0xff]
        %v1528 = vld [vmem:[%s1312 + $0x9a] sm:$0xff]
        %v1529 = vld [vmem:[%s1312 + $0xaa] sm:$0xff]
        %v1530 = vld [vmem:[%s1312 + $0xb2] sm:$0xff]
        %v1531 = vld [vmem:[%s1312 + $0xc2] sm:$0xff]
        %v1532 = vld [vmem:[%s1312 + $0xca] sm:$0xff]
        %v1533 = vld [vmem:[%s1312 + $0xda] sm:$0xff]
        %v1534 = vld [vmem:[%s1312 + $0xe2] sm:$0xff]
        %v1535 = vld [vmem:[%s1312 + $0xf2] sm:$0xff]
        %v1536 = vld [vmem:[%s1312 + $0xfa] sm:$0xff]
        %v1537 = vld [vmem:[%s1312 + $0x10a] sm:$0xff]
        %v1538 = vld [vmem:[%s1312 + $0x112] sm:$0xff]
        %v1539 = vld [vmem:[%s1312 + $0x122] sm:$0xff]
        %v1540 = vld [vmem:[%s1312 + $0x12a] sm:$0xff]
        %v1541 = vld [vmem:[%s1312 + $0x13a] sm:$0xff]
        %v1542 = vld [vmem:[%s1312 + $0x142] sm:$0xff]
        %v1543 = vld [vmem:[%s1312 + $0x152] sm:$0xff]
        %v1544 = vld [vmem:[%s1312 + $0x15a] sm:$0xff]
        %v1545 = vld [vmem:[%s1312 + $0x16a] sm:$0xff]
        %v1546 = vld [vmem:[%s1312 + $0x172] sm:$0xff]
        %v1547 = vlaneseq
        %v1548 = vshrl.u32 %v1547, 7
        %v1549 = vsub.s32 0, %v1548
        %v1550 = vrot.slane %v1514, %v1549
        %v1551 = vmul.f32 %v1515, %v1550
        %v1552 = vmul.f32 %v1516, %v1550
        %v1553 = vmul.f32 %v1517, %v1550
        %v1554 = vmul.f32 %v1518, %v1550
        %v1555 = vmul.f32 %v1519, %v1550
        %v1556 = vmul.f32 %v1520, %v1550
        %v1557 = vmul.f32 %v1521, %v1550
        %v1558 = vmul.f32 %v1522, %v1550
        %v1559 = vmul.f32 %v1523, %v1550
        %v1560 = vmul.f32 %v1524, %v1550
        %v1561 = vmul.f32 %v1525, %v1550
        %v1562 = vmul.f32 %v1526, %v1550
        %v1563 = vmul.f32 %v1527, %v1550
        %v1564 = vmul.f32 %v1528, %v1550
        %v1565 = vmul.f32 %v1529, %v1550
        %v1566 = vmul.f32 %v1530, %v1550
        %v1567 = vmul.f32 %v1531, %v1550
        %v1568 = vmul.f32 %v1532, %v1550
        %v1569 = vmul.f32 %v1533, %v1550
        %v1570 = vmul.f32 %v1534, %v1550
        %v1571 = vmul.f32 %v1535, %v1550
        %v1572 = vmul.f32 %v1536, %v1550
        %v1573 = vmul.f32 %v1537, %v1550
        %v1574 = vmul.f32 %v1538, %v1550
        %v1575 = vmul.f32 %v1539, %v1550
        %v1576 = vmul.f32 %v1540, %v1550
        %v1577 = vmul.f32 %v1541, %v1550
        %v1578 = vmul.f32 %v1542, %v1550
        %v1579 = vmul.f32 %v1543, %v1550
        %v1580 = vmul.f32 %v1544, %v1550
        %v1581 = vmul.f32 %v1545, %v1550
        %v1582 = vmul.f32 %v1546, %v1550
        %v1583 = vadd.f32 %v1482, %v1551
        %v1584 = vadd.f32 %v1483, %v1552
        %v1585 = vadd.f32 %v1484, %v1553
        %v1586 = vadd.f32 %v1485, %v1554
        %v1587 = vadd.f32 %v1486, %v1555
        %v1588 = vadd.f32 %v1487, %v1556
        %v1589 = vadd.f32 %v1488, %v1557
        %v1590 = vadd.f32 %v1489, %v1558
        %v1591 = vadd.f32 %v1490, %v1559
        %v1592 = vadd.f32 %v1491, %v1560
        %v1593 = vadd.f32 %v1492, %v1561
        %v1594 = vadd.f32 %v1493, %v1562
        %v1595 = vadd.f32 %v1494, %v1563
        %v1596 = vadd.f32 %v1495, %v1564
        %v1597 = vadd.f32 %v1496, %v1565
        %v1598 = vadd.f32 %v1497, %v1566
        %v1599 = vadd.f32 %v1498, %v1567
        %v1600 = vadd.f32 %v1499, %v1568
        %v1601 = vadd.f32 %v1500, %v1569
        %v1602 = vadd.f32 %v1501, %v1570
        %v1603 = vadd.f32 %v1502, %v1571
        %v1604 = vadd.f32 %v1503, %v1572
        %v1605 = vadd.f32 %v1504, %v1573
        %v1606 = vadd.f32 %v1505, %v1574
        %v1607 = vadd.f32 %v1506, %v1575
        %v1608 = vadd.f32 %v1507, %v1576
        %v1609 = vadd.f32 %v1508, %v1577
        %v1610 = vadd.f32 %v1509, %v1578
        %v1611 = vadd.f32 %v1510, %v1579
        %v1612 = vadd.f32 %v1511, %v1580
        %v1613 = vadd.f32 %v1512, %v1581
        %v1614 = vadd.f32 %v1513, %v1582
        %v1615 = vld [vmem:[%s1310 + $0x3] sm:$0x1]
        %v1616 = vld [vmem:[%s1312 + $0x3] sm:$0xff]
        %v1617 = vld [vmem:[%s1312 + $0xb] sm:$0xff]
        %v1618 = vld [vmem:[%s1312 + $0x1b] sm:$0xff]
        %v1619 = vld [vmem:[%s1312 + $0x23] sm:$0xff]
        %v1620 = vld [vmem:[%s1312 + $0x33] sm:$0xff]
        %v1621 = vld [vmem:[%s1312 + $0x3b] sm:$0xff]
        %v1622 = vld [vmem:[%s1312 + $0x4b] sm:$0xff]
        %v1623 = vld [vmem:[%s1312 + $0x53] sm:$0xff]
        %v1624 = vld [vmem:[%s1312 + $0x63] sm:$0xff]
        %v1625 = vld [vmem:[%s1312 + $0x6b] sm:$0xff]
        %v1626 = vld [vmem:[%s1312 + $0x7b] sm:$0xff]
        %v1627 = vld [vmem:[%s1312 + $0x83] sm:$0xff]
        %v1628 = vld [vmem:[%s1312 + $0x93] sm:$0xff]
        %v1629 = vld [vmem:[%s1312 + $0x9b] sm:$0xff]
        %v1630 = vld [vmem:[%s1312 + $0xab] sm:$0xff]
        %v1631 = vld [vmem:[%s1312 + $0xb3] sm:$0xff]
        %v1632 = vld [vmem:[%s1312 + $0xc3] sm:$0xff]
        %v1633 = vld [vmem:[%s1312 + $0xcb] sm:$0xff]
        %v1634 = vld [vmem:[%s1312 + $0xdb] sm:$0xff]
        %v1635 = vld [vmem:[%s1312 + $0xe3] sm:$0xff]
        %v1636 = vld [vmem:[%s1312 + $0xf3] sm:$0xff]
        %v1637 = vld [vmem:[%s1312 + $0xfb] sm:$0xff]
        %v1638 = vld [vmem:[%s1312 + $0x10b] sm:$0xff]
        %v1639 = vld [vmem:[%s1312 + $0x113] sm:$0xff]
        %v1640 = vld [vmem:[%s1312 + $0x123] sm:$0xff]
        %v1641 = vld [vmem:[%s1312 + $0x12b] sm:$0xff]
        %v1642 = vld [vmem:[%s1312 + $0x13b] sm:$0xff]
        %v1643 = vld [vmem:[%s1312 + $0x143] sm:$0xff]
        %v1644 = vld [vmem:[%s1312 + $0x153] sm:$0xff]
        %v1645 = vld [vmem:[%s1312 + $0x15b] sm:$0xff]
        %v1646 = vld [vmem:[%s1312 + $0x16b] sm:$0xff]
        %v1647 = vld [vmem:[%s1312 + $0x173] sm:$0xff]
        %v1648 = vlaneseq
        %v1649 = vshrl.u32 %v1648, 7
        %v1650 = vsub.s32 0, %v1649
        %v1651 = vrot.slane %v1615, %v1650
        %v1652 = vmul.f32 %v1616, %v1651
        %v1653 = vmul.f32 %v1617, %v1651
        %v1654 = vmul.f32 %v1618, %v1651
        %v1655 = vmul.f32 %v1619, %v1651
        %v1656 = vmul.f32 %v1620, %v1651
        %v1657 = vmul.f32 %v1621, %v1651
        %v1658 = vmul.f32 %v1622, %v1651
        %v1659 = vmul.f32 %v1623, %v1651
        %v1660 = vmul.f32 %v1624, %v1651
        %v1661 = vmul.f32 %v1625, %v1651
        %v1662 = vmul.f32 %v1626, %v1651
        %v1663 = vmul.f32 %v1627, %v1651
        %v1664 = vmul.f32 %v1628, %v1651
        %v1665 = vmul.f32 %v1629, %v1651
        %v1666 = vmul.f32 %v1630, %v1651
        %v1667 = vmul.f32 %v1631, %v1651
        %v1668 = vmul.f32 %v1632, %v1651
        %v1669 = vmul.f32 %v1633, %v1651
        %v1670 = vmul.f32 %v1634, %v1651
        %v1671 = vmul.f32 %v1635, %v1651
        %v1672 = vmul.f32 %v1636, %v1651
        %v1673 = vmul.f32 %v1637, %v1651
        %v1674 = vmul.f32 %v1638, %v1651
        %v1675 = vmul.f32 %v1639, %v1651
        %v1676 = vmul.f32 %v1640, %v1651
        %v1677 = vmul.f32 %v1641, %v1651
        %v1678 = vmul.f32 %v1642, %v1651
        %v1679 = vmul.f32 %v1643, %v1651
        %v1680 = vmul.f32 %v1644, %v1651
        %v1681 = vmul.f32 %v1645, %v1651
        %v1682 = vmul.f32 %v1646, %v1651
        %v1683 = vmul.f32 %v1647, %v1651
        %v1684 = vadd.f32 %v1583, %v1652
        %v1685 = vadd.f32 %v1584, %v1653
        %v1686 = vadd.f32 %v1585, %v1654
        %v1687 = vadd.f32 %v1586, %v1655
        %v1688 = vadd.f32 %v1587, %v1656
        %v1689 = vadd.f32 %v1588, %v1657
        %v1690 = vadd.f32 %v1589, %v1658
        %v1691 = vadd.f32 %v1590, %v1659
        %v1692 = vadd.f32 %v1591, %v1660
        %v1693 = vadd.f32 %v1592, %v1661
        %v1694 = vadd.f32 %v1593, %v1662
        %v1695 = vadd.f32 %v1594, %v1663
        %v1696 = vadd.f32 %v1595, %v1664
        %v1697 = vadd.f32 %v1596, %v1665
        %v1698 = vadd.f32 %v1597, %v1666
        %v1699 = vadd.f32 %v1598, %v1667
        %v1700 = vadd.f32 %v1599, %v1668
        %v1701 = vadd.f32 %v1600, %v1669
        %v1702 = vadd.f32 %v1601, %v1670
        %v1703 = vadd.f32 %v1602, %v1671
        %v1704 = vadd.f32 %v1603, %v1672
        %v1705 = vadd.f32 %v1604, %v1673
        %v1706 = vadd.f32 %v1605, %v1674
        %v1707 = vadd.f32 %v1606, %v1675
        %v1708 = vadd.f32 %v1607, %v1676
        %v1709 = vadd.f32 %v1608, %v1677
        %v1710 = vadd.f32 %v1609, %v1678
        %v1711 = vadd.f32 %v1610, %v1679
        %v1712 = vadd.f32 %v1611, %v1680
        %v1713 = vadd.f32 %v1612, %v1681
        %v1714 = vadd.f32 %v1613, %v1682
        %v1715 = vadd.f32 %v1614, %v1683
        %v1716 = vld [vmem:[%s1310 + $0x4] sm:$0x1]
        %v1717 = vld [vmem:[%s1312 + $0x4] sm:$0xff]
        %v1718 = vld [vmem:[%s1312 + $0xc] sm:$0xff]
        %v1719 = vld [vmem:[%s1312 + $0x1c] sm:$0xff]
        %v1720 = vld [vmem:[%s1312 + $0x24] sm:$0xff]
        %v1721 = vld [vmem:[%s1312 + $0x34] sm:$0xff]
        %v1722 = vld [vmem:[%s1312 + $0x3c] sm:$0xff]
        %v1723 = vld [vmem:[%s1312 + $0x4c] sm:$0xff]
        %v1724 = vld [vmem:[%s1312 + $0x54] sm:$0xff]
        %v1725 = vld [vmem:[%s1312 + $0x64] sm:$0xff]
        %v1726 = vld [vmem:[%s1312 + $0x6c] sm:$0xff]
        %v1727 = vld [vmem:[%s1312 + $0x7c] sm:$0xff]
        %v1728 = vld [vmem:[%s1312 + $0x84] sm:$0xff]
        %v1729 = vld [vmem:[%s1312 + $0x94] sm:$0xff]
        %v1730 = vld [vmem:[%s1312 + $0x9c] sm:$0xff]
        %v1731 = vld [vmem:[%s1312 + $0xac] sm:$0xff]
        %v1732 = vld [vmem:[%s1312 + $0xb4] sm:$0xff]
        %v1733 = vld [vmem:[%s1312 + $0xc4] sm:$0xff]
        %v1734 = vld [vmem:[%s1312 + $0xcc] sm:$0xff]
        %v1735 = vld [vmem:[%s1312 + $0xdc] sm:$0xff]
        %v1736 = vld [vmem:[%s1312 + $0xe4] sm:$0xff]
        %v1737 = vld [vmem:[%s1312 + $0xf4] sm:$0xff]
        %v1738 = vld [vmem:[%s1312 + $0xfc] sm:$0xff]
        %v1739 = vld [vmem:[%s1312 + $0x10c] sm:$0xff]
        %v1740 = vld [vmem:[%s1312 + $0x114] sm:$0xff]
        %v1741 = vld [vmem:[%s1312 + $0x124] sm:$0xff]
        %v1742 = vld [vmem:[%s1312 + $0x12c] sm:$0xff]
        %v1743 = vld [vmem:[%s1312 + $0x13c] sm:$0xff]
        %v1744 = vld [vmem:[%s1312 + $0x144] sm:$0xff]
        %v1745 = vld [vmem:[%s1312 + $0x154] sm:$0xff]
        %v1746 = vld [vmem:[%s1312 + $0x15c] sm:$0xff]
        %v1747 = vld [vmem:[%s1312 + $0x16c] sm:$0xff]
        %v1748 = vld [vmem:[%s1312 + $0x174] sm:$0xff]
        %v1749 = vlaneseq
        %v1750 = vshrl.u32 %v1749, 7
        %v1751 = vsub.s32 0, %v1750
        %v1752 = vrot.slane %v1716, %v1751
        %v1753 = vmul.f32 %v1717, %v1752
        %v1754 = vmul.f32 %v1718, %v1752
        %v1755 = vmul.f32 %v1719, %v1752
        %v1756 = vmul.f32 %v1720, %v1752
        %v1757 = vmul.f32 %v1721, %v1752
        %v1758 = vmul.f32 %v1722, %v1752
        %v1759 = vmul.f32 %v1723, %v1752
        %v1760 = vmul.f32 %v1724, %v1752
        %v1761 = vmul.f32 %v1725, %v1752
        %v1762 = vmul.f32 %v1726, %v1752
        %v1763 = vmul.f32 %v1727, %v1752
        %v1764 = vmul.f32 %v1728, %v1752
        %v1765 = vmul.f32 %v1729, %v1752
        %v1766 = vmul.f32 %v1730, %v1752
        %v1767 = vmul.f32 %v1731, %v1752
        %v1768 = vmul.f32 %v1732, %v1752
        %v1769 = vmul.f32 %v1733, %v1752
        %v1770 = vmul.f32 %v1734, %v1752
        %v1771 = vmul.f32 %v1735, %v1752
        %v1772 = vmul.f32 %v1736, %v1752
        %v1773 = vmul.f32 %v1737, %v1752
        %v1774 = vmul.f32 %v1738, %v1752
        %v1775 = vmul.f32 %v1739, %v1752
        %v1776 = vmul.f32 %v1740, %v1752
        %v1777 = vmul.f32 %v1741, %v1752
        %v1778 = vmul.f32 %v1742, %v1752
        %v1779 = vmul.f32 %v1743, %v1752
        %v1780 = vmul.f32 %v1744, %v1752
        %v1781 = vmul.f32 %v1745, %v1752
        %v1782 = vmul.f32 %v1746, %v1752
        %v1783 = vmul.f32 %v1747, %v1752
        %v1784 = vmul.f32 %v1748, %v1752
        %v1785 = vadd.f32 %v1684, %v1753
        %v1786 = vadd.f32 %v1685, %v1754
        %v1787 = vadd.f32 %v1686, %v1755
        %v1788 = vadd.f32 %v1687, %v1756
        %v1789 = vadd.f32 %v1688, %v1757
        %v1790 = vadd.f32 %v1689, %v1758
        %v1791 = vadd.f32 %v1690, %v1759
        %v1792 = vadd.f32 %v1691, %v1760
        %v1793 = vadd.f32 %v1692, %v1761
        %v1794 = vadd.f32 %v1693, %v1762
        %v1795 = vadd.f32 %v1694, %v1763
        %v1796 = vadd.f32 %v1695, %v1764
        %v1797 = vadd.f32 %v1696, %v1765
        %v1798 = vadd.f32 %v1697, %v1766
        %v1799 = vadd.f32 %v1698, %v1767
        %v1800 = vadd.f32 %v1699, %v1768
        %v1801 = vadd.f32 %v1700, %v1769
        %v1802 = vadd.f32 %v1701, %v1770
        %v1803 = vadd.f32 %v1702, %v1771
        %v1804 = vadd.f32 %v1703, %v1772
        %v1805 = vadd.f32 %v1704, %v1773
        %v1806 = vadd.f32 %v1705, %v1774
        %v1807 = vadd.f32 %v1706, %v1775
        %v1808 = vadd.f32 %v1707, %v1776
        %v1809 = vadd.f32 %v1708, %v1777
        %v1810 = vadd.f32 %v1709, %v1778
        %v1811 = vadd.f32 %v1710, %v1779
        %v1812 = vadd.f32 %v1711, %v1780
        %v1813 = vadd.f32 %v1712, %v1781
        %v1814 = vadd.f32 %v1713, %v1782
        %v1815 = vadd.f32 %v1714, %v1783
        %v1816 = vadd.f32 %v1715, %v1784
        %v1817 = vld [vmem:[%s1310 + $0x5] sm:$0x1]
        %v1818 = vld [vmem:[%s1312 + $0x5] sm:$0xff]
        %v1819 = vld [vmem:[%s1312 + $0xd] sm:$0xff]
        %v1820 = vld [vmem:[%s1312 + $0x1d] sm:$0xff]
        %v1821 = vld [vmem:[%s1312 + $0x25] sm:$0xff]
        %v1822 = vld [vmem:[%s1312 + $0x35] sm:$0xff]
        %v1823 = vld [vmem:[%s1312 + $0x3d] sm:$0xff]
        %v1824 = vld [vmem:[%s1312 + $0x4d] sm:$0xff]
        %v1825 = vld [vmem:[%s1312 + $0x55] sm:$0xff]
        %v1826 = vld [vmem:[%s1312 + $0x65] sm:$0xff]
        %v1827 = vld [vmem:[%s1312 + $0x6d] sm:$0xff]
        %v1828 = vld [vmem:[%s1312 + $0x7d] sm:$0xff]
        %v1829 = vld [vmem:[%s1312 + $0x85] sm:$0xff]
        %v1830 = vld [vmem:[%s1312 + $0x95] sm:$0xff]
        %v1831 = vld [vmem:[%s1312 + $0x9d] sm:$0xff]
        %v1832 = vld [vmem:[%s1312 + $0xad] sm:$0xff]
        %v1833 = vld [vmem:[%s1312 + $0xb5] sm:$0xff]
        %v1834 = vld [vmem:[%s1312 + $0xc5] sm:$0xff]
        %v1835 = vld [vmem:[%s1312 + $0xcd] sm:$0xff]
        %v1836 = vld [vmem:[%s1312 + $0xdd] sm:$0xff]
        %v1837 = vld [vmem:[%s1312 + $0xe5] sm:$0xff]
        %v1838 = vld [vmem:[%s1312 + $0xf5] sm:$0xff]
        %v1839 = vld [vmem:[%s1312 + $0xfd] sm:$0xff]
        %v1840 = vld [vmem:[%s1312 + $0x10d] sm:$0xff]
        %v1841 = vld [vmem:[%s1312 + $0x115] sm:$0xff]
        %v1842 = vld [vmem:[%s1312 + $0x125] sm:$0xff]
        %v1843 = vld [vmem:[%s1312 + $0x12d] sm:$0xff]
        %v1844 = vld [vmem:[%s1312 + $0x13d] sm:$0xff]
        %v1845 = vld [vmem:[%s1312 + $0x145] sm:$0xff]
        %v1846 = vld [vmem:[%s1312 + $0x155] sm:$0xff]
        %v1847 = vld [vmem:[%s1312 + $0x15d] sm:$0xff]
        %v1848 = vld [vmem:[%s1312 + $0x16d] sm:$0xff]
        %v1849 = vld [vmem:[%s1312 + $0x175] sm:$0xff]
        %v1850 = vlaneseq
        %v1851 = vshrl.u32 %v1850, 7
        %v1852 = vsub.s32 0, %v1851
        %v1853 = vrot.slane %v1817, %v1852
        %v1854 = vmul.f32 %v1818, %v1853
        %v1855 = vmul.f32 %v1819, %v1853
        %v1856 = vmul.f32 %v1820, %v1853
        %v1857 = vmul.f32 %v1821, %v1853
        %v1858 = vmul.f32 %v1822, %v1853
        %v1859 = vmul.f32 %v1823, %v1853
        %v1860 = vmul.f32 %v1824, %v1853
        %v1861 = vmul.f32 %v1825, %v1853
        %v1862 = vmul.f32 %v1826, %v1853
        %v1863 = vmul.f32 %v1827, %v1853
        %v1864 = vmul.f32 %v1828, %v1853
        %v1865 = vmul.f32 %v1829, %v1853
        %v1866 = vmul.f32 %v1830, %v1853
        %v1867 = vmul.f32 %v1831, %v1853
        %v1868 = vmul.f32 %v1832, %v1853
        %v1869 = vmul.f32 %v1833, %v1853
        %v1870 = vmul.f32 %v1834, %v1853
        %v1871 = vmul.f32 %v1835, %v1853
        %v1872 = vmul.f32 %v1836, %v1853
        %v1873 = vmul.f32 %v1837, %v1853
        %v1874 = vmul.f32 %v1838, %v1853
        %v1875 = vmul.f32 %v1839, %v1853
        %v1876 = vmul.f32 %v1840, %v1853
        %v1877 = vmul.f32 %v1841, %v1853
        %v1878 = vmul.f32 %v1842, %v1853
        %v1879 = vmul.f32 %v1843, %v1853
        %v1880 = vmul.f32 %v1844, %v1853
        %v1881 = vmul.f32 %v1845, %v1853
        %v1882 = vmul.f32 %v1846, %v1853
        %v1883 = vmul.f32 %v1847, %v1853
        %v1884 = vmul.f32 %v1848, %v1853
        %v1885 = vmul.f32 %v1849, %v1853
        %v1886 = vadd.f32 %v1785, %v1854
        %v1887 = vadd.f32 %v1786, %v1855
        %v1888 = vadd.f32 %v1787, %v1856
        %v1889 = vadd.f32 %v1788, %v1857
        %v1890 = vadd.f32 %v1789, %v1858
        %v1891 = vadd.f32 %v1790, %v1859
        %v1892 = vadd.f32 %v1791, %v1860
        %v1893 = vadd.f32 %v1792, %v1861
        %v1894 = vadd.f32 %v1793, %v1862
        %v1895 = vadd.f32 %v1794, %v1863
        %v1896 = vadd.f32 %v1795, %v1864
        %v1897 = vadd.f32 %v1796, %v1865
        %v1898 = vadd.f32 %v1797, %v1866
        %v1899 = vadd.f32 %v1798, %v1867
        %v1900 = vadd.f32 %v1799, %v1868
        %v1901 = vadd.f32 %v1800, %v1869
        %v1902 = vadd.f32 %v1801, %v1870
        %v1903 = vadd.f32 %v1802, %v1871
        %v1904 = vadd.f32 %v1803, %v1872
        %v1905 = vadd.f32 %v1804, %v1873
        %v1906 = vadd.f32 %v1805, %v1874
        %v1907 = vadd.f32 %v1806, %v1875
        %v1908 = vadd.f32 %v1807, %v1876
        %v1909 = vadd.f32 %v1808, %v1877
        %v1910 = vadd.f32 %v1809, %v1878
        %v1911 = vadd.f32 %v1810, %v1879
        %v1912 = vadd.f32 %v1811, %v1880
        %v1913 = vadd.f32 %v1812, %v1881
        %v1914 = vadd.f32 %v1813, %v1882
        %v1915 = vadd.f32 %v1814, %v1883
        %v1916 = vadd.f32 %v1815, %v1884
        %v1917 = vadd.f32 %v1816, %v1885
        %v1918 = vld [vmem:[%s1310 + $0x6] sm:$0x1]
        %v1919 = vld [vmem:[%s1312 + $0x6] sm:$0xff]
        %v1920 = vld [vmem:[%s1312 + $0xe] sm:$0xff]
        %v1921 = vld [vmem:[%s1312 + $0x1e] sm:$0xff]
        %v1922 = vld [vmem:[%s1312 + $0x26] sm:$0xff]
        %v1923 = vld [vmem:[%s1312 + $0x36] sm:$0xff]
        %v1924 = vld [vmem:[%s1312 + $0x3e] sm:$0xff]
        %v1925 = vld [vmem:[%s1312 + $0x4e] sm:$0xff]
        %v1926 = vld [vmem:[%s1312 + $0x56] sm:$0xff]
        %v1927 = vld [vmem:[%s1312 + $0x66] sm:$0xff]
        %v1928 = vld [vmem:[%s1312 + $0x6e] sm:$0xff]
        %v1929 = vld [vmem:[%s1312 + $0x7e] sm:$0xff]
        %v1930 = vld [vmem:[%s1312 + $0x86] sm:$0xff]
        %v1931 = vld [vmem:[%s1312 + $0x96] sm:$0xff]
        %v1932 = vld [vmem:[%s1312 + $0x9e] sm:$0xff]
        %v1933 = vld [vmem:[%s1312 + $0xae] sm:$0xff]
        %v1934 = vld [vmem:[%s1312 + $0xb6] sm:$0xff]
        %v1935 = vld [vmem:[%s1312 + $0xc6] sm:$0xff]
        %v1936 = vld [vmem:[%s1312 + $0xce] sm:$0xff]
        %v1937 = vld [vmem:[%s1312 + $0xde] sm:$0xff]
        %v1938 = vld [vmem:[%s1312 + $0xe6] sm:$0xff]
        %v1939 = vld [vmem:[%s1312 + $0xf6] sm:$0xff]
        %v1940 = vld [vmem:[%s1312 + $0xfe] sm:$0xff]
        %v1941 = vld [vmem:[%s1312 + $0x10e] sm:$0xff]
        %v1942 = vld [vmem:[%s1312 + $0x116] sm:$0xff]
        %v1943 = vld [vmem:[%s1312 + $0x126] sm:$0xff]
        %v1944 = vld [vmem:[%s1312 + $0x12e] sm:$0xff]
        %v1945 = vld [vmem:[%s1312 + $0x13e] sm:$0xff]
        %v1946 = vld [vmem:[%s1312 + $0x146] sm:$0xff]
        %v1947 = vld [vmem:[%s1312 + $0x156] sm:$0xff]
        %v1948 = vld [vmem:[%s1312 + $0x15e] sm:$0xff]
        %v1949 = vld [vmem:[%s1312 + $0x16e] sm:$0xff]
        %v1950 = vld [vmem:[%s1312 + $0x176] sm:$0xff]
        %v1951 = vlaneseq
        %v1952 = vshrl.u32 %v1951, 7
        %v1953 = vsub.s32 0, %v1952
        %v1954 = vrot.slane %v1918, %v1953
        %v1955 = vmul.f32 %v1919, %v1954
        %v1956 = vmul.f32 %v1920, %v1954
        %v1957 = vmul.f32 %v1921, %v1954
        %v1958 = vmul.f32 %v1922, %v1954
        %v1959 = vmul.f32 %v1923, %v1954
        %v1960 = vmul.f32 %v1924, %v1954
        %v1961 = vmul.f32 %v1925, %v1954
        %v1962 = vmul.f32 %v1926, %v1954
        %v1963 = vmul.f32 %v1927, %v1954
        %v1964 = vmul.f32 %v1928, %v1954
        %v1965 = vmul.f32 %v1929, %v1954
        %v1966 = vmul.f32 %v1930, %v1954
        %v1967 = vmul.f32 %v1931, %v1954
        %v1968 = vmul.f32 %v1932, %v1954
        %v1969 = vmul.f32 %v1933, %v1954
        %v1970 = vmul.f32 %v1934, %v1954
        %v1971 = vmul.f32 %v1935, %v1954
        %v1972 = vmul.f32 %v1936, %v1954
        %v1973 = vmul.f32 %v1937, %v1954
        %v1974 = vmul.f32 %v1938, %v1954
        %v1975 = vmul.f32 %v1939, %v1954
        %v1976 = vmul.f32 %v1940, %v1954
        %v1977 = vmul.f32 %v1941, %v1954
        %v1978 = vmul.f32 %v1942, %v1954
        %v1979 = vmul.f32 %v1943, %v1954
        %v1980 = vmul.f32 %v1944, %v1954
        %v1981 = vmul.f32 %v1945, %v1954
        %v1982 = vmul.f32 %v1946, %v1954
        %v1983 = vmul.f32 %v1947, %v1954
        %v1984 = vmul.f32 %v1948, %v1954
        %v1985 = vmul.f32 %v1949, %v1954
        %v1986 = vmul.f32 %v1950, %v1954
        %v1987 = vadd.f32 %v1886, %v1955
        %v1988 = vadd.f32 %v1887, %v1956
        %v1989 = vadd.f32 %v1888, %v1957
        %v1990 = vadd.f32 %v1889, %v1958
        %v1991 = vadd.f32 %v1890, %v1959
        %v1992 = vadd.f32 %v1891, %v1960
        %v1993 = vadd.f32 %v1892, %v1961
        %v1994 = vadd.f32 %v1893, %v1962
        %v1995 = vadd.f32 %v1894, %v1963
        %v1996 = vadd.f32 %v1895, %v1964
        %v1997 = vadd.f32 %v1896, %v1965
        %v1998 = vadd.f32 %v1897, %v1966
        %v1999 = vadd.f32 %v1898, %v1967
        %v2000 = vadd.f32 %v1899, %v1968
        %v2001 = vadd.f32 %v1900, %v1969
        %v2002 = vadd.f32 %v1901, %v1970
        %v2003 = vadd.f32 %v1902, %v1971
        %v2004 = vadd.f32 %v1903, %v1972
        %v2005 = vadd.f32 %v1904, %v1973
        %v2006 = vadd.f32 %v1905, %v1974
        %v2007 = vadd.f32 %v1906, %v1975
        %v2008 = vadd.f32 %v1907, %v1976
        %v2009 = vadd.f32 %v1908, %v1977
        %v2010 = vadd.f32 %v1909, %v1978
        %v2011 = vadd.f32 %v1910, %v1979
        %v2012 = vadd.f32 %v1911, %v1980
        %v2013 = vadd.f32 %v1912, %v1981
        %v2014 = vadd.f32 %v1913, %v1982
        %v2015 = vadd.f32 %v1914, %v1983
        %v2016 = vadd.f32 %v1915, %v1984
        %v2017 = vadd.f32 %v1916, %v1985
        %v2018 = vadd.f32 %v1917, %v1986
        %s2019 = scalar_lea.vmem [#allocation6], 16
        %v2020 = vld [vmem:[%s2019] sm:$0x1]
        %s2021 = scalar_lea.vmem [#allocation2], 48
        %v2022 = vld [vmem:[%s2021] sm:$0xff]
        %v2023 = vld [vmem:[%s2021 + $0x8] sm:$0xff]
        %v2024 = vld [vmem:[%s2021 + $0x18] sm:$0xff]
        %v2025 = vld [vmem:[%s2021 + $0x20] sm:$0xff]
        %v2026 = vld [vmem:[%s2021 + $0x30] sm:$0xff]
        %v2027 = vld [vmem:[%s2021 + $0x38] sm:$0xff]
        %v2028 = vld [vmem:[%s2021 + $0x48] sm:$0xff]
        %v2029 = vld [vmem:[%s2021 + $0x50] sm:$0xff]
        %v2030 = vld [vmem:[%s2021 + $0x60] sm:$0xff]
        %v2031 = vld [vmem:[%s2021 + $0x68] sm:$0xff]
        %v2032 = vld [vmem:[%s2021 + $0x78] sm:$0xff]
        %v2033 = vld [vmem:[%s2021 + $0x80] sm:$0xff]
        %v2034 = vld [vmem:[%s2021 + $0x90] sm:$0xff]
        %v2035 = vld [vmem:[%s2021 + $0x98] sm:$0xff]
        %v2036 = vld [vmem:[%s2021 + $0xa8] sm:$0xff]
        %v2037 = vld [vmem:[%s2021 + $0xb0] sm:$0xff]
        %v2038 = vld [vmem:[%s2021 + $0xc0] sm:$0xff]
        %v2039 = vld [vmem:[%s2021 + $0xc8] sm:$0xff]
        %v2040 = vld [vmem:[%s2021 + $0xd8] sm:$0xff]
        %v2041 = vld [vmem:[%s2021 + $0xe0] sm:$0xff]
        %v2042 = vld [vmem:[%s2021 + $0xf0] sm:$0xff]
        %v2043 = vld [vmem:[%s2021 + $0xf8] sm:$0xff]
        %v2044 = vld [vmem:[%s2021 + $0x108] sm:$0xff]
        %v2045 = vld [vmem:[%s2021 + $0x110] sm:$0xff]
        %v2046 = vld [vmem:[%s2021 + $0x120] sm:$0xff]
        %v2047 = vld [vmem:[%s2021 + $0x128] sm:$0xff]
        %v2048 = vld [vmem:[%s2021 + $0x138] sm:$0xff]
        %v2049 = vld [vmem:[%s2021 + $0x140] sm:$0xff]
        %v2050 = vld [vmem:[%s2021 + $0x150] sm:$0xff]
        %v2051 = vld [vmem:[%s2021 + $0x158] sm:$0xff]
        %v2052 = vld [vmem:[%s2021 + $0x168] sm:$0xff]
        %v2053 = vld [vmem:[%s2021 + $0x170] sm:$0xff]
        %v2054 = vlaneseq
        %v2055 = vshrl.u32 %v2054, 7
        %v2056 = vsub.s32 0, %v2055
        %v2057 = vrot.slane %v2020, %v2056
        %v2058 = vmul.f32 %v2022, %v2057
        %v2059 = vmul.f32 %v2023, %v2057
        %v2060 = vmul.f32 %v2024, %v2057
        %v2061 = vmul.f32 %v2025, %v2057
        %v2062 = vmul.f32 %v2026, %v2057
        %v2063 = vmul.f32 %v2027, %v2057
        %v2064 = vmul.f32 %v2028, %v2057
        %v2065 = vmul.f32 %v2029, %v2057
        %v2066 = vmul.f32 %v2030, %v2057
        %v2067 = vmul.f32 %v2031, %v2057
        %v2068 = vmul.f32 %v2032, %v2057
        %v2069 = vmul.f32 %v2033, %v2057
        %v2070 = vmul.f32 %v2034, %v2057
        %v2071 = vmul.f32 %v2035, %v2057
        %v2072 = vmul.f32 %v2036, %v2057
        %v2073 = vmul.f32 %v2037, %v2057
        %v2074 = vmul.f32 %v2038, %v2057
        %v2075 = vmul.f32 %v2039, %v2057
        %v2076 = vmul.f32 %v2040, %v2057
        %v2077 = vmul.f32 %v2041, %v2057
        %v2078 = vmul.f32 %v2042, %v2057
        %v2079 = vmul.f32 %v2043, %v2057
        %v2080 = vmul.f32 %v2044, %v2057
        %v2081 = vmul.f32 %v2045, %v2057
        %v2082 = vmul.f32 %v2046, %v2057
        %v2083 = vmul.f32 %v2047, %v2057
        %v2084 = vmul.f32 %v2048, %v2057
        %v2085 = vmul.f32 %v2049, %v2057
        %v2086 = vmul.f32 %v2050, %v2057
        %v2087 = vmul.f32 %v2051, %v2057
        %v2088 = vmul.f32 %v2052, %v2057
        %v2089 = vmul.f32 %v2053, %v2057
        %v2090 = vadd.f32 %v1987, %v2058
        %v2091 = vadd.f32 %v1988, %v2059
        %v2092 = vadd.f32 %v1989, %v2060
        %v2093 = vadd.f32 %v1990, %v2061
        %v2094 = vadd.f32 %v1991, %v2062
        %v2095 = vadd.f32 %v1992, %v2063
        %v2096 = vadd.f32 %v1993, %v2064
        %v2097 = vadd.f32 %v1994, %v2065
        %v2098 = vadd.f32 %v1995, %v2066
        %v2099 = vadd.f32 %v1996, %v2067
        %v2100 = vadd.f32 %v1997, %v2068
        %v2101 = vadd.f32 %v1998, %v2069
        %v2102 = vadd.f32 %v1999, %v2070
        %v2103 = vadd.f32 %v2000, %v2071
        %v2104 = vadd.f32 %v2001, %v2072
        %v2105 = vadd.f32 %v2002, %v2073
        %v2106 = vadd.f32 %v2003, %v2074
        %v2107 = vadd.f32 %v2004, %v2075
        %v2108 = vadd.f32 %v2005, %v2076
        %v2109 = vadd.f32 %v2006, %v2077
        %v2110 = vadd.f32 %v2007, %v2078
        %v2111 = vadd.f32 %v2008, %v2079
        %v2112 = vadd.f32 %v2009, %v2080
        %v2113 = vadd.f32 %v2010, %v2081
        %v2114 = vadd.f32 %v2011, %v2082
        %v2115 = vadd.f32 %v2012, %v2083
        %v2116 = vadd.f32 %v2013, %v2084
        %v2117 = vadd.f32 %v2014, %v2085
        %v2118 = vadd.f32 %v2015, %v2086
        %v2119 = vadd.f32 %v2016, %v2087
        %v2120 = vadd.f32 %v2017, %v2088
        %v2121 = vadd.f32 %v2018, %v2089
        %v2122 = vld [vmem:[%s2019 + $0x1] sm:$0x1]
        %v2123 = vld [vmem:[%s2021 + $0x1] sm:$0xff]
        %v2124 = vld [vmem:[%s2021 + $0x9] sm:$0xff]
        %v2125 = vld [vmem:[%s2021 + $0x19] sm:$0xff]
        %v2126 = vld [vmem:[%s2021 + $0x21] sm:$0xff]
        %v2127 = vld [vmem:[%s2021 + $0x31] sm:$0xff]
        %v2128 = vld [vmem:[%s2021 + $0x39] sm:$0xff]
        %v2129 = vld [vmem:[%s2021 + $0x49] sm:$0xff]
        %v2130 = vld [vmem:[%s2021 + $0x51] sm:$0xff]
        %v2131 = vld [vmem:[%s2021 + $0x61] sm:$0xff]
        %v2132 = vld [vmem:[%s2021 + $0x69] sm:$0xff]
        %v2133 = vld [vmem:[%s2021 + $0x79] sm:$0xff]
        %v2134 = vld [vmem:[%s2021 + $0x81] sm:$0xff]
        %v2135 = vld [vmem:[%s2021 + $0x91] sm:$0xff]
        %v2136 = vld [vmem:[%s2021 + $0x99] sm:$0xff]
        %v2137 = vld [vmem:[%s2021 + $0xa9] sm:$0xff]
        %v2138 = vld [vmem:[%s2021 + $0xb1] sm:$0xff]
        %v2139 = vld [vmem:[%s2021 + $0xc1] sm:$0xff]
        %v2140 = vld [vmem:[%s2021 + $0xc9] sm:$0xff]
        %v2141 = vld [vmem:[%s2021 + $0xd9] sm:$0xff]
        %v2142 = vld [vmem:[%s2021 + $0xe1] sm:$0xff]
        %v2143 = vld [vmem:[%s2021 + $0xf1] sm:$0xff]
        %v2144 = vld [vmem:[%s2021 + $0xf9] sm:$0xff]
        %v2145 = vld [vmem:[%s2021 + $0x109] sm:$0xff]
        %v2146 = vld [vmem:[%s2021 + $0x111] sm:$0xff]
        %v2147 = vld [vmem:[%s2021 + $0x121] sm:$0xff]
        %v2148 = vld [vmem:[%s2021 + $0x129] sm:$0xff]
        %v2149 = vld [vmem:[%s2021 + $0x139] sm:$0xff]
        %v2150 = vld [vmem:[%s2021 + $0x141] sm:$0xff]
        %v2151 = vld [vmem:[%s2021 + $0x151] sm:$0xff]
        %v2152 = vld [vmem:[%s2021 + $0x159] sm:$0xff]
        %v2153 = vld [vmem:[%s2021 + $0x169] sm:$0xff]
        %v2154 = vld [vmem:[%s2021 + $0x171] sm:$0xff]
        %v2155 = vlaneseq
        %v2156 = vshrl.u32 %v2155, 7
        %v2157 = vsub.s32 0, %v2156
        %v2158 = vrot.slane %v2122, %v2157
        %v2159 = vmul.f32 %v2123, %v2158
        %v2160 = vmul.f32 %v2124, %v2158
        %v2161 = vmul.f32 %v2125, %v2158
        %v2162 = vmul.f32 %v2126, %v2158
        %v2163 = vmul.f32 %v2127, %v2158
        %v2164 = vmul.f32 %v2128, %v2158
        %v2165 = vmul.f32 %v2129, %v2158
        %v2166 = vmul.f32 %v2130, %v2158
        %v2167 = vmul.f32 %v2131, %v2158
        %v2168 = vmul.f32 %v2132, %v2158
        %v2169 = vmul.f32 %v2133, %v2158
        %v2170 = vmul.f32 %v2134, %v2158
        %v2171 = vmul.f32 %v2135, %v2158
        %v2172 = vmul.f32 %v2136, %v2158
        %v2173 = vmul.f32 %v2137, %v2158
        %v2174 = vmul.f32 %v2138, %v2158
        %v2175 = vmul.f32 %v2139, %v2158
        %v2176 = vmul.f32 %v2140, %v2158
        %v2177 = vmul.f32 %v2141, %v2158
        %v2178 = vmul.f32 %v2142, %v2158
        %v2179 = vmul.f32 %v2143, %v2158
        %v2180 = vmul.f32 %v2144, %v2158
        %v2181 = vmul.f32 %v2145, %v2158
        %v2182 = vmul.f32 %v2146, %v2158
        %v2183 = vmul.f32 %v2147, %v2158
        %v2184 = vmul.f32 %v2148, %v2158
        %v2185 = vmul.f32 %v2149, %v2158
        %v2186 = vmul.f32 %v2150, %v2158
        %v2187 = vmul.f32 %v2151, %v2158
        %v2188 = vmul.f32 %v2152, %v2158
        %v2189 = vmul.f32 %v2153, %v2158
        %v2190 = vmul.f32 %v2154, %v2158
        %v2191 = vadd.f32 %v2090, %v2159
        %v2192 = vadd.f32 %v2091, %v2160
        %v2193 = vadd.f32 %v2092, %v2161
        %v2194 = vadd.f32 %v2093, %v2162
        %v2195 = vadd.f32 %v2094, %v2163
        %v2196 = vadd.f32 %v2095, %v2164
        %v2197 = vadd.f32 %v2096, %v2165
        %v2198 = vadd.f32 %v2097, %v2166
        %v2199 = vadd.f32 %v2098, %v2167
        %v2200 = vadd.f32 %v2099, %v2168
        %v2201 = vadd.f32 %v2100, %v2169
        %v2202 = vadd.f32 %v2101, %v2170
        %v2203 = vadd.f32 %v2102, %v2171
        %v2204 = vadd.f32 %v2103, %v2172
        %v2205 = vadd.f32 %v2104, %v2173
        %v2206 = vadd.f32 %v2105, %v2174
        %v2207 = vadd.f32 %v2106, %v2175
        %v2208 = vadd.f32 %v2107, %v2176
        %v2209 = vadd.f32 %v2108, %v2177
        %v2210 = vadd.f32 %v2109, %v2178
        %v2211 = vadd.f32 %v2110, %v2179
        %v2212 = vadd.f32 %v2111, %v2180
        %v2213 = vadd.f32 %v2112, %v2181
        %v2214 = vadd.f32 %v2113, %v2182
        %v2215 = vadd.f32 %v2114, %v2183
        %v2216 = vadd.f32 %v2115, %v2184
        %v2217 = vadd.f32 %v2116, %v2185
        %v2218 = vadd.f32 %v2117, %v2186
        %v2219 = vadd.f32 %v2118, %v2187
        %v2220 = vadd.f32 %v2119, %v2188
        %v2221 = vadd.f32 %v2120, %v2189
        %v2222 = vadd.f32 %v2121, %v2190
        %v2223 = vld [vmem:[%s2019 + $0x2] sm:$0x1]
        %v2224 = vld [vmem:[%s2021 + $0x2] sm:$0xff]
        %v2225 = vld [vmem:[%s2021 + $0xa] sm:$0xff]
        %v2226 = vld [vmem:[%s2021 + $0x1a] sm:$0xff]
        %v2227 = vld [vmem:[%s2021 + $0x22] sm:$0xff]
        %v2228 = vld [vmem:[%s2021 + $0x32] sm:$0xff]
        %v2229 = vld [vmem:[%s2021 + $0x3a] sm:$0xff]
        %v2230 = vld [vmem:[%s2021 + $0x4a] sm:$0xff]
        %v2231 = vld [vmem:[%s2021 + $0x52] sm:$0xff]
        %v2232 = vld [vmem:[%s2021 + $0x62] sm:$0xff]
        %v2233 = vld [vmem:[%s2021 + $0x6a] sm:$0xff]
        %v2234 = vld [vmem:[%s2021 + $0x7a] sm:$0xff]
        %v2235 = vld [vmem:[%s2021 + $0x82] sm:$0xff]
        %v2236 = vld [vmem:[%s2021 + $0x92] sm:$0xff]
        %v2237 = vld [vmem:[%s2021 + $0x9a] sm:$0xff]
        %v2238 = vld [vmem:[%s2021 + $0xaa] sm:$0xff]
        %v2239 = vld [vmem:[%s2021 + $0xb2] sm:$0xff]
        %v2240 = vld [vmem:[%s2021 + $0xc2] sm:$0xff]
        %v2241 = vld [vmem:[%s2021 + $0xca] sm:$0xff]
        %v2242 = vld [vmem:[%s2021 + $0xda] sm:$0xff]
        %v2243 = vld [vmem:[%s2021 + $0xe2] sm:$0xff]
        %v2244 = vld [vmem:[%s2021 + $0xf2] sm:$0xff]
        %v2245 = vld [vmem:[%s2021 + $0xfa] sm:$0xff]
        %v2246 = vld [vmem:[%s2021 + $0x10a] sm:$0xff]
        %v2247 = vld [vmem:[%s2021 + $0x112] sm:$0xff]
        %v2248 = vld [vmem:[%s2021 + $0x122] sm:$0xff]
        %v2249 = vld [vmem:[%s2021 + $0x12a] sm:$0xff]
        %v2250 = vld [vmem:[%s2021 + $0x13a] sm:$0xff]
        %v2251 = vld [vmem:[%s2021 + $0x142] sm:$0xff]
        %v2252 = vld [vmem:[%s2021 + $0x152] sm:$0xff]
        %v2253 = vld [vmem:[%s2021 + $0x15a] sm:$0xff]
        %v2254 = vld [vmem:[%s2021 + $0x16a] sm:$0xff]
        %v2255 = vld [vmem:[%s2021 + $0x172] sm:$0xff]
        %v2256 = vlaneseq
        %v2257 = vshrl.u32 %v2256, 7
        %v2258 = vsub.s32 0, %v2257
        %v2259 = vrot.slane %v2223, %v2258
        %v2260 = vmul.f32 %v2224, %v2259
        %v2261 = vmul.f32 %v2225, %v2259
        %v2262 = vmul.f32 %v2226, %v2259
        %v2263 = vmul.f32 %v2227, %v2259
        %v2264 = vmul.f32 %v2228, %v2259
        %v2265 = vmul.f32 %v2229, %v2259
        %v2266 = vmul.f32 %v2230, %v2259
        %v2267 = vmul.f32 %v2231, %v2259
        %v2268 = vmul.f32 %v2232, %v2259
        %v2269 = vmul.f32 %v2233, %v2259
        %v2270 = vmul.f32 %v2234, %v2259
        %v2271 = vmul.f32 %v2235, %v2259
        %v2272 = vmul.f32 %v2236, %v2259
        %v2273 = vmul.f32 %v2237, %v2259
        %v2274 = vmul.f32 %v2238, %v2259
        %v2275 = vmul.f32 %v2239, %v2259
        %v2276 = vmul.f32 %v2240, %v2259
        %v2277 = vmul.f32 %v2241, %v2259
        %v2278 = vmul.f32 %v2242, %v2259
        %v2279 = vmul.f32 %v2243, %v2259
        %v2280 = vmul.f32 %v2244, %v2259
        %v2281 = vmul.f32 %v2245, %v2259
        %v2282 = vmul.f32 %v2246, %v2259
        %v2283 = vmul.f32 %v2247, %v2259
        %v2284 = vmul.f32 %v2248, %v2259
        %v2285 = vmul.f32 %v2249, %v2259
        %v2286 = vmul.f32 %v2250, %v2259
        %v2287 = vmul.f32 %v2251, %v2259
        %v2288 = vmul.f32 %v2252, %v2259
        %v2289 = vmul.f32 %v2253, %v2259
        %v2290 = vmul.f32 %v2254, %v2259
        %v2291 = vmul.f32 %v2255, %v2259
        %v2292 = vadd.f32 %v2191, %v2260
        %v2293 = vadd.f32 %v2192, %v2261
        %v2294 = vadd.f32 %v2193, %v2262
        %v2295 = vadd.f32 %v2194, %v2263
        %v2296 = vadd.f32 %v2195, %v2264
        %v2297 = vadd.f32 %v2196, %v2265
        %v2298 = vadd.f32 %v2197, %v2266
        %v2299 = vadd.f32 %v2198, %v2267
        %v2300 = vadd.f32 %v2199, %v2268
        %v2301 = vadd.f32 %v2200, %v2269
        %v2302 = vadd.f32 %v2201, %v2270
        %v2303 = vadd.f32 %v2202, %v2271
        %v2304 = vadd.f32 %v2203, %v2272
        %v2305 = vadd.f32 %v2204, %v2273
        %v2306 = vadd.f32 %v2205, %v2274
        %v2307 = vadd.f32 %v2206, %v2275
        %v2308 = vadd.f32 %v2207, %v2276
        %v2309 = vadd.f32 %v2208, %v2277
        %v2310 = vadd.f32 %v2209, %v2278
        %v2311 = vadd.f32 %v2210, %v2279
        %v2312 = vadd.f32 %v2211, %v2280
        %v2313 = vadd.f32 %v2212, %v2281
        %v2314 = vadd.f32 %v2213, %v2282
        %v2315 = vadd.f32 %v2214, %v2283
        %v2316 = vadd.f32 %v2215, %v2284
        %v2317 = vadd.f32 %v2216, %v2285
        %v2318 = vadd.f32 %v2217, %v2286
        %v2319 = vadd.f32 %v2218, %v2287
        %v2320 = vadd.f32 %v2219, %v2288
        %v2321 = vadd.f32 %v2220, %v2289
        %v2322 = vadd.f32 %v2221, %v2290
        %v2323 = vadd.f32 %v2222, %v2291
        %v2324 = vld [vmem:[%s2019 + $0x3] sm:$0x1]
        %v2325 = vld [vmem:[%s2021 + $0x3] sm:$0xff]
        %v2326 = vld [vmem:[%s2021 + $0xb] sm:$0xff]
        %v2327 = vld [vmem:[%s2021 + $0x1b] sm:$0xff]
        %v2328 = vld [vmem:[%s2021 + $0x23] sm:$0xff]
        %v2329 = vld [vmem:[%s2021 + $0x33] sm:$0xff]
        %v2330 = vld [vmem:[%s2021 + $0x3b] sm:$0xff]
        %v2331 = vld [vmem:[%s2021 + $0x4b] sm:$0xff]
        %v2332 = vld [vmem:[%s2021 + $0x53] sm:$0xff]
        %v2333 = vld [vmem:[%s2021 + $0x63] sm:$0xff]
        %v2334 = vld [vmem:[%s2021 + $0x6b] sm:$0xff]
        %v2335 = vld [vmem:[%s2021 + $0x7b] sm:$0xff]
        %v2336 = vld [vmem:[%s2021 + $0x83] sm:$0xff]
        %v2337 = vld [vmem:[%s2021 + $0x93] sm:$0xff]
        %v2338 = vld [vmem:[%s2021 + $0x9b] sm:$0xff]
        %v2339 = vld [vmem:[%s2021 + $0xab] sm:$0xff]
        %v2340 = vld [vmem:[%s2021 + $0xb3] sm:$0xff]
        %v2341 = vld [vmem:[%s2021 + $0xc3] sm:$0xff]
        %v2342 = vld [vmem:[%s2021 + $0xcb] sm:$0xff]
        %v2343 = vld [vmem:[%s2021 + $0xdb] sm:$0xff]
        %v2344 = vld [vmem:[%s2021 + $0xe3] sm:$0xff]
        %v2345 = vld [vmem:[%s2021 + $0xf3] sm:$0xff]
        %v2346 = vld [vmem:[%s2021 + $0xfb] sm:$0xff]
        %v2347 = vld [vmem:[%s2021 + $0x10b] sm:$0xff]
        %v2348 = vld [vmem:[%s2021 + $0x113] sm:$0xff]
        %v2349 = vld [vmem:[%s2021 + $0x123] sm:$0xff]
        %v2350 = vld [vmem:[%s2021 + $0x12b] sm:$0xff]
        %v2351 = vld [vmem:[%s2021 + $0x13b] sm:$0xff]
        %v2352 = vld [vmem:[%s2021 + $0x143] sm:$0xff]
        %v2353 = vld [vmem:[%s2021 + $0x153] sm:$0xff]
        %v2354 = vld [vmem:[%s2021 + $0x15b] sm:$0xff]
        %v2355 = vld [vmem:[%s2021 + $0x16b] sm:$0xff]
        %v2356 = vld [vmem:[%s2021 + $0x173] sm:$0xff]
        %v2357 = vlaneseq
        %v2358 = vshrl.u32 %v2357, 7
        %v2359 = vsub.s32 0, %v2358
        %v2360 = vrot.slane %v2324, %v2359
        %v2361 = vmul.f32 %v2325, %v2360
        %v2362 = vmul.f32 %v2326, %v2360
        %v2363 = vmul.f32 %v2327, %v2360
        %v2364 = vmul.f32 %v2328, %v2360
        %v2365 = vmul.f32 %v2329, %v2360
        %v2366 = vmul.f32 %v2330, %v2360
        %v2367 = vmul.f32 %v2331, %v2360
        %v2368 = vmul.f32 %v2332, %v2360
        %v2369 = vmul.f32 %v2333, %v2360
        %v2370 = vmul.f32 %v2334, %v2360
        %v2371 = vmul.f32 %v2335, %v2360
        %v2372 = vmul.f32 %v2336, %v2360
        %v2373 = vmul.f32 %v2337, %v2360
        %v2374 = vmul.f32 %v2338, %v2360
        %v2375 = vmul.f32 %v2339, %v2360
        %v2376 = vmul.f32 %v2340, %v2360
        %v2377 = vmul.f32 %v2341, %v2360
        %v2378 = vmul.f32 %v2342, %v2360
        %v2379 = vmul.f32 %v2343, %v2360
        %v2380 = vmul.f32 %v2344, %v2360
        %v2381 = vmul.f32 %v2345, %v2360
        %v2382 = vmul.f32 %v2346, %v2360
        %v2383 = vmul.f32 %v2347, %v2360
        %v2384 = vmul.f32 %v2348, %v2360
        %v2385 = vmul.f32 %v2349, %v2360
        %v2386 = vmul.f32 %v2350, %v2360
        %v2387 = vmul.f32 %v2351, %v2360
        %v2388 = vmul.f32 %v2352, %v2360
        %v2389 = vmul.f32 %v2353, %v2360
        %v2390 = vmul.f32 %v2354, %v2360
        %v2391 = vmul.f32 %v2355, %v2360
        %v2392 = vmul.f32 %v2356, %v2360
        %v2393 = vadd.f32 %v2292, %v2361
        %v2394 = vadd.f32 %v2293, %v2362
        %v2395 = vadd.f32 %v2294, %v2363
        %v2396 = vadd.f32 %v2295, %v2364
        %v2397 = vadd.f32 %v2296, %v2365
        %v2398 = vadd.f32 %v2297, %v2366
        %v2399 = vadd.f32 %v2298, %v2367
        %v2400 = vadd.f32 %v2299, %v2368
        %v2401 = vadd.f32 %v2300, %v2369
        %v2402 = vadd.f32 %v2301, %v2370
        %v2403 = vadd.f32 %v2302, %v2371
        %v2404 = vadd.f32 %v2303, %v2372
        %v2405 = vadd.f32 %v2304, %v2373
        %v2406 = vadd.f32 %v2305, %v2374
        %v2407 = vadd.f32 %v2306, %v2375
        %v2408 = vadd.f32 %v2307, %v2376
        %v2409 = vadd.f32 %v2308, %v2377
        %v2410 = vadd.f32 %v2309, %v2378
        %v2411 = vadd.f32 %v2310, %v2379
        %v2412 = vadd.f32 %v2311, %v2380
        %v2413 = vadd.f32 %v2312, %v2381
        %v2414 = vadd.f32 %v2313, %v2382
        %v2415 = vadd.f32 %v2314, %v2383
        %v2416 = vadd.f32 %v2315, %v2384
        %v2417 = vadd.f32 %v2316, %v2385
        %v2418 = vadd.f32 %v2317, %v2386
        %v2419 = vadd.f32 %v2318, %v2387
        %v2420 = vadd.f32 %v2319, %v2388
        %v2421 = vadd.f32 %v2320, %v2389
        %v2422 = vadd.f32 %v2321, %v2390
        %v2423 = vadd.f32 %v2322, %v2391
        %v2424 = vadd.f32 %v2323, %v2392
        %v2425 = vld [vmem:[%s2019 + $0x4] sm:$0x1]
        %v2426 = vld [vmem:[%s2021 + $0x4] sm:$0xff]
        %v2427 = vld [vmem:[%s2021 + $0xc] sm:$0xff]
        %v2428 = vld [vmem:[%s2021 + $0x1c] sm:$0xff]
        %v2429 = vld [vmem:[%s2021 + $0x24] sm:$0xff]
        %v2430 = vld [vmem:[%s2021 + $0x34] sm:$0xff]
        %v2431 = vld [vmem:[%s2021 + $0x3c] sm:$0xff]
        %v2432 = vld [vmem:[%s2021 + $0x4c] sm:$0xff]
        %v2433 = vld [vmem:[%s2021 + $0x54] sm:$0xff]
        %v2434 = vld [vmem:[%s2021 + $0x64] sm:$0xff]
        %v2435 = vld [vmem:[%s2021 + $0x6c] sm:$0xff]
        %v2436 = vld [vmem:[%s2021 + $0x7c] sm:$0xff]
        %v2437 = vld [vmem:[%s2021 + $0x84] sm:$0xff]
        %v2438 = vld [vmem:[%s2021 + $0x94] sm:$0xff]
        %v2439 = vld [vmem:[%s2021 + $0x9c] sm:$0xff]
        %v2440 = vld [vmem:[%s2021 + $0xac] sm:$0xff]
        %v2441 = vld [vmem:[%s2021 + $0xb4] sm:$0xff]
        %v2442 = vld [vmem:[%s2021 + $0xc4] sm:$0xff]
        %v2443 = vld [vmem:[%s2021 + $0xcc] sm:$0xff]
        %v2444 = vld [vmem:[%s2021 + $0xdc] sm:$0xff]
        %v2445 = vld [vmem:[%s2021 + $0xe4] sm:$0xff]
        %v2446 = vld [vmem:[%s2021 + $0xf4] sm:$0xff]
        %v2447 = vld [vmem:[%s2021 + $0xfc] sm:$0xff]
        %v2448 = vld [vmem:[%s2021 + $0x10c] sm:$0xff]
        %v2449 = vld [vmem:[%s2021 + $0x114] sm:$0xff]
        %v2450 = vld [vmem:[%s2021 + $0x124] sm:$0xff]
        %v2451 = vld [vmem:[%s2021 + $0x12c] sm:$0xff]
        %v2452 = vld [vmem:[%s2021 + $0x13c] sm:$0xff]
        %v2453 = vld [vmem:[%s2021 + $0x144] sm:$0xff]
        %v2454 = vld [vmem:[%s2021 + $0x154] sm:$0xff]
        %v2455 = vld [vmem:[%s2021 + $0x15c] sm:$0xff]
        %v2456 = vld [vmem:[%s2021 + $0x16c] sm:$0xff]
        %v2457 = vld [vmem:[%s2021 + $0x174] sm:$0xff]
        %v2458 = vlaneseq
        %v2459 = vshrl.u32 %v2458, 7
        %v2460 = vsub.s32 0, %v2459
        %v2461 = vrot.slane %v2425, %v2460
        %v2462 = vmul.f32 %v2426, %v2461
        %v2463 = vmul.f32 %v2427, %v2461
        %v2464 = vmul.f32 %v2428, %v2461
        %v2465 = vmul.f32 %v2429, %v2461
        %v2466 = vmul.f32 %v2430, %v2461
        %v2467 = vmul.f32 %v2431, %v2461
        %v2468 = vmul.f32 %v2432, %v2461
        %v2469 = vmul.f32 %v2433, %v2461
        %v2470 = vmul.f32 %v2434, %v2461
        %v2471 = vmul.f32 %v2435, %v2461
        %v2472 = vmul.f32 %v2436, %v2461
        %v2473 = vmul.f32 %v2437, %v2461
        %v2474 = vmul.f32 %v2438, %v2461
        %v2475 = vmul.f32 %v2439, %v2461
        %v2476 = vmul.f32 %v2440, %v2461
        %v2477 = vmul.f32 %v2441, %v2461
        %v2478 = vmul.f32 %v2442, %v2461
        %v2479 = vmul.f32 %v2443, %v2461
        %v2480 = vmul.f32 %v2444, %v2461
        %v2481 = vmul.f32 %v2445, %v2461
        %v2482 = vmul.f32 %v2446, %v2461
        %v2483 = vmul.f32 %v2447, %v2461
        %v2484 = vmul.f32 %v2448, %v2461
        %v2485 = vmul.f32 %v2449, %v2461
        %v2486 = vmul.f32 %v2450, %v2461
        %v2487 = vmul.f32 %v2451, %v2461
        %v2488 = vmul.f32 %v2452, %v2461
        %v2489 = vmul.f32 %v2453, %v2461
        %v2490 = vmul.f32 %v2454, %v2461
        %v2491 = vmul.f32 %v2455, %v2461
        %v2492 = vmul.f32 %v2456, %v2461
        %v2493 = vmul.f32 %v2457, %v2461
        %v2494 = vadd.f32 %v2393, %v2462
        %v2495 = vadd.f32 %v2394, %v2463
        %v2496 = vadd.f32 %v2395, %v2464
        %v2497 = vadd.f32 %v2396, %v2465
        %v2498 = vadd.f32 %v2397, %v2466
        %v2499 = vadd.f32 %v2398, %v2467
        %v2500 = vadd.f32 %v2399, %v2468
        %v2501 = vadd.f32 %v2400, %v2469
        %v2502 = vadd.f32 %v2401, %v2470
        %v2503 = vadd.f32 %v2402, %v2471
        %v2504 = vadd.f32 %v2403, %v2472
        %v2505 = vadd.f32 %v2404, %v2473
        %v2506 = vadd.f32 %v2405, %v2474
        %v2507 = vadd.f32 %v2406, %v2475
        %v2508 = vadd.f32 %v2407, %v2476
        %v2509 = vadd.f32 %v2408, %v2477
        %v2510 = vadd.f32 %v2409, %v2478
        %v2511 = vadd.f32 %v2410, %v2479
        %v2512 = vadd.f32 %v2411, %v2480
        %v2513 = vadd.f32 %v2412, %v2481
        %v2514 = vadd.f32 %v2413, %v2482
        %v2515 = vadd.f32 %v2414, %v2483
        %v2516 = vadd.f32 %v2415, %v2484
        %v2517 = vadd.f32 %v2416, %v2485
        %v2518 = vadd.f32 %v2417, %v2486
        %v2519 = vadd.f32 %v2418, %v2487
        %v2520 = vadd.f32 %v2419, %v2488
        %v2521 = vadd.f32 %v2420, %v2489
        %v2522 = vadd.f32 %v2421, %v2490
        %v2523 = vadd.f32 %v2422, %v2491
        %v2524 = vadd.f32 %v2423, %v2492
        %v2525 = vadd.f32 %v2424, %v2493
        %v2526 = vld [vmem:[%s2019 + $0x5] sm:$0x1]
        %v2527 = vld [vmem:[%s2021 + $0x5] sm:$0xff]
        %v2528 = vld [vmem:[%s2021 + $0xd] sm:$0xff]
        %v2529 = vld [vmem:[%s2021 + $0x1d] sm:$0xff]
        %v2530 = vld [vmem:[%s2021 + $0x25] sm:$0xff]
        %v2531 = vld [vmem:[%s2021 + $0x35] sm:$0xff]
        %v2532 = vld [vmem:[%s2021 + $0x3d] sm:$0xff]
        %v2533 = vld [vmem:[%s2021 + $0x4d] sm:$0xff]
        %v2534 = vld [vmem:[%s2021 + $0x55] sm:$0xff]
        %v2535 = vld [vmem:[%s2021 + $0x65] sm:$0xff]
        %v2536 = vld [vmem:[%s2021 + $0x6d] sm:$0xff]
        %v2537 = vld [vmem:[%s2021 + $0x7d] sm:$0xff]
        %v2538 = vld [vmem:[%s2021 + $0x85] sm:$0xff]
        %v2539 = vld [vmem:[%s2021 + $0x95] sm:$0xff]
        %v2540 = vld [vmem:[%s2021 + $0x9d] sm:$0xff]
        %v2541 = vld [vmem:[%s2021 + $0xad] sm:$0xff]
        %v2542 = vld [vmem:[%s2021 + $0xb5] sm:$0xff]
        %v2543 = vld [vmem:[%s2021 + $0xc5] sm:$0xff]
        %v2544 = vld [vmem:[%s2021 + $0xcd] sm:$0xff]
        %v2545 = vld [vmem:[%s2021 + $0xdd] sm:$0xff]
        %v2546 = vld [vmem:[%s2021 + $0xe5] sm:$0xff]
        %v2547 = vld [vmem:[%s2021 + $0xf5] sm:$0xff]
        %v2548 = vld [vmem:[%s2021 + $0xfd] sm:$0xff]
        %v2549 = vld [vmem:[%s2021 + $0x10d] sm:$0xff]
        %v2550 = vld [vmem:[%s2021 + $0x115] sm:$0xff]
        %v2551 = vld [vmem:[%s2021 + $0x125] sm:$0xff]
        %v2552 = vld [vmem:[%s2021 + $0x12d] sm:$0xff]
        %v2553 = vld [vmem:[%s2021 + $0x13d] sm:$0xff]
        %v2554 = vld [vmem:[%s2021 + $0x145] sm:$0xff]
        %v2555 = vld [vmem:[%s2021 + $0x155] sm:$0xff]
        %v2556 = vld [vmem:[%s2021 + $0x15d] sm:$0xff]
        %v2557 = vld [vmem:[%s2021 + $0x16d] sm:$0xff]
        %v2558 = vld [vmem:[%s2021 + $0x175] sm:$0xff]
        %v2559 = vlaneseq
        %v2560 = vshrl.u32 %v2559, 7
        %v2561 = vsub.s32 0, %v2560
        %v2562 = vrot.slane %v2526, %v2561
        %v2563 = vmul.f32 %v2527, %v2562
        %v2564 = vmul.f32 %v2528, %v2562
        %v2565 = vmul.f32 %v2529, %v2562
        %v2566 = vmul.f32 %v2530, %v2562
        %v2567 = vmul.f32 %v2531, %v2562
        %v2568 = vmul.f32 %v2532, %v2562
        %v2569 = vmul.f32 %v2533, %v2562
        %v2570 = vmul.f32 %v2534, %v2562
        %v2571 = vmul.f32 %v2535, %v2562
        %v2572 = vmul.f32 %v2536, %v2562
        %v2573 = vmul.f32 %v2537, %v2562
        %v2574 = vmul.f32 %v2538, %v2562
        %v2575 = vmul.f32 %v2539, %v2562
        %v2576 = vmul.f32 %v2540, %v2562
        %v2577 = vmul.f32 %v2541, %v2562
        %v2578 = vmul.f32 %v2542, %v2562
        %v2579 = vmul.f32 %v2543, %v2562
        %v2580 = vmul.f32 %v2544, %v2562
        %v2581 = vmul.f32 %v2545, %v2562
        %v2582 = vmul.f32 %v2546, %v2562
        %v2583 = vmul.f32 %v2547, %v2562
        %v2584 = vmul.f32 %v2548, %v2562
        %v2585 = vmul.f32 %v2549, %v2562
        %v2586 = vmul.f32 %v2550, %v2562
        %v2587 = vmul.f32 %v2551, %v2562
        %v2588 = vmul.f32 %v2552, %v2562
        %v2589 = vmul.f32 %v2553, %v2562
        %v2590 = vmul.f32 %v2554, %v2562
        %v2591 = vmul.f32 %v2555, %v2562
        %v2592 = vmul.f32 %v2556, %v2562
        %v2593 = vmul.f32 %v2557, %v2562
        %v2594 = vmul.f32 %v2558, %v2562
        %v2595 = vadd.f32 %v2494, %v2563
        %v2596 = vadd.f32 %v2495, %v2564
        %v2597 = vadd.f32 %v2496, %v2565
        %v2598 = vadd.f32 %v2497, %v2566
        %v2599 = vadd.f32 %v2498, %v2567
        %v2600 = vadd.f32 %v2499, %v2568
        %v2601 = vadd.f32 %v2500, %v2569
        %v2602 = vadd.f32 %v2501, %v2570
        %v2603 = vadd.f32 %v2502, %v2571
        %v2604 = vadd.f32 %v2503, %v2572
        %v2605 = vadd.f32 %v2504, %v2573
        %v2606 = vadd.f32 %v2505, %v2574
        %v2607 = vadd.f32 %v2506, %v2575
        %v2608 = vadd.f32 %v2507, %v2576
        %v2609 = vadd.f32 %v2508, %v2577
        %v2610 = vadd.f32 %v2509, %v2578
        %v2611 = vadd.f32 %v2510, %v2579
        %v2612 = vadd.f32 %v2511, %v2580
        %v2613 = vadd.f32 %v2512, %v2581
        %v2614 = vadd.f32 %v2513, %v2582
        %v2615 = vadd.f32 %v2514, %v2583
        %v2616 = vadd.f32 %v2515, %v2584
        %v2617 = vadd.f32 %v2516, %v2585
        %v2618 = vadd.f32 %v2517, %v2586
        %v2619 = vadd.f32 %v2518, %v2587
        %v2620 = vadd.f32 %v2519, %v2588
        %v2621 = vadd.f32 %v2520, %v2589
        %v2622 = vadd.f32 %v2521, %v2590
        %v2623 = vadd.f32 %v2522, %v2591
        %v2624 = vadd.f32 %v2523, %v2592
        %v2625 = vadd.f32 %v2524, %v2593
        %v2626 = vadd.f32 %v2525, %v2594
        %v2627 = vld [vmem:[%s2019 + $0x6] sm:$0x1]
        %v2628 = vld [vmem:[%s2021 + $0x6] sm:$0xff]
        %v2629 = vld [vmem:[%s2021 + $0xe] sm:$0xff]
        %v2630 = vld [vmem:[%s2021 + $0x1e] sm:$0xff]
        %v2631 = vld [vmem:[%s2021 + $0x26] sm:$0xff]
        %v2632 = vld [vmem:[%s2021 + $0x36] sm:$0xff]
        %v2633 = vld [vmem:[%s2021 + $0x3e] sm:$0xff]
        %v2634 = vld [vmem:[%s2021 + $0x4e] sm:$0xff]
        %v2635 = vld [vmem:[%s2021 + $0x56] sm:$0xff]
        %v2636 = vld [vmem:[%s2021 + $0x66] sm:$0xff]
        %v2637 = vld [vmem:[%s2021 + $0x6e] sm:$0xff]
        %v2638 = vld [vmem:[%s2021 + $0x7e] sm:$0xff]
        %v2639 = vld [vmem:[%s2021 + $0x86] sm:$0xff]
        %v2640 = vld [vmem:[%s2021 + $0x96] sm:$0xff]
        %v2641 = vld [vmem:[%s2021 + $0x9e] sm:$0xff]
        %v2642 = vld [vmem:[%s2021 + $0xae] sm:$0xff]
        %v2643 = vld [vmem:[%s2021 + $0xb6] sm:$0xff]
        %v2644 = vld [vmem:[%s2021 + $0xc6] sm:$0xff]
        %v2645 = vld [vmem:[%s2021 + $0xce] sm:$0xff]
        %v2646 = vld [vmem:[%s2021 + $0xde] sm:$0xff]
        %v2647 = vld [vmem:[%s2021 + $0xe6] sm:$0xff]
        %v2648 = vld [vmem:[%s2021 + $0xf6] sm:$0xff]
        %v2649 = vld [vmem:[%s2021 + $0xfe] sm:$0xff]
        %v2650 = vld [vmem:[%s2021 + $0x10e] sm:$0xff]
        %v2651 = vld [vmem:[%s2021 + $0x116] sm:$0xff]
        %v2652 = vld [vmem:[%s2021 + $0x126] sm:$0xff]
        %v2653 = vld [vmem:[%s2021 + $0x12e] sm:$0xff]
        %v2654 = vld [vmem:[%s2021 + $0x13e] sm:$0xff]
        %v2655 = vld [vmem:[%s2021 + $0x146] sm:$0xff]
        %v2656 = vld [vmem:[%s2021 + $0x156] sm:$0xff]
        %v2657 = vld [vmem:[%s2021 + $0x15e] sm:$0xff]
        %v2658 = vld [vmem:[%s2021 + $0x16e] sm:$0xff]
        %v2659 = vld [vmem:[%s2021 + $0x176] sm:$0xff]
        %v2660 = vlaneseq
        %v2661 = vshrl.u32 %v2660, 7
        %v2662 = vsub.s32 0, %v2661
        %v2663 = vrot.slane %v2627, %v2662
        %v2664 = vmul.f32 %v2628, %v2663
        %v2665 = vmul.f32 %v2629, %v2663
        %v2666 = vmul.f32 %v2630, %v2663
        %v2667 = vmul.f32 %v2631, %v2663
        %v2668 = vmul.f32 %v2632, %v2663
        %v2669 = vmul.f32 %v2633, %v2663
        %v2670 = vmul.f32 %v2634, %v2663
        %v2671 = vmul.f32 %v2635, %v2663
        %v2672 = vmul.f32 %v2636, %v2663
        %v2673 = vmul.f32 %v2637, %v2663
        %v2674 = vmul.f32 %v2638, %v2663
        %v2675 = vmul.f32 %v2639, %v2663
        %v2676 = vmul.f32 %v2640, %v2663
        %v2677 = vmul.f32 %v2641, %v2663
        %v2678 = vmul.f32 %v2642, %v2663
        %v2679 = vmul.f32 %v2643, %v2663
        %v2680 = vmul.f32 %v2644, %v2663
        %v2681 = vmul.f32 %v2645, %v2663
        %v2682 = vmul.f32 %v2646, %v2663
        %v2683 = vmul.f32 %v2647, %v2663
        %v2684 = vmul.f32 %v2648, %v2663
        %v2685 = vmul.f32 %v2649, %v2663
        %v2686 = vmul.f32 %v2650, %v2663
        %v2687 = vmul.f32 %v2651, %v2663
        %v2688 = vmul.f32 %v2652, %v2663
        %v2689 = vmul.f32 %v2653, %v2663
        %v2690 = vmul.f32 %v2654, %v2663
        %v2691 = vmul.f32 %v2655, %v2663
        %v2692 = vmul.f32 %v2656, %v2663
        %v2693 = vmul.f32 %v2657, %v2663
        %v2694 = vmul.f32 %v2658, %v2663
        %v2695 = vmul.f32 %v2659, %v2663
        %v2696 = vadd.f32 %v2595, %v2664
        %v2697 = vadd.f32 %v2596, %v2665
        %v2698 = vadd.f32 %v2597, %v2666
        %v2699 = vadd.f32 %v2598, %v2667
        %v2700 = vadd.f32 %v2599, %v2668
        %v2701 = vadd.f32 %v2600, %v2669
        %v2702 = vadd.f32 %v2601, %v2670
        %v2703 = vadd.f32 %v2602, %v2671
        %v2704 = vadd.f32 %v2603, %v2672
        %v2705 = vadd.f32 %v2604, %v2673
        %v2706 = vadd.f32 %v2605, %v2674
        %v2707 = vadd.f32 %v2606, %v2675
        %v2708 = vadd.f32 %v2607, %v2676
        %v2709 = vadd.f32 %v2608, %v2677
        %v2710 = vadd.f32 %v2609, %v2678
        %v2711 = vadd.f32 %v2610, %v2679
        %v2712 = vadd.f32 %v2611, %v2680
        %v2713 = vadd.f32 %v2612, %v2681
        %v2714 = vadd.f32 %v2613, %v2682
        %v2715 = vadd.f32 %v2614, %v2683
        %v2716 = vadd.f32 %v2615, %v2684
        %v2717 = vadd.f32 %v2616, %v2685
        %v2718 = vadd.f32 %v2617, %v2686
        %v2719 = vadd.f32 %v2618, %v2687
        %v2720 = vadd.f32 %v2619, %v2688
        %v2721 = vadd.f32 %v2620, %v2689
        %v2722 = vadd.f32 %v2621, %v2690
        %v2723 = vadd.f32 %v2622, %v2691
        %v2724 = vadd.f32 %v2623, %v2692
        %v2725 = vadd.f32 %v2624, %v2693
        %v2726 = vadd.f32 %v2625, %v2694
        %v2727 = vadd.f32 %v2626, %v2695
        %s2728 = scalar_lea.vmem [#allocation6], 24
        %v2729 = vld [vmem:[%s2728] sm:$0x1]
        %v2730 = vld [vmem:[%s570] sm:$0xff]
        %v2731 = vld [vmem:[%s570 + $0x8] sm:$0xff]
        %v2732 = vld [vmem:[%s570 + $0x18] sm:$0xff]
        %v2733 = vld [vmem:[%s570 + $0x20] sm:$0xff]
        %v2734 = vld [vmem:[%s570 + $0x30] sm:$0xff]
        %v2735 = vld [vmem:[%s570 + $0x38] sm:$0xff]
        %v2736 = vld [vmem:[%s570 + $0x48] sm:$0xff]
        %v2737 = vld [vmem:[%s570 + $0x50] sm:$0xff]
        %v2738 = vld [vmem:[%s570 + $0x60] sm:$0xff]
        %v2739 = vld [vmem:[%s570 + $0x68] sm:$0xff]
        %v2740 = vld [vmem:[%s570 + $0x78] sm:$0xff]
        %v2741 = vld [vmem:[%s570 + $0x80] sm:$0xff]
        %v2742 = vld [vmem:[%s570 + $0x90] sm:$0xff]
        %v2743 = vld [vmem:[%s570 + $0x98] sm:$0xff]
        %v2744 = vld [vmem:[%s570 + $0xa8] sm:$0xff]
        %v2745 = vld [vmem:[%s570 + $0xb0] sm:$0xff]
        %v2746 = vld [vmem:[%s570 + $0xc0] sm:$0xff]
        %v2747 = vld [vmem:[%s570 + $0xc8] sm:$0xff]
        %v2748 = vld [vmem:[%s570 + $0xd8] sm:$0xff]
        %v2749 = vld [vmem:[%s570 + $0xe0] sm:$0xff]
        %v2750 = vld [vmem:[%s570 + $0xf0] sm:$0xff]
        %v2751 = vld [vmem:[%s570 + $0xf8] sm:$0xff]
        %v2752 = vld [vmem:[%s570 + $0x108] sm:$0xff]
        %v2753 = vld [vmem:[%s570 + $0x110] sm:$0xff]
        %v2754 = vld [vmem:[%s570 + $0x120] sm:$0xff]
        %v2755 = vld [vmem:[%s570 + $0x128] sm:$0xff]
        %v2756 = vld [vmem:[%s570 + $0x138] sm:$0xff]
        %v2757 = vld [vmem:[%s570 + $0x140] sm:$0xff]
        %v2758 = vld [vmem:[%s570 + $0x150] sm:$0xff]
        %v2759 = vld [vmem:[%s570 + $0x158] sm:$0xff]
        %v2760 = vld [vmem:[%s570 + $0x168] sm:$0xff]
        %v2761 = vld [vmem:[%s570 + $0x170] sm:$0xff]
        %v2762 = vlaneseq
        %v2763 = vshrl.u32 %v2762, 7
        %v2764 = vsub.s32 0, %v2763
        %v2765 = vrot.slane %v2729, %v2764
        %v2766 = vmul.f32 %v2730, %v2765
        %v2767 = vmul.f32 %v2731, %v2765
        %v2768 = vmul.f32 %v2732, %v2765
        %v2769 = vmul.f32 %v2733, %v2765
        %v2770 = vmul.f32 %v2734, %v2765
        %v2771 = vmul.f32 %v2735, %v2765
        %v2772 = vmul.f32 %v2736, %v2765
        %v2773 = vmul.f32 %v2737, %v2765
        %v2774 = vmul.f32 %v2738, %v2765
        %v2775 = vmul.f32 %v2739, %v2765
        %v2776 = vmul.f32 %v2740, %v2765
        %v2777 = vmul.f32 %v2741, %v2765
        %v2778 = vmul.f32 %v2742, %v2765
        %v2779 = vmul.f32 %v2743, %v2765
        %v2780 = vmul.f32 %v2744, %v2765
        %v2781 = vmul.f32 %v2745, %v2765
        %v2782 = vmul.f32 %v2746, %v2765
        %v2783 = vmul.f32 %v2747, %v2765
        %v2784 = vmul.f32 %v2748, %v2765
        %v2785 = vmul.f32 %v2749, %v2765
        %v2786 = vmul.f32 %v2750, %v2765
        %v2787 = vmul.f32 %v2751, %v2765
        %v2788 = vmul.f32 %v2752, %v2765
        %v2789 = vmul.f32 %v2753, %v2765
        %v2790 = vmul.f32 %v2754, %v2765
        %v2791 = vmul.f32 %v2755, %v2765
        %v2792 = vmul.f32 %v2756, %v2765
        %v2793 = vmul.f32 %v2757, %v2765
        %v2794 = vmul.f32 %v2758, %v2765
        %v2795 = vmul.f32 %v2759, %v2765
        %v2796 = vmul.f32 %v2760, %v2765
        %v2797 = vmul.f32 %v2761, %v2765
        %v2798 = vadd.f32 %v2696, %v2766
        %v2799 = vadd.f32 %v2697, %v2767
        %v2800 = vadd.f32 %v2698, %v2768
        %v2801 = vadd.f32 %v2699, %v2769
        %v2802 = vadd.f32 %v2700, %v2770
        %v2803 = vadd.f32 %v2701, %v2771
        %v2804 = vadd.f32 %v2702, %v2772
        %v2805 = vadd.f32 %v2703, %v2773
        %v2806 = vadd.f32 %v2704, %v2774
        %v2807 = vadd.f32 %v2705, %v2775
        %v2808 = vadd.f32 %v2706, %v2776
        %v2809 = vadd.f32 %v2707, %v2777
        %v2810 = vadd.f32 %v2708, %v2778
        %v2811 = vadd.f32 %v2709, %v2779
        %v2812 = vadd.f32 %v2710, %v2780
        %v2813 = vadd.f32 %v2711, %v2781
        %v2814 = vadd.f32 %v2712, %v2782
        %v2815 = vadd.f32 %v2713, %v2783
        %v2816 = vadd.f32 %v2714, %v2784
        %v2817 = vadd.f32 %v2715, %v2785
        %v2818 = vadd.f32 %v2716, %v2786
        %v2819 = vadd.f32 %v2717, %v2787
        %v2820 = vadd.f32 %v2718, %v2788
        %v2821 = vadd.f32 %v2719, %v2789
        %v2822 = vadd.f32 %v2720, %v2790
        %v2823 = vadd.f32 %v2721, %v2791
        %v2824 = vadd.f32 %v2722, %v2792
        %v2825 = vadd.f32 %v2723, %v2793
        %v2826 = vadd.f32 %v2724, %v2794
        %v2827 = vadd.f32 %v2725, %v2795
        %v2828 = vadd.f32 %v2726, %v2796
        %v2829 = vadd.f32 %v2727, %v2797
        %v2830 = vld [vmem:[%s2728 + $0x1] sm:$0x1]
        %v2831 = vld [vmem:[%s570 + $0x1] sm:$0xff]
        %v2832 = vld [vmem:[%s570 + $0x9] sm:$0xff]
        %v2833 = vld [vmem:[%s570 + $0x19] sm:$0xff]
        %v2834 = vld [vmem:[%s570 + $0x21] sm:$0xff]
        %v2835 = vld [vmem:[%s570 + $0x31] sm:$0xff]
        %v2836 = vld [vmem:[%s570 + $0x39] sm:$0xff]
        %v2837 = vld [vmem:[%s570 + $0x49] sm:$0xff]
        %v2838 = vld [vmem:[%s570 + $0x51] sm:$0xff]
        %v2839 = vld [vmem:[%s570 + $0x61] sm:$0xff]
        %v2840 = vld [vmem:[%s570 + $0x69] sm:$0xff]
        %v2841 = vld [vmem:[%s570 + $0x79] sm:$0xff]
        %v2842 = vld [vmem:[%s570 + $0x81] sm:$0xff]
        %v2843 = vld [vmem:[%s570 + $0x91] sm:$0xff]
        %v2844 = vld [vmem:[%s570 + $0x99] sm:$0xff]
        %v2845 = vld [vmem:[%s570 + $0xa9] sm:$0xff]
        %v2846 = vld [vmem:[%s570 + $0xb1] sm:$0xff]
        %v2847 = vld [vmem:[%s570 + $0xc1] sm:$0xff]
        %v2848 = vld [vmem:[%s570 + $0xc9] sm:$0xff]
        %v2849 = vld [vmem:[%s570 + $0xd9] sm:$0xff]
        %v2850 = vld [vmem:[%s570 + $0xe1] sm:$0xff]
        %v2851 = vld [vmem:[%s570 + $0xf1] sm:$0xff]
        %v2852 = vld [vmem:[%s570 + $0xf9] sm:$0xff]
        %v2853 = vld [vmem:[%s570 + $0x109] sm:$0xff]
        %v2854 = vld [vmem:[%s570 + $0x111] sm:$0xff]
        %v2855 = vld [vmem:[%s570 + $0x121] sm:$0xff]
        %v2856 = vld [vmem:[%s570 + $0x129] sm:$0xff]
        %v2857 = vld [vmem:[%s570 + $0x139] sm:$0xff]
        %v2858 = vld [vmem:[%s570 + $0x141] sm:$0xff]
        %v2859 = vld [vmem:[%s570 + $0x151] sm:$0xff]
        %v2860 = vld [vmem:[%s570 + $0x159] sm:$0xff]
        %v2861 = vld [vmem:[%s570 + $0x169] sm:$0xff]
        %v2862 = vld [vmem:[%s570 + $0x171] sm:$0xff]
        %v2863 = vlaneseq
        %v2864 = vshrl.u32 %v2863, 7
        %v2865 = vsub.s32 0, %v2864
        %v2866 = vrot.slane %v2830, %v2865
        %v2867 = vmul.f32 %v2831, %v2866
        %v2868 = vmul.f32 %v2832, %v2866
        %v2869 = vmul.f32 %v2833, %v2866
        %v2870 = vmul.f32 %v2834, %v2866
        %v2871 = vmul.f32 %v2835, %v2866
        %v2872 = vmul.f32 %v2836, %v2866
        %v2873 = vmul.f32 %v2837, %v2866
        %v2874 = vmul.f32 %v2838, %v2866
        %v2875 = vmul.f32 %v2839, %v2866
        %v2876 = vmul.f32 %v2840, %v2866
        %v2877 = vmul.f32 %v2841, %v2866
        %v2878 = vmul.f32 %v2842, %v2866
        %v2879 = vmul.f32 %v2843, %v2866
        %v2880 = vmul.f32 %v2844, %v2866
        %v2881 = vmul.f32 %v2845, %v2866
        %v2882 = vmul.f32 %v2846, %v2866
        %v2883 = vmul.f32 %v2847, %v2866
        %v2884 = vmul.f32 %v2848, %v2866
        %v2885 = vmul.f32 %v2849, %v2866
        %v2886 = vmul.f32 %v2850, %v2866
        %v2887 = vmul.f32 %v2851, %v2866
        %v2888 = vmul.f32 %v2852, %v2866
        %v2889 = vmul.f32 %v2853, %v2866
        %v2890 = vmul.f32 %v2854, %v2866
        %v2891 = vmul.f32 %v2855, %v2866
        %v2892 = vmul.f32 %v2856, %v2866
        %v2893 = vmul.f32 %v2857, %v2866
        %v2894 = vmul.f32 %v2858, %v2866
        %v2895 = vmul.f32 %v2859, %v2866
        %v2896 = vmul.f32 %v2860, %v2866
        %v2897 = vmul.f32 %v2861, %v2866
        %v2898 = vmul.f32 %v2862, %v2866
        %v2899 = vadd.f32 %v2798, %v2867
        %v2900 = vadd.f32 %v2799, %v2868
        %v2901 = vadd.f32 %v2800, %v2869
        %v2902 = vadd.f32 %v2801, %v2870
        %v2903 = vadd.f32 %v2802, %v2871
        %v2904 = vadd.f32 %v2803, %v2872
        %v2905 = vadd.f32 %v2804, %v2873
        %v2906 = vadd.f32 %v2805, %v2874
        %v2907 = vadd.f32 %v2806, %v2875
        %v2908 = vadd.f32 %v2807, %v2876
        %v2909 = vadd.f32 %v2808, %v2877
        %v2910 = vadd.f32 %v2809, %v2878
        %v2911 = vadd.f32 %v2810, %v2879
        %v2912 = vadd.f32 %v2811, %v2880
        %v2913 = vadd.f32 %v2812, %v2881
        %v2914 = vadd.f32 %v2813, %v2882
        %v2915 = vadd.f32 %v2814, %v2883
        %v2916 = vadd.f32 %v2815, %v2884
        %v2917 = vadd.f32 %v2816, %v2885
        %v2918 = vadd.f32 %v2817, %v2886
        %v2919 = vadd.f32 %v2818, %v2887
        %v2920 = vadd.f32 %v2819, %v2888
        %v2921 = vadd.f32 %v2820, %v2889
        %v2922 = vadd.f32 %v2821, %v2890
        %v2923 = vadd.f32 %v2822, %v2891
        %v2924 = vadd.f32 %v2823, %v2892
        %v2925 = vadd.f32 %v2824, %v2893
        %v2926 = vadd.f32 %v2825, %v2894
        %v2927 = vadd.f32 %v2826, %v2895
        %v2928 = vadd.f32 %v2827, %v2896
        %v2929 = vadd.f32 %v2828, %v2897
        %v2930 = vadd.f32 %v2829, %v2898
        %v2931 = vld [vmem:[%s2728 + $0x2] sm:$0x1]
        %v2932 = vld [vmem:[%s570 + $0x2] sm:$0xff]
        %v2933 = vld [vmem:[%s570 + $0xa] sm:$0xff]
        %v2934 = vld [vmem:[%s570 + $0x1a] sm:$0xff]
        %v2935 = vld [vmem:[%s570 + $0x22] sm:$0xff]
        %v2936 = vld [vmem:[%s570 + $0x32] sm:$0xff]
        %v2937 = vld [vmem:[%s570 + $0x3a] sm:$0xff]
        %v2938 = vld [vmem:[%s570 + $0x4a] sm:$0xff]
        %v2939 = vld [vmem:[%s570 + $0x52] sm:$0xff]
        %v2940 = vld [vmem:[%s570 + $0x62] sm:$0xff]
        %v2941 = vld [vmem:[%s570 + $0x6a] sm:$0xff]
        %v2942 = vld [vmem:[%s570 + $0x7a] sm:$0xff]
        %v2943 = vld [vmem:[%s570 + $0x82] sm:$0xff]
        %v2944 = vld [vmem:[%s570 + $0x92] sm:$0xff]
        %v2945 = vld [vmem:[%s570 + $0x9a] sm:$0xff]
        %v2946 = vld [vmem:[%s570 + $0xaa] sm:$0xff]
        %v2947 = vld [vmem:[%s570 + $0xb2] sm:$0xff]
        %v2948 = vld [vmem:[%s570 + $0xc2] sm:$0xff]
        %v2949 = vld [vmem:[%s570 + $0xca] sm:$0xff]
        %v2950 = vld [vmem:[%s570 + $0xda] sm:$0xff]
        %v2951 = vld [vmem:[%s570 + $0xe2] sm:$0xff]
        %v2952 = vld [vmem:[%s570 + $0xf2] sm:$0xff]
        %v2953 = vld [vmem:[%s570 + $0xfa] sm:$0xff]
        %v2954 = vld [vmem:[%s570 + $0x10a] sm:$0xff]
        %v2955 = vld [vmem:[%s570 + $0x112] sm:$0xff]
        %v2956 = vld [vmem:[%s570 + $0x122] sm:$0xff]
        %v2957 = vld [vmem:[%s570 + $0x12a] sm:$0xff]
        %v2958 = vld [vmem:[%s570 + $0x13a] sm:$0xff]
        %v2959 = vld [vmem:[%s570 + $0x142] sm:$0xff]
        %v2960 = vld [vmem:[%s570 + $0x152] sm:$0xff]
        %v2961 = vld [vmem:[%s570 + $0x15a] sm:$0xff]
        %v2962 = vld [vmem:[%s570 + $0x16a] sm:$0xff]
        %v2963 = vld [vmem:[%s570 + $0x172] sm:$0xff]
        %v2964 = vlaneseq
        %v2965 = vshrl.u32 %v2964, 7
        %v2966 = vsub.s32 0, %v2965
        %v2967 = vrot.slane %v2931, %v2966
        %v2968 = vmul.f32 %v2932, %v2967
        %v2969 = vmul.f32 %v2933, %v2967
        %v2970 = vmul.f32 %v2934, %v2967
        %v2971 = vmul.f32 %v2935, %v2967
        %v2972 = vmul.f32 %v2936, %v2967
        %v2973 = vmul.f32 %v2937, %v2967
        %v2974 = vmul.f32 %v2938, %v2967
        %v2975 = vmul.f32 %v2939, %v2967
        %v2976 = vmul.f32 %v2940, %v2967
        %v2977 = vmul.f32 %v2941, %v2967
        %v2978 = vmul.f32 %v2942, %v2967
        %v2979 = vmul.f32 %v2943, %v2967
        %v2980 = vmul.f32 %v2944, %v2967
        %v2981 = vmul.f32 %v2945, %v2967
        %v2982 = vmul.f32 %v2946, %v2967
        %v2983 = vmul.f32 %v2947, %v2967
        %v2984 = vmul.f32 %v2948, %v2967
        %v2985 = vmul.f32 %v2949, %v2967
        %v2986 = vmul.f32 %v2950, %v2967
        %v2987 = vmul.f32 %v2951, %v2967
        %v2988 = vmul.f32 %v2952, %v2967
        %v2989 = vmul.f32 %v2953, %v2967
        %v2990 = vmul.f32 %v2954, %v2967
        %v2991 = vmul.f32 %v2955, %v2967
        %v2992 = vmul.f32 %v2956, %v2967
        %v2993 = vmul.f32 %v2957, %v2967
        %v2994 = vmul.f32 %v2958, %v2967
        %v2995 = vmul.f32 %v2959, %v2967
        %v2996 = vmul.f32 %v2960, %v2967
        %v2997 = vmul.f32 %v2961, %v2967
        %v2998 = vmul.f32 %v2962, %v2967
        %v2999 = vmul.f32 %v2963, %v2967
        %v3000 = vadd.f32 %v2899, %v2968
        %v3001 = vadd.f32 %v2900, %v2969
        %v3002 = vadd.f32 %v2901, %v2970
        %v3003 = vadd.f32 %v2902, %v2971
        %v3004 = vadd.f32 %v2903, %v2972
        %v3005 = vadd.f32 %v2904, %v2973
        %v3006 = vadd.f32 %v2905, %v2974
        %v3007 = vadd.f32 %v2906, %v2975
        %v3008 = vadd.f32 %v2907, %v2976
        %v3009 = vadd.f32 %v2908, %v2977
        %v3010 = vadd.f32 %v2909, %v2978
        %v3011 = vadd.f32 %v2910, %v2979
        %v3012 = vadd.f32 %v2911, %v2980
        %v3013 = vadd.f32 %v2912, %v2981
        %v3014 = vadd.f32 %v2913, %v2982
        %v3015 = vadd.f32 %v2914, %v2983
        %v3016 = vadd.f32 %v2915, %v2984
        %v3017 = vadd.f32 %v2916, %v2985
        %v3018 = vadd.f32 %v2917, %v2986
        %v3019 = vadd.f32 %v2918, %v2987
        %v3020 = vadd.f32 %v2919, %v2988
        %v3021 = vadd.f32 %v2920, %v2989
        %v3022 = vadd.f32 %v2921, %v2990
        %v3023 = vadd.f32 %v2922, %v2991
        %v3024 = vadd.f32 %v2923, %v2992
        %v3025 = vadd.f32 %v2924, %v2993
        %v3026 = vadd.f32 %v2925, %v2994
        %v3027 = vadd.f32 %v2926, %v2995
        %v3028 = vadd.f32 %v2927, %v2996
        %v3029 = vadd.f32 %v2928, %v2997
        %v3030 = vadd.f32 %v2929, %v2998
        %v3031 = vadd.f32 %v2930, %v2999
        %v3032 = vld [vmem:[%s2728 + $0x3] sm:$0x1]
        %v3033 = vld [vmem:[%s570 + $0x3] sm:$0xff]
        %v3034 = vld [vmem:[%s570 + $0xb] sm:$0xff]
        %v3035 = vld [vmem:[%s570 + $0x1b] sm:$0xff]
        %v3036 = vld [vmem:[%s570 + $0x23] sm:$0xff]
        %v3037 = vld [vmem:[%s570 + $0x33] sm:$0xff]
        %v3038 = vld [vmem:[%s570 + $0x3b] sm:$0xff]
        %v3039 = vld [vmem:[%s570 + $0x4b] sm:$0xff]
        %v3040 = vld [vmem:[%s570 + $0x53] sm:$0xff]
        %v3041 = vld [vmem:[%s570 + $0x63] sm:$0xff]
        %v3042 = vld [vmem:[%s570 + $0x6b] sm:$0xff]
        %v3043 = vld [vmem:[%s570 + $0x7b] sm:$0xff]
        %v3044 = vld [vmem:[%s570 + $0x83] sm:$0xff]
        %v3045 = vld [vmem:[%s570 + $0x93] sm:$0xff]
        %v3046 = vld [vmem:[%s570 + $0x9b] sm:$0xff]
        %v3047 = vld [vmem:[%s570 + $0xab] sm:$0xff]
        %v3048 = vld [vmem:[%s570 + $0xb3] sm:$0xff]
        %v3049 = vld [vmem:[%s570 + $0xc3] sm:$0xff]
        %v3050 = vld [vmem:[%s570 + $0xcb] sm:$0xff]
        %v3051 = vld [vmem:[%s570 + $0xdb] sm:$0xff]
        %v3052 = vld [vmem:[%s570 + $0xe3] sm:$0xff]
        %v3053 = vld [vmem:[%s570 + $0xf3] sm:$0xff]
        %v3054 = vld [vmem:[%s570 + $0xfb] sm:$0xff]
        %v3055 = vld [vmem:[%s570 + $0x10b] sm:$0xff]
        %v3056 = vld [vmem:[%s570 + $0x113] sm:$0xff]
        %v3057 = vld [vmem:[%s570 + $0x123] sm:$0xff]
        %v3058 = vld [vmem:[%s570 + $0x12b] sm:$0xff]
        %v3059 = vld [vmem:[%s570 + $0x13b] sm:$0xff]
        %v3060 = vld [vmem:[%s570 + $0x143] sm:$0xff]
        %v3061 = vld [vmem:[%s570 + $0x153] sm:$0xff]
        %v3062 = vld [vmem:[%s570 + $0x15b] sm:$0xff]
        %v3063 = vld [vmem:[%s570 + $0x16b] sm:$0xff]
        %v3064 = vld [vmem:[%s570 + $0x173] sm:$0xff]
        %v3065 = vlaneseq
        %v3066 = vshrl.u32 %v3065, 7
        %v3067 = vsub.s32 0, %v3066
        %v3068 = vrot.slane %v3032, %v3067
        %v3069 = vmul.f32 %v3033, %v3068
        %v3070 = vmul.f32 %v3034, %v3068
        %v3071 = vmul.f32 %v3035, %v3068
        %v3072 = vmul.f32 %v3036, %v3068
        %v3073 = vmul.f32 %v3037, %v3068
        %v3074 = vmul.f32 %v3038, %v3068
        %v3075 = vmul.f32 %v3039, %v3068
        %v3076 = vmul.f32 %v3040, %v3068
        %v3077 = vmul.f32 %v3041, %v3068
        %v3078 = vmul.f32 %v3042, %v3068
        %v3079 = vmul.f32 %v3043, %v3068
        %v3080 = vmul.f32 %v3044, %v3068
        %v3081 = vmul.f32 %v3045, %v3068
        %v3082 = vmul.f32 %v3046, %v3068
        %v3083 = vmul.f32 %v3047, %v3068
        %v3084 = vmul.f32 %v3048, %v3068
        %v3085 = vmul.f32 %v3049, %v3068
        %v3086 = vmul.f32 %v3050, %v3068
        %v3087 = vmul.f32 %v3051, %v3068
        %v3088 = vmul.f32 %v3052, %v3068
        %v3089 = vmul.f32 %v3053, %v3068
        %v3090 = vmul.f32 %v3054, %v3068
        %v3091 = vmul.f32 %v3055, %v3068
        %v3092 = vmul.f32 %v3056, %v3068
        %v3093 = vmul.f32 %v3057, %v3068
        %v3094 = vmul.f32 %v3058, %v3068
        %v3095 = vmul.f32 %v3059, %v3068
        %v3096 = vmul.f32 %v3060, %v3068
        %v3097 = vmul.f32 %v3061, %v3068
        %v3098 = vmul.f32 %v3062, %v3068
        %v3099 = vmul.f32 %v3063, %v3068
        %v3100 = vmul.f32 %v3064, %v3068
        %v3101 = vadd.f32 %v3000, %v3069
        %v3102 = vadd.f32 %v3001, %v3070
        %v3103 = vadd.f32 %v3002, %v3071
        %v3104 = vadd.f32 %v3003, %v3072
        %v3105 = vadd.f32 %v3004, %v3073
        %v3106 = vadd.f32 %v3005, %v3074
        %v3107 = vadd.f32 %v3006, %v3075
        %v3108 = vadd.f32 %v3007, %v3076
        %v3109 = vadd.f32 %v3008, %v3077
        %v3110 = vadd.f32 %v3009, %v3078
        %v3111 = vadd.f32 %v3010, %v3079
        %v3112 = vadd.f32 %v3011, %v3080
        %v3113 = vadd.f32 %v3012, %v3081
        %v3114 = vadd.f32 %v3013, %v3082
        %v3115 = vadd.f32 %v3014, %v3083
        %v3116 = vadd.f32 %v3015, %v3084
        %v3117 = vadd.f32 %v3016, %v3085
        %v3118 = vadd.f32 %v3017, %v3086
        %v3119 = vadd.f32 %v3018, %v3087
        %v3120 = vadd.f32 %v3019, %v3088
        %v3121 = vadd.f32 %v3020, %v3089
        %v3122 = vadd.f32 %v3021, %v3090
        %v3123 = vadd.f32 %v3022, %v3091
        %v3124 = vadd.f32 %v3023, %v3092
        %v3125 = vadd.f32 %v3024, %v3093
        %v3126 = vadd.f32 %v3025, %v3094
        %v3127 = vadd.f32 %v3026, %v3095
        %v3128 = vadd.f32 %v3027, %v3096
        %v3129 = vadd.f32 %v3028, %v3097
        %v3130 = vadd.f32 %v3029, %v3098
        %v3131 = vadd.f32 %v3030, %v3099
        %v3132 = vadd.f32 %v3031, %v3100
        %v3133 = vld [vmem:[%s2728 + $0x4] sm:$0x1]
        %v3134 = vld [vmem:[%s570 + $0x4] sm:$0xff]
        %v3135 = vld [vmem:[%s570 + $0xc] sm:$0xff]
        %v3136 = vld [vmem:[%s570 + $0x1c] sm:$0xff]
        %v3137 = vld [vmem:[%s570 + $0x24] sm:$0xff]
        %v3138 = vld [vmem:[%s570 + $0x34] sm:$0xff]
        %v3139 = vld [vmem:[%s570 + $0x3c] sm:$0xff]
        %v3140 = vld [vmem:[%s570 + $0x4c] sm:$0xff]
        %v3141 = vld [vmem:[%s570 + $0x54] sm:$0xff]
        %v3142 = vld [vmem:[%s570 + $0x64] sm:$0xff]
        %v3143 = vld [vmem:[%s570 + $0x6c] sm:$0xff]
        %v3144 = vld [vmem:[%s570 + $0x7c] sm:$0xff]
        %v3145 = vld [vmem:[%s570 + $0x84] sm:$0xff]
        %v3146 = vld [vmem:[%s570 + $0x94] sm:$0xff]
        %v3147 = vld [vmem:[%s570 + $0x9c] sm:$0xff]
        %v3148 = vld [vmem:[%s570 + $0xac] sm:$0xff]
        %v3149 = vld [vmem:[%s570 + $0xb4] sm:$0xff]
        %v3150 = vld [vmem:[%s570 + $0xc4] sm:$0xff]
        %v3151 = vld [vmem:[%s570 + $0xcc] sm:$0xff]
        %v3152 = vld [vmem:[%s570 + $0xdc] sm:$0xff]
        %v3153 = vld [vmem:[%s570 + $0xe4] sm:$0xff]
        %v3154 = vld [vmem:[%s570 + $0xf4] sm:$0xff]
        %v3155 = vld [vmem:[%s570 + $0xfc] sm:$0xff]
        %v3156 = vld [vmem:[%s570 + $0x10c] sm:$0xff]
        %v3157 = vld [vmem:[%s570 + $0x114] sm:$0xff]
        %v3158 = vld [vmem:[%s570 + $0x124] sm:$0xff]
        %v3159 = vld [vmem:[%s570 + $0x12c] sm:$0xff]
        %v3160 = vld [vmem:[%s570 + $0x13c] sm:$0xff]
        %v3161 = vld [vmem:[%s570 + $0x144] sm:$0xff]
        %v3162 = vld [vmem:[%s570 + $0x154] sm:$0xff]
        %v3163 = vld [vmem:[%s570 + $0x15c] sm:$0xff]
        %v3164 = vld [vmem:[%s570 + $0x16c] sm:$0xff]
        %v3165 = vld [vmem:[%s570 + $0x174] sm:$0xff]
        %v3166 = vlaneseq
        %v3167 = vshrl.u32 %v3166, 7
        %v3168 = vsub.s32 0, %v3167
        %v3169 = vrot.slane %v3133, %v3168
        %v3170 = vmul.f32 %v3134, %v3169
        %v3171 = vmul.f32 %v3135, %v3169
        %v3172 = vmul.f32 %v3136, %v3169
        %v3173 = vmul.f32 %v3137, %v3169
        %v3174 = vmul.f32 %v3138, %v3169
        %v3175 = vmul.f32 %v3139, %v3169
        %v3176 = vmul.f32 %v3140, %v3169
        %v3177 = vmul.f32 %v3141, %v3169
        %v3178 = vmul.f32 %v3142, %v3169
        %v3179 = vmul.f32 %v3143, %v3169
        %v3180 = vmul.f32 %v3144, %v3169
        %v3181 = vmul.f32 %v3145, %v3169
        %v3182 = vmul.f32 %v3146, %v3169
        %v3183 = vmul.f32 %v3147, %v3169
        %v3184 = vmul.f32 %v3148, %v3169
        %v3185 = vmul.f32 %v3149, %v3169
        %v3186 = vmul.f32 %v3150, %v3169
        %v3187 = vmul.f32 %v3151, %v3169
        %v3188 = vmul.f32 %v3152, %v3169
        %v3189 = vmul.f32 %v3153, %v3169
        %v3190 = vmul.f32 %v3154, %v3169
        %v3191 = vmul.f32 %v3155, %v3169
        %v3192 = vmul.f32 %v3156, %v3169
        %v3193 = vmul.f32 %v3157, %v3169
        %v3194 = vmul.f32 %v3158, %v3169
        %v3195 = vmul.f32 %v3159, %v3169
        %v3196 = vmul.f32 %v3160, %v3169
        %v3197 = vmul.f32 %v3161, %v3169
        %v3198 = vmul.f32 %v3162, %v3169
        %v3199 = vmul.f32 %v3163, %v3169
        %v3200 = vmul.f32 %v3164, %v3169
        %v3201 = vmul.f32 %v3165, %v3169
        %v3202 = vadd.f32 %v3101, %v3170
        %v3203 = vadd.f32 %v3102, %v3171
        %v3204 = vadd.f32 %v3103, %v3172
        %v3205 = vadd.f32 %v3104, %v3173
        %v3206 = vadd.f32 %v3105, %v3174
        %v3207 = vadd.f32 %v3106, %v3175
        %v3208 = vadd.f32 %v3107, %v3176
        %v3209 = vadd.f32 %v3108, %v3177
        %v3210 = vadd.f32 %v3109, %v3178
        %v3211 = vadd.f32 %v3110, %v3179
        %v3212 = vadd.f32 %v3111, %v3180
        %v3213 = vadd.f32 %v3112, %v3181
        %v3214 = vadd.f32 %v3113, %v3182
        %v3215 = vadd.f32 %v3114, %v3183
        %v3216 = vadd.f32 %v3115, %v3184
        %v3217 = vadd.f32 %v3116, %v3185
        %v3218 = vadd.f32 %v3117, %v3186
        %v3219 = vadd.f32 %v3118, %v3187
        %v3220 = vadd.f32 %v3119, %v3188
        %v3221 = vadd.f32 %v3120, %v3189
        %v3222 = vadd.f32 %v3121, %v3190
        %v3223 = vadd.f32 %v3122, %v3191
        %v3224 = vadd.f32 %v3123, %v3192
        %v3225 = vadd.f32 %v3124, %v3193
        %v3226 = vadd.f32 %v3125, %v3194
        %v3227 = vadd.f32 %v3126, %v3195
        %v3228 = vadd.f32 %v3127, %v3196
        %v3229 = vadd.f32 %v3128, %v3197
        %v3230 = vadd.f32 %v3129, %v3198
        %v3231 = vadd.f32 %v3130, %v3199
        %v3232 = vadd.f32 %v3131, %v3200
        %v3233 = vadd.f32 %v3132, %v3201
        %v3234 = vld [vmem:[%s2728 + $0x5] sm:$0x1]
        %v3235 = vld [vmem:[%s570 + $0x5] sm:$0xff]
        %v3236 = vld [vmem:[%s570 + $0xd] sm:$0xff]
        %v3237 = vld [vmem:[%s570 + $0x1d] sm:$0xff]
        %v3238 = vld [vmem:[%s570 + $0x25] sm:$0xff]
        %v3239 = vld [vmem:[%s570 + $0x35] sm:$0xff]
        %v3240 = vld [vmem:[%s570 + $0x3d] sm:$0xff]
        %v3241 = vld [vmem:[%s570 + $0x4d] sm:$0xff]
        %v3242 = vld [vmem:[%s570 + $0x55] sm:$0xff]
        %v3243 = vld [vmem:[%s570 + $0x65] sm:$0xff]
        %v3244 = vld [vmem:[%s570 + $0x6d] sm:$0xff]
        %v3245 = vld [vmem:[%s570 + $0x7d] sm:$0xff]
        %v3246 = vld [vmem:[%s570 + $0x85] sm:$0xff]
        %v3247 = vld [vmem:[%s570 + $0x95] sm:$0xff]
        %v3248 = vld [vmem:[%s570 + $0x9d] sm:$0xff]
        %v3249 = vld [vmem:[%s570 + $0xad] sm:$0xff]
        %v3250 = vld [vmem:[%s570 + $0xb5] sm:$0xff]
        %v3251 = vld [vmem:[%s570 + $0xc5] sm:$0xff]
        %v3252 = vld [vmem:[%s570 + $0xcd] sm:$0xff]
        %v3253 = vld [vmem:[%s570 + $0xdd] sm:$0xff]
        %v3254 = vld [vmem:[%s570 + $0xe5] sm:$0xff]
        %v3255 = vld [vmem:[%s570 + $0xf5] sm:$0xff]
        %v3256 = vld [vmem:[%s570 + $0xfd] sm:$0xff]
        %v3257 = vld [vmem:[%s570 + $0x10d] sm:$0xff]
        %v3258 = vld [vmem:[%s570 + $0x115] sm:$0xff]
        %v3259 = vld [vmem:[%s570 + $0x125] sm:$0xff]
        %v3260 = vld [vmem:[%s570 + $0x12d] sm:$0xff]
        %v3261 = vld [vmem:[%s570 + $0x13d] sm:$0xff]
        %v3262 = vld [vmem:[%s570 + $0x145] sm:$0xff]
        %v3263 = vld [vmem:[%s570 + $0x155] sm:$0xff]
        %v3264 = vld [vmem:[%s570 + $0x15d] sm:$0xff]
        %v3265 = vld [vmem:[%s570 + $0x16d] sm:$0xff]
        %v3266 = vld [vmem:[%s570 + $0x175] sm:$0xff]
        %v3267 = vlaneseq
        %v3268 = vshrl.u32 %v3267, 7
        %v3269 = vsub.s32 0, %v3268
        %v3270 = vrot.slane %v3234, %v3269
        %v3271 = vmul.f32 %v3235, %v3270
        %v3272 = vmul.f32 %v3236, %v3270
        %v3273 = vmul.f32 %v3237, %v3270
        %v3274 = vmul.f32 %v3238, %v3270
        %v3275 = vmul.f32 %v3239, %v3270
        %v3276 = vmul.f32 %v3240, %v3270
        %v3277 = vmul.f32 %v3241, %v3270
        %v3278 = vmul.f32 %v3242, %v3270
        %v3279 = vmul.f32 %v3243, %v3270
        %v3280 = vmul.f32 %v3244, %v3270
        %v3281 = vmul.f32 %v3245, %v3270
        %v3282 = vmul.f32 %v3246, %v3270
        %v3283 = vmul.f32 %v3247, %v3270
        %v3284 = vmul.f32 %v3248, %v3270
        %v3285 = vmul.f32 %v3249, %v3270
        %v3286 = vmul.f32 %v3250, %v3270
        %v3287 = vmul.f32 %v3251, %v3270
        %v3288 = vmul.f32 %v3252, %v3270
        %v3289 = vmul.f32 %v3253, %v3270
        %v3290 = vmul.f32 %v3254, %v3270
        %v3291 = vmul.f32 %v3255, %v3270
        %v3292 = vmul.f32 %v3256, %v3270
        %v3293 = vmul.f32 %v3257, %v3270
        %v3294 = vmul.f32 %v3258, %v3270
        %v3295 = vmul.f32 %v3259, %v3270
        %v3296 = vmul.f32 %v3260, %v3270
        %v3297 = vmul.f32 %v3261, %v3270
        %v3298 = vmul.f32 %v3262, %v3270
        %v3299 = vmul.f32 %v3263, %v3270
        %v3300 = vmul.f32 %v3264, %v3270
        %v3301 = vmul.f32 %v3265, %v3270
        %v3302 = vmul.f32 %v3266, %v3270
        %v3303 = vadd.f32 %v3202, %v3271
        %v3304 = vadd.f32 %v3203, %v3272
        %v3305 = vadd.f32 %v3204, %v3273
        %v3306 = vadd.f32 %v3205, %v3274
        %v3307 = vadd.f32 %v3206, %v3275
        %v3308 = vadd.f32 %v3207, %v3276
        %v3309 = vadd.f32 %v3208, %v3277
        %v3310 = vadd.f32 %v3209, %v3278
        %v3311 = vadd.f32 %v3210, %v3279
        %v3312 = vadd.f32 %v3211, %v3280
        %v3313 = vadd.f32 %v3212, %v3281
        %v3314 = vadd.f32 %v3213, %v3282
        %v3315 = vadd.f32 %v3214, %v3283
        %v3316 = vadd.f32 %v3215, %v3284
        %v3317 = vadd.f32 %v3216, %v3285
        %v3318 = vadd.f32 %v3217, %v3286
        %v3319 = vadd.f32 %v3218, %v3287
        %v3320 = vadd.f32 %v3219, %v3288
        %v3321 = vadd.f32 %v3220, %v3289
        %v3322 = vadd.f32 %v3221, %v3290
        %v3323 = vadd.f32 %v3222, %v3291
        %v3324 = vadd.f32 %v3223, %v3292
        %v3325 = vadd.f32 %v3224, %v3293
        %v3326 = vadd.f32 %v3225, %v3294
        %v3327 = vadd.f32 %v3226, %v3295
        %v3328 = vadd.f32 %v3227, %v3296
        %v3329 = vadd.f32 %v3228, %v3297
        %v3330 = vadd.f32 %v3229, %v3298
        %v3331 = vadd.f32 %v3230, %v3299
        %v3332 = vadd.f32 %v3231, %v3300
        %v3333 = vadd.f32 %v3232, %v3301
        %v3334 = vadd.f32 %v3233, %v3302
        %v3335 = vld [vmem:[%s2728 + $0x6] sm:$0x1]
        %v3336 = vld [vmem:[%s570 + $0x6] sm:$0xff]
        %v3337 = vld [vmem:[%s570 + $0xe] sm:$0xff]
        %v3338 = vld [vmem:[%s570 + $0x1e] sm:$0xff]
        %v3339 = vld [vmem:[%s570 + $0x26] sm:$0xff]
        %v3340 = vld [vmem:[%s570 + $0x36] sm:$0xff]
        %v3341 = vld [vmem:[%s570 + $0x3e] sm:$0xff]
        %v3342 = vld [vmem:[%s570 + $0x4e] sm:$0xff]
        %v3343 = vld [vmem:[%s570 + $0x56] sm:$0xff]
        %v3344 = vld [vmem:[%s570 + $0x66] sm:$0xff]
        %v3345 = vld [vmem:[%s570 + $0x6e] sm:$0xff]
        %v3346 = vld [vmem:[%s570 + $0x7e] sm:$0xff]
        %v3347 = vld [vmem:[%s570 + $0x86] sm:$0xff]
        %v3348 = vld [vmem:[%s570 + $0x96] sm:$0xff]
        %v3349 = vld [vmem:[%s570 + $0x9e] sm:$0xff]
        %v3350 = vld [vmem:[%s570 + $0xae] sm:$0xff]
        %v3351 = vld [vmem:[%s570 + $0xb6] sm:$0xff]
        %v3352 = vld [vmem:[%s570 + $0xc6] sm:$0xff]
        %v3353 = vld [vmem:[%s570 + $0xce] sm:$0xff]
        %v3354 = vld [vmem:[%s570 + $0xde] sm:$0xff]
        %v3355 = vld [vmem:[%s570 + $0xe6] sm:$0xff]
        %v3356 = vld [vmem:[%s570 + $0xf6] sm:$0xff]
        %v3357 = vld [vmem:[%s570 + $0xfe] sm:$0xff]
        %v3358 = vld [vmem:[%s570 + $0x10e] sm:$0xff]
        %v3359 = vld [vmem:[%s570 + $0x116] sm:$0xff]
        %v3360 = vld [vmem:[%s570 + $0x126] sm:$0xff]
        %v3361 = vld [vmem:[%s570 + $0x12e] sm:$0xff]
        %v3362 = vld [vmem:[%s570 + $0x13e] sm:$0xff]
        %v3363 = vld [vmem:[%s570 + $0x146] sm:$0xff]
        %v3364 = vld [vmem:[%s570 + $0x156] sm:$0xff]
        %v3365 = vld [vmem:[%s570 + $0x15e] sm:$0xff]
        %v3366 = vld [vmem:[%s570 + $0x16e] sm:$0xff]
        %v3367 = vld [vmem:[%s570 + $0x176] sm:$0xff]
        %v3368 = vlaneseq
        %v3369 = vshrl.u32 %v3368, 7
        %v3370 = vsub.s32 0, %v3369
        %v3371 = vrot.slane %v3335, %v3370
        %v3372 = vmul.f32 %v3336, %v3371
        %v3373 = vmul.f32 %v3337, %v3371
        %v3374 = vmul.f32 %v3338, %v3371
        %v3375 = vmul.f32 %v3339, %v3371
        %v3376 = vmul.f32 %v3340, %v3371
        %v3377 = vmul.f32 %v3341, %v3371
        %v3378 = vmul.f32 %v3342, %v3371
        %v3379 = vmul.f32 %v3343, %v3371
        %v3380 = vmul.f32 %v3344, %v3371
        %v3381 = vmul.f32 %v3345, %v3371
        %v3382 = vmul.f32 %v3346, %v3371
        %v3383 = vmul.f32 %v3347, %v3371
        %v3384 = vmul.f32 %v3348, %v3371
        %v3385 = vmul.f32 %v3349, %v3371
        %v3386 = vmul.f32 %v3350, %v3371
        %v3387 = vmul.f32 %v3351, %v3371
        %v3388 = vmul.f32 %v3352, %v3371
        %v3389 = vmul.f32 %v3353, %v3371
        %v3390 = vmul.f32 %v3354, %v3371
        %v3391 = vmul.f32 %v3355, %v3371
        %v3392 = vmul.f32 %v3356, %v3371
        %v3393 = vmul.f32 %v3357, %v3371
        %v3394 = vmul.f32 %v3358, %v3371
        %v3395 = vmul.f32 %v3359, %v3371
        %v3396 = vmul.f32 %v3360, %v3371
        %v3397 = vmul.f32 %v3361, %v3371
        %v3398 = vmul.f32 %v3362, %v3371
        %v3399 = vmul.f32 %v3363, %v3371
        %v3400 = vmul.f32 %v3364, %v3371
        %v3401 = vmul.f32 %v3365, %v3371
        %v3402 = vmul.f32 %v3366, %v3371
        %v3403 = vmul.f32 %v3367, %v3371
        %v3404 = vadd.f32 %v3303, %v3372
        %v3405 = vadd.f32 %v3304, %v3373
        %v3406 = vadd.f32 %v3305, %v3374
        %v3407 = vadd.f32 %v3306, %v3375
        %v3408 = vadd.f32 %v3307, %v3376
        %v3409 = vadd.f32 %v3308, %v3377
        %v3410 = vadd.f32 %v3309, %v3378
        %v3411 = vadd.f32 %v3310, %v3379
        %v3412 = vadd.f32 %v3311, %v3380
        %v3413 = vadd.f32 %v3312, %v3381
        %v3414 = vadd.f32 %v3313, %v3382
        %v3415 = vadd.f32 %v3314, %v3383
        %v3416 = vadd.f32 %v3315, %v3384
        %v3417 = vadd.f32 %v3316, %v3385
        %v3418 = vadd.f32 %v3317, %v3386
        %v3419 = vadd.f32 %v3318, %v3387
        %v3420 = vadd.f32 %v3319, %v3388
        %v3421 = vadd.f32 %v3320, %v3389
        %v3422 = vadd.f32 %v3321, %v3390
        %v3423 = vadd.f32 %v3322, %v3391
        %v3424 = vadd.f32 %v3323, %v3392
        %v3425 = vadd.f32 %v3324, %v3393
        %v3426 = vadd.f32 %v3325, %v3394
        %v3427 = vadd.f32 %v3326, %v3395
        %v3428 = vadd.f32 %v3327, %v3396
        %v3429 = vadd.f32 %v3328, %v3397
        %v3430 = vadd.f32 %v3329, %v3398
        %v3431 = vadd.f32 %v3330, %v3399
        %v3432 = vadd.f32 %v3331, %v3400
        %v3433 = vadd.f32 %v3332, %v3401
        %v3434 = vadd.f32 %v3333, %v3402
        %v3435 = vadd.f32 %v3334, %v3403
        %s3436 = scalar_lea.vmem [#allocation6], 32
        %v3437 = vld [vmem:[%s3436] sm:$0x1]
        %s3438 = scalar_lea.vmem [#allocation2], 96
        %v3439 = vld [vmem:[%s3438] sm:$0xff]
        %v3440 = vld [vmem:[%s3438 + $0x8] sm:$0xff]
        %v3441 = vld [vmem:[%s3438 + $0x18] sm:$0xff]
        %v3442 = vld [vmem:[%s3438 + $0x20] sm:$0xff]
        %v3443 = vld [vmem:[%s3438 + $0x30] sm:$0xff]
        %v3444 = vld [vmem:[%s3438 + $0x38] sm:$0xff]
        %v3445 = vld [vmem:[%s3438 + $0x48] sm:$0xff]
        %v3446 = vld [vmem:[%s3438 + $0x50] sm:$0xff]
        %v3447 = vld [vmem:[%s3438 + $0x60] sm:$0xff]
        %v3448 = vld [vmem:[%s3438 + $0x68] sm:$0xff]
        %v3449 = vld [vmem:[%s3438 + $0x78] sm:$0xff]
        %v3450 = vld [vmem:[%s3438 + $0x80] sm:$0xff]
        %v3451 = vld [vmem:[%s3438 + $0x90] sm:$0xff]
        %v3452 = vld [vmem:[%s3438 + $0x98] sm:$0xff]
        %v3453 = vld [vmem:[%s3438 + $0xa8] sm:$0xff]
        %v3454 = vld [vmem:[%s3438 + $0xb0] sm:$0xff]
        %v3455 = vld [vmem:[%s3438 + $0xc0] sm:$0xff]
        %v3456 = vld [vmem:[%s3438 + $0xc8] sm:$0xff]
        %v3457 = vld [vmem:[%s3438 + $0xd8] sm:$0xff]
        %v3458 = vld [vmem:[%s3438 + $0xe0] sm:$0xff]
        %v3459 = vld [vmem:[%s3438 + $0xf0] sm:$0xff]
        %v3460 = vld [vmem:[%s3438 + $0xf8] sm:$0xff]
        %v3461 = vld [vmem:[%s3438 + $0x108] sm:$0xff]
        %v3462 = vld [vmem:[%s3438 + $0x110] sm:$0xff]
        %v3463 = vld [vmem:[%s3438 + $0x120] sm:$0xff]
        %v3464 = vld [vmem:[%s3438 + $0x128] sm:$0xff]
        %v3465 = vld [vmem:[%s3438 + $0x138] sm:$0xff]
        %v3466 = vld [vmem:[%s3438 + $0x140] sm:$0xff]
        %v3467 = vld [vmem:[%s3438 + $0x150] sm:$0xff]
        %v3468 = vld [vmem:[%s3438 + $0x158] sm:$0xff]
        %v3469 = vld [vmem:[%s3438 + $0x168] sm:$0xff]
        %v3470 = vld [vmem:[%s3438 + $0x170] sm:$0xff]
        %v3471 = vlaneseq
        %v3472 = vshrl.u32 %v3471, 7
        %v3473 = vsub.s32 0, %v3472
        %v3474 = vrot.slane %v3437, %v3473
        %v3475 = vmul.f32 %v3439, %v3474
        %v3476 = vmul.f32 %v3440, %v3474
        %v3477 = vmul.f32 %v3441, %v3474
        %v3478 = vmul.f32 %v3442, %v3474
        %v3479 = vmul.f32 %v3443, %v3474
        %v3480 = vmul.f32 %v3444, %v3474
        %v3481 = vmul.f32 %v3445, %v3474
        %v3482 = vmul.f32 %v3446, %v3474
        %v3483 = vmul.f32 %v3447, %v3474
        %v3484 = vmul.f32 %v3448, %v3474
        %v3485 = vmul.f32 %v3449, %v3474
        %v3486 = vmul.f32 %v3450, %v3474
        %v3487 = vmul.f32 %v3451, %v3474
        %v3488 = vmul.f32 %v3452, %v3474
        %v3489 = vmul.f32 %v3453, %v3474
        %v3490 = vmul.f32 %v3454, %v3474
        %v3491 = vmul.f32 %v3455, %v3474
        %v3492 = vmul.f32 %v3456, %v3474
        %v3493 = vmul.f32 %v3457, %v3474
        %v3494 = vmul.f32 %v3458, %v3474
        %v3495 = vmul.f32 %v3459, %v3474
        %v3496 = vmul.f32 %v3460, %v3474
        %v3497 = vmul.f32 %v3461, %v3474
        %v3498 = vmul.f32 %v3462, %v3474
        %v3499 = vmul.f32 %v3463, %v3474
        %v3500 = vmul.f32 %v3464, %v3474
        %v3501 = vmul.f32 %v3465, %v3474
        %v3502 = vmul.f32 %v3466, %v3474
        %v3503 = vmul.f32 %v3467, %v3474
        %v3504 = vmul.f32 %v3468, %v3474
        %v3505 = vmul.f32 %v3469, %v3474
        %v3506 = vmul.f32 %v3470, %v3474
        %v3507 = vadd.f32 %v3404, %v3475
        %v3508 = vadd.f32 %v3405, %v3476
        %v3509 = vadd.f32 %v3406, %v3477
        %v3510 = vadd.f32 %v3407, %v3478
        %v3511 = vadd.f32 %v3408, %v3479
        %v3512 = vadd.f32 %v3409, %v3480
        %v3513 = vadd.f32 %v3410, %v3481
        %v3514 = vadd.f32 %v3411, %v3482
        %v3515 = vadd.f32 %v3412, %v3483
        %v3516 = vadd.f32 %v3413, %v3484
        %v3517 = vadd.f32 %v3414, %v3485
        %v3518 = vadd.f32 %v3415, %v3486
        %v3519 = vadd.f32 %v3416, %v3487
        %v3520 = vadd.f32 %v3417, %v3488
        %v3521 = vadd.f32 %v3418, %v3489
        %v3522 = vadd.f32 %v3419, %v3490
        %v3523 = vadd.f32 %v3420, %v3491
        %v3524 = vadd.f32 %v3421, %v3492
        %v3525 = vadd.f32 %v3422, %v3493
        %v3526 = vadd.f32 %v3423, %v3494
        %v3527 = vadd.f32 %v3424, %v3495
        %v3528 = vadd.f32 %v3425, %v3496
        %v3529 = vadd.f32 %v3426, %v3497
        %v3530 = vadd.f32 %v3427, %v3498
        %v3531 = vadd.f32 %v3428, %v3499
        %v3532 = vadd.f32 %v3429, %v3500
        %v3533 = vadd.f32 %v3430, %v3501
        %v3534 = vadd.f32 %v3431, %v3502
        %v3535 = vadd.f32 %v3432, %v3503
        %v3536 = vadd.f32 %v3433, %v3504
        %v3537 = vadd.f32 %v3434, %v3505
        %v3538 = vadd.f32 %v3435, %v3506
        %v3539 = vld [vmem:[%s3436 + $0x1] sm:$0x1]
        %v3540 = vld [vmem:[%s3438 + $0x1] sm:$0xff]
        %v3541 = vld [vmem:[%s3438 + $0x9] sm:$0xff]
        %v3542 = vld [vmem:[%s3438 + $0x19] sm:$0xff]
        %v3543 = vld [vmem:[%s3438 + $0x21] sm:$0xff]
        %v3544 = vld [vmem:[%s3438 + $0x31] sm:$0xff]
        %v3545 = vld [vmem:[%s3438 + $0x39] sm:$0xff]
        %v3546 = vld [vmem:[%s3438 + $0x49] sm:$0xff]
        %v3547 = vld [vmem:[%s3438 + $0x51] sm:$0xff]
        %v3548 = vld [vmem:[%s3438 + $0x61] sm:$0xff]
        %v3549 = vld [vmem:[%s3438 + $0x69] sm:$0xff]
        %v3550 = vld [vmem:[%s3438 + $0x79] sm:$0xff]
        %v3551 = vld [vmem:[%s3438 + $0x81] sm:$0xff]
        %v3552 = vld [vmem:[%s3438 + $0x91] sm:$0xff]
        %v3553 = vld [vmem:[%s3438 + $0x99] sm:$0xff]
        %v3554 = vld [vmem:[%s3438 + $0xa9] sm:$0xff]
        %v3555 = vld [vmem:[%s3438 + $0xb1] sm:$0xff]
        %v3556 = vld [vmem:[%s3438 + $0xc1] sm:$0xff]
        %v3557 = vld [vmem:[%s3438 + $0xc9] sm:$0xff]
        %v3558 = vld [vmem:[%s3438 + $0xd9] sm:$0xff]
        %v3559 = vld [vmem:[%s3438 + $0xe1] sm:$0xff]
        %v3560 = vld [vmem:[%s3438 + $0xf1] sm:$0xff]
        %v3561 = vld [vmem:[%s3438 + $0xf9] sm:$0xff]
        %v3562 = vld [vmem:[%s3438 + $0x109] sm:$0xff]
        %v3563 = vld [vmem:[%s3438 + $0x111] sm:$0xff]
        %v3564 = vld [vmem:[%s3438 + $0x121] sm:$0xff]
        %v3565 = vld [vmem:[%s3438 + $0x129] sm:$0xff]
        %v3566 = vld [vmem:[%s3438 + $0x139] sm:$0xff]
        %v3567 = vld [vmem:[%s3438 + $0x141] sm:$0xff]
        %v3568 = vld [vmem:[%s3438 + $0x151] sm:$0xff]
        %v3569 = vld [vmem:[%s3438 + $0x159] sm:$0xff]
        %v3570 = vld [vmem:[%s3438 + $0x169] sm:$0xff]
        %v3571 = vld [vmem:[%s3438 + $0x171] sm:$0xff]
        %v3572 = vlaneseq
        %v3573 = vshrl.u32 %v3572, 7
        %v3574 = vsub.s32 0, %v3573
        %v3575 = vrot.slane %v3539, %v3574
        %v3576 = vmul.f32 %v3540, %v3575
        %v3577 = vmul.f32 %v3541, %v3575
        %v3578 = vmul.f32 %v3542, %v3575
        %v3579 = vmul.f32 %v3543, %v3575
        %v3580 = vmul.f32 %v3544, %v3575
        %v3581 = vmul.f32 %v3545, %v3575
        %v3582 = vmul.f32 %v3546, %v3575
        %v3583 = vmul.f32 %v3547, %v3575
        %v3584 = vmul.f32 %v3548, %v3575
        %v3585 = vmul.f32 %v3549, %v3575
        %v3586 = vmul.f32 %v3550, %v3575
        %v3587 = vmul.f32 %v3551, %v3575
        %v3588 = vmul.f32 %v3552, %v3575
        %v3589 = vmul.f32 %v3553, %v3575
        %v3590 = vmul.f32 %v3554, %v3575
        %v3591 = vmul.f32 %v3555, %v3575
        %v3592 = vmul.f32 %v3556, %v3575
        %v3593 = vmul.f32 %v3557, %v3575
        %v3594 = vmul.f32 %v3558, %v3575
        %v3595 = vmul.f32 %v3559, %v3575
        %v3596 = vmul.f32 %v3560, %v3575
        %v3597 = vmul.f32 %v3561, %v3575
        %v3598 = vmul.f32 %v3562, %v3575
        %v3599 = vmul.f32 %v3563, %v3575
        %v3600 = vmul.f32 %v3564, %v3575
        %v3601 = vmul.f32 %v3565, %v3575
        %v3602 = vmul.f32 %v3566, %v3575
        %v3603 = vmul.f32 %v3567, %v3575
        %v3604 = vmul.f32 %v3568, %v3575
        %v3605 = vmul.f32 %v3569, %v3575
        %v3606 = vmul.f32 %v3570, %v3575
        %v3607 = vmul.f32 %v3571, %v3575
        %v3608 = vadd.f32 %v3507, %v3576
        %v3609 = vadd.f32 %v3508, %v3577
        %v3610 = vadd.f32 %v3509, %v3578
        %v3611 = vadd.f32 %v3510, %v3579
        %v3612 = vadd.f32 %v3511, %v3580
        %v3613 = vadd.f32 %v3512, %v3581
        %v3614 = vadd.f32 %v3513, %v3582
        %v3615 = vadd.f32 %v3514, %v3583
        %v3616 = vadd.f32 %v3515, %v3584
        %v3617 = vadd.f32 %v3516, %v3585
        %v3618 = vadd.f32 %v3517, %v3586
        %v3619 = vadd.f32 %v3518, %v3587
        %v3620 = vadd.f32 %v3519, %v3588
        %v3621 = vadd.f32 %v3520, %v3589
        %v3622 = vadd.f32 %v3521, %v3590
        %v3623 = vadd.f32 %v3522, %v3591
        %v3624 = vadd.f32 %v3523, %v3592
        %v3625 = vadd.f32 %v3524, %v3593
        %v3626 = vadd.f32 %v3525, %v3594
        %v3627 = vadd.f32 %v3526, %v3595
        %v3628 = vadd.f32 %v3527, %v3596
        %v3629 = vadd.f32 %v3528, %v3597
        %v3630 = vadd.f32 %v3529, %v3598
        %v3631 = vadd.f32 %v3530, %v3599
        %v3632 = vadd.f32 %v3531, %v3600
        %v3633 = vadd.f32 %v3532, %v3601
        %v3634 = vadd.f32 %v3533, %v3602
        %v3635 = vadd.f32 %v3534, %v3603
        %v3636 = vadd.f32 %v3535, %v3604
        %v3637 = vadd.f32 %v3536, %v3605
        %v3638 = vadd.f32 %v3537, %v3606
        %v3639 = vadd.f32 %v3538, %v3607
        %v3640 = vld [vmem:[%s3436 + $0x2] sm:$0x1]
        %v3641 = vld [vmem:[%s3438 + $0x2] sm:$0xff]
        %v3642 = vld [vmem:[%s3438 + $0xa] sm:$0xff]
        %v3643 = vld [vmem:[%s3438 + $0x1a] sm:$0xff]
        %v3644 = vld [vmem:[%s3438 + $0x22] sm:$0xff]
        %v3645 = vld [vmem:[%s3438 + $0x32] sm:$0xff]
        %v3646 = vld [vmem:[%s3438 + $0x3a] sm:$0xff]
        %v3647 = vld [vmem:[%s3438 + $0x4a] sm:$0xff]
        %v3648 = vld [vmem:[%s3438 + $0x52] sm:$0xff]
        %v3649 = vld [vmem:[%s3438 + $0x62] sm:$0xff]
        %v3650 = vld [vmem:[%s3438 + $0x6a] sm:$0xff]
        %v3651 = vld [vmem:[%s3438 + $0x7a] sm:$0xff]
        %v3652 = vld [vmem:[%s3438 + $0x82] sm:$0xff]
        %v3653 = vld [vmem:[%s3438 + $0x92] sm:$0xff]
        %v3654 = vld [vmem:[%s3438 + $0x9a] sm:$0xff]
        %v3655 = vld [vmem:[%s3438 + $0xaa] sm:$0xff]
        %v3656 = vld [vmem:[%s3438 + $0xb2] sm:$0xff]
        %v3657 = vld [vmem:[%s3438 + $0xc2] sm:$0xff]
        %v3658 = vld [vmem:[%s3438 + $0xca] sm:$0xff]
        %v3659 = vld [vmem:[%s3438 + $0xda] sm:$0xff]
        %v3660 = vld [vmem:[%s3438 + $0xe2] sm:$0xff]
        %v3661 = vld [vmem:[%s3438 + $0xf2] sm:$0xff]
        %v3662 = vld [vmem:[%s3438 + $0xfa] sm:$0xff]
        %v3663 = vld [vmem:[%s3438 + $0x10a] sm:$0xff]
        %v3664 = vld [vmem:[%s3438 + $0x112] sm:$0xff]
        %v3665 = vld [vmem:[%s3438 + $0x122] sm:$0xff]
        %v3666 = vld [vmem:[%s3438 + $0x12a] sm:$0xff]
        %v3667 = vld [vmem:[%s3438 + $0x13a] sm:$0xff]
        %v3668 = vld [vmem:[%s3438 + $0x142] sm:$0xff]
        %v3669 = vld [vmem:[%s3438 + $0x152] sm:$0xff]
        %v3670 = vld [vmem:[%s3438 + $0x15a] sm:$0xff]
        %v3671 = vld [vmem:[%s3438 + $0x16a] sm:$0xff]
        %v3672 = vld [vmem:[%s3438 + $0x172] sm:$0xff]
        %v3673 = vlaneseq
        %v3674 = vshrl.u32 %v3673, 7
        %v3675 = vsub.s32 0, %v3674
        %v3676 = vrot.slane %v3640, %v3675
        %v3677 = vmul.f32 %v3641, %v3676
        %v3678 = vmul.f32 %v3642, %v3676
        %v3679 = vmul.f32 %v3643, %v3676
        %v3680 = vmul.f32 %v3644, %v3676
        %v3681 = vmul.f32 %v3645, %v3676
        %v3682 = vmul.f32 %v3646, %v3676
        %v3683 = vmul.f32 %v3647, %v3676
        %v3684 = vmul.f32 %v3648, %v3676
        %v3685 = vmul.f32 %v3649, %v3676
        %v3686 = vmul.f32 %v3650, %v3676
        %v3687 = vmul.f32 %v3651, %v3676
        %v3688 = vmul.f32 %v3652, %v3676
        %v3689 = vmul.f32 %v3653, %v3676
        %v3690 = vmul.f32 %v3654, %v3676
        %v3691 = vmul.f32 %v3655, %v3676
        %v3692 = vmul.f32 %v3656, %v3676
        %v3693 = vmul.f32 %v3657, %v3676
        %v3694 = vmul.f32 %v3658, %v3676
        %v3695 = vmul.f32 %v3659, %v3676
        %v3696 = vmul.f32 %v3660, %v3676
        %v3697 = vmul.f32 %v3661, %v3676
        %v3698 = vmul.f32 %v3662, %v3676
        %v3699 = vmul.f32 %v3663, %v3676
        %v3700 = vmul.f32 %v3664, %v3676
        %v3701 = vmul.f32 %v3665, %v3676
        %v3702 = vmul.f32 %v3666, %v3676
        %v3703 = vmul.f32 %v3667, %v3676
        %v3704 = vmul.f32 %v3668, %v3676
        %v3705 = vmul.f32 %v3669, %v3676
        %v3706 = vmul.f32 %v3670, %v3676
        %v3707 = vmul.f32 %v3671, %v3676
        %v3708 = vmul.f32 %v3672, %v3676
        %v3709 = vadd.f32 %v3608, %v3677
        %v3710 = vadd.f32 %v3609, %v3678
        %v3711 = vadd.f32 %v3610, %v3679
        %v3712 = vadd.f32 %v3611, %v3680
        %v3713 = vadd.f32 %v3612, %v3681
        %v3714 = vadd.f32 %v3613, %v3682
        %v3715 = vadd.f32 %v3614, %v3683
        %v3716 = vadd.f32 %v3615, %v3684
        %v3717 = vadd.f32 %v3616, %v3685
        %v3718 = vadd.f32 %v3617, %v3686
        %v3719 = vadd.f32 %v3618, %v3687
        %v3720 = vadd.f32 %v3619, %v3688
        %v3721 = vadd.f32 %v3620, %v3689
        %v3722 = vadd.f32 %v3621, %v3690
        %v3723 = vadd.f32 %v3622, %v3691
        %v3724 = vadd.f32 %v3623, %v3692
        %v3725 = vadd.f32 %v3624, %v3693
        %v3726 = vadd.f32 %v3625, %v3694
        %v3727 = vadd.f32 %v3626, %v3695
        %v3728 = vadd.f32 %v3627, %v3696
        %v3729 = vadd.f32 %v3628, %v3697
        %v3730 = vadd.f32 %v3629, %v3698
        %v3731 = vadd.f32 %v3630, %v3699
        %v3732 = vadd.f32 %v3631, %v3700
        %v3733 = vadd.f32 %v3632, %v3701
        %v3734 = vadd.f32 %v3633, %v3702
        %v3735 = vadd.f32 %v3634, %v3703
        %v3736 = vadd.f32 %v3635, %v3704
        %v3737 = vadd.f32 %v3636, %v3705
        %v3738 = vadd.f32 %v3637, %v3706
        %v3739 = vadd.f32 %v3638, %v3707
        %v3740 = vadd.f32 %v3639, %v3708
        %v3741 = vld [vmem:[%s3436 + $0x3] sm:$0x1]
        %v3742 = vld [vmem:[%s3438 + $0x3] sm:$0xff]
        %v3743 = vld [vmem:[%s3438 + $0xb] sm:$0xff]
        %v3744 = vld [vmem:[%s3438 + $0x1b] sm:$0xff]
        %v3745 = vld [vmem:[%s3438 + $0x23] sm:$0xff]
        %v3746 = vld [vmem:[%s3438 + $0x33] sm:$0xff]
        %v3747 = vld [vmem:[%s3438 + $0x3b] sm:$0xff]
        %v3748 = vld [vmem:[%s3438 + $0x4b] sm:$0xff]
        %v3749 = vld [vmem:[%s3438 + $0x53] sm:$0xff]
        %v3750 = vld [vmem:[%s3438 + $0x63] sm:$0xff]
        %v3751 = vld [vmem:[%s3438 + $0x6b] sm:$0xff]
        %v3752 = vld [vmem:[%s3438 + $0x7b] sm:$0xff]
        %v3753 = vld [vmem:[%s3438 + $0x83] sm:$0xff]
        %v3754 = vld [vmem:[%s3438 + $0x93] sm:$0xff]
        %v3755 = vld [vmem:[%s3438 + $0x9b] sm:$0xff]
        %v3756 = vld [vmem:[%s3438 + $0xab] sm:$0xff]
        %v3757 = vld [vmem:[%s3438 + $0xb3] sm:$0xff]
        %v3758 = vld [vmem:[%s3438 + $0xc3] sm:$0xff]
        %v3759 = vld [vmem:[%s3438 + $0xcb] sm:$0xff]
        %v3760 = vld [vmem:[%s3438 + $0xdb] sm:$0xff]
        %v3761 = vld [vmem:[%s3438 + $0xe3] sm:$0xff]
        %v3762 = vld [vmem:[%s3438 + $0xf3] sm:$0xff]
        %v3763 = vld [vmem:[%s3438 + $0xfb] sm:$0xff]
        %v3764 = vld [vmem:[%s3438 + $0x10b] sm:$0xff]
        %v3765 = vld [vmem:[%s3438 + $0x113] sm:$0xff]
        %v3766 = vld [vmem:[%s3438 + $0x123] sm:$0xff]
        %v3767 = vld [vmem:[%s3438 + $0x12b] sm:$0xff]
        %v3768 = vld [vmem:[%s3438 + $0x13b] sm:$0xff]
        %v3769 = vld [vmem:[%s3438 + $0x143] sm:$0xff]
        %v3770 = vld [vmem:[%s3438 + $0x153] sm:$0xff]
        %v3771 = vld [vmem:[%s3438 + $0x15b] sm:$0xff]
        %v3772 = vld [vmem:[%s3438 + $0x16b] sm:$0xff]
        %v3773 = vld [vmem:[%s3438 + $0x173] sm:$0xff]
        %v3774 = vlaneseq
        %v3775 = vshrl.u32 %v3774, 7
        %v3776 = vsub.s32 0, %v3775
        %v3777 = vrot.slane %v3741, %v3776
        %v3778 = vmul.f32 %v3742, %v3777
        %v3779 = vmul.f32 %v3743, %v3777
        %v3780 = vmul.f32 %v3744, %v3777
        %v3781 = vmul.f32 %v3745, %v3777
        %v3782 = vmul.f32 %v3746, %v3777
        %v3783 = vmul.f32 %v3747, %v3777
        %v3784 = vmul.f32 %v3748, %v3777
        %v3785 = vmul.f32 %v3749, %v3777
        %v3786 = vmul.f32 %v3750, %v3777
        %v3787 = vmul.f32 %v3751, %v3777
        %v3788 = vmul.f32 %v3752, %v3777
        %v3789 = vmul.f32 %v3753, %v3777
        %v3790 = vmul.f32 %v3754, %v3777
        %v3791 = vmul.f32 %v3755, %v3777
        %v3792 = vmul.f32 %v3756, %v3777
        %v3793 = vmul.f32 %v3757, %v3777
        %v3794 = vmul.f32 %v3758, %v3777
        %v3795 = vmul.f32 %v3759, %v3777
        %v3796 = vmul.f32 %v3760, %v3777
        %v3797 = vmul.f32 %v3761, %v3777
        %v3798 = vmul.f32 %v3762, %v3777
        %v3799 = vmul.f32 %v3763, %v3777
        %v3800 = vmul.f32 %v3764, %v3777
        %v3801 = vmul.f32 %v3765, %v3777
        %v3802 = vmul.f32 %v3766, %v3777
        %v3803 = vmul.f32 %v3767, %v3777
        %v3804 = vmul.f32 %v3768, %v3777
        %v3805 = vmul.f32 %v3769, %v3777
        %v3806 = vmul.f32 %v3770, %v3777
        %v3807 = vmul.f32 %v3771, %v3777
        %v3808 = vmul.f32 %v3772, %v3777
        %v3809 = vmul.f32 %v3773, %v3777
        %v3810 = vadd.f32 %v3709, %v3778
        %v3811 = vadd.f32 %v3710, %v3779
        %v3812 = vadd.f32 %v3711, %v3780
        %v3813 = vadd.f32 %v3712, %v3781
        %v3814 = vadd.f32 %v3713, %v3782
        %v3815 = vadd.f32 %v3714, %v3783
        %v3816 = vadd.f32 %v3715, %v3784
        %v3817 = vadd.f32 %v3716, %v3785
        %v3818 = vadd.f32 %v3717, %v3786
        %v3819 = vadd.f32 %v3718, %v3787
        %v3820 = vadd.f32 %v3719, %v3788
        %v3821 = vadd.f32 %v3720, %v3789
        %v3822 = vadd.f32 %v3721, %v3790
        %v3823 = vadd.f32 %v3722, %v3791
        %v3824 = vadd.f32 %v3723, %v3792
        %v3825 = vadd.f32 %v3724, %v3793
        %v3826 = vadd.f32 %v3725, %v3794
        %v3827 = vadd.f32 %v3726, %v3795
        %v3828 = vadd.f32 %v3727, %v3796
        %v3829 = vadd.f32 %v3728, %v3797
        %v3830 = vadd.f32 %v3729, %v3798
        %v3831 = vadd.f32 %v3730, %v3799
        %v3832 = vadd.f32 %v3731, %v3800
        %v3833 = vadd.f32 %v3732, %v3801
        %v3834 = vadd.f32 %v3733, %v3802
        %v3835 = vadd.f32 %v3734, %v3803
        %v3836 = vadd.f32 %v3735, %v3804
        %v3837 = vadd.f32 %v3736, %v3805
        %v3838 = vadd.f32 %v3737, %v3806
        %v3839 = vadd.f32 %v3738, %v3807
        %v3840 = vadd.f32 %v3739, %v3808
        %v3841 = vadd.f32 %v3740, %v3809
        %v3842 = vld [vmem:[%s3436 + $0x4] sm:$0x1]
        %v3843 = vld [vmem:[%s3438 + $0x4] sm:$0xff]
        %v3844 = vld [vmem:[%s3438 + $0xc] sm:$0xff]
        %v3845 = vld [vmem:[%s3438 + $0x1c] sm:$0xff]
        %v3846 = vld [vmem:[%s3438 + $0x24] sm:$0xff]
        %v3847 = vld [vmem:[%s3438 + $0x34] sm:$0xff]
        %v3848 = vld [vmem:[%s3438 + $0x3c] sm:$0xff]
        %v3849 = vld [vmem:[%s3438 + $0x4c] sm:$0xff]
        %v3850 = vld [vmem:[%s3438 + $0x54] sm:$0xff]
        %v3851 = vld [vmem:[%s3438 + $0x64] sm:$0xff]
        %v3852 = vld [vmem:[%s3438 + $0x6c] sm:$0xff]
        %v3853 = vld [vmem:[%s3438 + $0x7c] sm:$0xff]
        %v3854 = vld [vmem:[%s3438 + $0x84] sm:$0xff]
        %v3855 = vld [vmem:[%s3438 + $0x94] sm:$0xff]
        %v3856 = vld [vmem:[%s3438 + $0x9c] sm:$0xff]
        %v3857 = vld [vmem:[%s3438 + $0xac] sm:$0xff]
        %v3858 = vld [vmem:[%s3438 + $0xb4] sm:$0xff]
        %v3859 = vld [vmem:[%s3438 + $0xc4] sm:$0xff]
        %v3860 = vld [vmem:[%s3438 + $0xcc] sm:$0xff]
        %v3861 = vld [vmem:[%s3438 + $0xdc] sm:$0xff]
        %v3862 = vld [vmem:[%s3438 + $0xe4] sm:$0xff]
        %v3863 = vld [vmem:[%s3438 + $0xf4] sm:$0xff]
        %v3864 = vld [vmem:[%s3438 + $0xfc] sm:$0xff]
        %v3865 = vld [vmem:[%s3438 + $0x10c] sm:$0xff]
        %v3866 = vld [vmem:[%s3438 + $0x114] sm:$0xff]
        %v3867 = vld [vmem:[%s3438 + $0x124] sm:$0xff]
        %v3868 = vld [vmem:[%s3438 + $0x12c] sm:$0xff]
        %v3869 = vld [vmem:[%s3438 + $0x13c] sm:$0xff]
        %v3870 = vld [vmem:[%s3438 + $0x144] sm:$0xff]
        %v3871 = vld [vmem:[%s3438 + $0x154] sm:$0xff]
        %v3872 = vld [vmem:[%s3438 + $0x15c] sm:$0xff]
        %v3873 = vld [vmem:[%s3438 + $0x16c] sm:$0xff]
        %v3874 = vld [vmem:[%s3438 + $0x174] sm:$0xff]
        %v3875 = vlaneseq
        %v3876 = vshrl.u32 %v3875, 7
        %v3877 = vsub.s32 0, %v3876
        %v3878 = vrot.slane %v3842, %v3877
        %v3879 = vmul.f32 %v3843, %v3878
        %v3880 = vmul.f32 %v3844, %v3878
        %v3881 = vmul.f32 %v3845, %v3878
        %v3882 = vmul.f32 %v3846, %v3878
        %v3883 = vmul.f32 %v3847, %v3878
        %v3884 = vmul.f32 %v3848, %v3878
        %v3885 = vmul.f32 %v3849, %v3878
        %v3886 = vmul.f32 %v3850, %v3878
        %v3887 = vmul.f32 %v3851, %v3878
        %v3888 = vmul.f32 %v3852, %v3878
        %v3889 = vmul.f32 %v3853, %v3878
        %v3890 = vmul.f32 %v3854, %v3878
        %v3891 = vmul.f32 %v3855, %v3878
        %v3892 = vmul.f32 %v3856, %v3878
        %v3893 = vmul.f32 %v3857, %v3878
        %v3894 = vmul.f32 %v3858, %v3878
        %v3895 = vmul.f32 %v3859, %v3878
        %v3896 = vmul.f32 %v3860, %v3878
        %v3897 = vmul.f32 %v3861, %v3878
        %v3898 = vmul.f32 %v3862, %v3878
        %v3899 = vmul.f32 %v3863, %v3878
        %v3900 = vmul.f32 %v3864, %v3878
        %v3901 = vmul.f32 %v3865, %v3878
        %v3902 = vmul.f32 %v3866, %v3878
        %v3903 = vmul.f32 %v3867, %v3878
        %v3904 = vmul.f32 %v3868, %v3878
        %v3905 = vmul.f32 %v3869, %v3878
        %v3906 = vmul.f32 %v3870, %v3878
        %v3907 = vmul.f32 %v3871, %v3878
        %v3908 = vmul.f32 %v3872, %v3878
        %v3909 = vmul.f32 %v3873, %v3878
        %v3910 = vmul.f32 %v3874, %v3878
        %v3911 = vadd.f32 %v3810, %v3879
        %v3912 = vadd.f32 %v3811, %v3880
        %v3913 = vadd.f32 %v3812, %v3881
        %v3914 = vadd.f32 %v3813, %v3882
        %v3915 = vadd.f32 %v3814, %v3883
        %v3916 = vadd.f32 %v3815, %v3884
        %v3917 = vadd.f32 %v3816, %v3885
        %v3918 = vadd.f32 %v3817, %v3886
        %v3919 = vadd.f32 %v3818, %v3887
        %v3920 = vadd.f32 %v3819, %v3888
        %v3921 = vadd.f32 %v3820, %v3889
        %v3922 = vadd.f32 %v3821, %v3890
        %v3923 = vadd.f32 %v3822, %v3891
        %v3924 = vadd.f32 %v3823, %v3892
        %v3925 = vadd.f32 %v3824, %v3893
        %v3926 = vadd.f32 %v3825, %v3894
        %v3927 = vadd.f32 %v3826, %v3895
        %v3928 = vadd.f32 %v3827, %v3896
        %v3929 = vadd.f32 %v3828, %v3897
        %v3930 = vadd.f32 %v3829, %v3898
        %v3931 = vadd.f32 %v3830, %v3899
        %v3932 = vadd.f32 %v3831, %v3900
        %v3933 = vadd.f32 %v3832, %v3901
        %v3934 = vadd.f32 %v3833, %v3902
        %v3935 = vadd.f32 %v3834, %v3903
        %v3936 = vadd.f32 %v3835, %v3904
        %v3937 = vadd.f32 %v3836, %v3905
        %v3938 = vadd.f32 %v3837, %v3906
        %v3939 = vadd.f32 %v3838, %v3907
        %v3940 = vadd.f32 %v3839, %v3908
        %v3941 = vadd.f32 %v3840, %v3909
        %v3942 = vadd.f32 %v3841, %v3910
        %v3943 = vld [vmem:[%s3436 + $0x5] sm:$0x1]
        %v3944 = vld [vmem:[%s3438 + $0x5] sm:$0xff]
        %v3945 = vld [vmem:[%s3438 + $0xd] sm:$0xff]
        %v3946 = vld [vmem:[%s3438 + $0x1d] sm:$0xff]
        %v3947 = vld [vmem:[%s3438 + $0x25] sm:$0xff]
        %v3948 = vld [vmem:[%s3438 + $0x35] sm:$0xff]
        %v3949 = vld [vmem:[%s3438 + $0x3d] sm:$0xff]
        %v3950 = vld [vmem:[%s3438 + $0x4d] sm:$0xff]
        %v3951 = vld [vmem:[%s3438 + $0x55] sm:$0xff]
        %v3952 = vld [vmem:[%s3438 + $0x65] sm:$0xff]
        %v3953 = vld [vmem:[%s3438 + $0x6d] sm:$0xff]
        %v3954 = vld [vmem:[%s3438 + $0x7d] sm:$0xff]
        %v3955 = vld [vmem:[%s3438 + $0x85] sm:$0xff]
        %v3956 = vld [vmem:[%s3438 + $0x95] sm:$0xff]
        %v3957 = vld [vmem:[%s3438 + $0x9d] sm:$0xff]
        %v3958 = vld [vmem:[%s3438 + $0xad] sm:$0xff]
        %v3959 = vld [vmem:[%s3438 + $0xb5] sm:$0xff]
        %v3960 = vld [vmem:[%s3438 + $0xc5] sm:$0xff]
        %v3961 = vld [vmem:[%s3438 + $0xcd] sm:$0xff]
        %v3962 = vld [vmem:[%s3438 + $0xdd] sm:$0xff]
        %v3963 = vld [vmem:[%s3438 + $0xe5] sm:$0xff]
        %v3964 = vld [vmem:[%s3438 + $0xf5] sm:$0xff]
        %v3965 = vld [vmem:[%s3438 + $0xfd] sm:$0xff]
        %v3966 = vld [vmem:[%s3438 + $0x10d] sm:$0xff]
        %v3967 = vld [vmem:[%s3438 + $0x115] sm:$0xff]
        %v3968 = vld [vmem:[%s3438 + $0x125] sm:$0xff]
        %v3969 = vld [vmem:[%s3438 + $0x12d] sm:$0xff]
        %v3970 = vld [vmem:[%s3438 + $0x13d] sm:$0xff]
        %v3971 = vld [vmem:[%s3438 + $0x145] sm:$0xff]
        %v3972 = vld [vmem:[%s3438 + $0x155] sm:$0xff]
        %v3973 = vld [vmem:[%s3438 + $0x15d] sm:$0xff]
        %v3974 = vld [vmem:[%s3438 + $0x16d] sm:$0xff]
        %v3975 = vld [vmem:[%s3438 + $0x175] sm:$0xff]
        %v3976 = vlaneseq
        %v3977 = vshrl.u32 %v3976, 7
        %v3978 = vsub.s32 0, %v3977
        %v3979 = vrot.slane %v3943, %v3978
        %v3980 = vmul.f32 %v3944, %v3979
        %v3981 = vmul.f32 %v3945, %v3979
        %v3982 = vmul.f32 %v3946, %v3979
        %v3983 = vmul.f32 %v3947, %v3979
        %v3984 = vmul.f32 %v3948, %v3979
        %v3985 = vmul.f32 %v3949, %v3979
        %v3986 = vmul.f32 %v3950, %v3979
        %v3987 = vmul.f32 %v3951, %v3979
        %v3988 = vmul.f32 %v3952, %v3979
        %v3989 = vmul.f32 %v3953, %v3979
        %v3990 = vmul.f32 %v3954, %v3979
        %v3991 = vmul.f32 %v3955, %v3979
        %v3992 = vmul.f32 %v3956, %v3979
        %v3993 = vmul.f32 %v3957, %v3979
        %v3994 = vmul.f32 %v3958, %v3979
        %v3995 = vmul.f32 %v3959, %v3979
        %v3996 = vmul.f32 %v3960, %v3979
        %v3997 = vmul.f32 %v3961, %v3979
        %v3998 = vmul.f32 %v3962, %v3979
        %v3999 = vmul.f32 %v3963, %v3979
        %v4000 = vmul.f32 %v3964, %v3979
        %v4001 = vmul.f32 %v3965, %v3979
        %v4002 = vmul.f32 %v3966, %v3979
        %v4003 = vmul.f32 %v3967, %v3979
        %v4004 = vmul.f32 %v3968, %v3979
        %v4005 = vmul.f32 %v3969, %v3979
        %v4006 = vmul.f32 %v3970, %v3979
        %v4007 = vmul.f32 %v3971, %v3979
        %v4008 = vmul.f32 %v3972, %v3979
        %v4009 = vmul.f32 %v3973, %v3979
        %v4010 = vmul.f32 %v3974, %v3979
        %v4011 = vmul.f32 %v3975, %v3979
        %v4012 = vadd.f32 %v3911, %v3980
        %v4013 = vadd.f32 %v3912, %v3981
        %v4014 = vadd.f32 %v3913, %v3982
        %v4015 = vadd.f32 %v3914, %v3983
        %v4016 = vadd.f32 %v3915, %v3984
        %v4017 = vadd.f32 %v3916, %v3985
        %v4018 = vadd.f32 %v3917, %v3986
        %v4019 = vadd.f32 %v3918, %v3987
        %v4020 = vadd.f32 %v3919, %v3988
        %v4021 = vadd.f32 %v3920, %v3989
        %v4022 = vadd.f32 %v3921, %v3990
        %v4023 = vadd.f32 %v3922, %v3991
        %v4024 = vadd.f32 %v3923, %v3992
        %v4025 = vadd.f32 %v3924, %v3993
        %v4026 = vadd.f32 %v3925, %v3994
        %v4027 = vadd.f32 %v3926, %v3995
        %v4028 = vadd.f32 %v3927, %v3996
        %v4029 = vadd.f32 %v3928, %v3997
        %v4030 = vadd.f32 %v3929, %v3998
        %v4031 = vadd.f32 %v3930, %v3999
        %v4032 = vadd.f32 %v3931, %v4000
        %v4033 = vadd.f32 %v3932, %v4001
        %v4034 = vadd.f32 %v3933, %v4002
        %v4035 = vadd.f32 %v3934, %v4003
        %v4036 = vadd.f32 %v3935, %v4004
        %v4037 = vadd.f32 %v3936, %v4005
        %v4038 = vadd.f32 %v3937, %v4006
        %v4039 = vadd.f32 %v3938, %v4007
        %v4040 = vadd.f32 %v3939, %v4008
        %v4041 = vadd.f32 %v3940, %v4009
        %v4042 = vadd.f32 %v3941, %v4010
        %v4043 = vadd.f32 %v3942, %v4011
        %v4044 = vld [vmem:[%s3436 + $0x6] sm:$0x1]
        %v4045 = vld [vmem:[%s3438 + $0x6] sm:$0xff]
        %v4046 = vld [vmem:[%s3438 + $0xe] sm:$0xff]
        %v4047 = vld [vmem:[%s3438 + $0x1e] sm:$0xff]
        %v4048 = vld [vmem:[%s3438 + $0x26] sm:$0xff]
        %v4049 = vld [vmem:[%s3438 + $0x36] sm:$0xff]
        %v4050 = vld [vmem:[%s3438 + $0x3e] sm:$0xff]
        %v4051 = vld [vmem:[%s3438 + $0x4e] sm:$0xff]
        %v4052 = vld [vmem:[%s3438 + $0x56] sm:$0xff]
        %v4053 = vld [vmem:[%s3438 + $0x66] sm:$0xff]
        %v4054 = vld [vmem:[%s3438 + $0x6e] sm:$0xff]
        %v4055 = vld [vmem:[%s3438 + $0x7e] sm:$0xff]
        %v4056 = vld [vmem:[%s3438 + $0x86] sm:$0xff]
        %v4057 = vld [vmem:[%s3438 + $0x96] sm:$0xff]
        %v4058 = vld [vmem:[%s3438 + $0x9e] sm:$0xff]
        %v4059 = vld [vmem:[%s3438 + $0xae] sm:$0xff]
        %v4060 = vld [vmem:[%s3438 + $0xb6] sm:$0xff]
        %v4061 = vld [vmem:[%s3438 + $0xc6] sm:$0xff]
        %v4062 = vld [vmem:[%s3438 + $0xce] sm:$0xff]
        %v4063 = vld [vmem:[%s3438 + $0xde] sm:$0xff]
        %v4064 = vld [vmem:[%s3438 + $0xe6] sm:$0xff]
        %v4065 = vld [vmem:[%s3438 + $0xf6] sm:$0xff]
        %v4066 = vld [vmem:[%s3438 + $0xfe] sm:$0xff]
        %v4067 = vld [vmem:[%s3438 + $0x10e] sm:$0xff]
        %v4068 = vld [vmem:[%s3438 + $0x116] sm:$0xff]
        %v4069 = vld [vmem:[%s3438 + $0x126] sm:$0xff]
        %v4070 = vld [vmem:[%s3438 + $0x12e] sm:$0xff]
        %v4071 = vld [vmem:[%s3438 + $0x13e] sm:$0xff]
        %v4072 = vld [vmem:[%s3438 + $0x146] sm:$0xff]
        %v4073 = vld [vmem:[%s3438 + $0x156] sm:$0xff]
        %v4074 = vld [vmem:[%s3438 + $0x15e] sm:$0xff]
        %v4075 = vld [vmem:[%s3438 + $0x16e] sm:$0xff]
        %v4076 = vld [vmem:[%s3438 + $0x176] sm:$0xff]
        %v4077 = vlaneseq
        %v4078 = vshrl.u32 %v4077, 7
        %v4079 = vsub.s32 0, %v4078
        %v4080 = vrot.slane %v4044, %v4079
        %v4081 = vmul.f32 %v4045, %v4080
        %v4082 = vmul.f32 %v4046, %v4080
        %v4083 = vmul.f32 %v4047, %v4080
        %v4084 = vmul.f32 %v4048, %v4080
        %v4085 = vmul.f32 %v4049, %v4080
        %v4086 = vmul.f32 %v4050, %v4080
        %v4087 = vmul.f32 %v4051, %v4080
        %v4088 = vmul.f32 %v4052, %v4080
        %v4089 = vmul.f32 %v4053, %v4080
        %v4090 = vmul.f32 %v4054, %v4080
        %v4091 = vmul.f32 %v4055, %v4080
        %v4092 = vmul.f32 %v4056, %v4080
        %v4093 = vmul.f32 %v4057, %v4080
        %v4094 = vmul.f32 %v4058, %v4080
        %v4095 = vmul.f32 %v4059, %v4080
        %v4096 = vmul.f32 %v4060, %v4080
        %v4097 = vmul.f32 %v4061, %v4080
        %v4098 = vmul.f32 %v4062, %v4080
        %v4099 = vmul.f32 %v4063, %v4080
        %v4100 = vmul.f32 %v4064, %v4080
        %v4101 = vmul.f32 %v4065, %v4080
        %v4102 = vmul.f32 %v4066, %v4080
        %v4103 = vmul.f32 %v4067, %v4080
        %v4104 = vmul.f32 %v4068, %v4080
        %v4105 = vmul.f32 %v4069, %v4080
        %v4106 = vmul.f32 %v4070, %v4080
        %v4107 = vmul.f32 %v4071, %v4080
        %v4108 = vmul.f32 %v4072, %v4080
        %v4109 = vmul.f32 %v4073, %v4080
        %v4110 = vmul.f32 %v4074, %v4080
        %v4111 = vmul.f32 %v4075, %v4080
        %v4112 = vmul.f32 %v4076, %v4080
        %v4113 = vadd.f32 %v4012, %v4081
        %v4114 = vadd.f32 %v4013, %v4082
        %v4115 = vadd.f32 %v4014, %v4083
        %v4116 = vadd.f32 %v4015, %v4084
        %v4117 = vadd.f32 %v4016, %v4085
        %v4118 = vadd.f32 %v4017, %v4086
        %v4119 = vadd.f32 %v4018, %v4087
        %v4120 = vadd.f32 %v4019, %v4088
        %v4121 = vadd.f32 %v4020, %v4089
        %v4122 = vadd.f32 %v4021, %v4090
        %v4123 = vadd.f32 %v4022, %v4091
        %v4124 = vadd.f32 %v4023, %v4092
        %v4125 = vadd.f32 %v4024, %v4093
        %v4126 = vadd.f32 %v4025, %v4094
        %v4127 = vadd.f32 %v4026, %v4095
        %v4128 = vadd.f32 %v4027, %v4096
        %v4129 = vadd.f32 %v4028, %v4097
        %v4130 = vadd.f32 %v4029, %v4098
        %v4131 = vadd.f32 %v4030, %v4099
        %v4132 = vadd.f32 %v4031, %v4100
        %v4133 = vadd.f32 %v4032, %v4101
        %v4134 = vadd.f32 %v4033, %v4102
        %v4135 = vadd.f32 %v4034, %v4103
        %v4136 = vadd.f32 %v4035, %v4104
        %v4137 = vadd.f32 %v4036, %v4105
        %v4138 = vadd.f32 %v4037, %v4106
        %v4139 = vadd.f32 %v4038, %v4107
        %v4140 = vadd.f32 %v4039, %v4108
        %v4141 = vadd.f32 %v4040, %v4109
        %v4142 = vadd.f32 %v4041, %v4110
        %v4143 = vadd.f32 %v4042, %v4111
        %v4144 = vadd.f32 %v4043, %v4112
        %s4145 = scalar_lea.vmem [#allocation6], 40
        %v4146 = vld [vmem:[%s4145] sm:$0x1]
        %s4147 = scalar_lea.vmem [#allocation2], 120
        %v4148 = vld [vmem:[%s4147] sm:$0xff]
        %v4149 = vld [vmem:[%s4147 + $0x8] sm:$0xff]
        %v4150 = vld [vmem:[%s4147 + $0x18] sm:$0xff]
        %v4151 = vld [vmem:[%s4147 + $0x20] sm:$0xff]
        %v4152 = vld [vmem:[%s4147 + $0x30] sm:$0xff]
        %v4153 = vld [vmem:[%s4147 + $0x38] sm:$0xff]
        %v4154 = vld [vmem:[%s4147 + $0x48] sm:$0xff]
        %v4155 = vld [vmem:[%s4147 + $0x50] sm:$0xff]
        %v4156 = vld [vmem:[%s4147 + $0x60] sm:$0xff]
        %v4157 = vld [vmem:[%s4147 + $0x68] sm:$0xff]
        %v4158 = vld [vmem:[%s4147 + $0x78] sm:$0xff]
        %v4159 = vld [vmem:[%s4147 + $0x80] sm:$0xff]
        %v4160 = vld [vmem:[%s4147 + $0x90] sm:$0xff]
        %v4161 = vld [vmem:[%s4147 + $0x98] sm:$0xff]
        %v4162 = vld [vmem:[%s4147 + $0xa8] sm:$0xff]
        %v4163 = vld [vmem:[%s4147 + $0xb0] sm:$0xff]
        %v4164 = vld [vmem:[%s4147 + $0xc0] sm:$0xff]
        %v4165 = vld [vmem:[%s4147 + $0xc8] sm:$0xff]
        %v4166 = vld [vmem:[%s4147 + $0xd8] sm:$0xff]
        %v4167 = vld [vmem:[%s4147 + $0xe0] sm:$0xff]
        %v4168 = vld [vmem:[%s4147 + $0xf0] sm:$0xff]
        %v4169 = vld [vmem:[%s4147 + $0xf8] sm:$0xff]
        %v4170 = vld [vmem:[%s4147 + $0x108] sm:$0xff]
        %v4171 = vld [vmem:[%s4147 + $0x110] sm:$0xff]
        %v4172 = vld [vmem:[%s4147 + $0x120] sm:$0xff]
        %v4173 = vld [vmem:[%s4147 + $0x128] sm:$0xff]
        %v4174 = vld [vmem:[%s4147 + $0x138] sm:$0xff]
        %v4175 = vld [vmem:[%s4147 + $0x140] sm:$0xff]
        %v4176 = vld [vmem:[%s4147 + $0x150] sm:$0xff]
        %v4177 = vld [vmem:[%s4147 + $0x158] sm:$0xff]
        %v4178 = vld [vmem:[%s4147 + $0x168] sm:$0xff]
        %v4179 = vld [vmem:[%s4147 + $0x170] sm:$0xff]
        %v4180 = vlaneseq
        %v4181 = vshrl.u32 %v4180, 7
        %v4182 = vsub.s32 0, %v4181
        %v4183 = vrot.slane %v4146, %v4182
        %v4184 = vmul.f32 %v4148, %v4183
        %v4185 = vmul.f32 %v4149, %v4183
        %v4186 = vmul.f32 %v4150, %v4183
        %v4187 = vmul.f32 %v4151, %v4183
        %v4188 = vmul.f32 %v4152, %v4183
        %v4189 = vmul.f32 %v4153, %v4183
        %v4190 = vmul.f32 %v4154, %v4183
        %v4191 = vmul.f32 %v4155, %v4183
        %v4192 = vmul.f32 %v4156, %v4183
        %v4193 = vmul.f32 %v4157, %v4183
        %v4194 = vmul.f32 %v4158, %v4183
        %v4195 = vmul.f32 %v4159, %v4183
        %v4196 = vmul.f32 %v4160, %v4183
        %v4197 = vmul.f32 %v4161, %v4183
        %v4198 = vmul.f32 %v4162, %v4183
        %v4199 = vmul.f32 %v4163, %v4183
        %v4200 = vmul.f32 %v4164, %v4183
        %v4201 = vmul.f32 %v4165, %v4183
        %v4202 = vmul.f32 %v4166, %v4183
        %v4203 = vmul.f32 %v4167, %v4183
        %v4204 = vmul.f32 %v4168, %v4183
        %v4205 = vmul.f32 %v4169, %v4183
        %v4206 = vmul.f32 %v4170, %v4183
        %v4207 = vmul.f32 %v4171, %v4183
        %v4208 = vmul.f32 %v4172, %v4183
        %v4209 = vmul.f32 %v4173, %v4183
        %v4210 = vmul.f32 %v4174, %v4183
        %v4211 = vmul.f32 %v4175, %v4183
        %v4212 = vmul.f32 %v4176, %v4183
        %v4213 = vmul.f32 %v4177, %v4183
        %v4214 = vmul.f32 %v4178, %v4183
        %v4215 = vmul.f32 %v4179, %v4183
        %v4216 = vadd.f32 %v4113, %v4184
        %v4217 = vadd.f32 %v4114, %v4185
        %v4218 = vadd.f32 %v4115, %v4186
        %v4219 = vadd.f32 %v4116, %v4187
        %v4220 = vadd.f32 %v4117, %v4188
        %v4221 = vadd.f32 %v4118, %v4189
        %v4222 = vadd.f32 %v4119, %v4190
        %v4223 = vadd.f32 %v4120, %v4191
        %v4224 = vadd.f32 %v4121, %v4192
        %v4225 = vadd.f32 %v4122, %v4193
        %v4226 = vadd.f32 %v4123, %v4194
        %v4227 = vadd.f32 %v4124, %v4195
        %v4228 = vadd.f32 %v4125, %v4196
        %v4229 = vadd.f32 %v4126, %v4197
        %v4230 = vadd.f32 %v4127, %v4198
        %v4231 = vadd.f32 %v4128, %v4199
        %v4232 = vadd.f32 %v4129, %v4200
        %v4233 = vadd.f32 %v4130, %v4201
        %v4234 = vadd.f32 %v4131, %v4202
        %v4235 = vadd.f32 %v4132, %v4203
        %v4236 = vadd.f32 %v4133, %v4204
        %v4237 = vadd.f32 %v4134, %v4205
        %v4238 = vadd.f32 %v4135, %v4206
        %v4239 = vadd.f32 %v4136, %v4207
        %v4240 = vadd.f32 %v4137, %v4208
        %v4241 = vadd.f32 %v4138, %v4209
        %v4242 = vadd.f32 %v4139, %v4210
        %v4243 = vadd.f32 %v4140, %v4211
        %v4244 = vadd.f32 %v4141, %v4212
        %v4245 = vadd.f32 %v4142, %v4213
        %v4246 = vadd.f32 %v4143, %v4214
        %v4247 = vadd.f32 %v4144, %v4215
        %v4248 = vld [vmem:[%s4145 + $0x1] sm:$0x1]
        %v4249 = vld [vmem:[%s4147 + $0x1] sm:$0xff]
        %v4250 = vld [vmem:[%s4147 + $0x9] sm:$0xff]
        %v4251 = vld [vmem:[%s4147 + $0x19] sm:$0xff]
        %v4252 = vld [vmem:[%s4147 + $0x21] sm:$0xff]
        %v4253 = vld [vmem:[%s4147 + $0x31] sm:$0xff]
        %v4254 = vld [vmem:[%s4147 + $0x39] sm:$0xff]
        %v4255 = vld [vmem:[%s4147 + $0x49] sm:$0xff]
        %v4256 = vld [vmem:[%s4147 + $0x51] sm:$0xff]
        %v4257 = vld [vmem:[%s4147 + $0x61] sm:$0xff]
        %v4258 = vld [vmem:[%s4147 + $0x69] sm:$0xff]
        %v4259 = vld [vmem:[%s4147 + $0x79] sm:$0xff]
        %v4260 = vld [vmem:[%s4147 + $0x81] sm:$0xff]
        %v4261 = vld [vmem:[%s4147 + $0x91] sm:$0xff]
        %v4262 = vld [vmem:[%s4147 + $0x99] sm:$0xff]
        %v4263 = vld [vmem:[%s4147 + $0xa9] sm:$0xff]
        %v4264 = vld [vmem:[%s4147 + $0xb1] sm:$0xff]
        %v4265 = vld [vmem:[%s4147 + $0xc1] sm:$0xff]
        %v4266 = vld [vmem:[%s4147 + $0xc9] sm:$0xff]
        %v4267 = vld [vmem:[%s4147 + $0xd9] sm:$0xff]
        %v4268 = vld [vmem:[%s4147 + $0xe1] sm:$0xff]
        %v4269 = vld [vmem:[%s4147 + $0xf1] sm:$0xff]
        %v4270 = vld [vmem:[%s4147 + $0xf9] sm:$0xff]
        %v4271 = vld [vmem:[%s4147 + $0x109] sm:$0xff]
        %v4272 = vld [vmem:[%s4147 + $0x111] sm:$0xff]
        %v4273 = vld [vmem:[%s4147 + $0x121] sm:$0xff]
        %v4274 = vld [vmem:[%s4147 + $0x129] sm:$0xff]
        %v4275 = vld [vmem:[%s4147 + $0x139] sm:$0xff]
        %v4276 = vld [vmem:[%s4147 + $0x141] sm:$0xff]
        %v4277 = vld [vmem:[%s4147 + $0x151] sm:$0xff]
        %v4278 = vld [vmem:[%s4147 + $0x159] sm:$0xff]
        %v4279 = vld [vmem:[%s4147 + $0x169] sm:$0xff]
        %v4280 = vld [vmem:[%s4147 + $0x171] sm:$0xff]
        %v4281 = vlaneseq
        %v4282 = vshrl.u32 %v4281, 7
        %v4283 = vsub.s32 0, %v4282
        %v4284 = vrot.slane %v4248, %v4283
        %v4285 = vmul.f32 %v4249, %v4284
        %v4286 = vmul.f32 %v4250, %v4284
        %v4287 = vmul.f32 %v4251, %v4284
        %v4288 = vmul.f32 %v4252, %v4284
        %v4289 = vmul.f32 %v4253, %v4284
        %v4290 = vmul.f32 %v4254, %v4284
        %v4291 = vmul.f32 %v4255, %v4284
        %v4292 = vmul.f32 %v4256, %v4284
        %v4293 = vmul.f32 %v4257, %v4284
        %v4294 = vmul.f32 %v4258, %v4284
        %v4295 = vmul.f32 %v4259, %v4284
        %v4296 = vmul.f32 %v4260, %v4284
        %v4297 = vmul.f32 %v4261, %v4284
        %v4298 = vmul.f32 %v4262, %v4284
        %v4299 = vmul.f32 %v4263, %v4284
        %v4300 = vmul.f32 %v4264, %v4284
        %v4301 = vmul.f32 %v4265, %v4284
        %v4302 = vmul.f32 %v4266, %v4284
        %v4303 = vmul.f32 %v4267, %v4284
        %v4304 = vmul.f32 %v4268, %v4284
        %v4305 = vmul.f32 %v4269, %v4284
        %v4306 = vmul.f32 %v4270, %v4284
        %v4307 = vmul.f32 %v4271, %v4284
        %v4308 = vmul.f32 %v4272, %v4284
        %v4309 = vmul.f32 %v4273, %v4284
        %v4310 = vmul.f32 %v4274, %v4284
        %v4311 = vmul.f32 %v4275, %v4284
        %v4312 = vmul.f32 %v4276, %v4284
        %v4313 = vmul.f32 %v4277, %v4284
        %v4314 = vmul.f32 %v4278, %v4284
        %v4315 = vmul.f32 %v4279, %v4284
        %v4316 = vmul.f32 %v4280, %v4284
        %v4317 = vadd.f32 %v4216, %v4285
        %v4318 = vadd.f32 %v4217, %v4286
        %v4319 = vadd.f32 %v4218, %v4287
        %v4320 = vadd.f32 %v4219, %v4288
        %v4321 = vadd.f32 %v4220, %v4289
        %v4322 = vadd.f32 %v4221, %v4290
        %v4323 = vadd.f32 %v4222, %v4291
        %v4324 = vadd.f32 %v4223, %v4292
        %v4325 = vadd.f32 %v4224, %v4293
        %v4326 = vadd.f32 %v4225, %v4294
        %v4327 = vadd.f32 %v4226, %v4295
        %v4328 = vadd.f32 %v4227, %v4296
        %v4329 = vadd.f32 %v4228, %v4297
        %v4330 = vadd.f32 %v4229, %v4298
        %v4331 = vadd.f32 %v4230, %v4299
        %v4332 = vadd.f32 %v4231, %v4300
        %v4333 = vadd.f32 %v4232, %v4301
        %v4334 = vadd.f32 %v4233, %v4302
        %v4335 = vadd.f32 %v4234, %v4303
        %v4336 = vadd.f32 %v4235, %v4304
        %v4337 = vadd.f32 %v4236, %v4305
        %v4338 = vadd.f32 %v4237, %v4306
        %v4339 = vadd.f32 %v4238, %v4307
        %v4340 = vadd.f32 %v4239, %v4308
        %v4341 = vadd.f32 %v4240, %v4309
        %v4342 = vadd.f32 %v4241, %v4310
        %v4343 = vadd.f32 %v4242, %v4311
        %v4344 = vadd.f32 %v4243, %v4312
        %v4345 = vadd.f32 %v4244, %v4313
        %v4346 = vadd.f32 %v4245, %v4314
        %v4347 = vadd.f32 %v4246, %v4315
        %v4348 = vadd.f32 %v4247, %v4316
        %v4349 = vld [vmem:[%s4145 + $0x2] sm:$0x1]
        %v4350 = vld [vmem:[%s4147 + $0x2] sm:$0xff]
        %v4351 = vld [vmem:[%s4147 + $0xa] sm:$0xff]
        %v4352 = vld [vmem:[%s4147 + $0x1a] sm:$0xff]
        %v4353 = vld [vmem:[%s4147 + $0x22] sm:$0xff]
        %v4354 = vld [vmem:[%s4147 + $0x32] sm:$0xff]
        %v4355 = vld [vmem:[%s4147 + $0x3a] sm:$0xff]
        %v4356 = vld [vmem:[%s4147 + $0x4a] sm:$0xff]
        %v4357 = vld [vmem:[%s4147 + $0x52] sm:$0xff]
        %v4358 = vld [vmem:[%s4147 + $0x62] sm:$0xff]
        %v4359 = vld [vmem:[%s4147 + $0x6a] sm:$0xff]
        %v4360 = vld [vmem:[%s4147 + $0x7a] sm:$0xff]
        %v4361 = vld [vmem:[%s4147 + $0x82] sm:$0xff]
        %v4362 = vld [vmem:[%s4147 + $0x92] sm:$0xff]
        %v4363 = vld [vmem:[%s4147 + $0x9a] sm:$0xff]
        %v4364 = vld [vmem:[%s4147 + $0xaa] sm:$0xff]
        %v4365 = vld [vmem:[%s4147 + $0xb2] sm:$0xff]
        %v4366 = vld [vmem:[%s4147 + $0xc2] sm:$0xff]
        %v4367 = vld [vmem:[%s4147 + $0xca] sm:$0xff]
        %v4368 = vld [vmem:[%s4147 + $0xda] sm:$0xff]
        %v4369 = vld [vmem:[%s4147 + $0xe2] sm:$0xff]
        %v4370 = vld [vmem:[%s4147 + $0xf2] sm:$0xff]
        %v4371 = vld [vmem:[%s4147 + $0xfa] sm:$0xff]
        %v4372 = vld [vmem:[%s4147 + $0x10a] sm:$0xff]
        %v4373 = vld [vmem:[%s4147 + $0x112] sm:$0xff]
        %v4374 = vld [vmem:[%s4147 + $0x122] sm:$0xff]
        %v4375 = vld [vmem:[%s4147 + $0x12a] sm:$0xff]
        %v4376 = vld [vmem:[%s4147 + $0x13a] sm:$0xff]
        %v4377 = vld [vmem:[%s4147 + $0x142] sm:$0xff]
        %v4378 = vld [vmem:[%s4147 + $0x152] sm:$0xff]
        %v4379 = vld [vmem:[%s4147 + $0x15a] sm:$0xff]
        %v4380 = vld [vmem:[%s4147 + $0x16a] sm:$0xff]
        %v4381 = vld [vmem:[%s4147 + $0x172] sm:$0xff]
        %v4382 = vlaneseq
        %v4383 = vshrl.u32 %v4382, 7
        %v4384 = vsub.s32 0, %v4383
        %v4385 = vrot.slane %v4349, %v4384
        %v4386 = vmul.f32 %v4350, %v4385
        %v4387 = vmul.f32 %v4351, %v4385
        %v4388 = vmul.f32 %v4352, %v4385
        %v4389 = vmul.f32 %v4353, %v4385
        %v4390 = vmul.f32 %v4354, %v4385
        %v4391 = vmul.f32 %v4355, %v4385
        %v4392 = vmul.f32 %v4356, %v4385
        %v4393 = vmul.f32 %v4357, %v4385
        %v4394 = vmul.f32 %v4358, %v4385
        %v4395 = vmul.f32 %v4359, %v4385
        %v4396 = vmul.f32 %v4360, %v4385
        %v4397 = vmul.f32 %v4361, %v4385
        %v4398 = vmul.f32 %v4362, %v4385
        %v4399 = vmul.f32 %v4363, %v4385
        %v4400 = vmul.f32 %v4364, %v4385
        %v4401 = vmul.f32 %v4365, %v4385
        %v4402 = vmul.f32 %v4366, %v4385
        %v4403 = vmul.f32 %v4367, %v4385
        %v4404 = vmul.f32 %v4368, %v4385
        %v4405 = vmul.f32 %v4369, %v4385
        %v4406 = vmul.f32 %v4370, %v4385
        %v4407 = vmul.f32 %v4371, %v4385
        %v4408 = vmul.f32 %v4372, %v4385
        %v4409 = vmul.f32 %v4373, %v4385
        %v4410 = vmul.f32 %v4374, %v4385
        %v4411 = vmul.f32 %v4375, %v4385
        %v4412 = vmul.f32 %v4376, %v4385
        %v4413 = vmul.f32 %v4377, %v4385
        %v4414 = vmul.f32 %v4378, %v4385
        %v4415 = vmul.f32 %v4379, %v4385
        %v4416 = vmul.f32 %v4380, %v4385
        %v4417 = vmul.f32 %v4381, %v4385
        %v4418 = vadd.f32 %v4317, %v4386
        %v4419 = vadd.f32 %v4318, %v4387
        %v4420 = vadd.f32 %v4319, %v4388
        %v4421 = vadd.f32 %v4320, %v4389
        %v4422 = vadd.f32 %v4321, %v4390
        %v4423 = vadd.f32 %v4322, %v4391
        %v4424 = vadd.f32 %v4323, %v4392
        %v4425 = vadd.f32 %v4324, %v4393
        %v4426 = vadd.f32 %v4325, %v4394
        %v4427 = vadd.f32 %v4326, %v4395
        %v4428 = vadd.f32 %v4327, %v4396
        %v4429 = vadd.f32 %v4328, %v4397
        %v4430 = vadd.f32 %v4329, %v4398
        %v4431 = vadd.f32 %v4330, %v4399
        %v4432 = vadd.f32 %v4331, %v4400
        %v4433 = vadd.f32 %v4332, %v4401
        %v4434 = vadd.f32 %v4333, %v4402
        %v4435 = vadd.f32 %v4334, %v4403
        %v4436 = vadd.f32 %v4335, %v4404
        %v4437 = vadd.f32 %v4336, %v4405
        %v4438 = vadd.f32 %v4337, %v4406
        %v4439 = vadd.f32 %v4338, %v4407
        %v4440 = vadd.f32 %v4339, %v4408
        %v4441 = vadd.f32 %v4340, %v4409
        %v4442 = vadd.f32 %v4341, %v4410
        %v4443 = vadd.f32 %v4342, %v4411
        %v4444 = vadd.f32 %v4343, %v4412
        %v4445 = vadd.f32 %v4344, %v4413
        %v4446 = vadd.f32 %v4345, %v4414
        %v4447 = vadd.f32 %v4346, %v4415
        %v4448 = vadd.f32 %v4347, %v4416
        %v4449 = vadd.f32 %v4348, %v4417
        %v4450 = vld [vmem:[%s4145 + $0x3] sm:$0x1]
        %v4451 = vld [vmem:[%s4147 + $0x3] sm:$0xff]
        %v4452 = vld [vmem:[%s4147 + $0xb] sm:$0xff]
        %v4453 = vld [vmem:[%s4147 + $0x1b] sm:$0xff]
        %v4454 = vld [vmem:[%s4147 + $0x23] sm:$0xff]
        %v4455 = vld [vmem:[%s4147 + $0x33] sm:$0xff]
        %v4456 = vld [vmem:[%s4147 + $0x3b] sm:$0xff]
        %v4457 = vld [vmem:[%s4147 + $0x4b] sm:$0xff]
        %v4458 = vld [vmem:[%s4147 + $0x53] sm:$0xff]
        %v4459 = vld [vmem:[%s4147 + $0x63] sm:$0xff]
        %v4460 = vld [vmem:[%s4147 + $0x6b] sm:$0xff]
        %v4461 = vld [vmem:[%s4147 + $0x7b] sm:$0xff]
        %v4462 = vld [vmem:[%s4147 + $0x83] sm:$0xff]
        %v4463 = vld [vmem:[%s4147 + $0x93] sm:$0xff]
        %v4464 = vld [vmem:[%s4147 + $0x9b] sm:$0xff]
        %v4465 = vld [vmem:[%s4147 + $0xab] sm:$0xff]
        %v4466 = vld [vmem:[%s4147 + $0xb3] sm:$0xff]
        %v4467 = vld [vmem:[%s4147 + $0xc3] sm:$0xff]
        %v4468 = vld [vmem:[%s4147 + $0xcb] sm:$0xff]
        %v4469 = vld [vmem:[%s4147 + $0xdb] sm:$0xff]
        %v4470 = vld [vmem:[%s4147 + $0xe3] sm:$0xff]
        %v4471 = vld [vmem:[%s4147 + $0xf3] sm:$0xff]
        %v4472 = vld [vmem:[%s4147 + $0xfb] sm:$0xff]
        %v4473 = vld [vmem:[%s4147 + $0x10b] sm:$0xff]
        %v4474 = vld [vmem:[%s4147 + $0x113] sm:$0xff]
        %v4475 = vld [vmem:[%s4147 + $0x123] sm:$0xff]
        %v4476 = vld [vmem:[%s4147 + $0x12b] sm:$0xff]
        %v4477 = vld [vmem:[%s4147 + $0x13b] sm:$0xff]
        %v4478 = vld [vmem:[%s4147 + $0x143] sm:$0xff]
        %v4479 = vld [vmem:[%s4147 + $0x153] sm:$0xff]
        %v4480 = vld [vmem:[%s4147 + $0x15b] sm:$0xff]
        %v4481 = vld [vmem:[%s4147 + $0x16b] sm:$0xff]
        %v4482 = vld [vmem:[%s4147 + $0x173] sm:$0xff]
        %v4483 = vlaneseq
        %v4484 = vshrl.u32 %v4483, 7
        %v4485 = vsub.s32 0, %v4484
        %v4486 = vrot.slane %v4450, %v4485
        %v4487 = vmul.f32 %v4451, %v4486
        %v4488 = vmul.f32 %v4452, %v4486
        %v4489 = vmul.f32 %v4453, %v4486
        %v4490 = vmul.f32 %v4454, %v4486
        %v4491 = vmul.f32 %v4455, %v4486
        %v4492 = vmul.f32 %v4456, %v4486
        %v4493 = vmul.f32 %v4457, %v4486
        %v4494 = vmul.f32 %v4458, %v4486
        %v4495 = vmul.f32 %v4459, %v4486
        %v4496 = vmul.f32 %v4460, %v4486
        %v4497 = vmul.f32 %v4461, %v4486
        %v4498 = vmul.f32 %v4462, %v4486
        %v4499 = vmul.f32 %v4463, %v4486
        %v4500 = vmul.f32 %v4464, %v4486
        %v4501 = vmul.f32 %v4465, %v4486
        %v4502 = vmul.f32 %v4466, %v4486
        %v4503 = vmul.f32 %v4467, %v4486
        %v4504 = vmul.f32 %v4468, %v4486
        %v4505 = vmul.f32 %v4469, %v4486
        %v4506 = vmul.f32 %v4470, %v4486
        %v4507 = vmul.f32 %v4471, %v4486
        %v4508 = vmul.f32 %v4472, %v4486
        %v4509 = vmul.f32 %v4473, %v4486
        %v4510 = vmul.f32 %v4474, %v4486
        %v4511 = vmul.f32 %v4475, %v4486
        %v4512 = vmul.f32 %v4476, %v4486
        %v4513 = vmul.f32 %v4477, %v4486
        %v4514 = vmul.f32 %v4478, %v4486
        %v4515 = vmul.f32 %v4479, %v4486
        %v4516 = vmul.f32 %v4480, %v4486
        %v4517 = vmul.f32 %v4481, %v4486
        %v4518 = vmul.f32 %v4482, %v4486
        %v4519 = vadd.f32 %v4418, %v4487
        %v4520 = vadd.f32 %v4419, %v4488
        %v4521 = vadd.f32 %v4420, %v4489
        %v4522 = vadd.f32 %v4421, %v4490
        %v4523 = vadd.f32 %v4422, %v4491
        %v4524 = vadd.f32 %v4423, %v4492
        %v4525 = vadd.f32 %v4424, %v4493
        %v4526 = vadd.f32 %v4425, %v4494
        %v4527 = vadd.f32 %v4426, %v4495
        %v4528 = vadd.f32 %v4427, %v4496
        %v4529 = vadd.f32 %v4428, %v4497
        %v4530 = vadd.f32 %v4429, %v4498
        %v4531 = vadd.f32 %v4430, %v4499
        %v4532 = vadd.f32 %v4431, %v4500
        %v4533 = vadd.f32 %v4432, %v4501
        %v4534 = vadd.f32 %v4433, %v4502
        %v4535 = vadd.f32 %v4434, %v4503
        %v4536 = vadd.f32 %v4435, %v4504
        %v4537 = vadd.f32 %v4436, %v4505
        %v4538 = vadd.f32 %v4437, %v4506
        %v4539 = vadd.f32 %v4438, %v4507
        %v4540 = vadd.f32 %v4439, %v4508
        %v4541 = vadd.f32 %v4440, %v4509
        %v4542 = vadd.f32 %v4441, %v4510
        %v4543 = vadd.f32 %v4442, %v4511
        %v4544 = vadd.f32 %v4443, %v4512
        %v4545 = vadd.f32 %v4444, %v4513
        %v4546 = vadd.f32 %v4445, %v4514
        %v4547 = vadd.f32 %v4446, %v4515
        %v4548 = vadd.f32 %v4447, %v4516
        %v4549 = vadd.f32 %v4448, %v4517
        %v4550 = vadd.f32 %v4449, %v4518
        %v4551 = vld [vmem:[%s4145 + $0x4] sm:$0x1]
        %v4552 = vld [vmem:[%s4147 + $0x4] sm:$0xff]
        %v4553 = vld [vmem:[%s4147 + $0xc] sm:$0xff]
        %v4554 = vld [vmem:[%s4147 + $0x1c] sm:$0xff]
        %v4555 = vld [vmem:[%s4147 + $0x24] sm:$0xff]
        %v4556 = vld [vmem:[%s4147 + $0x34] sm:$0xff]
        %v4557 = vld [vmem:[%s4147 + $0x3c] sm:$0xff]
        %v4558 = vld [vmem:[%s4147 + $0x4c] sm:$0xff]
        %v4559 = vld [vmem:[%s4147 + $0x54] sm:$0xff]
        %v4560 = vld [vmem:[%s4147 + $0x64] sm:$0xff]
        %v4561 = vld [vmem:[%s4147 + $0x6c] sm:$0xff]
        %v4562 = vld [vmem:[%s4147 + $0x7c] sm:$0xff]
        %v4563 = vld [vmem:[%s4147 + $0x84] sm:$0xff]
        %v4564 = vld [vmem:[%s4147 + $0x94] sm:$0xff]
        %v4565 = vld [vmem:[%s4147 + $0x9c] sm:$0xff]
        %v4566 = vld [vmem:[%s4147 + $0xac] sm:$0xff]
        %v4567 = vld [vmem:[%s4147 + $0xb4] sm:$0xff]
        %v4568 = vld [vmem:[%s4147 + $0xc4] sm:$0xff]
        %v4569 = vld [vmem:[%s4147 + $0xcc] sm:$0xff]
        %v4570 = vld [vmem:[%s4147 + $0xdc] sm:$0xff]
        %v4571 = vld [vmem:[%s4147 + $0xe4] sm:$0xff]
        %v4572 = vld [vmem:[%s4147 + $0xf4] sm:$0xff]
        %v4573 = vld [vmem:[%s4147 + $0xfc] sm:$0xff]
        %v4574 = vld [vmem:[%s4147 + $0x10c] sm:$0xff]
        %v4575 = vld [vmem:[%s4147 + $0x114] sm:$0xff]
        %v4576 = vld [vmem:[%s4147 + $0x124] sm:$0xff]
        %v4577 = vld [vmem:[%s4147 + $0x12c] sm:$0xff]
        %v4578 = vld [vmem:[%s4147 + $0x13c] sm:$0xff]
        %v4579 = vld [vmem:[%s4147 + $0x144] sm:$0xff]
        %v4580 = vld [vmem:[%s4147 + $0x154] sm:$0xff]
        %v4581 = vld [vmem:[%s4147 + $0x15c] sm:$0xff]
        %v4582 = vld [vmem:[%s4147 + $0x16c] sm:$0xff]
        %v4583 = vld [vmem:[%s4147 + $0x174] sm:$0xff]
        %v4584 = vlaneseq
        %v4585 = vshrl.u32 %v4584, 7
        %v4586 = vsub.s32 0, %v4585
        %v4587 = vrot.slane %v4551, %v4586
        %v4588 = vmul.f32 %v4552, %v4587
        %v4589 = vmul.f32 %v4553, %v4587
        %v4590 = vmul.f32 %v4554, %v4587
        %v4591 = vmul.f32 %v4555, %v4587
        %v4592 = vmul.f32 %v4556, %v4587
        %v4593 = vmul.f32 %v4557, %v4587
        %v4594 = vmul.f32 %v4558, %v4587
        %v4595 = vmul.f32 %v4559, %v4587
        %v4596 = vmul.f32 %v4560, %v4587
        %v4597 = vmul.f32 %v4561, %v4587
        %v4598 = vmul.f32 %v4562, %v4587
        %v4599 = vmul.f32 %v4563, %v4587
        %v4600 = vmul.f32 %v4564, %v4587
        %v4601 = vmul.f32 %v4565, %v4587
        %v4602 = vmul.f32 %v4566, %v4587
        %v4603 = vmul.f32 %v4567, %v4587
        %v4604 = vmul.f32 %v4568, %v4587
        %v4605 = vmul.f32 %v4569, %v4587
        %v4606 = vmul.f32 %v4570, %v4587
        %v4607 = vmul.f32 %v4571, %v4587
        %v4608 = vmul.f32 %v4572, %v4587
        %v4609 = vmul.f32 %v4573, %v4587
        %v4610 = vmul.f32 %v4574, %v4587
        %v4611 = vmul.f32 %v4575, %v4587
        %v4612 = vmul.f32 %v4576, %v4587
        %v4613 = vmul.f32 %v4577, %v4587
        %v4614 = vmul.f32 %v4578, %v4587
        %v4615 = vmul.f32 %v4579, %v4587
        %v4616 = vmul.f32 %v4580, %v4587
        %v4617 = vmul.f32 %v4581, %v4587
        %v4618 = vmul.f32 %v4582, %v4587
        %v4619 = vmul.f32 %v4583, %v4587
        %v4620 = vadd.f32 %v4519, %v4588
        %v4621 = vadd.f32 %v4520, %v4589
        %v4622 = vadd.f32 %v4521, %v4590
        %v4623 = vadd.f32 %v4522, %v4591
        %v4624 = vadd.f32 %v4523, %v4592
        %v4625 = vadd.f32 %v4524, %v4593
        %v4626 = vadd.f32 %v4525, %v4594
        %v4627 = vadd.f32 %v4526, %v4595
        %v4628 = vadd.f32 %v4527, %v4596
        %v4629 = vadd.f32 %v4528, %v4597
        %v4630 = vadd.f32 %v4529, %v4598
        %v4631 = vadd.f32 %v4530, %v4599
        %v4632 = vadd.f32 %v4531, %v4600
        %v4633 = vadd.f32 %v4532, %v4601
        %v4634 = vadd.f32 %v4533, %v4602
        %v4635 = vadd.f32 %v4534, %v4603
        %v4636 = vadd.f32 %v4535, %v4604
        %v4637 = vadd.f32 %v4536, %v4605
        %v4638 = vadd.f32 %v4537, %v4606
        %v4639 = vadd.f32 %v4538, %v4607
        %v4640 = vadd.f32 %v4539, %v4608
        %v4641 = vadd.f32 %v4540, %v4609
        %v4642 = vadd.f32 %v4541, %v4610
        %v4643 = vadd.f32 %v4542, %v4611
        %v4644 = vadd.f32 %v4543, %v4612
        %v4645 = vadd.f32 %v4544, %v4613
        %v4646 = vadd.f32 %v4545, %v4614
        %v4647 = vadd.f32 %v4546, %v4615
        %v4648 = vadd.f32 %v4547, %v4616
        %v4649 = vadd.f32 %v4548, %v4617
        %v4650 = vadd.f32 %v4549, %v4618
        %v4651 = vadd.f32 %v4550, %v4619
        %v4652 = vld [vmem:[%s4145 + $0x5] sm:$0x1]
        %v4653 = vld [vmem:[%s4147 + $0x5] sm:$0xff]
        %v4654 = vld [vmem:[%s4147 + $0xd] sm:$0xff]
        %v4655 = vld [vmem:[%s4147 + $0x1d] sm:$0xff]
        %v4656 = vld [vmem:[%s4147 + $0x25] sm:$0xff]
        %v4657 = vld [vmem:[%s4147 + $0x35] sm:$0xff]
        %v4658 = vld [vmem:[%s4147 + $0x3d] sm:$0xff]
        %v4659 = vld [vmem:[%s4147 + $0x4d] sm:$0xff]
        %v4660 = vld [vmem:[%s4147 + $0x55] sm:$0xff]
        %v4661 = vld [vmem:[%s4147 + $0x65] sm:$0xff]
        %v4662 = vld [vmem:[%s4147 + $0x6d] sm:$0xff]
        %v4663 = vld [vmem:[%s4147 + $0x7d] sm:$0xff]
        %v4664 = vld [vmem:[%s4147 + $0x85] sm:$0xff]
        %v4665 = vld [vmem:[%s4147 + $0x95] sm:$0xff]
        %v4666 = vld [vmem:[%s4147 + $0x9d] sm:$0xff]
        %v4667 = vld [vmem:[%s4147 + $0xad] sm:$0xff]
        %v4668 = vld [vmem:[%s4147 + $0xb5] sm:$0xff]
        %v4669 = vld [vmem:[%s4147 + $0xc5] sm:$0xff]
        %v4670 = vld [vmem:[%s4147 + $0xcd] sm:$0xff]
        %v4671 = vld [vmem:[%s4147 + $0xdd] sm:$0xff]
        %v4672 = vld [vmem:[%s4147 + $0xe5] sm:$0xff]
        %v4673 = vld [vmem:[%s4147 + $0xf5] sm:$0xff]
        %v4674 = vld [vmem:[%s4147 + $0xfd] sm:$0xff]
        %v4675 = vld [vmem:[%s4147 + $0x10d] sm:$0xff]
        %v4676 = vld [vmem:[%s4147 + $0x115] sm:$0xff]
        %v4677 = vld [vmem:[%s4147 + $0x125] sm:$0xff]
        %v4678 = vld [vmem:[%s4147 + $0x12d] sm:$0xff]
        %v4679 = vld [vmem:[%s4147 + $0x13d] sm:$0xff]
        %v4680 = vld [vmem:[%s4147 + $0x145] sm:$0xff]
        %v4681 = vld [vmem:[%s4147 + $0x155] sm:$0xff]
        %v4682 = vld [vmem:[%s4147 + $0x15d] sm:$0xff]
        %v4683 = vld [vmem:[%s4147 + $0x16d] sm:$0xff]
        %v4684 = vld [vmem:[%s4147 + $0x175] sm:$0xff]
        %v4685 = vlaneseq
        %v4686 = vshrl.u32 %v4685, 7
        %v4687 = vsub.s32 0, %v4686
        %v4688 = vrot.slane %v4652, %v4687
        %v4689 = vmul.f32 %v4653, %v4688
        %v4690 = vmul.f32 %v4654, %v4688
        %v4691 = vmul.f32 %v4655, %v4688
        %v4692 = vmul.f32 %v4656, %v4688
        %v4693 = vmul.f32 %v4657, %v4688
        %v4694 = vmul.f32 %v4658, %v4688
        %v4695 = vmul.f32 %v4659, %v4688
        %v4696 = vmul.f32 %v4660, %v4688
        %v4697 = vmul.f32 %v4661, %v4688
        %v4698 = vmul.f32 %v4662, %v4688
        %v4699 = vmul.f32 %v4663, %v4688
        %v4700 = vmul.f32 %v4664, %v4688
        %v4701 = vmul.f32 %v4665, %v4688
        %v4702 = vmul.f32 %v4666, %v4688
        %v4703 = vmul.f32 %v4667, %v4688
        %v4704 = vmul.f32 %v4668, %v4688
        %v4705 = vmul.f32 %v4669, %v4688
        %v4706 = vmul.f32 %v4670, %v4688
        %v4707 = vmul.f32 %v4671, %v4688
        %v4708 = vmul.f32 %v4672, %v4688
        %v4709 = vmul.f32 %v4673, %v4688
        %v4710 = vmul.f32 %v4674, %v4688
        %v4711 = vmul.f32 %v4675, %v4688
        %v4712 = vmul.f32 %v4676, %v4688
        %v4713 = vmul.f32 %v4677, %v4688
        %v4714 = vmul.f32 %v4678, %v4688
        %v4715 = vmul.f32 %v4679, %v4688
        %v4716 = vmul.f32 %v4680, %v4688
        %v4717 = vmul.f32 %v4681, %v4688
        %v4718 = vmul.f32 %v4682, %v4688
        %v4719 = vmul.f32 %v4683, %v4688
        %v4720 = vmul.f32 %v4684, %v4688
        %v4721 = vadd.f32 %v4620, %v4689
        %v4722 = vadd.f32 %v4621, %v4690
        %v4723 = vadd.f32 %v4622, %v4691
        %v4724 = vadd.f32 %v4623, %v4692
        %v4725 = vadd.f32 %v4624, %v4693
        %v4726 = vadd.f32 %v4625, %v4694
        %v4727 = vadd.f32 %v4626, %v4695
        %v4728 = vadd.f32 %v4627, %v4696
        %v4729 = vadd.f32 %v4628, %v4697
        %v4730 = vadd.f32 %v4629, %v4698
        %v4731 = vadd.f32 %v4630, %v4699
        %v4732 = vadd.f32 %v4631, %v4700
        %v4733 = vadd.f32 %v4632, %v4701
        %v4734 = vadd.f32 %v4633, %v4702
        %v4735 = vadd.f32 %v4634, %v4703
        %v4736 = vadd.f32 %v4635, %v4704
        %v4737 = vadd.f32 %v4636, %v4705
        %v4738 = vadd.f32 %v4637, %v4706
        %v4739 = vadd.f32 %v4638, %v4707
        %v4740 = vadd.f32 %v4639, %v4708
        %v4741 = vadd.f32 %v4640, %v4709
        %v4742 = vadd.f32 %v4641, %v4710
        %v4743 = vadd.f32 %v4642, %v4711
        %v4744 = vadd.f32 %v4643, %v4712
        %v4745 = vadd.f32 %v4644, %v4713
        %v4746 = vadd.f32 %v4645, %v4714
        %v4747 = vadd.f32 %v4646, %v4715
        %v4748 = vadd.f32 %v4647, %v4716
        %v4749 = vadd.f32 %v4648, %v4717
        %v4750 = vadd.f32 %v4649, %v4718
        %v4751 = vadd.f32 %v4650, %v4719
        %v4752 = vadd.f32 %v4651, %v4720
        %v4753 = vld [vmem:[%s4145 + $0x6] sm:$0x1]
        %v4754 = vld [vmem:[%s4147 + $0x6] sm:$0xff]
        %v4755 = vld [vmem:[%s4147 + $0xe] sm:$0xff]
        %v4756 = vld [vmem:[%s4147 + $0x1e] sm:$0xff]
        %v4757 = vld [vmem:[%s4147 + $0x26] sm:$0xff]
        %v4758 = vld [vmem:[%s4147 + $0x36] sm:$0xff]
        %v4759 = vld [vmem:[%s4147 + $0x3e] sm:$0xff]
        %v4760 = vld [vmem:[%s4147 + $0x4e] sm:$0xff]
        %v4761 = vld [vmem:[%s4147 + $0x56] sm:$0xff]
        %v4762 = vld [vmem:[%s4147 + $0x66] sm:$0xff]
        %v4763 = vld [vmem:[%s4147 + $0x6e] sm:$0xff]
        %v4764 = vld [vmem:[%s4147 + $0x7e] sm:$0xff]
        %v4765 = vld [vmem:[%s4147 + $0x86] sm:$0xff]
        %v4766 = vld [vmem:[%s4147 + $0x96] sm:$0xff]
        %v4767 = vld [vmem:[%s4147 + $0x9e] sm:$0xff]
        %v4768 = vld [vmem:[%s4147 + $0xae] sm:$0xff]
        %v4769 = vld [vmem:[%s4147 + $0xb6] sm:$0xff]
        %v4770 = vld [vmem:[%s4147 + $0xc6] sm:$0xff]
        %v4771 = vld [vmem:[%s4147 + $0xce] sm:$0xff]
        %v4772 = vld [vmem:[%s4147 + $0xde] sm:$0xff]
        %v4773 = vld [vmem:[%s4147 + $0xe6] sm:$0xff]
        %v4774 = vld [vmem:[%s4147 + $0xf6] sm:$0xff]
        %v4775 = vld [vmem:[%s4147 + $0xfe] sm:$0xff]
        %v4776 = vld [vmem:[%s4147 + $0x10e] sm:$0xff]
        %v4777 = vld [vmem:[%s4147 + $0x116] sm:$0xff]
        %v4778 = vld [vmem:[%s4147 + $0x126] sm:$0xff]
        %v4779 = vld [vmem:[%s4147 + $0x12e] sm:$0xff]
        %v4780 = vld [vmem:[%s4147 + $0x13e] sm:$0xff]
        %v4781 = vld [vmem:[%s4147 + $0x146] sm:$0xff]
        %v4782 = vld [vmem:[%s4147 + $0x156] sm:$0xff]
        %v4783 = vld [vmem:[%s4147 + $0x15e] sm:$0xff]
        %v4784 = vld [vmem:[%s4147 + $0x16e] sm:$0xff]
        %v4785 = vld [vmem:[%s4147 + $0x176] sm:$0xff]
        %v4786 = vlaneseq
        %v4787 = vshrl.u32 %v4786, 7
        %v4788 = vsub.s32 0, %v4787
        %v4789 = vrot.slane %v4753, %v4788
        %v4790 = vmul.f32 %v4754, %v4789
        %v4791 = vmul.f32 %v4755, %v4789
        %v4792 = vmul.f32 %v4756, %v4789
        %v4793 = vmul.f32 %v4757, %v4789
        %v4794 = vmul.f32 %v4758, %v4789
        %v4795 = vmul.f32 %v4759, %v4789
        %v4796 = vmul.f32 %v4760, %v4789
        %v4797 = vmul.f32 %v4761, %v4789
        %v4798 = vmul.f32 %v4762, %v4789
        %v4799 = vmul.f32 %v4763, %v4789
        %v4800 = vmul.f32 %v4764, %v4789
        %v4801 = vmul.f32 %v4765, %v4789
        %v4802 = vmul.f32 %v4766, %v4789
        %v4803 = vmul.f32 %v4767, %v4789
        %v4804 = vmul.f32 %v4768, %v4789
        %v4805 = vmul.f32 %v4769, %v4789
        %v4806 = vmul.f32 %v4770, %v4789
        %v4807 = vmul.f32 %v4771, %v4789
        %v4808 = vmul.f32 %v4772, %v4789
        %v4809 = vmul.f32 %v4773, %v4789
        %v4810 = vmul.f32 %v4774, %v4789
        %v4811 = vmul.f32 %v4775, %v4789
        %v4812 = vmul.f32 %v4776, %v4789
        %v4813 = vmul.f32 %v4777, %v4789
        %v4814 = vmul.f32 %v4778, %v4789
        %v4815 = vmul.f32 %v4779, %v4789
        %v4816 = vmul.f32 %v4780, %v4789
        %v4817 = vmul.f32 %v4781, %v4789
        %v4818 = vmul.f32 %v4782, %v4789
        %v4819 = vmul.f32 %v4783, %v4789
        %v4820 = vmul.f32 %v4784, %v4789
        %v4821 = vmul.f32 %v4785, %v4789
        %v4822 = vadd.f32 %v4721, %v4790
        %v4823 = vadd.f32 %v4722, %v4791
        %v4824 = vadd.f32 %v4723, %v4792
        %v4825 = vadd.f32 %v4724, %v4793
        %v4826 = vadd.f32 %v4725, %v4794
        %v4827 = vadd.f32 %v4726, %v4795
        %v4828 = vadd.f32 %v4727, %v4796
        %v4829 = vadd.f32 %v4728, %v4797
        %v4830 = vadd.f32 %v4729, %v4798
        %v4831 = vadd.f32 %v4730, %v4799
        %v4832 = vadd.f32 %v4731, %v4800
        %v4833 = vadd.f32 %v4732, %v4801
        %v4834 = vadd.f32 %v4733, %v4802
        %v4835 = vadd.f32 %v4734, %v4803
        %v4836 = vadd.f32 %v4735, %v4804
        %v4837 = vadd.f32 %v4736, %v4805
        %v4838 = vadd.f32 %v4737, %v4806
        %v4839 = vadd.f32 %v4738, %v4807
        %v4840 = vadd.f32 %v4739, %v4808
        %v4841 = vadd.f32 %v4740, %v4809
        %v4842 = vadd.f32 %v4741, %v4810
        %v4843 = vadd.f32 %v4742, %v4811
        %v4844 = vadd.f32 %v4743, %v4812
        %v4845 = vadd.f32 %v4744, %v4813
        %v4846 = vadd.f32 %v4745, %v4814
        %v4847 = vadd.f32 %v4746, %v4815
        %v4848 = vadd.f32 %v4747, %v4816
        %v4849 = vadd.f32 %v4748, %v4817
        %v4850 = vadd.f32 %v4749, %v4818
        %v4851 = vadd.f32 %v4750, %v4819
        %v4852 = vadd.f32 %v4751, %v4820
        %v4853 = vadd.f32 %v4752, %v4821
        %s4854 = scalar_lea.vmem [#allocation6], 48
        %v4855 = vld [vmem:[%s4854] sm:$0x1]
        %s4856 = scalar_lea.vmem [#allocation2], 144
        %v4857 = vld [vmem:[%s4856] sm:$0xff]
        %v4858 = vld [vmem:[%s4856 + $0x8] sm:$0xff]
        %v4859 = vld [vmem:[%s4856 + $0x18] sm:$0xff]
        %v4860 = vld [vmem:[%s4856 + $0x20] sm:$0xff]
        %v4861 = vld [vmem:[%s4856 + $0x30] sm:$0xff]
        %v4862 = vld [vmem:[%s4856 + $0x38] sm:$0xff]
        %v4863 = vld [vmem:[%s4856 + $0x48] sm:$0xff]
        %v4864 = vld [vmem:[%s4856 + $0x50] sm:$0xff]
        %v4865 = vld [vmem:[%s4856 + $0x60] sm:$0xff]
        %v4866 = vld [vmem:[%s4856 + $0x68] sm:$0xff]
        %v4867 = vld [vmem:[%s4856 + $0x78] sm:$0xff]
        %v4868 = vld [vmem:[%s4856 + $0x80] sm:$0xff]
        %v4869 = vld [vmem:[%s4856 + $0x90] sm:$0xff]
        %v4870 = vld [vmem:[%s4856 + $0x98] sm:$0xff]
        %v4871 = vld [vmem:[%s4856 + $0xa8] sm:$0xff]
        %v4872 = vld [vmem:[%s4856 + $0xb0] sm:$0xff]
        %v4873 = vld [vmem:[%s4856 + $0xc0] sm:$0xff]
        %v4874 = vld [vmem:[%s4856 + $0xc8] sm:$0xff]
        %v4875 = vld [vmem:[%s4856 + $0xd8] sm:$0xff]
        %v4876 = vld [vmem:[%s4856 + $0xe0] sm:$0xff]
        %v4877 = vld [vmem:[%s4856 + $0xf0] sm:$0xff]
        %v4878 = vld [vmem:[%s4856 + $0xf8] sm:$0xff]
        %v4879 = vld [vmem:[%s4856 + $0x108] sm:$0xff]
        %v4880 = vld [vmem:[%s4856 + $0x110] sm:$0xff]
        %v4881 = vld [vmem:[%s4856 + $0x120] sm:$0xff]
        %v4882 = vld [vmem:[%s4856 + $0x128] sm:$0xff]
        %v4883 = vld [vmem:[%s4856 + $0x138] sm:$0xff]
        %v4884 = vld [vmem:[%s4856 + $0x140] sm:$0xff]
        %v4885 = vld [vmem:[%s4856 + $0x150] sm:$0xff]
        %v4886 = vld [vmem:[%s4856 + $0x158] sm:$0xff]
        %v4887 = vld [vmem:[%s4856 + $0x168] sm:$0xff]
        %v4888 = vld [vmem:[%s4856 + $0x170] sm:$0xff]
        %v4889 = vlaneseq
        %v4890 = vshrl.u32 %v4889, 7
        %v4891 = vsub.s32 0, %v4890
        %v4892 = vrot.slane %v4855, %v4891
        %v4893 = vmul.f32 %v4857, %v4892
        %v4894 = vmul.f32 %v4858, %v4892
        %v4895 = vmul.f32 %v4859, %v4892
        %v4896 = vmul.f32 %v4860, %v4892
        %v4897 = vmul.f32 %v4861, %v4892
        %v4898 = vmul.f32 %v4862, %v4892
        %v4899 = vmul.f32 %v4863, %v4892
        %v4900 = vmul.f32 %v4864, %v4892
        %v4901 = vmul.f32 %v4865, %v4892
        %v4902 = vmul.f32 %v4866, %v4892
        %v4903 = vmul.f32 %v4867, %v4892
        %v4904 = vmul.f32 %v4868, %v4892
        %v4905 = vmul.f32 %v4869, %v4892
        %v4906 = vmul.f32 %v4870, %v4892
        %v4907 = vmul.f32 %v4871, %v4892
        %v4908 = vmul.f32 %v4872, %v4892
        %v4909 = vmul.f32 %v4873, %v4892
        %v4910 = vmul.f32 %v4874, %v4892
        %v4911 = vmul.f32 %v4875, %v4892
        %v4912 = vmul.f32 %v4876, %v4892
        %v4913 = vmul.f32 %v4877, %v4892
        %v4914 = vmul.f32 %v4878, %v4892
        %v4915 = vmul.f32 %v4879, %v4892
        %v4916 = vmul.f32 %v4880, %v4892
        %v4917 = vmul.f32 %v4881, %v4892
        %v4918 = vmul.f32 %v4882, %v4892
        %v4919 = vmul.f32 %v4883, %v4892
        %v4920 = vmul.f32 %v4884, %v4892
        %v4921 = vmul.f32 %v4885, %v4892
        %v4922 = vmul.f32 %v4886, %v4892
        %v4923 = vmul.f32 %v4887, %v4892
        %v4924 = vmul.f32 %v4888, %v4892
        %v4925 = vadd.f32 %v4822, %v4893
        %v4926 = vadd.f32 %v4823, %v4894
        %v4927 = vadd.f32 %v4824, %v4895
        %v4928 = vadd.f32 %v4825, %v4896
        %v4929 = vadd.f32 %v4826, %v4897
        %v4930 = vadd.f32 %v4827, %v4898
        %v4931 = vadd.f32 %v4828, %v4899
        %v4932 = vadd.f32 %v4829, %v4900
        %v4933 = vadd.f32 %v4830, %v4901
        %v4934 = vadd.f32 %v4831, %v4902
        %v4935 = vadd.f32 %v4832, %v4903
        %v4936 = vadd.f32 %v4833, %v4904
        %v4937 = vadd.f32 %v4834, %v4905
        %v4938 = vadd.f32 %v4835, %v4906
        %v4939 = vadd.f32 %v4836, %v4907
        %v4940 = vadd.f32 %v4837, %v4908
        %v4941 = vadd.f32 %v4838, %v4909
        %v4942 = vadd.f32 %v4839, %v4910
        %v4943 = vadd.f32 %v4840, %v4911
        %v4944 = vadd.f32 %v4841, %v4912
        %v4945 = vadd.f32 %v4842, %v4913
        %v4946 = vadd.f32 %v4843, %v4914
        %v4947 = vadd.f32 %v4844, %v4915
        %v4948 = vadd.f32 %v4845, %v4916
        %v4949 = vadd.f32 %v4846, %v4917
        %v4950 = vadd.f32 %v4847, %v4918
        %v4951 = vadd.f32 %v4848, %v4919
        %v4952 = vadd.f32 %v4849, %v4920
        %v4953 = vadd.f32 %v4850, %v4921
        %v4954 = vadd.f32 %v4851, %v4922
        %v4955 = vadd.f32 %v4852, %v4923
        %v4956 = vadd.f32 %v4853, %v4924
        %v4957 = vld [vmem:[%s4854 + $0x1] sm:$0x1]
        %v4958 = vld [vmem:[%s4856 + $0x1] sm:$0xff]
        %v4959 = vld [vmem:[%s4856 + $0x9] sm:$0xff]
        %v4960 = vld [vmem:[%s4856 + $0x19] sm:$0xff]
        %v4961 = vld [vmem:[%s4856 + $0x21] sm:$0xff]
        %v4962 = vld [vmem:[%s4856 + $0x31] sm:$0xff]
        %v4963 = vld [vmem:[%s4856 + $0x39] sm:$0xff]
        %v4964 = vld [vmem:[%s4856 + $0x49] sm:$0xff]
        %v4965 = vld [vmem:[%s4856 + $0x51] sm:$0xff]
        %v4966 = vld [vmem:[%s4856 + $0x61] sm:$0xff]
        %v4967 = vld [vmem:[%s4856 + $0x69] sm:$0xff]
        %v4968 = vld [vmem:[%s4856 + $0x79] sm:$0xff]
        %v4969 = vld [vmem:[%s4856 + $0x81] sm:$0xff]
        %v4970 = vld [vmem:[%s4856 + $0x91] sm:$0xff]
        %v4971 = vld [vmem:[%s4856 + $0x99] sm:$0xff]
        %v4972 = vld [vmem:[%s4856 + $0xa9] sm:$0xff]
        %v4973 = vld [vmem:[%s4856 + $0xb1] sm:$0xff]
        %v4974 = vld [vmem:[%s4856 + $0xc1] sm:$0xff]
        %v4975 = vld [vmem:[%s4856 + $0xc9] sm:$0xff]
        %v4976 = vld [vmem:[%s4856 + $0xd9] sm:$0xff]
        %v4977 = vld [vmem:[%s4856 + $0xe1] sm:$0xff]
        %v4978 = vld [vmem:[%s4856 + $0xf1] sm:$0xff]
        %v4979 = vld [vmem:[%s4856 + $0xf9] sm:$0xff]
        %v4980 = vld [vmem:[%s4856 + $0x109] sm:$0xff]
        %v4981 = vld [vmem:[%s4856 + $0x111] sm:$0xff]
        %v4982 = vld [vmem:[%s4856 + $0x121] sm:$0xff]
        %v4983 = vld [vmem:[%s4856 + $0x129] sm:$0xff]
        %v4984 = vld [vmem:[%s4856 + $0x139] sm:$0xff]
        %v4985 = vld [vmem:[%s4856 + $0x141] sm:$0xff]
        %v4986 = vld [vmem:[%s4856 + $0x151] sm:$0xff]
        %v4987 = vld [vmem:[%s4856 + $0x159] sm:$0xff]
        %v4988 = vld [vmem:[%s4856 + $0x169] sm:$0xff]
        %v4989 = vld [vmem:[%s4856 + $0x171] sm:$0xff]
        %v4990 = vlaneseq
        %v4991 = vshrl.u32 %v4990, 7
        %v4992 = vsub.s32 0, %v4991
        %v4993 = vrot.slane %v4957, %v4992
        %v4994 = vmul.f32 %v4958, %v4993
        %v4995 = vmul.f32 %v4959, %v4993
        %v4996 = vmul.f32 %v4960, %v4993
        %v4997 = vmul.f32 %v4961, %v4993
        %v4998 = vmul.f32 %v4962, %v4993
        %v4999 = vmul.f32 %v4963, %v4993
        %v5000 = vmul.f32 %v4964, %v4993
        %v5001 = vmul.f32 %v4965, %v4993
        %v5002 = vmul.f32 %v4966, %v4993
        %v5003 = vmul.f32 %v4967, %v4993
        %v5004 = vmul.f32 %v4968, %v4993
        %v5005 = vmul.f32 %v4969, %v4993
        %v5006 = vmul.f32 %v4970, %v4993
        %v5007 = vmul.f32 %v4971, %v4993
        %v5008 = vmul.f32 %v4972, %v4993
        %v5009 = vmul.f32 %v4973, %v4993
        %v5010 = vmul.f32 %v4974, %v4993
        %v5011 = vmul.f32 %v4975, %v4993
        %v5012 = vmul.f32 %v4976, %v4993
        %v5013 = vmul.f32 %v4977, %v4993
        %v5014 = vmul.f32 %v4978, %v4993
        %v5015 = vmul.f32 %v4979, %v4993
        %v5016 = vmul.f32 %v4980, %v4993
        %v5017 = vmul.f32 %v4981, %v4993
        %v5018 = vmul.f32 %v4982, %v4993
        %v5019 = vmul.f32 %v4983, %v4993
        %v5020 = vmul.f32 %v4984, %v4993
        %v5021 = vmul.f32 %v4985, %v4993
        %v5022 = vmul.f32 %v4986, %v4993
        %v5023 = vmul.f32 %v4987, %v4993
        %v5024 = vmul.f32 %v4988, %v4993
        %v5025 = vmul.f32 %v4989, %v4993
        %v5026 = vadd.f32 %v4925, %v4994
        %v5027 = vadd.f32 %v4926, %v4995
        %v5028 = vadd.f32 %v4927, %v4996
        %v5029 = vadd.f32 %v4928, %v4997
        %v5030 = vadd.f32 %v4929, %v4998
        %v5031 = vadd.f32 %v4930, %v4999
        %v5032 = vadd.f32 %v4931, %v5000
        %v5033 = vadd.f32 %v4932, %v5001
        %v5034 = vadd.f32 %v4933, %v5002
        %v5035 = vadd.f32 %v4934, %v5003
        %v5036 = vadd.f32 %v4935, %v5004
        %v5037 = vadd.f32 %v4936, %v5005
        %v5038 = vadd.f32 %v4937, %v5006
        %v5039 = vadd.f32 %v4938, %v5007
        %v5040 = vadd.f32 %v4939, %v5008
        %v5041 = vadd.f32 %v4940, %v5009
        %v5042 = vadd.f32 %v4941, %v5010
        %v5043 = vadd.f32 %v4942, %v5011
        %v5044 = vadd.f32 %v4943, %v5012
        %v5045 = vadd.f32 %v4944, %v5013
        %v5046 = vadd.f32 %v4945, %v5014
        %v5047 = vadd.f32 %v4946, %v5015
        %v5048 = vadd.f32 %v4947, %v5016
        %v5049 = vadd.f32 %v4948, %v5017
        %v5050 = vadd.f32 %v4949, %v5018
        %v5051 = vadd.f32 %v4950, %v5019
        %v5052 = vadd.f32 %v4951, %v5020
        %v5053 = vadd.f32 %v4952, %v5021
        %v5054 = vadd.f32 %v4953, %v5022
        %v5055 = vadd.f32 %v4954, %v5023
        %v5056 = vadd.f32 %v4955, %v5024
        %v5057 = vadd.f32 %v4956, %v5025
        %v5058 = vld [vmem:[%s4854 + $0x2] sm:$0x1]
        %v5059 = vld [vmem:[%s4856 + $0x2] sm:$0xff]
        %v5060 = vld [vmem:[%s4856 + $0xa] sm:$0xff]
        %v5061 = vld [vmem:[%s4856 + $0x1a] sm:$0xff]
        %v5062 = vld [vmem:[%s4856 + $0x22] sm:$0xff]
        %v5063 = vld [vmem:[%s4856 + $0x32] sm:$0xff]
        %v5064 = vld [vmem:[%s4856 + $0x3a] sm:$0xff]
        %v5065 = vld [vmem:[%s4856 + $0x4a] sm:$0xff]
        %v5066 = vld [vmem:[%s4856 + $0x52] sm:$0xff]
        %v5067 = vld [vmem:[%s4856 + $0x62] sm:$0xff]
        %v5068 = vld [vmem:[%s4856 + $0x6a] sm:$0xff]
        %v5069 = vld [vmem:[%s4856 + $0x7a] sm:$0xff]
        %v5070 = vld [vmem:[%s4856 + $0x82] sm:$0xff]
        %v5071 = vld [vmem:[%s4856 + $0x92] sm:$0xff]
        %v5072 = vld [vmem:[%s4856 + $0x9a] sm:$0xff]
        %v5073 = vld [vmem:[%s4856 + $0xaa] sm:$0xff]
        %v5074 = vld [vmem:[%s4856 + $0xb2] sm:$0xff]
        %v5075 = vld [vmem:[%s4856 + $0xc2] sm:$0xff]
        %v5076 = vld [vmem:[%s4856 + $0xca] sm:$0xff]
        %v5077 = vld [vmem:[%s4856 + $0xda] sm:$0xff]
        %v5078 = vld [vmem:[%s4856 + $0xe2] sm:$0xff]
        %v5079 = vld [vmem:[%s4856 + $0xf2] sm:$0xff]
        %v5080 = vld [vmem:[%s4856 + $0xfa] sm:$0xff]
        %v5081 = vld [vmem:[%s4856 + $0x10a] sm:$0xff]
        %v5082 = vld [vmem:[%s4856 + $0x112] sm:$0xff]
        %v5083 = vld [vmem:[%s4856 + $0x122] sm:$0xff]
        %v5084 = vld [vmem:[%s4856 + $0x12a] sm:$0xff]
        %v5085 = vld [vmem:[%s4856 + $0x13a] sm:$0xff]
        %v5086 = vld [vmem:[%s4856 + $0x142] sm:$0xff]
        %v5087 = vld [vmem:[%s4856 + $0x152] sm:$0xff]
        %v5088 = vld [vmem:[%s4856 + $0x15a] sm:$0xff]
        %v5089 = vld [vmem:[%s4856 + $0x16a] sm:$0xff]
        %v5090 = vld [vmem:[%s4856 + $0x172] sm:$0xff]
        %v5091 = vlaneseq
        %v5092 = vshrl.u32 %v5091, 7
        %v5093 = vsub.s32 0, %v5092
        %v5094 = vrot.slane %v5058, %v5093
        %v5095 = vmul.f32 %v5059, %v5094
        %v5096 = vmul.f32 %v5060, %v5094
        %v5097 = vmul.f32 %v5061, %v5094
        %v5098 = vmul.f32 %v5062, %v5094
        %v5099 = vmul.f32 %v5063, %v5094
        %v5100 = vmul.f32 %v5064, %v5094
        %v5101 = vmul.f32 %v5065, %v5094
        %v5102 = vmul.f32 %v5066, %v5094
        %v5103 = vmul.f32 %v5067, %v5094
        %v5104 = vmul.f32 %v5068, %v5094
        %v5105 = vmul.f32 %v5069, %v5094
        %v5106 = vmul.f32 %v5070, %v5094
        %v5107 = vmul.f32 %v5071, %v5094
        %v5108 = vmul.f32 %v5072, %v5094
        %v5109 = vmul.f32 %v5073, %v5094
        %v5110 = vmul.f32 %v5074, %v5094
        %v5111 = vmul.f32 %v5075, %v5094
        %v5112 = vmul.f32 %v5076, %v5094
        %v5113 = vmul.f32 %v5077, %v5094
        %v5114 = vmul.f32 %v5078, %v5094
        %v5115 = vmul.f32 %v5079, %v5094
        %v5116 = vmul.f32 %v5080, %v5094
        %v5117 = vmul.f32 %v5081, %v5094
        %v5118 = vmul.f32 %v5082, %v5094
        %v5119 = vmul.f32 %v5083, %v5094
        %v5120 = vmul.f32 %v5084, %v5094
        %v5121 = vmul.f32 %v5085, %v5094
        %v5122 = vmul.f32 %v5086, %v5094
        %v5123 = vmul.f32 %v5087, %v5094
        %v5124 = vmul.f32 %v5088, %v5094
        %v5125 = vmul.f32 %v5089, %v5094
        %v5126 = vmul.f32 %v5090, %v5094
        %v5127 = vadd.f32 %v5026, %v5095
        %v5128 = vadd.f32 %v5027, %v5096
        %v5129 = vadd.f32 %v5028, %v5097
        %v5130 = vadd.f32 %v5029, %v5098
        %v5131 = vadd.f32 %v5030, %v5099
        %v5132 = vadd.f32 %v5031, %v5100
        %v5133 = vadd.f32 %v5032, %v5101
        %v5134 = vadd.f32 %v5033, %v5102
        %v5135 = vadd.f32 %v5034, %v5103
        %v5136 = vadd.f32 %v5035, %v5104
        %v5137 = vadd.f32 %v5036, %v5105
        %v5138 = vadd.f32 %v5037, %v5106
        %v5139 = vadd.f32 %v5038, %v5107
        %v5140 = vadd.f32 %v5039, %v5108
        %v5141 = vadd.f32 %v5040, %v5109
        %v5142 = vadd.f32 %v5041, %v5110
        %v5143 = vadd.f32 %v5042, %v5111
        %v5144 = vadd.f32 %v5043, %v5112
        %v5145 = vadd.f32 %v5044, %v5113
        %v5146 = vadd.f32 %v5045, %v5114
        %v5147 = vadd.f32 %v5046, %v5115
        %v5148 = vadd.f32 %v5047, %v5116
        %v5149 = vadd.f32 %v5048, %v5117
        %v5150 = vadd.f32 %v5049, %v5118
        %v5151 = vadd.f32 %v5050, %v5119
        %v5152 = vadd.f32 %v5051, %v5120
        %v5153 = vadd.f32 %v5052, %v5121
        %v5154 = vadd.f32 %v5053, %v5122
        %v5155 = vadd.f32 %v5054, %v5123
        %v5156 = vadd.f32 %v5055, %v5124
        %v5157 = vadd.f32 %v5056, %v5125
        %v5158 = vadd.f32 %v5057, %v5126
        %v5159 = vld [vmem:[%s4854 + $0x3] sm:$0x1]
        %v5160 = vld [vmem:[%s4856 + $0x3] sm:$0xff]
        %v5161 = vld [vmem:[%s4856 + $0xb] sm:$0xff]
        %v5162 = vld [vmem:[%s4856 + $0x1b] sm:$0xff]
        %v5163 = vld [vmem:[%s4856 + $0x23] sm:$0xff]
        %v5164 = vld [vmem:[%s4856 + $0x33] sm:$0xff]
        %v5165 = vld [vmem:[%s4856 + $0x3b] sm:$0xff]
        %v5166 = vld [vmem:[%s4856 + $0x4b] sm:$0xff]
        %v5167 = vld [vmem:[%s4856 + $0x53] sm:$0xff]
        %v5168 = vld [vmem:[%s4856 + $0x63] sm:$0xff]
        %v5169 = vld [vmem:[%s4856 + $0x6b] sm:$0xff]
        %v5170 = vld [vmem:[%s4856 + $0x7b] sm:$0xff]
        %v5171 = vld [vmem:[%s4856 + $0x83] sm:$0xff]
        %v5172 = vld [vmem:[%s4856 + $0x93] sm:$0xff]
        %v5173 = vld [vmem:[%s4856 + $0x9b] sm:$0xff]
        %v5174 = vld [vmem:[%s4856 + $0xab] sm:$0xff]
        %v5175 = vld [vmem:[%s4856 + $0xb3] sm:$0xff]
        %v5176 = vld [vmem:[%s4856 + $0xc3] sm:$0xff]
        %v5177 = vld [vmem:[%s4856 + $0xcb] sm:$0xff]
        %v5178 = vld [vmem:[%s4856 + $0xdb] sm:$0xff]
        %v5179 = vld [vmem:[%s4856 + $0xe3] sm:$0xff]
        %v5180 = vld [vmem:[%s4856 + $0xf3] sm:$0xff]
        %v5181 = vld [vmem:[%s4856 + $0xfb] sm:$0xff]
        %v5182 = vld [vmem:[%s4856 + $0x10b] sm:$0xff]
        %v5183 = vld [vmem:[%s4856 + $0x113] sm:$0xff]
        %v5184 = vld [vmem:[%s4856 + $0x123] sm:$0xff]
        %v5185 = vld [vmem:[%s4856 + $0x12b] sm:$0xff]
        %v5186 = vld [vmem:[%s4856 + $0x13b] sm:$0xff]
        %v5187 = vld [vmem:[%s4856 + $0x143] sm:$0xff]
        %v5188 = vld [vmem:[%s4856 + $0x153] sm:$0xff]
        %v5189 = vld [vmem:[%s4856 + $0x15b] sm:$0xff]
        %v5190 = vld [vmem:[%s4856 + $0x16b] sm:$0xff]
        %v5191 = vld [vmem:[%s4856 + $0x173] sm:$0xff]
        %v5192 = vlaneseq
        %v5193 = vshrl.u32 %v5192, 7
        %v5194 = vsub.s32 0, %v5193
        %v5195 = vrot.slane %v5159, %v5194
        %v5196 = vmul.f32 %v5160, %v5195
        %v5197 = vmul.f32 %v5161, %v5195
        %v5198 = vmul.f32 %v5162, %v5195
        %v5199 = vmul.f32 %v5163, %v5195
        %v5200 = vmul.f32 %v5164, %v5195
        %v5201 = vmul.f32 %v5165, %v5195
        %v5202 = vmul.f32 %v5166, %v5195
        %v5203 = vmul.f32 %v5167, %v5195
        %v5204 = vmul.f32 %v5168, %v5195
        %v5205 = vmul.f32 %v5169, %v5195
        %v5206 = vmul.f32 %v5170, %v5195
        %v5207 = vmul.f32 %v5171, %v5195
        %v5208 = vmul.f32 %v5172, %v5195
        %v5209 = vmul.f32 %v5173, %v5195
        %v5210 = vmul.f32 %v5174, %v5195
        %v5211 = vmul.f32 %v5175, %v5195
        %v5212 = vmul.f32 %v5176, %v5195
        %v5213 = vmul.f32 %v5177, %v5195
        %v5214 = vmul.f32 %v5178, %v5195
        %v5215 = vmul.f32 %v5179, %v5195
        %v5216 = vmul.f32 %v5180, %v5195
        %v5217 = vmul.f32 %v5181, %v5195
        %v5218 = vmul.f32 %v5182, %v5195
        %v5219 = vmul.f32 %v5183, %v5195
        %v5220 = vmul.f32 %v5184, %v5195
        %v5221 = vmul.f32 %v5185, %v5195
        %v5222 = vmul.f32 %v5186, %v5195
        %v5223 = vmul.f32 %v5187, %v5195
        %v5224 = vmul.f32 %v5188, %v5195
        %v5225 = vmul.f32 %v5189, %v5195
        %v5226 = vmul.f32 %v5190, %v5195
        %v5227 = vmul.f32 %v5191, %v5195
        %v5228 = vadd.f32 %v5127, %v5196
        %v5229 = vadd.f32 %v5128, %v5197
        %v5230 = vadd.f32 %v5129, %v5198
        %v5231 = vadd.f32 %v5130, %v5199
        %v5232 = vadd.f32 %v5131, %v5200
        %v5233 = vadd.f32 %v5132, %v5201
        %v5234 = vadd.f32 %v5133, %v5202
        %v5235 = vadd.f32 %v5134, %v5203
        %v5236 = vadd.f32 %v5135, %v5204
        %v5237 = vadd.f32 %v5136, %v5205
        %v5238 = vadd.f32 %v5137, %v5206
        %v5239 = vadd.f32 %v5138, %v5207
        %v5240 = vadd.f32 %v5139, %v5208
        %v5241 = vadd.f32 %v5140, %v5209
        %v5242 = vadd.f32 %v5141, %v5210
        %v5243 = vadd.f32 %v5142, %v5211
        %v5244 = vadd.f32 %v5143, %v5212
        %v5245 = vadd.f32 %v5144, %v5213
        %v5246 = vadd.f32 %v5145, %v5214
        %v5247 = vadd.f32 %v5146, %v5215
        %v5248 = vadd.f32 %v5147, %v5216
        %v5249 = vadd.f32 %v5148, %v5217
        %v5250 = vadd.f32 %v5149, %v5218
        %v5251 = vadd.f32 %v5150, %v5219
        %v5252 = vadd.f32 %v5151, %v5220
        %v5253 = vadd.f32 %v5152, %v5221
        %v5254 = vadd.f32 %v5153, %v5222
        %v5255 = vadd.f32 %v5154, %v5223
        %v5256 = vadd.f32 %v5155, %v5224
        %v5257 = vadd.f32 %v5156, %v5225
        %v5258 = vadd.f32 %v5157, %v5226
        %v5259 = vadd.f32 %v5158, %v5227
        %v5260 = vld [vmem:[%s4854 + $0x4] sm:$0x1]
        %v5261 = vld [vmem:[%s4856 + $0x4] sm:$0xff]
        %v5262 = vld [vmem:[%s4856 + $0xc] sm:$0xff]
        %v5263 = vld [vmem:[%s4856 + $0x1c] sm:$0xff]
        %v5264 = vld [vmem:[%s4856 + $0x24] sm:$0xff]
        %v5265 = vld [vmem:[%s4856 + $0x34] sm:$0xff]
        %v5266 = vld [vmem:[%s4856 + $0x3c] sm:$0xff]
        %v5267 = vld [vmem:[%s4856 + $0x4c] sm:$0xff]
        %v5268 = vld [vmem:[%s4856 + $0x54] sm:$0xff]
        %v5269 = vld [vmem:[%s4856 + $0x64] sm:$0xff]
        %v5270 = vld [vmem:[%s4856 + $0x6c] sm:$0xff]
        %v5271 = vld [vmem:[%s4856 + $0x7c] sm:$0xff]
        %v5272 = vld [vmem:[%s4856 + $0x84] sm:$0xff]
        %v5273 = vld [vmem:[%s4856 + $0x94] sm:$0xff]
        %v5274 = vld [vmem:[%s4856 + $0x9c] sm:$0xff]
        %v5275 = vld [vmem:[%s4856 + $0xac] sm:$0xff]
        %v5276 = vld [vmem:[%s4856 + $0xb4] sm:$0xff]
        %v5277 = vld [vmem:[%s4856 + $0xc4] sm:$0xff]
        %v5278 = vld [vmem:[%s4856 + $0xcc] sm:$0xff]
        %v5279 = vld [vmem:[%s4856 + $0xdc] sm:$0xff]
        %v5280 = vld [vmem:[%s4856 + $0xe4] sm:$0xff]
        %v5281 = vld [vmem:[%s4856 + $0xf4] sm:$0xff]
        %v5282 = vld [vmem:[%s4856 + $0xfc] sm:$0xff]
        %v5283 = vld [vmem:[%s4856 + $0x10c] sm:$0xff]
        %v5284 = vld [vmem:[%s4856 + $0x114] sm:$0xff]
        %v5285 = vld [vmem:[%s4856 + $0x124] sm:$0xff]
        %v5286 = vld [vmem:[%s4856 + $0x12c] sm:$0xff]
        %v5287 = vld [vmem:[%s4856 + $0x13c] sm:$0xff]
        %v5288 = vld [vmem:[%s4856 + $0x144] sm:$0xff]
        %v5289 = vld [vmem:[%s4856 + $0x154] sm:$0xff]
        %v5290 = vld [vmem:[%s4856 + $0x15c] sm:$0xff]
        %v5291 = vld [vmem:[%s4856 + $0x16c] sm:$0xff]
        %v5292 = vld [vmem:[%s4856 + $0x174] sm:$0xff]
        %v5293 = vlaneseq
        %v5294 = vshrl.u32 %v5293, 7
        %v5295 = vsub.s32 0, %v5294
        %v5296 = vrot.slane %v5260, %v5295
        %v5297 = vmul.f32 %v5261, %v5296
        %v5298 = vmul.f32 %v5262, %v5296
        %v5299 = vmul.f32 %v5263, %v5296
        %v5300 = vmul.f32 %v5264, %v5296
        %v5301 = vmul.f32 %v5265, %v5296
        %v5302 = vmul.f32 %v5266, %v5296
        %v5303 = vmul.f32 %v5267, %v5296
        %v5304 = vmul.f32 %v5268, %v5296
        %v5305 = vmul.f32 %v5269, %v5296
        %v5306 = vmul.f32 %v5270, %v5296
        %v5307 = vmul.f32 %v5271, %v5296
        %v5308 = vmul.f32 %v5272, %v5296
        %v5309 = vmul.f32 %v5273, %v5296
        %v5310 = vmul.f32 %v5274, %v5296
        %v5311 = vmul.f32 %v5275, %v5296
        %v5312 = vmul.f32 %v5276, %v5296
        %v5313 = vmul.f32 %v5277, %v5296
        %v5314 = vmul.f32 %v5278, %v5296
        %v5315 = vmul.f32 %v5279, %v5296
        %v5316 = vmul.f32 %v5280, %v5296
        %v5317 = vmul.f32 %v5281, %v5296
        %v5318 = vmul.f32 %v5282, %v5296
        %v5319 = vmul.f32 %v5283, %v5296
        %v5320 = vmul.f32 %v5284, %v5296
        %v5321 = vmul.f32 %v5285, %v5296
        %v5322 = vmul.f32 %v5286, %v5296
        %v5323 = vmul.f32 %v5287, %v5296
        %v5324 = vmul.f32 %v5288, %v5296
        %v5325 = vmul.f32 %v5289, %v5296
        %v5326 = vmul.f32 %v5290, %v5296
        %v5327 = vmul.f32 %v5291, %v5296
        %v5328 = vmul.f32 %v5292, %v5296
        %v5329 = vadd.f32 %v5228, %v5297
        %v5330 = vadd.f32 %v5229, %v5298
        %v5331 = vadd.f32 %v5230, %v5299
        %v5332 = vadd.f32 %v5231, %v5300
        %v5333 = vadd.f32 %v5232, %v5301
        %v5334 = vadd.f32 %v5233, %v5302
        %v5335 = vadd.f32 %v5234, %v5303
        %v5336 = vadd.f32 %v5235, %v5304
        %v5337 = vadd.f32 %v5236, %v5305
        %v5338 = vadd.f32 %v5237, %v5306
        %v5339 = vadd.f32 %v5238, %v5307
        %v5340 = vadd.f32 %v5239, %v5308
        %v5341 = vadd.f32 %v5240, %v5309
        %v5342 = vadd.f32 %v5241, %v5310
        %v5343 = vadd.f32 %v5242, %v5311
        %v5344 = vadd.f32 %v5243, %v5312
        %v5345 = vadd.f32 %v5244, %v5313
        %v5346 = vadd.f32 %v5245, %v5314
        %v5347 = vadd.f32 %v5246, %v5315
        %v5348 = vadd.f32 %v5247, %v5316
        %v5349 = vadd.f32 %v5248, %v5317
        %v5350 = vadd.f32 %v5249, %v5318
        %v5351 = vadd.f32 %v5250, %v5319
        %v5352 = vadd.f32 %v5251, %v5320
        %v5353 = vadd.f32 %v5252, %v5321
        %v5354 = vadd.f32 %v5253, %v5322
        %v5355 = vadd.f32 %v5254, %v5323
        %v5356 = vadd.f32 %v5255, %v5324
        %v5357 = vadd.f32 %v5256, %v5325
        %v5358 = vadd.f32 %v5257, %v5326
        %v5359 = vadd.f32 %v5258, %v5327
        %v5360 = vadd.f32 %v5259, %v5328
        %v5361 = vld [vmem:[%s4854 + $0x5] sm:$0x1]
        %v5362 = vld [vmem:[%s4856 + $0x5] sm:$0xff]
        %v5363 = vld [vmem:[%s4856 + $0xd] sm:$0xff]
        %v5364 = vld [vmem:[%s4856 + $0x1d] sm:$0xff]
        %v5365 = vld [vmem:[%s4856 + $0x25] sm:$0xff]
        %v5366 = vld [vmem:[%s4856 + $0x35] sm:$0xff]
        %v5367 = vld [vmem:[%s4856 + $0x3d] sm:$0xff]
        %v5368 = vld [vmem:[%s4856 + $0x4d] sm:$0xff]
        %v5369 = vld [vmem:[%s4856 + $0x55] sm:$0xff]
        %v5370 = vld [vmem:[%s4856 + $0x65] sm:$0xff]
        %v5371 = vld [vmem:[%s4856 + $0x6d] sm:$0xff]
        %v5372 = vld [vmem:[%s4856 + $0x7d] sm:$0xff]
        %v5373 = vld [vmem:[%s4856 + $0x85] sm:$0xff]
        %v5374 = vld [vmem:[%s4856 + $0x95] sm:$0xff]
        %v5375 = vld [vmem:[%s4856 + $0x9d] sm:$0xff]
        %v5376 = vld [vmem:[%s4856 + $0xad] sm:$0xff]
        %v5377 = vld [vmem:[%s4856 + $0xb5] sm:$0xff]
        %v5378 = vld [vmem:[%s4856 + $0xc5] sm:$0xff]
        %v5379 = vld [vmem:[%s4856 + $0xcd] sm:$0xff]
        %v5380 = vld [vmem:[%s4856 + $0xdd] sm:$0xff]
        %v5381 = vld [vmem:[%s4856 + $0xe5] sm:$0xff]
        %v5382 = vld [vmem:[%s4856 + $0xf5] sm:$0xff]
        %v5383 = vld [vmem:[%s4856 + $0xfd] sm:$0xff]
        %v5384 = vld [vmem:[%s4856 + $0x10d] sm:$0xff]
        %v5385 = vld [vmem:[%s4856 + $0x115] sm:$0xff]
        %v5386 = vld [vmem:[%s4856 + $0x125] sm:$0xff]
        %v5387 = vld [vmem:[%s4856 + $0x12d] sm:$0xff]
        %v5388 = vld [vmem:[%s4856 + $0x13d] sm:$0xff]
        %v5389 = vld [vmem:[%s4856 + $0x145] sm:$0xff]
        %v5390 = vld [vmem:[%s4856 + $0x155] sm:$0xff]
        %v5391 = vld [vmem:[%s4856 + $0x15d] sm:$0xff]
        %v5392 = vld [vmem:[%s4856 + $0x16d] sm:$0xff]
        %v5393 = vld [vmem:[%s4856 + $0x175] sm:$0xff]
        %v5394 = vlaneseq
        %v5395 = vshrl.u32 %v5394, 7
        %v5396 = vsub.s32 0, %v5395
        %v5397 = vrot.slane %v5361, %v5396
        %v5398 = vmul.f32 %v5362, %v5397
        %v5399 = vmul.f32 %v5363, %v5397
        %v5400 = vmul.f32 %v5364, %v5397
        %v5401 = vmul.f32 %v5365, %v5397
        %v5402 = vmul.f32 %v5366, %v5397
        %v5403 = vmul.f32 %v5367, %v5397
        %v5404 = vmul.f32 %v5368, %v5397
        %v5405 = vmul.f32 %v5369, %v5397
        %v5406 = vmul.f32 %v5370, %v5397
        %v5407 = vmul.f32 %v5371, %v5397
        %v5408 = vmul.f32 %v5372, %v5397
        %v5409 = vmul.f32 %v5373, %v5397
        %v5410 = vmul.f32 %v5374, %v5397
        %v5411 = vmul.f32 %v5375, %v5397
        %v5412 = vmul.f32 %v5376, %v5397
        %v5413 = vmul.f32 %v5377, %v5397
        %v5414 = vmul.f32 %v5378, %v5397
        %v5415 = vmul.f32 %v5379, %v5397
        %v5416 = vmul.f32 %v5380, %v5397
        %v5417 = vmul.f32 %v5381, %v5397
        %v5418 = vmul.f32 %v5382, %v5397
        %v5419 = vmul.f32 %v5383, %v5397
        %v5420 = vmul.f32 %v5384, %v5397
        %v5421 = vmul.f32 %v5385, %v5397
        %v5422 = vmul.f32 %v5386, %v5397
        %v5423 = vmul.f32 %v5387, %v5397
        %v5424 = vmul.f32 %v5388, %v5397
        %v5425 = vmul.f32 %v5389, %v5397
        %v5426 = vmul.f32 %v5390, %v5397
        %v5427 = vmul.f32 %v5391, %v5397
        %v5428 = vmul.f32 %v5392, %v5397
        %v5429 = vmul.f32 %v5393, %v5397
        %v5430 = vadd.f32 %v5329, %v5398
        %v5431 = vadd.f32 %v5330, %v5399
        %v5432 = vadd.f32 %v5331, %v5400
        %v5433 = vadd.f32 %v5332, %v5401
        %v5434 = vadd.f32 %v5333, %v5402
        %v5435 = vadd.f32 %v5334, %v5403
        %v5436 = vadd.f32 %v5335, %v5404
        %v5437 = vadd.f32 %v5336, %v5405
        %v5438 = vadd.f32 %v5337, %v5406
        %v5439 = vadd.f32 %v5338, %v5407
        %v5440 = vadd.f32 %v5339, %v5408
        %v5441 = vadd.f32 %v5340, %v5409
        %v5442 = vadd.f32 %v5341, %v5410
        %v5443 = vadd.f32 %v5342, %v5411
        %v5444 = vadd.f32 %v5343, %v5412
        %v5445 = vadd.f32 %v5344, %v5413
        %v5446 = vadd.f32 %v5345, %v5414
        %v5447 = vadd.f32 %v5346, %v5415
        %v5448 = vadd.f32 %v5347, %v5416
        %v5449 = vadd.f32 %v5348, %v5417
        %v5450 = vadd.f32 %v5349, %v5418
        %v5451 = vadd.f32 %v5350, %v5419
        %v5452 = vadd.f32 %v5351, %v5420
        %v5453 = vadd.f32 %v5352, %v5421
        %v5454 = vadd.f32 %v5353, %v5422
        %v5455 = vadd.f32 %v5354, %v5423
        %v5456 = vadd.f32 %v5355, %v5424
        %v5457 = vadd.f32 %v5356, %v5425
        %v5458 = vadd.f32 %v5357, %v5426
        %v5459 = vadd.f32 %v5358, %v5427
        %v5460 = vadd.f32 %v5359, %v5428
        %v5461 = vadd.f32 %v5360, %v5429
        %v5462 = vld [vmem:[%s4854 + $0x6] sm:$0x1]
        %v5463 = vld [vmem:[%s4856 + $0x6] sm:$0xff]
        %v5464 = vld [vmem:[%s4856 + $0xe] sm:$0xff]
        %v5465 = vld [vmem:[%s4856 + $0x1e] sm:$0xff]
        %v5466 = vld [vmem:[%s4856 + $0x26] sm:$0xff]
        %v5467 = vld [vmem:[%s4856 + $0x36] sm:$0xff]
        %v5468 = vld [vmem:[%s4856 + $0x3e] sm:$0xff]
        %v5469 = vld [vmem:[%s4856 + $0x4e] sm:$0xff]
        %v5470 = vld [vmem:[%s4856 + $0x56] sm:$0xff]
        %v5471 = vld [vmem:[%s4856 + $0x66] sm:$0xff]
        %v5472 = vld [vmem:[%s4856 + $0x6e] sm:$0xff]
        %v5473 = vld [vmem:[%s4856 + $0x7e] sm:$0xff]
        %v5474 = vld [vmem:[%s4856 + $0x86] sm:$0xff]
        %v5475 = vld [vmem:[%s4856 + $0x96] sm:$0xff]
        %v5476 = vld [vmem:[%s4856 + $0x9e] sm:$0xff]
        %v5477 = vld [vmem:[%s4856 + $0xae] sm:$0xff]
        %v5478 = vld [vmem:[%s4856 + $0xb6] sm:$0xff]
        %v5479 = vld [vmem:[%s4856 + $0xc6] sm:$0xff]
        %v5480 = vld [vmem:[%s4856 + $0xce] sm:$0xff]
        %v5481 = vld [vmem:[%s4856 + $0xde] sm:$0xff]
        %v5482 = vld [vmem:[%s4856 + $0xe6] sm:$0xff]
        %v5483 = vld [vmem:[%s4856 + $0xf6] sm:$0xff]
        %v5484 = vld [vmem:[%s4856 + $0xfe] sm:$0xff]
        %v5485 = vld [vmem:[%s4856 + $0x10e] sm:$0xff]
        %v5486 = vld [vmem:[%s4856 + $0x116] sm:$0xff]
        %v5487 = vld [vmem:[%s4856 + $0x126] sm:$0xff]
        %v5488 = vld [vmem:[%s4856 + $0x12e] sm:$0xff]
        %v5489 = vld [vmem:[%s4856 + $0x13e] sm:$0xff]
        %v5490 = vld [vmem:[%s4856 + $0x146] sm:$0xff]
        %v5491 = vld [vmem:[%s4856 + $0x156] sm:$0xff]
        %v5492 = vld [vmem:[%s4856 + $0x15e] sm:$0xff]
        %v5493 = vld [vmem:[%s4856 + $0x16e] sm:$0xff]
        %v5494 = vld [vmem:[%s4856 + $0x176] sm:$0xff]
        %v5495 = vlaneseq
        %v5496 = vshrl.u32 %v5495, 7
        %v5497 = vsub.s32 0, %v5496
        %v5498 = vrot.slane %v5462, %v5497
        %v5499 = vmul.f32 %v5463, %v5498
        %v5500 = vmul.f32 %v5464, %v5498
        %v5501 = vmul.f32 %v5465, %v5498
        %v5502 = vmul.f32 %v5466, %v5498
        %v5503 = vmul.f32 %v5467, %v5498
        %v5504 = vmul.f32 %v5468, %v5498
        %v5505 = vmul.f32 %v5469, %v5498
        %v5506 = vmul.f32 %v5470, %v5498
        %v5507 = vmul.f32 %v5471, %v5498
        %v5508 = vmul.f32 %v5472, %v5498
        %v5509 = vmul.f32 %v5473, %v5498
        %v5510 = vmul.f32 %v5474, %v5498
        %v5511 = vmul.f32 %v5475, %v5498
        %v5512 = vmul.f32 %v5476, %v5498
        %v5513 = vmul.f32 %v5477, %v5498
        %v5514 = vmul.f32 %v5478, %v5498
        %v5515 = vmul.f32 %v5479, %v5498
        %v5516 = vmul.f32 %v5480, %v5498
        %v5517 = vmul.f32 %v5481, %v5498
        %v5518 = vmul.f32 %v5482, %v5498
        %v5519 = vmul.f32 %v5483, %v5498
        %v5520 = vmul.f32 %v5484, %v5498
        %v5521 = vmul.f32 %v5485, %v5498
        %v5522 = vmul.f32 %v5486, %v5498
        %v5523 = vmul.f32 %v5487, %v5498
        %v5524 = vmul.f32 %v5488, %v5498
        %v5525 = vmul.f32 %v5489, %v5498
        %v5526 = vmul.f32 %v5490, %v5498
        %v5527 = vmul.f32 %v5491, %v5498
        %v5528 = vmul.f32 %v5492, %v5498
        %v5529 = vmul.f32 %v5493, %v5498
        %v5530 = vmul.f32 %v5494, %v5498
        %v5531 = vadd.f32 %v5430, %v5499
        %v5532 = vadd.f32 %v5431, %v5500
        %v5533 = vadd.f32 %v5432, %v5501
        %v5534 = vadd.f32 %v5433, %v5502
        %v5535 = vadd.f32 %v5434, %v5503
        %v5536 = vadd.f32 %v5435, %v5504
        %v5537 = vadd.f32 %v5436, %v5505
        %v5538 = vadd.f32 %v5437, %v5506
        %v5539 = vadd.f32 %v5438, %v5507
        %v5540 = vadd.f32 %v5439, %v5508
        %v5541 = vadd.f32 %v5440, %v5509
        %v5542 = vadd.f32 %v5441, %v5510
        %v5543 = vadd.f32 %v5442, %v5511
        %v5544 = vadd.f32 %v5443, %v5512
        %v5545 = vadd.f32 %v5444, %v5513
        %v5546 = vadd.f32 %v5445, %v5514
        %v5547 = vadd.f32 %v5446, %v5515
        %v5548 = vadd.f32 %v5447, %v5516
        %v5549 = vadd.f32 %v5448, %v5517
        %v5550 = vadd.f32 %v5449, %v5518
        %v5551 = vadd.f32 %v5450, %v5519
        %v5552 = vadd.f32 %v5451, %v5520
        %v5553 = vadd.f32 %v5452, %v5521
        %v5554 = vadd.f32 %v5453, %v5522
        %v5555 = vadd.f32 %v5454, %v5523
        %v5556 = vadd.f32 %v5455, %v5524
        %v5557 = vadd.f32 %v5456, %v5525
        %v5558 = vadd.f32 %v5457, %v5526
        %v5559 = vadd.f32 %v5458, %v5527
        %v5560 = vadd.f32 %v5459, %v5528
        %v5561 = vadd.f32 %v5460, %v5529
        %v5562 = vadd.f32 %v5461, %v5530
        %v5563 = vld [vmem:[#allocation8] sm:$0x1]
        %v5565 = vlaneseq
        %v5566 = vshrl.u32 %v5565, 7
        %v5567 = vsub.s32 0, %v5566
        %v5568 = vrot.slane %v5563, %v5567
        %v5570 = vadd.f32 %v5531, %v5568
        %v5571 = vadd.f32 %v5532, %v5568
        %v5572 = vadd.f32 %v5533, %v5568
        %v5573 = vadd.f32 %v5534, %v5568
        %v5574 = vadd.f32 %v5535, %v5568
        %v5575 = vadd.f32 %v5536, %v5568
        %v5576 = vadd.f32 %v5537, %v5568
        %v5577 = vadd.f32 %v5538, %v5568
        %v5578 = vadd.f32 %v5539, %v5568
        %v5579 = vadd.f32 %v5540, %v5568
        %v5580 = vadd.f32 %v5541, %v5568
        %v5581 = vadd.f32 %v5542, %v5568
        %v5582 = vadd.f32 %v5543, %v5568
        %v5583 = vadd.f32 %v5544, %v5568
        %v5584 = vadd.f32 %v5545, %v5568
        %v5585 = vadd.f32 %v5546, %v5568
        %v5586 = vadd.f32 %v5547, %v5568
        %v5587 = vadd.f32 %v5548, %v5568
        %v5588 = vadd.f32 %v5549, %v5568
        %v5589 = vadd.f32 %v5550, %v5568
        %v5590 = vadd.f32 %v5551, %v5568
        %v5591 = vadd.f32 %v5552, %v5568
        %v5592 = vadd.f32 %v5553, %v5568
        %v5593 = vadd.f32 %v5554, %v5568
        %v5594 = vadd.f32 %v5555, %v5568
        %v5595 = vadd.f32 %v5556, %v5568
        %v5596 = vadd.f32 %v5557, %v5568
        %v5597 = vadd.f32 %v5558, %v5568
        %v5598 = vadd.f32 %v5559, %v5568
        %v5599 = vadd.f32 %v5560, %v5568
        %v5600 = vadd.f32 %v5561, %v5568
        %v5601 = vadd.f32 %v5562, %v5568
        %v5602 = vsel %vm470, %v5570, 0.0
        %v5603 = vsel %vm470, %v5571, 0.0
        %v5604 = vadd.f32 %v5602, %v5603
        %v5605 = vrot.slane %v5604, 4
        %v5606 = vadd.f32 %v5604, %v5605
        %v5607 = vrot.slane %v5606, 2
        %v5608 = vadd.f32 %v5606, %v5607
        %v5609 = vrot.slane %v5608, 1
        %v5610 = vadd.f32 %v5608, %v5609
        %v5611 = vsel %vm470, %v5572, 0.0
        %v5612 = vsel %vm470, %v5573, 0.0
        %v5613 = vadd.f32 %v5611, %v5612
        %v5614 = vrot.slane %v5613, 4
        %v5615 = vadd.f32 %v5613, %v5614
        %v5616 = vrot.slane %v5615, 2
        %v5617 = vadd.f32 %v5615, %v5616
        %v5618 = vrot.slane %v5617, 1
        %v5619 = vadd.f32 %v5617, %v5618
        %v5620 = vsel %vm470, %v5574, 0.0
        %v5621 = vsel %vm470, %v5575, 0.0
        %v5622 = vadd.f32 %v5620, %v5621
        %v5623 = vrot.slane %v5622, 4
        %v5624 = vadd.f32 %v5622, %v5623
        %v5625 = vrot.slane %v5624, 2
        %v5626 = vadd.f32 %v5624, %v5625
        %v5627 = vrot.slane %v5626, 1
        %v5628 = vadd.f32 %v5626, %v5627
        %v5629 = vsel %vm470, %v5576, 0.0
        %v5630 = vsel %vm470, %v5577, 0.0
        %v5631 = vadd.f32 %v5629, %v5630
        %v5632 = vrot.slane %v5631, 4
        %v5633 = vadd.f32 %v5631, %v5632
        %v5634 = vrot.slane %v5633, 2
        %v5635 = vadd.f32 %v5633, %v5634
        %v5636 = vrot.slane %v5635, 1
        %v5637 = vadd.f32 %v5635, %v5636
        %v5638 = vsel %vm470, %v5578, 0.0
        %v5639 = vsel %vm470, %v5579, 0.0
        %v5640 = vadd.f32 %v5638, %v5639
        %v5641 = vrot.slane %v5640, 4
        %v5642 = vadd.f32 %v5640, %v5641
        %v5643 = vrot.slane %v5642, 2
        %v5644 = vadd.f32 %v5642, %v5643
        %v5645 = vrot.slane %v5644, 1
        %v5646 = vadd.f32 %v5644, %v5645
        %v5647 = vsel %vm470, %v5580, 0.0
        %v5648 = vsel %vm470, %v5581, 0.0
        %v5649 = vadd.f32 %v5647, %v5648
        %v5650 = vrot.slane %v5649, 4
        %v5651 = vadd.f32 %v5649, %v5650
        %v5652 = vrot.slane %v5651, 2
        %v5653 = vadd.f32 %v5651, %v5652
        %v5654 = vrot.slane %v5653, 1
        %v5655 = vadd.f32 %v5653, %v5654
        %v5656 = vsel %vm470, %v5582, 0.0
        %v5657 = vsel %vm470, %v5583, 0.0
        %v5658 = vadd.f32 %v5656, %v5657
        %v5659 = vrot.slane %v5658, 4
        %v5660 = vadd.f32 %v5658, %v5659
        %v5661 = vrot.slane %v5660, 2
        %v5662 = vadd.f32 %v5660, %v5661
        %v5663 = vrot.slane %v5662, 1
        %v5664 = vadd.f32 %v5662, %v5663
        %v5665 = vsel %vm470, %v5584, 0.0
        %v5666 = vsel %vm470, %v5585, 0.0
        %v5667 = vadd.f32 %v5665, %v5666
        %v5668 = vrot.slane %v5667, 4
        %v5669 = vadd.f32 %v5667, %v5668
        %v5670 = vrot.slane %v5669, 2
        %v5671 = vadd.f32 %v5669, %v5670
        %v5672 = vrot.slane %v5671, 1
        %v5673 = vadd.f32 %v5671, %v5672
        %v5674 = vsel %vm470, %v5586, 0.0
        %v5675 = vsel %vm470, %v5587, 0.0
        %v5676 = vadd.f32 %v5674, %v5675
        %v5677 = vrot.slane %v5676, 4
        %v5678 = vadd.f32 %v5676, %v5677
        %v5679 = vrot.slane %v5678, 2
        %v5680 = vadd.f32 %v5678, %v5679
        %v5681 = vrot.slane %v5680, 1
        %v5682 = vadd.f32 %v5680, %v5681
        %v5683 = vsel %vm470, %v5588, 0.0
        %v5684 = vsel %vm470, %v5589, 0.0
        %v5685 = vadd.f32 %v5683, %v5684
        %v5686 = vrot.slane %v5685, 4
        %v5687 = vadd.f32 %v5685, %v5686
        %v5688 = vrot.slane %v5687, 2
        %v5689 = vadd.f32 %v5687, %v5688
        %v5690 = vrot.slane %v5689, 1
        %v5691 = vadd.f32 %v5689, %v5690
        %v5692 = vsel %vm470, %v5590, 0.0
        %v5693 = vsel %vm470, %v5591, 0.0
        %v5694 = vadd.f32 %v5692, %v5693
        %v5695 = vrot.slane %v5694, 4
        %v5696 = vadd.f32 %v5694, %v5695
        %v5697 = vrot.slane %v5696, 2
        %v5698 = vadd.f32 %v5696, %v5697
        %v5699 = vrot.slane %v5698, 1
        %v5700 = vadd.f32 %v5698, %v5699
        %v5701 = vsel %vm470, %v5592, 0.0
        %v5702 = vsel %vm470, %v5593, 0.0
        %v5703 = vadd.f32 %v5701, %v5702
        %v5704 = vrot.slane %v5703, 4
        %v5705 = vadd.f32 %v5703, %v5704
        %v5706 = vrot.slane %v5705, 2
        %v5707 = vadd.f32 %v5705, %v5706
        %v5708 = vrot.slane %v5707, 1
        %v5709 = vadd.f32 %v5707, %v5708
        %v5710 = vsel %vm470, %v5594, 0.0
        %v5711 = vsel %vm470, %v5595, 0.0
        %v5712 = vadd.f32 %v5710, %v5711
        %v5713 = vrot.slane %v5712, 4
        %v5714 = vadd.f32 %v5712, %v5713
        %v5715 = vrot.slane %v5714, 2
        %v5716 = vadd.f32 %v5714, %v5715
        %v5717 = vrot.slane %v5716, 1
        %v5718 = vadd.f32 %v5716, %v5717
        %v5719 = vsel %vm470, %v5596, 0.0
        %v5720 = vsel %vm470, %v5597, 0.0
        %v5721 = vadd.f32 %v5719, %v5720
        %v5722 = vrot.slane %v5721, 4
        %v5723 = vadd.f32 %v5721, %v5722
        %v5724 = vrot.slane %v5723, 2
        %v5725 = vadd.f32 %v5723, %v5724
        %v5726 = vrot.slane %v5725, 1
        %v5727 = vadd.f32 %v5725, %v5726
        %v5728 = vsel %vm470, %v5598, 0.0
        %v5729 = vsel %vm470, %v5599, 0.0
        %v5730 = vadd.f32 %v5728, %v5729
        %v5731 = vrot.slane %v5730, 4
        %v5732 = vadd.f32 %v5730, %v5731
        %v5733 = vrot.slane %v5732, 2
        %v5734 = vadd.f32 %v5732, %v5733
        %v5735 = vrot.slane %v5734, 1
        %v5736 = vadd.f32 %v5734, %v5735
        %v5737 = vsel %vm470, %v5600, 0.0
        %v5738 = vsel %vm470, %v5601, 0.0
        %v5739 = vadd.f32 %v5737, %v5738
        %v5740 = vrot.slane %v5739, 4
        %v5741 = vadd.f32 %v5739, %v5740
        %v5742 = vrot.slane %v5741, 2
        %v5743 = vadd.f32 %v5741, %v5742
        %v5744 = vrot.slane %v5743, 1
        %v5745 = vadd.f32 %v5743, %v5744
        %v5746 = vrcp.pop 16.0
        %v5747 = vmul.f32 %v5610, %v5746
        %v5748 = vmul.f32 %v5619, %v5746
        %v5749 = vmul.f32 %v5628, %v5746
        %v5750 = vmul.f32 %v5637, %v5746
        %v5751 = vmul.f32 %v5646, %v5746
        %v5752 = vmul.f32 %v5655, %v5746
        %v5753 = vmul.f32 %v5664, %v5746
        %v5754 = vmul.f32 %v5673, %v5746
        %v5755 = vmul.f32 %v5682, %v5746
        %v5756 = vmul.f32 %v5691, %v5746
        %v5757 = vmul.f32 %v5700, %v5746
        %v5758 = vmul.f32 %v5709, %v5746
        %v5759 = vmul.f32 %v5718, %v5746
        %v5760 = vmul.f32 %v5727, %v5746
        %v5761 = vmul.f32 %v5736, %v5746
        %v5762 = vmul.f32 %v5745, %v5746
        %v5763 = vsub.f32 %v5570, %v5747
        %v5764 = vsub.f32 %v5571, %v5747
        %v5765 = vsub.f32 %v5572, %v5748
        %v5766 = vsub.f32 %v5573, %v5748
        %v5767 = vsub.f32 %v5574, %v5749
        %v5768 = vsub.f32 %v5575, %v5749
        %v5769 = vsub.f32 %v5576, %v5750
        %v5770 = vsub.f32 %v5577, %v5750
        %v5771 = vsub.f32 %v5578, %v5751
        %v5772 = vsub.f32 %v5579, %v5751
        %v5773 = vsub.f32 %v5580, %v5752
        %v5774 = vsub.f32 %v5581, %v5752
        %v5775 = vsub.f32 %v5582, %v5753
        %v5776 = vsub.f32 %v5583, %v5753
        %v5777 = vsub.f32 %v5584, %v5754
        %v5778 = vsub.f32 %v5585, %v5754
        %v5779 = vsub.f32 %v5586, %v5755
        %v5780 = vsub.f32 %v5587, %v5755
        %v5781 = vsub.f32 %v5588, %v5756
        %v5782 = vsub.f32 %v5589, %v5756
        %v5783 = vsub.f32 %v5590, %v5757
        %v5784 = vsub.f32 %v5591, %v5757
        %v5785 = vsub.f32 %v5592, %v5758
        %v5786 = vsub.f32 %v5593, %v5758
        %v5787 = vsub.f32 %v5594, %v5759
        %v5788 = vsub.f32 %v5595, %v5759
        %v5789 = vsub.f32 %v5596, %v5760
        %v5790 = vsub.f32 %v5597, %v5760
        %v5791 = vsub.f32 %v5598, %v5761
        %v5792 = vsub.f32 %v5599, %v5761
        %v5793 = vsub.f32 %v5600, %v5762
        %v5794 = vsub.f32 %v5601, %v5762
        %v5795 = vmul.f32 %v5763, %v5763
        %v5796 = vmul.f32 %v5764, %v5764
        %v5797 = vmul.f32 %v5765, %v5765
        %v5798 = vmul.f32 %v5766, %v5766
        %v5799 = vmul.f32 %v5767, %v5767
        %v5800 = vmul.f32 %v5768, %v5768
        %v5801 = vmul.f32 %v5769, %v5769
        %v5802 = vmul.f32 %v5770, %v5770
        %v5803 = vmul.f32 %v5771, %v5771
        %v5804 = vmul.f32 %v5772, %v5772
        %v5805 = vmul.f32 %v5773, %v5773
        %v5806 = vmul.f32 %v5774, %v5774
        %v5807 = vmul.f32 %v5775, %v5775
        %v5808 = vmul.f32 %v5776, %v5776
        %v5809 = vmul.f32 %v5777, %v5777
        %v5810 = vmul.f32 %v5778, %v5778
        %v5811 = vmul.f32 %v5779, %v5779
        %v5812 = vmul.f32 %v5780, %v5780
        %v5813 = vmul.f32 %v5781, %v5781
        %v5814 = vmul.f32 %v5782, %v5782
        %v5815 = vmul.f32 %v5783, %v5783
        %v5816 = vmul.f32 %v5784, %v5784
        %v5817 = vmul.f32 %v5785, %v5785
        %v5818 = vmul.f32 %v5786, %v5786
        %v5819 = vmul.f32 %v5787, %v5787
        %v5820 = vmul.f32 %v5788, %v5788
        %v5821 = vmul.f32 %v5789, %v5789
        %v5822 = vmul.f32 %v5790, %v5790
        %v5823 = vmul.f32 %v5791, %v5791
        %v5824 = vmul.f32 %v5792, %v5792
        %v5825 = vmul.f32 %v5793, %v5793
        %v5826 = vmul.f32 %v5794, %v5794
        %v5827 = vsel %vm470, %v5795, 0.0
        %v5828 = vsel %vm470, %v5796, 0.0
        %v5829 = vadd.f32 %v5827, %v5828
        %v5830 = vrot.slane %v5829, 4
        %v5831 = vadd.f32 %v5829, %v5830
        %v5832 = vrot.slane %v5831, 2
        %v5833 = vadd.f32 %v5831, %v5832
        %v5834 = vrot.slane %v5833, 1
        %v5835 = vadd.f32 %v5833, %v5834
        %v5836 = vsel %vm470, %v5797, 0.0
        %v5837 = vsel %vm470, %v5798, 0.0
        %v5838 = vadd.f32 %v5836, %v5837
        %v5839 = vrot.slane %v5838, 4
        %v5840 = vadd.f32 %v5838, %v5839
        %v5841 = vrot.slane %v5840, 2
        %v5842 = vadd.f32 %v5840, %v5841
        %v5843 = vrot.slane %v5842, 1
        %v5844 = vadd.f32 %v5842, %v5843
        %v5845 = vsel %vm470, %v5799, 0.0
        %v5846 = vsel %vm470, %v5800, 0.0
        %v5847 = vadd.f32 %v5845, %v5846
        %v5848 = vrot.slane %v5847, 4
        %v5849 = vadd.f32 %v5847, %v5848
        %v5850 = vrot.slane %v5849, 2
        %v5851 = vadd.f32 %v5849, %v5850
        %v5852 = vrot.slane %v5851, 1
        %v5853 = vadd.f32 %v5851, %v5852
        %v5854 = vsel %vm470, %v5801, 0.0
        %v5855 = vsel %vm470, %v5802, 0.0
        %v5856 = vadd.f32 %v5854, %v5855
        %v5857 = vrot.slane %v5856, 4
        %v5858 = vadd.f32 %v5856, %v5857
        %v5859 = vrot.slane %v5858, 2
        %v5860 = vadd.f32 %v5858, %v5859
        %v5861 = vrot.slane %v5860, 1
        %v5862 = vadd.f32 %v5860, %v5861
        %v5863 = vsel %vm470, %v5803, 0.0
        %v5864 = vsel %vm470, %v5804, 0.0
        %v5865 = vadd.f32 %v5863, %v5864
        %v5866 = vrot.slane %v5865, 4
        %v5867 = vadd.f32 %v5865, %v5866
        %v5868 = vrot.slane %v5867, 2
        %v5869 = vadd.f32 %v5867, %v5868
        %v5870 = vrot.slane %v5869, 1
        %v5871 = vadd.f32 %v5869, %v5870
        %v5872 = vsel %vm470, %v5805, 0.0
        %v5873 = vsel %vm470, %v5806, 0.0
        %v5874 = vadd.f32 %v5872, %v5873
        %v5875 = vrot.slane %v5874, 4
        %v5876 = vadd.f32 %v5874, %v5875
        %v5877 = vrot.slane %v5876, 2
        %v5878 = vadd.f32 %v5876, %v5877
        %v5879 = vrot.slane %v5878, 1
        %v5880 = vadd.f32 %v5878, %v5879
        %v5881 = vsel %vm470, %v5807, 0.0
        %v5882 = vsel %vm470, %v5808, 0.0
        %v5883 = vadd.f32 %v5881, %v5882
        %v5884 = vrot.slane %v5883, 4
        %v5885 = vadd.f32 %v5883, %v5884
        %v5886 = vrot.slane %v5885, 2
        %v5887 = vadd.f32 %v5885, %v5886
        %v5888 = vrot.slane %v5887, 1
        %v5889 = vadd.f32 %v5887, %v5888
        %v5890 = vsel %vm470, %v5809, 0.0
        %v5891 = vsel %vm470, %v5810, 0.0
        %v5892 = vadd.f32 %v5890, %v5891
        %v5893 = vrot.slane %v5892, 4
        %v5894 = vadd.f32 %v5892, %v5893
        %v5895 = vrot.slane %v5894, 2
        %v5896 = vadd.f32 %v5894, %v5895
        %v5897 = vrot.slane %v5896, 1
        %v5898 = vadd.f32 %v5896, %v5897
        %v5899 = vsel %vm470, %v5811, 0.0
        %v5900 = vsel %vm470, %v5812, 0.0
        %v5901 = vadd.f32 %v5899, %v5900
        %v5902 = vrot.slane %v5901, 4
        %v5903 = vadd.f32 %v5901, %v5902
        %v5904 = vrot.slane %v5903, 2
        %v5905 = vadd.f32 %v5903, %v5904
        %v5906 = vrot.slane %v5905, 1
        %v5907 = vadd.f32 %v5905, %v5906
        %v5908 = vsel %vm470, %v5813, 0.0
        %v5909 = vsel %vm470, %v5814, 0.0
        %v5910 = vadd.f32 %v5908, %v5909
        %v5911 = vrot.slane %v5910, 4
        %v5912 = vadd.f32 %v5910, %v5911
        %v5913 = vrot.slane %v5912, 2
        %v5914 = vadd.f32 %v5912, %v5913
        %v5915 = vrot.slane %v5914, 1
        %v5916 = vadd.f32 %v5914, %v5915
        %v5917 = vsel %vm470, %v5815, 0.0
        %v5918 = vsel %vm470, %v5816, 0.0
        %v5919 = vadd.f32 %v5917, %v5918
        %v5920 = vrot.slane %v5919, 4
        %v5921 = vadd.f32 %v5919, %v5920
        %v5922 = vrot.slane %v5921, 2
        %v5923 = vadd.f32 %v5921, %v5922
        %v5924 = vrot.slane %v5923, 1
        %v5925 = vadd.f32 %v5923, %v5924
        %v5926 = vsel %vm470, %v5817, 0.0
        %v5927 = vsel %vm470, %v5818, 0.0
        %v5928 = vadd.f32 %v5926, %v5927
        %v5929 = vrot.slane %v5928, 4
        %v5930 = vadd.f32 %v5928, %v5929
        %v5931 = vrot.slane %v5930, 2
        %v5932 = vadd.f32 %v5930, %v5931
        %v5933 = vrot.slane %v5932, 1
        %v5934 = vadd.f32 %v5932, %v5933
        %v5935 = vsel %vm470, %v5819, 0.0
        %v5936 = vsel %vm470, %v5820, 0.0
        %v5937 = vadd.f32 %v5935, %v5936
        %v5938 = vrot.slane %v5937, 4
        %v5939 = vadd.f32 %v5937, %v5938
        %v5940 = vrot.slane %v5939, 2
        %v5941 = vadd.f32 %v5939, %v5940
        %v5942 = vrot.slane %v5941, 1
        %v5943 = vadd.f32 %v5941, %v5942
        %v5944 = vsel %vm470, %v5821, 0.0
        %v5945 = vsel %vm470, %v5822, 0.0
        %v5946 = vadd.f32 %v5944, %v5945
        %v5947 = vrot.slane %v5946, 4
        %v5948 = vadd.f32 %v5946, %v5947
        %v5949 = vrot.slane %v5948, 2
        %v5950 = vadd.f32 %v5948, %v5949
        %v5951 = vrot.slane %v5950, 1
        %v5952 = vadd.f32 %v5950, %v5951
        %v5953 = vsel %vm470, %v5823, 0.0
        %v5954 = vsel %vm470, %v5824, 0.0
        %v5955 = vadd.f32 %v5953, %v5954
        %v5956 = vrot.slane %v5955, 4
        %v5957 = vadd.f32 %v5955, %v5956
        %v5958 = vrot.slane %v5957, 2
        %v5959 = vadd.f32 %v5957, %v5958
        %v5960 = vrot.slane %v5959, 1
        %v5961 = vadd.f32 %v5959, %v5960
        %v5962 = vsel %vm470, %v5825, 0.0
        %v5963 = vsel %vm470, %v5826, 0.0
        %v5964 = vadd.f32 %v5962, %v5963
        %v5965 = vrot.slane %v5964, 4
        %v5966 = vadd.f32 %v5964, %v5965
        %v5967 = vrot.slane %v5966, 2
        %v5968 = vadd.f32 %v5966, %v5967
        %v5969 = vrot.slane %v5968, 1
        %v5970 = vadd.f32 %v5968, %v5969
        %v5971 = vmul.f32 %v5835, %v5746
        %v5972 = vmul.f32 %v5844, %v5746
        %v5973 = vmul.f32 %v5853, %v5746
        %v5974 = vmul.f32 %v5862, %v5746
        %v5975 = vmul.f32 %v5871, %v5746
        %v5976 = vmul.f32 %v5880, %v5746
        %v5977 = vmul.f32 %v5889, %v5746
        %v5978 = vmul.f32 %v5898, %v5746
        %v5979 = vmul.f32 %v5907, %v5746
        %v5980 = vmul.f32 %v5916, %v5746
        %v5981 = vmul.f32 %v5925, %v5746
        %v5982 = vmul.f32 %v5934, %v5746
        %v5983 = vmul.f32 %v5943, %v5746
        %v5984 = vmul.f32 %v5952, %v5746
        %v5985 = vmul.f32 %v5961, %v5746
        %v5986 = vmul.f32 %v5970, %v5746
        %v5987 = vadd.f32 %v5971, 1e-05
        %v5988 = vadd.f32 %v5972, 1e-05
        %v5989 = vadd.f32 %v5973, 1e-05
        %v5990 = vadd.f32 %v5974, 1e-05
        %v5991 = vadd.f32 %v5975, 1e-05
        %v5992 = vadd.f32 %v5976, 1e-05
        %v5993 = vadd.f32 %v5977, 1e-05
        %v5994 = vadd.f32 %v5978, 1e-05
        %v5995 = vadd.f32 %v5979, 1e-05
        %v5996 = vadd.f32 %v5980, 1e-05
        %v5997 = vadd.f32 %v5981, 1e-05
        %v5998 = vadd.f32 %v5982, 1e-05
        %v5999 = vadd.f32 %v5983, 1e-05
        %v6000 = vadd.f32 %v5984, 1e-05
        %v6001 = vadd.f32 %v5985, 1e-05
        %v6002 = vadd.f32 %v5986, 1e-05
        %v6003 = vrsqrt.pop %v5987
        %v6004 = vrsqrt.pop %v5988
        %v6005 = vrsqrt.pop %v5989
        %v6006 = vrsqrt.pop %v5990
        %v6007 = vrsqrt.pop %v5991
        %v6008 = vrsqrt.pop %v5992
        %v6009 = vrsqrt.pop %v5993
        %v6010 = vrsqrt.pop %v5994
        %v6011 = vrsqrt.pop %v5995
        %v6012 = vrsqrt.pop %v5996
        %v6013 = vrsqrt.pop %v5997
        %v6014 = vrsqrt.pop %v5998
        %v6015 = vrsqrt.pop %v5999
        %v6016 = vrsqrt.pop %v6000
        %v6017 = vrsqrt.pop %v6001
        %v6018 = vrsqrt.pop %v6002
        %v6019 = vmul.f32 %v5763, %v6003
        %v6020 = vmul.f32 %v5764, %v6003
        %v6021 = vmul.f32 %v5765, %v6004
        %v6022 = vmul.f32 %v5766, %v6004
        %v6023 = vmul.f32 %v5767, %v6005
        %v6024 = vmul.f32 %v5768, %v6005
        %v6025 = vmul.f32 %v5769, %v6006
        %v6026 = vmul.f32 %v5770, %v6006
        %v6027 = vmul.f32 %v5771, %v6007
        %v6028 = vmul.f32 %v5772, %v6007
        %v6029 = vmul.f32 %v5773, %v6008
        %v6030 = vmul.f32 %v5774, %v6008
        %v6031 = vmul.f32 %v5775, %v6009
        %v6032 = vmul.f32 %v5776, %v6009
        %v6033 = vmul.f32 %v5777, %v6010
        %v6034 = vmul.f32 %v5778, %v6010
        %v6035 = vmul.f32 %v5779, %v6011
        %v6036 = vmul.f32 %v5780, %v6011
        %v6037 = vmul.f32 %v5781, %v6012
        %v6038 = vmul.f32 %v5782, %v6012
        %v6039 = vmul.f32 %v5783, %v6013
        %v6040 = vmul.f32 %v5784, %v6013
        %v6041 = vmul.f32 %v5785, %v6014
        %v6042 = vmul.f32 %v5786, %v6014
        %v6043 = vmul.f32 %v5787, %v6015
        %v6044 = vmul.f32 %v5788, %v6015
        %v6045 = vmul.f32 %v5789, %v6016
        %v6046 = vmul.f32 %v5790, %v6016
        %v6047 = vmul.f32 %v5791, %v6017
        %v6048 = vmul.f32 %v5792, %v6017
        %v6049 = vmul.f32 %v5793, %v6018
        %v6050 = vmul.f32 %v5794, %v6018
        %v6051 = vld [vmem:[%s3] sm:$0xff]
        %v6052 = vld [vmem:[%s3 + $0x8] sm:$0xff]
        %v6053 = vmul.f32 %v6019, %v6051
        %v6054 = vmul.f32 %v6020, %v6052
        %v6055 = vmul.f32 %v6021, %v6051
        %v6056 = vmul.f32 %v6022, %v6052
        %v6057 = vmul.f32 %v6023, %v6051
        %v6058 = vmul.f32 %v6024, %v6052
        %v6059 = vmul.f32 %v6025, %v6051
        %v6060 = vmul.f32 %v6026, %v6052
        %v6061 = vmul.f32 %v6027, %v6051
        %v6062 = vmul.f32 %v6028, %v6052
        %v6063 = vmul.f32 %v6029, %v6051
        %v6064 = vmul.f32 %v6030, %v6052
        %v6065 = vmul.f32 %v6031, %v6051
        %v6066 = vmul.f32 %v6032, %v6052
        %v6067 = vmul.f32 %v6033, %v6051
        %v6068 = vmul.f32 %v6034, %v6052
        %v6069 = vmul.f32 %v6035, %v6051
        %v6070 = vmul.f32 %v6036, %v6052
        %v6071 = vmul.f32 %v6037, %v6051
        %v6072 = vmul.f32 %v6038, %v6052
        %v6073 = vmul.f32 %v6039, %v6051
        %v6074 = vmul.f32 %v6040, %v6052
        %v6075 = vmul.f32 %v6041, %v6051
        %v6076 = vmul.f32 %v6042, %v6052
        %v6077 = vmul.f32 %v6043, %v6051
        %v6078 = vmul.f32 %v6044, %v6052
        %v6079 = vmul.f32 %v6045, %v6051
        %v6080 = vmul.f32 %v6046, %v6052
        %v6081 = vmul.f32 %v6047, %v6051
        %v6082 = vmul.f32 %v6048, %v6052
        %v6083 = vmul.f32 %v6049, %v6051
        %v6084 = vmul.f32 %v6050, %v6052
        %v6085 = vld [vmem:[%s4] sm:$0xff]
        %v6086 = vld [vmem:[%s4 + $0x8] sm:$0xff]
        %v6087 = vadd.f32 %v6053, %v6085
        %v6088 = vadd.f32 %v6054, %v6086
        %v6089 = vadd.f32 %v6055, %v6085
        %v6090 = vadd.f32 %v6056, %v6086
        %v6091 = vadd.f32 %v6057, %v6085
        %v6092 = vadd.f32 %v6058, %v6086
        %v6093 = vadd.f32 %v6059, %v6085
        %v6094 = vadd.f32 %v6060, %v6086
        %v6095 = vadd.f32 %v6061, %v6085
        %v6096 = vadd.f32 %v6062, %v6086
        %v6097 = vadd.f32 %v6063, %v6085
        %v6098 = vadd.f32 %v6064, %v6086
        %v6099 = vadd.f32 %v6065, %v6085
        %v6100 = vadd.f32 %v6066, %v6086
        %v6101 = vadd.f32 %v6067, %v6085
        %v6102 = vadd.f32 %v6068, %v6086
        %v6103 = vadd.f32 %v6069, %v6085
        %v6104 = vadd.f32 %v6070, %v6086
        %v6105 = vadd.f32 %v6071, %v6085
        %v6106 = vadd.f32 %v6072, %v6086
        %v6107 = vadd.f32 %v6073, %v6085
        %v6108 = vadd.f32 %v6074, %v6086
        %v6109 = vadd.f32 %v6075, %v6085
        %v6110 = vadd.f32 %v6076, %v6086
        %v6111 = vadd.f32 %v6077, %v6085
        %v6112 = vadd.f32 %v6078, %v6086
        %v6113 = vadd.f32 %v6079, %v6085
        %v6114 = vadd.f32 %v6080, %v6086
        %v6115 = vadd.f32 %v6081, %v6085
        %v6116 = vadd.f32 %v6082, %v6086
        %v6117 = vadd.f32 %v6083, %v6085
        %v6118 = vadd.f32 %v6084, %v6086
        %v6119 = vld [vmem:[%s5] sm:$0xff]
        %v6120 = vld [vmem:[%s5 + $0x8] sm:$0xff]
        %v6121 = vld [vmem:[#allocation9] sm:$0x1]
        %v6123 = vlaneseq
        %v6124 = vshrl.u32 %v6123, 7
        %v6125 = vsub.s32 0, %v6124
        %v6126 = vrot.slane %v6121, %v6125
        %v6129 = vsel %vm470, %v6087, 0
        %v6132 = vsel %vm470, %v6088, 0
        %v6135 = vsel %vm470, %v6089, 0
        %v6138 = vsel %vm470, %v6090, 0
        %v6141 = vsel %vm470, %v6091, 0
        %v6144 = vsel %vm470, %v6092, 0
        %v6147 = vsel %vm470, %v6093, 0
        %v6150 = vsel %vm470, %v6094, 0
        %v6153 = vsel %vm470, %v6095, 0
        %v6156 = vsel %vm470, %v6096, 0
        %v6159 = vsel %vm470, %v6097, 0
        %v6162 = vsel %vm470, %v6098, 0
        %v6165 = vsel %vm470, %v6099, 0
        %v6168 = vsel %vm470, %v6100, 0
        %v6171 = vsel %vm470, %v6101, 0
        %v6174 = vsel %vm470, %v6102, 0
        %v6177 = vsel %vm470, %v6103, 0
        %v6180 = vsel %vm470, %v6104, 0
        %v6183 = vsel %vm470, %v6105, 0
        %v6186 = vsel %vm470, %v6106, 0
        %v6189 = vsel %vm470, %v6107, 0
        %v6192 = vsel %vm470, %v6108, 0
        %v6195 = vsel %vm470, %v6109, 0
        %v6198 = vsel %vm470, %v6110, 0
        %v6201 = vsel %vm470, %v6111, 0
        %v6204 = vsel %vm470, %v6112, 0
        %v6207 = vsel %vm470, %v6113, 0
        %v6210 = vsel %vm470, %v6114, 0
        %v6213 = vsel %vm470, %v6115, 0
        %v6216 = vsel %vm470, %v6116, 0
        %v6219 = vsel %vm470, %v6117, 0
        %v6222 = vsel %vm470, %v6118, 0
        %6224 = vmatprep.subr.mxu0 0.0
        %6225 = vmatpush1.msra.mxu0 0.0
        %6226 = vmatprep.subr.mxu0 0.0
        %6227 = vmatpush1.msra.mxu0 0.0
        %6228 = vmatprep.subr.mxu0 0.0
        %6229 = vmatpush1.msra.mxu0 0.0
        %6230 = vmatprep.subr.mxu0 0.0
        %6231 = vmatpush1.msra.mxu0 0.0
        %6232 = vmatprep.subr.mxu0 0.0
        %6233 = vmatpush1.msra.mxu0 0.0
        %6234 = vmatprep.subr.mxu0 0.0
        %6235 = vmatpush1.msra.mxu0 0.0
        %6236 = vmatprep.subr.mxu0 0.0
        %6237 = vmatpush1.msra.mxu0 0.0
        %6238 = vmatprep.subr.mxu0 0.0
        %6239 = vmatpush1.msra.mxu0 0.0
        %6240 = vmatprep.subr.mxu0 0.0
        %6241 = vmatpush1.msra.mxu0 0.0
        %6242 = vmatprep.subr.mxu0 0.0
        %6243 = vmatpush1.msra.mxu0 0.0
        %6244 = vmatprep.subr.mxu0 0.0
        %6245 = vmatpush1.msra.mxu0 0.0
        %6246 = vmatprep.subr.mxu0 0.0
        %6247 = vmatpush1.msra.mxu0 0.0
        %6248 = vmatprep.subr.mxu0 0.0
        %6249 = vmatpush1.msra.mxu0 0.0
        %6250 = vmatprep.subr.mxu0 0.0
        %6251 = vmatpush1.msra.mxu0 0.0
        %6252 = vmatprep.subr.mxu0 0.0
        %6253 = vmatpush1.msra.mxu0 %v6120
        %6254 = vmatprep.subr.mxu0 0.0
        %6255 = vmatpush1.msra.mxu0 %v6119
        %6256 = vmatprep.subr.mxu0 0.0
        %6257 = vmatpush2.msra.mxu0 0.0
        %6258 = vmatprep.subr.mxu0 0.0
        %6259 = vmatpush2.msra.mxu0 0.0
        %6260 = vmatprep.subr.mxu0 0.0
        %6261 = vmatpush2.msra.mxu0 0.0
        %6262 = vmatprep.subr.mxu0 0.0
        %6263 = vmatpush2.msra.mxu0 0.0
        %6264 = vmatprep.subr.mxu0 0.0
        %6265 = vmatpush2.msra.mxu0 0.0
        %6266 = vmatprep.subr.mxu0 0.0
        %6267 = vmatpush2.msra.mxu0 0.0
        %6268 = vmatprep.subr.mxu0 0.0
        %6269 = vmatpush2.msra.mxu0 0.0
        %6270 = vmatprep.subr.mxu0 0.0
        %6271 = vmatpush2.msra.mxu0 0.0
        %6272 = vmatprep.subr.mxu0 0.0
        %6273 = vmatpush2.msra.mxu0 0.0
        %6274 = vmatprep.subr.mxu0 0.0
        %6275 = vmatpush2.msra.mxu0 0.0
        %6276 = vmatprep.subr.mxu0 0.0
        %6277 = vmatpush2.msra.mxu0 0.0
        %6278 = vmatprep.subr.mxu0 0.0
        %6279 = vmatpush2.msra.mxu0 0.0
        %6280 = vmatprep.subr.mxu0 0.0
        %6281 = vmatpush2.msra.mxu0 0.0
        %6282 = vmatprep.subr.mxu0 0.0
        %6283 = vmatpush2.msra.mxu0 0.0
        %6284 = vmatprep.subr.mxu0 0.0
        %6285 = vmatpush2.msra.mxu0 0.0
        %6286 = vmatprep.subr.mxu0 0.0
        %6287 = vmatpush2.msra.mxu0 0.0
        %6288 = vmatprep.mubr.f32.mxu0 0.0
        %6289 = vmatmul.mubr.f32.gmra.mxu0 %v6129
        %v6290 = vpop.f32.mrf.mxu0
        %v6291 = vadd.f32 %v6126, %v6290
        %v6292 = vpop.f32.mrf.mxu0
        %6293 = vmatprep.mubr.f32.mxu0 0.0
        %6294 = vmatmul.mubr.f32.gmra.mxu0 %v6132
        %v6295 = vpop.f32.mrf.mxu0
        %v6296 = vadd.f32 %v6126, %v6295
        %v6297 = vpop.f32.mrf.mxu0
        %6298 = vmatprep.mubr.f32.mxu0 0.0
        %6299 = vmatmul.mubr.f32.gmra.mxu0 %v6135
        %v6300 = vpop.f32.mrf.mxu0
        %v6301 = vadd.f32 %v6126, %v6300
        %v6302 = vpop.f32.mrf.mxu0
        %6303 = vmatprep.mubr.f32.mxu0 0.0
        %6304 = vmatmul.mubr.f32.gmra.mxu0 %v6138
        %v6305 = vpop.f32.mrf.mxu0
        %v6306 = vadd.f32 %v6126, %v6305
        %v6307 = vpop.f32.mrf.mxu0
        %6308 = vmatprep.mubr.f32.mxu0 0.0
        %6309 = vmatmul.mubr.f32.gmra.mxu0 %v6141
        %v6310 = vpop.f32.mrf.mxu0
        %v6311 = vadd.f32 %v6126, %v6310
        %v6312 = vpop.f32.mrf.mxu0
        %6313 = vmatprep.mubr.f32.mxu0 0.0
        %6314 = vmatmul.mubr.f32.gmra.mxu0 %v6144
        %v6315 = vpop.f32.mrf.mxu0
        %v6316 = vadd.f32 %v6126, %v6315
        %v6317 = vpop.f32.mrf.mxu0
        %6318 = vmatprep.mubr.f32.mxu0 0.0
        %6319 = vmatmul.mubr.f32.gmra.mxu0 %v6147
        %v6320 = vpop.f32.mrf.mxu0
        %v6321 = vadd.f32 %v6126, %v6320
        %v6322 = vpop.f32.mrf.mxu0
        %6323 = vmatprep.mubr.f32.mxu0 0.0
        %6324 = vmatmul.mubr.f32.gmra.mxu0 %v6150
        %v6325 = vpop.f32.mrf.mxu0
        %v6326 = vadd.f32 %v6126, %v6325
        %v6327 = vpop.f32.mrf.mxu0
        %6328 = vmatprep.mubr.f32.mxu0 0.0
        %6329 = vmatmul.mubr.f32.gmra.mxu0 %v6153
        %v6330 = vpop.f32.mrf.mxu0
        %v6331 = vadd.f32 %v6126, %v6330
        %v6332 = vpop.f32.mrf.mxu0
        %6333 = vmatprep.mubr.f32.mxu0 0.0
        %6334 = vmatmul.mubr.f32.gmra.mxu0 %v6156
        %v6335 = vpop.f32.mrf.mxu0
        %v6336 = vadd.f32 %v6126, %v6335
        %v6337 = vpop.f32.mrf.mxu0
        %6338 = vmatprep.mubr.f32.mxu0 0.0
        %6339 = vmatmul.mubr.f32.gmra.mxu0 %v6159
        %v6340 = vpop.f32.mrf.mxu0
        %v6341 = vadd.f32 %v6126, %v6340
        %v6342 = vpop.f32.mrf.mxu0
        %6343 = vmatprep.mubr.f32.mxu0 0.0
        %6344 = vmatmul.mubr.f32.gmra.mxu0 %v6162
        %v6345 = vpop.f32.mrf.mxu0
        %v6346 = vadd.f32 %v6126, %v6345
        %v6347 = vpop.f32.mrf.mxu0
        %6348 = vmatprep.mubr.f32.mxu0 0.0
        %6349 = vmatmul.mubr.f32.gmra.mxu0 %v6165
        %v6350 = vpop.f32.mrf.mxu0
        %v6351 = vadd.f32 %v6126, %v6350
        %v6352 = vpop.f32.mrf.mxu0
        %6353 = vmatprep.mubr.f32.mxu0 0.0
        %6354 = vmatmul.mubr.f32.gmra.mxu0 %v6168
        %v6355 = vpop.f32.mrf.mxu0
        %v6356 = vadd.f32 %v6126, %v6355
        %v6357 = vpop.f32.mrf.mxu0
        %6358 = vmatprep.mubr.f32.mxu0 0.0
        %6359 = vmatmul.mubr.f32.gmra.mxu0 %v6171
        %v6360 = vpop.f32.mrf.mxu0
        %v6361 = vadd.f32 %v6126, %v6360
        %v6362 = vpop.f32.mrf.mxu0
        %6363 = vmatprep.mubr.f32.mxu0 0.0
        %6364 = vmatmul.mubr.f32.gmra.mxu0 %v6174
        %v6365 = vpop.f32.mrf.mxu0
        %v6366 = vadd.f32 %v6126, %v6365
        %v6367 = vpop.f32.mrf.mxu0
        %6368 = vmatprep.mubr.f32.mxu0 0.0
        %6369 = vmatmul.mubr.f32.gmra.mxu0 %v6177
        %v6370 = vpop.f32.mrf.mxu0
        %v6371 = vadd.f32 %v6126, %v6370
        %v6372 = vpop.f32.mrf.mxu0
        %6373 = vmatprep.mubr.f32.mxu0 0.0
        %6374 = vmatmul.mubr.f32.gmra.mxu0 %v6180
        %v6375 = vpop.f32.mrf.mxu0
        %v6376 = vadd.f32 %v6126, %v6375
        %v6377 = vpop.f32.mrf.mxu0
        %6378 = vmatprep.mubr.f32.mxu0 0.0
        %6379 = vmatmul.mubr.f32.gmra.mxu0 %v6183
        %v6380 = vpop.f32.mrf.mxu0
        %v6381 = vadd.f32 %v6126, %v6380
        %v6382 = vpop.f32.mrf.mxu0
        %6383 = vmatprep.mubr.f32.mxu0 0.0
        %6384 = vmatmul.mubr.f32.gmra.mxu0 %v6186
        %v6385 = vpop.f32.mrf.mxu0
        %v6386 = vadd.f32 %v6126, %v6385
        %v6387 = vpop.f32.mrf.mxu0
        %6388 = vmatprep.mubr.f32.mxu0 0.0
        %6389 = vmatmul.mubr.f32.gmra.mxu0 %v6189
        %v6390 = vpop.f32.mrf.mxu0
        %v6391 = vadd.f32 %v6126, %v6390
        %v6392 = vpop.f32.mrf.mxu0
        %6393 = vmatprep.mubr.f32.mxu0 0.0
        %6394 = vmatmul.mubr.f32.gmra.mxu0 %v6192
        %v6395 = vpop.f32.mrf.mxu0
        %v6396 = vadd.f32 %v6126, %v6395
        %v6397 = vpop.f32.mrf.mxu0
        %6398 = vmatprep.mubr.f32.mxu0 0.0
        %6399 = vmatmul.mubr.f32.gmra.mxu0 %v6195
        %v6400 = vpop.f32.mrf.mxu0
        %v6401 = vadd.f32 %v6126, %v6400
        %v6402 = vpop.f32.mrf.mxu0
        %6403 = vmatprep.mubr.f32.mxu0 0.0
        %6404 = vmatmul.mubr.f32.gmra.mxu0 %v6198
        %v6405 = vpop.f32.mrf.mxu0
        %v6406 = vadd.f32 %v6126, %v6405
        %v6407 = vpop.f32.mrf.mxu0
        %6408 = vmatprep.mubr.f32.mxu0 0.0
        %6409 = vmatmul.mubr.f32.gmra.mxu0 %v6201
        %v6410 = vpop.f32.mrf.mxu0
        %v6411 = vadd.f32 %v6126, %v6410
        %v6412 = vpop.f32.mrf.mxu0
        %6413 = vmatprep.mubr.f32.mxu0 0.0
        %6414 = vmatmul.mubr.f32.gmra.mxu0 %v6204
        %v6415 = vpop.f32.mrf.mxu0
        %v6416 = vadd.f32 %v6126, %v6415
        %v6417 = vpop.f32.mrf.mxu0
        %6418 = vmatprep.mubr.f32.mxu0 0.0
        %6419 = vmatmul.mubr.f32.gmra.mxu0 %v6207
        %v6420 = vpop.f32.mrf.mxu0
        %v6421 = vadd.f32 %v6126, %v6420
        %v6422 = vpop.f32.mrf.mxu0
        %6423 = vmatprep.mubr.f32.mxu0 0.0
        %6424 = vmatmul.mubr.f32.gmra.mxu0 %v6210
        %v6425 = vpop.f32.mrf.mxu0
        %v6426 = vadd.f32 %v6126, %v6425
        %v6427 = vpop.f32.mrf.mxu0
        %6428 = vmatprep.mubr.f32.mxu0 0.0
        %6429 = vmatmul.mubr.f32.gmra.mxu0 %v6213
        %v6430 = vpop.f32.mrf.mxu0
        %v6431 = vadd.f32 %v6126, %v6430
        %v6432 = vpop.f32.mrf.mxu0
        %6433 = vmatprep.mubr.f32.mxu0 0.0
        %6434 = vmatmul.mubr.f32.gmra.mxu0 %v6216
        %v6435 = vpop.f32.mrf.mxu0
        %v6436 = vadd.f32 %v6126, %v6435
        %v6437 = vpop.f32.mrf.mxu0
        %6438 = vmatprep.mubr.f32.mxu0 0.0
        %6439 = vmatmul.mubr.f32.gmra.mxu0 %v6219
        %v6440 = vpop.f32.mrf.mxu0
        %v6441 = vadd.f32 %v6126, %v6440
        %v6442 = vpop.f32.mrf.mxu0
        %6443 = vmatprep.mubr.f32.mxu0 0.0
        %6444 = vmatmul.mubr.f32.gmra.mxu0 %v6222
        %v6445 = vpop.f32.mrf.mxu0
        %v6446 = vadd.f32 %v6126, %v6445
        %v6447 = vpop.f32.mrf.mxu0
        %6448 = vdwg.mxu0
        %v6449 = vmul.f32 %v6291, %v6291
        %v6450 = vmul.f32 %v6296, %v6296
        %v6451 = vmul.f32 %v6301, %v6301
        %v6452 = vmul.f32 %v6306, %v6306
        %v6453 = vmul.f32 %v6311, %v6311
        %v6454 = vmul.f32 %v6316, %v6316
        %v6455 = vmul.f32 %v6321, %v6321
        %v6456 = vmul.f32 %v6326, %v6326
        %v6457 = vmul.f32 %v6331, %v6331
        %v6458 = vmul.f32 %v6336, %v6336
        %v6459 = vmul.f32 %v6341, %v6341
        %v6460 = vmul.f32 %v6346, %v6346
        %v6461 = vmul.f32 %v6351, %v6351
        %v6462 = vmul.f32 %v6356, %v6356
        %v6463 = vmul.f32 %v6361, %v6361
        %v6464 = vmul.f32 %v6366, %v6366
        %v6465 = vmul.f32 %v6371, %v6371
        %v6466 = vmul.f32 %v6376, %v6376
        %v6467 = vmul.f32 %v6381, %v6381
        %v6468 = vmul.f32 %v6386, %v6386
        %v6469 = vmul.f32 %v6391, %v6391
        %v6470 = vmul.f32 %v6396, %v6396
        %v6471 = vmul.f32 %v6401, %v6401
        %v6472 = vmul.f32 %v6406, %v6406
        %v6473 = vmul.f32 %v6411, %v6411
        %v6474 = vmul.f32 %v6416, %v6416
        %v6475 = vmul.f32 %v6421, %v6421
        %v6476 = vmul.f32 %v6426, %v6426
        %v6477 = vmul.f32 %v6431, %v6431
        %v6478 = vmul.f32 %v6436, %v6436
        %v6479 = vmul.f32 %v6441, %v6441
        %v6480 = vmul.f32 %v6446, %v6446
        %vm6481 = vcmask 261120
        %v6482 = vsel %vm6481, %v6449, 0.0
        %v6483 = vsel %vm6481, %v6450, 0.0
        %v6484 = vadd.f32 %v6482, %v6483
        %v6485 = vsel %vm6481, %v6451, 0.0
        %v6486 = vadd.f32 %v6484, %v6485
        %v6487 = vsel %vm6481, %v6452, 0.0
        %v6488 = vadd.f32 %v6486, %v6487
        %v6489 = vsel %vm6481, %v6453, 0.0
        %v6490 = vadd.f32 %v6488, %v6489
        %v6491 = vsel %vm6481, %v6454, 0.0
        %v6492 = vadd.f32 %v6490, %v6491
        %v6493 = vsel %vm6481, %v6455, 0.0
        %v6494 = vadd.f32 %v6492, %v6493
        %v6495 = vsel %vm6481, %v6456, 0.0
        %v6496 = vadd.f32 %v6494, %v6495
        %v6497 = vsel %vm6481, %v6457, 0.0
        %v6498 = vadd.f32 %v6496, %v6497
        %v6499 = vsel %vm6481, %v6458, 0.0
        %v6500 = vadd.f32 %v6498, %v6499
        %v6501 = vsel %vm6481, %v6459, 0.0
        %v6502 = vadd.f32 %v6500, %v6501
        %v6503 = vsel %vm6481, %v6460, 0.0
        %v6504 = vadd.f32 %v6502, %v6503
        %v6505 = vsel %vm6481, %v6461, 0.0
        %v6506 = vadd.f32 %v6504, %v6505
        %v6507 = vsel %vm6481, %v6462, 0.0
        %v6508 = vadd.f32 %v6506, %v6507
        %v6509 = vsel %vm6481, %v6463, 0.0
        %v6510 = vadd.f32 %v6508, %v6509
        %v6511 = vsel %vm6481, %v6464, 0.0
        %v6512 = vadd.f32 %v6510, %v6511
        %v6513 = vsel %vm6481, %v6465, 0.0
        %v6514 = vadd.f32 %v6512, %v6513
        %v6515 = vsel %vm6481, %v6466, 0.0
        %v6516 = vadd.f32 %v6514, %v6515
        %v6517 = vsel %vm6481, %v6467, 0.0
        %v6518 = vadd.f32 %v6516, %v6517
        %v6519 = vsel %vm6481, %v6468, 0.0
        %v6520 = vadd.f32 %v6518, %v6519
        %v6521 = vsel %vm6481, %v6469, 0.0
        %v6522 = vadd.f32 %v6520, %v6521
        %v6523 = vsel %vm6481, %v6470, 0.0
        %v6524 = vadd.f32 %v6522, %v6523
        %v6525 = vsel %vm6481, %v6471, 0.0
        %v6526 = vadd.f32 %v6524, %v6525
        %v6527 = vsel %vm6481, %v6472, 0.0
        %v6528 = vadd.f32 %v6526, %v6527
        %v6529 = vsel %vm6481, %v6473, 0.0
        %v6530 = vadd.f32 %v6528, %v6529
        %v6531 = vsel %vm6481, %v6474, 0.0
        %v6532 = vadd.f32 %v6530, %v6531
        %v6533 = vsel %vm6481, %v6475, 0.0
        %v6534 = vadd.f32 %v6532, %v6533
        %v6535 = vsel %vm6481, %v6476, 0.0
        %v6536 = vadd.f32 %v6534, %v6535
        %v6537 = vsel %vm6481, %v6477, 0.0
        %v6538 = vadd.f32 %v6536, %v6537
        %v6539 = vsel %vm6481, %v6478, 0.0
        %v6540 = vadd.f32 %v6538, %v6539
        %v6541 = vsel %vm6481, %v6479, 0.0
        %v6542 = vadd.f32 %v6540, %v6541
        %v6543 = vsel %vm6481, %v6480, 0.0
        %v6544 = vadd.f32 %v6542, %v6543
        %v6545 = vrot.slane %v6544, 4
        %v6546 = vadd.f32 %v6544, %v6545
        %v6547 = vrot.slane %v6546, 2
        %v6548 = vadd.f32 %v6546, %v6547
        %v6549 = vrot.slane %v6548, 1
        %v6550 = vadd.f32 %v6548, %v6549
        %v6551 = vrsqrt.pop %v6550
        %v6552 = vmul.f32 %v6550, %v6551
        %vm6553 = vcmp.eq.f32.partialorder %v6550, inf
        %v6554 = vsel %vm6553, %v6550, %v6552
        %vm6555 = vcmp.eq.f32.partialorder %v6550, 0.0
        %v6556 = vand.u32 %v6550, 2147483648
        %v6557 = vsel %vm6555, %v6556, %v6554
        %v6558 = vsel %vm6481, %v6557, 0.0
        %6559 = vadd.xlane.f32.xlu0 %v6558
        %v6560 = vpop.xlane.xlu0 %6559
        %v6561 = vrcp.pop 32.0
        %v6562 = vmul.f32 %v6560, %v6561
        %v6563 = vadd.f32 %v6562, 1e-06
        %v6564 = vrcp.pop %v6563
        %v6565 = vmul.f32 %v6557, %v6564
        %v6566 = vld [vmem:[#allocation11] sm:$0x1]
        %v6567 = vmul.f32 %v6291, %v6565
        %v6568 = vmul.f32 %v6296, %v6565
        %v6569 = vmul.f32 %v6301, %v6565
        %v6570 = vmul.f32 %v6306, %v6565
        %v6571 = vmul.f32 %v6311, %v6565
        %v6572 = vmul.f32 %v6316, %v6565
        %v6573 = vmul.f32 %v6321, %v6565
        %v6574 = vmul.f32 %v6326, %v6565
        %v6575 = vmul.f32 %v6331, %v6565
        %v6576 = vmul.f32 %v6336, %v6565
        %v6577 = vmul.f32 %v6341, %v6565
        %v6578 = vmul.f32 %v6346, %v6565
        %v6579 = vmul.f32 %v6351, %v6565
        %v6580 = vmul.f32 %v6356, %v6565
        %v6581 = vmul.f32 %v6361, %v6565
        %v6582 = vmul.f32 %v6366, %v6565
        %v6583 = vmul.f32 %v6371, %v6565
        %v6584 = vmul.f32 %v6376, %v6565
        %v6585 = vmul.f32 %v6381, %v6565
        %v6586 = vmul.f32 %v6386, %v6565
        %v6587 = vmul.f32 %v6391, %v6565
        %v6588 = vmul.f32 %v6396, %v6565
        %v6589 = vmul.f32 %v6401, %v6565
        %v6590 = vmul.f32 %v6406, %v6565
        %v6591 = vmul.f32 %v6411, %v6565
        %v6592 = vmul.f32 %v6416, %v6565
        %v6593 = vmul.f32 %v6421, %v6565
        %v6594 = vmul.f32 %v6426, %v6565
        %v6595 = vmul.f32 %v6431, %v6565
        %v6596 = vmul.f32 %v6436, %v6565
        %v6597 = vmul.f32 %v6441, %v6565
        %v6598 = vmul.f32 %v6446, %v6565
        %v6600 = vlaneseq
        %v6601 = vshrl.u32 %v6600, 7
        %v6602 = vsub.s32 0, %v6601
        %v6603 = vrot.slane %v6566, %v6602
        %v6605 = vmul.f32 %v6603, %v6567
        %v6606 = vmul.f32 %v6603, %v6568
        %v6607 = vmul.f32 %v6603, %v6569
        %v6608 = vmul.f32 %v6603, %v6570
        %v6609 = vmul.f32 %v6603, %v6571
        %v6610 = vmul.f32 %v6603, %v6572
        %v6611 = vmul.f32 %v6603, %v6573
        %v6612 = vmul.f32 %v6603, %v6574
        %v6613 = vmul.f32 %v6603, %v6575
        %v6614 = vmul.f32 %v6603, %v6576
        %v6615 = vmul.f32 %v6603, %v6577
        %v6616 = vmul.f32 %v6603, %v6578
        %v6617 = vmul.f32 %v6603, %v6579
        %v6618 = vmul.f32 %v6603, %v6580
        %v6619 = vmul.f32 %v6603, %v6581
        %v6620 = vmul.f32 %v6603, %v6582
        %v6621 = vmul.f32 %v6603, %v6583
        %v6622 = vmul.f32 %v6603, %v6584
        %v6623 = vmul.f32 %v6603, %v6585
        %v6624 = vmul.f32 %v6603, %v6586
        %v6625 = vmul.f32 %v6603, %v6587
        %v6626 = vmul.f32 %v6603, %v6588
        %v6627 = vmul.f32 %v6603, %v6589
        %v6628 = vmul.f32 %v6603, %v6590
        %v6629 = vmul.f32 %v6603, %v6591
        %v6630 = vmul.f32 %v6603, %v6592
        %v6631 = vmul.f32 %v6603, %v6593
        %v6632 = vmul.f32 %v6603, %v6594
        %v6633 = vmul.f32 %v6603, %v6595
        %v6634 = vmul.f32 %v6603, %v6596
        %v6635 = vmul.f32 %v6603, %v6597
        %v6636 = vmul.f32 %v6603, %v6598
        %v6637 = vld [vmem:[#allocation12] sm:$0x1]
        %v6639 = vlaneseq
        %v6640 = vshrl.u32 %v6639, 7
        %v6641 = vsub.s32 0, %v6640
        %v6642 = vrot.slane %v6637, %v6641
        %v6644 = vadd.f32 %v6605, %v6642
        %v6645 = vadd.f32 %v6606, %v6642
        %v6646 = vadd.f32 %v6607, %v6642
        %v6647 = vadd.f32 %v6608, %v6642
        %v6648 = vadd.f32 %v6609, %v6642
        %v6649 = vadd.f32 %v6610, %v6642
        %v6650 = vadd.f32 %v6611, %v6642
        %v6651 = vadd.f32 %v6612, %v6642
        %v6652 = vadd.f32 %v6613, %v6642
        %v6653 = vadd.f32 %v6614, %v6642
        %v6654 = vadd.f32 %v6615, %v6642
        %v6655 = vadd.f32 %v6616, %v6642
        %v6656 = vadd.f32 %v6617, %v6642
        %v6657 = vadd.f32 %v6618, %v6642
        %v6658 = vadd.f32 %v6619, %v6642
        %v6659 = vadd.f32 %v6620, %v6642
        %v6660 = vadd.f32 %v6621, %v6642
        %v6661 = vadd.f32 %v6622, %v6642
        %v6662 = vadd.f32 %v6623, %v6642
        %v6663 = vadd.f32 %v6624, %v6642
        %v6664 = vadd.f32 %v6625, %v6642
        %v6665 = vadd.f32 %v6626, %v6642
        %v6666 = vadd.f32 %v6627, %v6642
        %v6667 = vadd.f32 %v6628, %v6642
        %v6668 = vadd.f32 %v6629, %v6642
        %v6669 = vadd.f32 %v6630, %v6642
        %v6670 = vadd.f32 %v6631, %v6642
        %v6671 = vadd.f32 %v6632, %v6642
        %v6672 = vadd.f32 %v6633, %v6642
        %v6673 = vadd.f32 %v6634, %v6642
        %v6674 = vadd.f32 %v6635, %v6642
        %v6675 = vadd.f32 %v6636, %v6642
        %v6676 = vadd.f32 %v6644, %v6291
        %v6677 = vadd.f32 %v6645, %v6296
        %v6678 = vadd.f32 %v6646, %v6301
        %v6679 = vadd.f32 %v6647, %v6306
        %v6680 = vadd.f32 %v6648, %v6311
        %v6681 = vadd.f32 %v6649, %v6316
        %v6682 = vadd.f32 %v6650, %v6321
        %v6683 = vadd.f32 %v6651, %v6326
        %v6684 = vadd.f32 %v6652, %v6331
        %v6685 = vadd.f32 %v6653, %v6336
        %v6686 = vadd.f32 %v6654, %v6341
        %v6687 = vadd.f32 %v6655, %v6346
        %v6688 = vadd.f32 %v6656, %v6351
        %v6689 = vadd.f32 %v6657, %v6356
        %v6690 = vadd.f32 %v6658, %v6361
        %v6691 = vadd.f32 %v6659, %v6366
        %v6692 = vadd.f32 %v6660, %v6371
        %v6693 = vadd.f32 %v6661, %v6376
        %v6694 = vadd.f32 %v6662, %v6381
        %v6695 = vadd.f32 %v6663, %v6386
        %v6696 = vadd.f32 %v6664, %v6391
        %v6697 = vadd.f32 %v6665, %v6396
        %v6698 = vadd.f32 %v6666, %v6401
        %v6699 = vadd.f32 %v6667, %v6406
        %v6700 = vadd.f32 %v6668, %v6411
        %v6701 = vadd.f32 %v6669, %v6416
        %v6702 = vadd.f32 %v6670, %v6421
        %v6703 = vadd.f32 %v6671, %v6426
        %v6704 = vadd.f32 %v6672, %v6431
        %v6705 = vadd.f32 %v6673, %v6436
        %v6706 = vadd.f32 %v6674, %v6441
        %v6707 = vadd.f32 %v6675, %v6446
        %v6708 = vld [vmem:[%s9] sm:$0xff]
        %v6709 = vld [vmem:[%s9 + $0x8] sm:$0xff]
        %v6710 = vld [vmem:[%s9 + $0x10] sm:$0xff]
        %v6711 = vld [vmem:[%s9 + $0x18] sm:$0xff]
        %v6712 = vld [vmem:[%s10] sm:$0x1]
        %v6714 = vlaneseq
        %v6715 = vshrl.u32 %v6714, 7
        %v6716 = vsub.s32 0, %v6715
        %v6717 = vrot.slane %v6712, %v6716
        %v6720 = vsel %vm6481, %v6676, 0
        %v6723 = vsel %vm6481, %v6677, 0
        %v6726 = vsel %vm6481, %v6678, 0
        %v6729 = vsel %vm6481, %v6679, 0
        %v6732 = vsel %vm6481, %v6680, 0
        %v6735 = vsel %vm6481, %v6681, 0
        %v6738 = vsel %vm6481, %v6682, 0
        %v6741 = vsel %vm6481, %v6683, 0
        %v6744 = vsel %vm6481, %v6684, 0
        %v6747 = vsel %vm6481, %v6685, 0
        %v6750 = vsel %vm6481, %v6686, 0
        %v6753 = vsel %vm6481, %v6687, 0
        %v6756 = vsel %vm6481, %v6688, 0
        %v6759 = vsel %vm6481, %v6689, 0
        %v6762 = vsel %vm6481, %v6690, 0
        %v6765 = vsel %vm6481, %v6691, 0
        %v6768 = vsel %vm6481, %v6692, 0
        %v6771 = vsel %vm6481, %v6693, 0
        %v6774 = vsel %vm6481, %v6694, 0
        %v6777 = vsel %vm6481, %v6695, 0
        %v6780 = vsel %vm6481, %v6696, 0
        %v6783 = vsel %vm6481, %v6697, 0
        %v6786 = vsel %vm6481, %v6698, 0
        %v6789 = vsel %vm6481, %v6699, 0
        %v6792 = vsel %vm6481, %v6700, 0
        %v6795 = vsel %vm6481, %v6701, 0
        %v6798 = vsel %vm6481, %v6702, 0
        %v6801 = vsel %vm6481, %v6703, 0
        %v6804 = vsel %vm6481, %v6704, 0
        %v6807 = vsel %vm6481, %v6705, 0
        %v6810 = vsel %vm6481, %v6706, 0
        %v6813 = vsel %vm6481, %v6707, 0
        %6815 = vmatprep.subr.mxu0 0.0
        %6816 = vmatpush1.msra.mxu0 0.0
        %6817 = vmatprep.subr.mxu0 0.0
        %6818 = vmatpush1.msra.mxu0 0.0
        %6819 = vmatprep.subr.mxu0 0.0
        %6820 = vmatpush1.msra.mxu0 0.0
        %6821 = vmatprep.subr.mxu0 0.0
        %6822 = vmatpush1.msra.mxu0 0.0
        %6823 = vmatprep.subr.mxu0 0.0
        %6824 = vmatpush1.msra.mxu0 0.0
        %6825 = vmatprep.subr.mxu0 0.0
        %6826 = vmatpush1.msra.mxu0 0.0
        %6827 = vmatprep.subr.mxu0 0.0
        %6828 = vmatpush1.msra.mxu0 0.0
        %6829 = vmatprep.subr.mxu0 0.0
        %6830 = vmatpush1.msra.mxu0 0.0
        %6831 = vmatprep.subr.mxu0 0.0
        %6832 = vmatpush1.msra.mxu0 0.0
        %6833 = vmatprep.subr.mxu0 0.0
        %6834 = vmatpush1.msra.mxu0 0.0
        %6835 = vmatprep.subr.mxu0 0.0
        %6836 = vmatpush1.msra.mxu0 0.0
        %6837 = vmatprep.subr.mxu0 0.0
        %6838 = vmatpush1.msra.mxu0 0.0
        %6839 = vmatprep.subr.mxu0 0.0
        %6840 = vmatpush1.msra.mxu0 %v6711
        %6841 = vmatprep.subr.mxu0 0.0
        %6842 = vmatpush1.msra.mxu0 %v6710
        %6843 = vmatprep.subr.mxu0 0.0
        %6844 = vmatpush1.msra.mxu0 %v6709
        %6845 = vmatprep.subr.mxu0 0.0
        %6846 = vmatpush1.msra.mxu0 %v6708
        %6847 = vmatprep.subr.mxu0 0.0
        %6848 = vmatpush2.msra.mxu0 0.0
        %6849 = vmatprep.subr.mxu0 0.0
        %6850 = vmatpush2.msra.mxu0 0.0
        %6851 = vmatprep.subr.mxu0 0.0
        %6852 = vmatpush2.msra.mxu0 0.0
        %6853 = vmatprep.subr.mxu0 0.0
        %6854 = vmatpush2.msra.mxu0 0.0
        %6855 = vmatprep.subr.mxu0 0.0
        %6856 = vmatpush2.msra.mxu0 0.0
        %6857 = vmatprep.subr.mxu0 0.0
        %6858 = vmatpush2.msra.mxu0 0.0
        %6859 = vmatprep.subr.mxu0 0.0
        %6860 = vmatpush2.msra.mxu0 0.0
        %6861 = vmatprep.subr.mxu0 0.0
        %6862 = vmatpush2.msra.mxu0 0.0
        %6863 = vmatprep.subr.mxu0 0.0
        %6864 = vmatpush2.msra.mxu0 0.0
        %6865 = vmatprep.subr.mxu0 0.0
        %6866 = vmatpush2.msra.mxu0 0.0
        %6867 = vmatprep.subr.mxu0 0.0
        %6868 = vmatpush2.msra.mxu0 0.0
        %6869 = vmatprep.subr.mxu0 0.0
        %6870 = vmatpush2.msra.mxu0 0.0
        %6871 = vmatprep.subr.mxu0 0.0
        %6872 = vmatpush2.msra.mxu0 0.0
        %6873 = vmatprep.subr.mxu0 0.0
        %6874 = vmatpush2.msra.mxu0 0.0
        %6875 = vmatprep.subr.mxu0 0.0
        %6876 = vmatpush2.msra.mxu0 0.0
        %6877 = vmatprep.subr.mxu0 0.0
        %6878 = vmatpush2.msra.mxu0 0.0
        %6879 = vmatprep.mubr.f32.mxu0 0.0
        %6880 = vmatmul.mubr.f32.gmra.mxu0 %v6720
        %v6881 = vpop.f32.mrf.mxu0
        %v6882 = vadd.f32 %v6717, %v6881
        %v6883 = vpop.f32.mrf.mxu0
        %6884 = vmatprep.mubr.f32.mxu0 0.0
        %6885 = vmatmul.mubr.f32.gmra.mxu0 %v6723
        %v6886 = vpop.f32.mrf.mxu0
        %v6887 = vadd.f32 %v6717, %v6886
        %v6888 = vpop.f32.mrf.mxu0
        %6889 = vmatprep.mubr.f32.mxu0 0.0
        %6890 = vmatmul.mubr.f32.gmra.mxu0 %v6726
        %v6891 = vpop.f32.mrf.mxu0
        %v6892 = vadd.f32 %v6717, %v6891
        %v6893 = vpop.f32.mrf.mxu0
        %6894 = vmatprep.mubr.f32.mxu0 0.0
        %6895 = vmatmul.mubr.f32.gmra.mxu0 %v6729
        %v6896 = vpop.f32.mrf.mxu0
        %v6897 = vadd.f32 %v6717, %v6896
        %v6898 = vpop.f32.mrf.mxu0
        %6899 = vmatprep.mubr.f32.mxu0 0.0
        %6900 = vmatmul.mubr.f32.gmra.mxu0 %v6732
        %v6901 = vpop.f32.mrf.mxu0
        %v6902 = vadd.f32 %v6717, %v6901
        %v6903 = vpop.f32.mrf.mxu0
        %6904 = vmatprep.mubr.f32.mxu0 0.0
        %6905 = vmatmul.mubr.f32.gmra.mxu0 %v6735
        %v6906 = vpop.f32.mrf.mxu0
        %v6907 = vadd.f32 %v6717, %v6906
        %v6908 = vpop.f32.mrf.mxu0
        %6909 = vmatprep.mubr.f32.mxu0 0.0
        %6910 = vmatmul.mubr.f32.gmra.mxu0 %v6738
        %v6911 = vpop.f32.mrf.mxu0
        %v6912 = vadd.f32 %v6717, %v6911
        %v6913 = vpop.f32.mrf.mxu0
        %6914 = vmatprep.mubr.f32.mxu0 0.0
        %6915 = vmatmul.mubr.f32.gmra.mxu0 %v6741
        %v6916 = vpop.f32.mrf.mxu0
        %v6917 = vadd.f32 %v6717, %v6916
        %v6918 = vpop.f32.mrf.mxu0
        %6919 = vmatprep.mubr.f32.mxu0 0.0
        %6920 = vmatmul.mubr.f32.gmra.mxu0 %v6744
        %v6921 = vpop.f32.mrf.mxu0
        %v6922 = vadd.f32 %v6717, %v6921
        %v6923 = vpop.f32.mrf.mxu0
        %6924 = vmatprep.mubr.f32.mxu0 0.0
        %6925 = vmatmul.mubr.f32.gmra.mxu0 %v6747
        %v6926 = vpop.f32.mrf.mxu0
        %v6927 = vadd.f32 %v6717, %v6926
        %v6928 = vpop.f32.mrf.mxu0
        %6929 = vmatprep.mubr.f32.mxu0 0.0
        %6930 = vmatmul.mubr.f32.gmra.mxu0 %v6750
        %v6931 = vpop.f32.mrf.mxu0
        %v6932 = vadd.f32 %v6717, %v6931
        %v6933 = vpop.f32.mrf.mxu0
        %6934 = vmatprep.mubr.f32.mxu0 0.0
        %6935 = vmatmul.mubr.f32.gmra.mxu0 %v6753
        %v6936 = vpop.f32.mrf.mxu0
        %v6937 = vadd.f32 %v6717, %v6936
        %v6938 = vpop.f32.mrf.mxu0
        %6939 = vmatprep.mubr.f32.mxu0 0.0
        %6940 = vmatmul.mubr.f32.gmra.mxu0 %v6756
        %v6941 = vpop.f32.mrf.mxu0
        %v6942 = vadd.f32 %v6717, %v6941
        %v6943 = vpop.f32.mrf.mxu0
        %6944 = vmatprep.mubr.f32.mxu0 0.0
        %6945 = vmatmul.mubr.f32.gmra.mxu0 %v6759
        %v6946 = vpop.f32.mrf.mxu0
        %v6947 = vadd.f32 %v6717, %v6946
        %v6948 = vpop.f32.mrf.mxu0
        %6949 = vmatprep.mubr.f32.mxu0 0.0
        %6950 = vmatmul.mubr.f32.gmra.mxu0 %v6762
        %v6951 = vpop.f32.mrf.mxu0
        %v6952 = vadd.f32 %v6717, %v6951
        %v6953 = vpop.f32.mrf.mxu0
        %6954 = vmatprep.mubr.f32.mxu0 0.0
        %6955 = vmatmul.mubr.f32.gmra.mxu0 %v6765
        %v6956 = vpop.f32.mrf.mxu0
        %v6957 = vadd.f32 %v6717, %v6956
        %v6958 = vpop.f32.mrf.mxu0
        %6959 = vmatprep.mubr.f32.mxu0 0.0
        %6960 = vmatmul.mubr.f32.gmra.mxu0 %v6768
        %v6961 = vpop.f32.mrf.mxu0
        %v6962 = vadd.f32 %v6717, %v6961
        %v6963 = vpop.f32.mrf.mxu0
        %6964 = vmatprep.mubr.f32.mxu0 0.0
        %6965 = vmatmul.mubr.f32.gmra.mxu0 %v6771
        %v6966 = vpop.f32.mrf.mxu0
        %v6967 = vadd.f32 %v6717, %v6966
        %v6968 = vpop.f32.mrf.mxu0
        %6969 = vmatprep.mubr.f32.mxu0 0.0
        %6970 = vmatmul.mubr.f32.gmra.mxu0 %v6774
        %v6971 = vpop.f32.mrf.mxu0
        %v6972 = vadd.f32 %v6717, %v6971
        %v6973 = vpop.f32.mrf.mxu0
        %6974 = vmatprep.mubr.f32.mxu0 0.0
        %6975 = vmatmul.mubr.f32.gmra.mxu0 %v6777
        %v6976 = vpop.f32.mrf.mxu0
        %v6977 = vadd.f32 %v6717, %v6976
        %v6978 = vpop.f32.mrf.mxu0
        %6979 = vmatprep.mubr.f32.mxu0 0.0
        %6980 = vmatmul.mubr.f32.gmra.mxu0 %v6780
        %v6981 = vpop.f32.mrf.mxu0
        %v6982 = vadd.f32 %v6717, %v6981
        %v6983 = vpop.f32.mrf.mxu0
        %6984 = vmatprep.mubr.f32.mxu0 0.0
        %6985 = vmatmul.mubr.f32.gmra.mxu0 %v6783
        %v6986 = vpop.f32.mrf.mxu0
        %v6987 = vadd.f32 %v6717, %v6986
        %v6988 = vpop.f32.mrf.mxu0
        %6989 = vmatprep.mubr.f32.mxu0 0.0
        %6990 = vmatmul.mubr.f32.gmra.mxu0 %v6786
        %v6991 = vpop.f32.mrf.mxu0
        %v6992 = vadd.f32 %v6717, %v6991
        %v6993 = vpop.f32.mrf.mxu0
        %6994 = vmatprep.mubr.f32.mxu0 0.0
        %6995 = vmatmul.mubr.f32.gmra.mxu0 %v6789
        %v6996 = vpop.f32.mrf.mxu0
        %v6997 = vadd.f32 %v6717, %v6996
        %v6998 = vpop.f32.mrf.mxu0
        %6999 = vmatprep.mubr.f32.mxu0 0.0
        %7000 = vmatmul.mubr.f32.gmra.mxu0 %v6792
        %v7001 = vpop.f32.mrf.mxu0
        %v7002 = vadd.f32 %v6717, %v7001
        %v7003 = vpop.f32.mrf.mxu0
        %7004 = vmatprep.mubr.f32.mxu0 0.0
        %7005 = vmatmul.mubr.f32.gmra.mxu0 %v6795
        %v7006 = vpop.f32.mrf.mxu0
        %v7007 = vadd.f32 %v6717, %v7006
        %v7008 = vpop.f32.mrf.mxu0
        %7009 = vmatprep.mubr.f32.mxu0 0.0
        %7010 = vmatmul.mubr.f32.gmra.mxu0 %v6798
        %v7011 = vpop.f32.mrf.mxu0
        %v7012 = vadd.f32 %v6717, %v7011
        %v7013 = vpop.f32.mrf.mxu0
        %7014 = vmatprep.mubr.f32.mxu0 0.0
        %7015 = vmatmul.mubr.f32.gmra.mxu0 %v6801
        %v7016 = vpop.f32.mrf.mxu0
        %v7017 = vadd.f32 %v6717, %v7016
        %v7018 = vpop.f32.mrf.mxu0
        %7019 = vmatprep.mubr.f32.mxu0 0.0
        %7020 = vmatmul.mubr.f32.gmra.mxu0 %v6804
        %v7021 = vpop.f32.mrf.mxu0
        %v7022 = vadd.f32 %v6717, %v7021
        %v7023 = vpop.f32.mrf.mxu0
        %7024 = vmatprep.mubr.f32.mxu0 0.0
        %7025 = vmatmul.mubr.f32.gmra.mxu0 %v6807
        %v7026 = vpop.f32.mrf.mxu0
        %v7027 = vadd.f32 %v6717, %v7026
        %v7028 = vpop.f32.mrf.mxu0
        %7029 = vmatprep.mubr.f32.mxu0 0.0
        %7030 = vmatmul.mubr.f32.gmra.mxu0 %v6810
        %v7031 = vpop.f32.mrf.mxu0
        %v7032 = vadd.f32 %v6717, %v7031
        %v7033 = vpop.f32.mrf.mxu0
        %7034 = vmatprep.mubr.f32.mxu0 0.0
        %7035 = vmatmul.mubr.f32.gmra.mxu0 %v6813
        %v7036 = vpop.f32.mrf.mxu0
        %v7037 = vadd.f32 %v6717, %v7036
        %v7038 = vpop.f32.mrf.mxu0
        %7039 = vdwg.mxu0
        %v7040 = vld [vmem:[%s411] sm:$0xff]
        %v7041 = vld [vmem:[%s411 + $0x8] sm:$0xff]
        %v7042 = vld [vmem:[%s411 + $0x10] sm:$0xff]
        %v7043 = vld [vmem:[%s411 + $0x18] sm:$0xff]
        %v7044 = vld [vmem:[%s411 + $0x20] sm:$0xff]
        %v7045 = vld [vmem:[%s411 + $0x28] sm:$0xff]
        %v7046 = vld [vmem:[%s411 + $0x30] sm:$0xff]
        %v7047 = vld [vmem:[%s411 + $0x38] sm:$0xff]
        %v7048 = vld [vmem:[%s411 + $0x40] sm:$0xff]
        %v7049 = vld [vmem:[%s411 + $0x48] sm:$0xff]
        %v7050 = vld [vmem:[%s411 + $0x50] sm:$0xff]
        %v7051 = vld [vmem:[%s411 + $0x58] sm:$0xff]
        %v7052 = vld [vmem:[%s411 + $0x60] sm:$0xff]
        %v7053 = vld [vmem:[%s411 + $0x68] sm:$0xff]
        %v7054 = vld [vmem:[%s411 + $0x70] sm:$0xff]
        %v7055 = vld [vmem:[%s411 + $0x78] sm:$0xff]
        %v7056 = vld [vmem:[%s411 + $0x80] sm:$0xff]
        %v7057 = vld [vmem:[%s411 + $0x88] sm:$0xff]
        %v7058 = vld [vmem:[%s411 + $0x90] sm:$0xff]
        %v7059 = vld [vmem:[%s411 + $0x98] sm:$0xff]
        %v7060 = vld [vmem:[%s411 + $0xa0] sm:$0xff]
        %v7061 = vld [vmem:[%s411 + $0xa8] sm:$0xff]
        %v7062 = vld [vmem:[%s411 + $0xb0] sm:$0xff]
        %v7063 = vld [vmem:[%s411 + $0xb8] sm:$0xff]
        %v7064 = vld [vmem:[%s411 + $0xc0] sm:$0xff]
        %v7065 = vld [vmem:[%s411 + $0xc8] sm:$0xff]
        %v7066 = vld [vmem:[%s411 + $0xd0] sm:$0xff]
        %v7067 = vld [vmem:[%s411 + $0xd8] sm:$0xff]
        %v7068 = vld [vmem:[%s411 + $0xe0] sm:$0xff]
        %v7069 = vld [vmem:[%s411 + $0xe8] sm:$0xff]
        %v7070 = vld [vmem:[%s411 + $0xf0] sm:$0xff]
        %v7071 = vld [vmem:[%s411 + $0xf8] sm:$0xff]
        %v7072 = vadd.f32 %v6882, %v7040
        %v7073 = vadd.f32 %v6887, %v7041
        %v7074 = vadd.f32 %v6892, %v7042
        %v7075 = vadd.f32 %v6897, %v7043
        %v7076 = vadd.f32 %v6902, %v7044
        %v7077 = vadd.f32 %v6907, %v7045
        %v7078 = vadd.f32 %v6912, %v7046
        %v7079 = vadd.f32 %v6917, %v7047
        %v7080 = vadd.f32 %v6922, %v7048
        %v7081 = vadd.f32 %v6927, %v7049
        %v7082 = vadd.f32 %v6932, %v7050
        %v7083 = vadd.f32 %v6937, %v7051
        %v7084 = vadd.f32 %v6942, %v7052
        %v7085 = vadd.f32 %v6947, %v7053
        %v7086 = vadd.f32 %v6952, %v7054
        %v7087 = vadd.f32 %v6957, %v7055
        %v7088 = vadd.f32 %v6962, %v7056
        %v7089 = vadd.f32 %v6967, %v7057
        %v7090 = vadd.f32 %v6972, %v7058
        %v7091 = vadd.f32 %v6977, %v7059
        %v7092 = vadd.f32 %v6982, %v7060
        %v7093 = vadd.f32 %v6987, %v7061
        %v7094 = vadd.f32 %v6992, %v7062
        %v7095 = vadd.f32 %v6997, %v7063
        %v7096 = vadd.f32 %v7002, %v7064
        %v7097 = vadd.f32 %v7007, %v7065
        %v7098 = vadd.f32 %v7012, %v7066
        %v7099 = vadd.f32 %v7017, %v7067
        %v7100 = vadd.f32 %v7022, %v7068
        %v7101 = vadd.f32 %v7027, %v7069
        %v7102 = vadd.f32 %v7032, %v7070
        %v7103 = vadd.f32 %v7037, %v7071
        %7104 = vst.msk [vmem:[%s469] sm:$0xff] %vm470, %v7072
        %7105 = vst.msk [vmem:[%s469 + $0x8] sm:$0xff] %vm470, %v7073
        %7106 = vst.msk [vmem:[%s469 + $0x10] sm:$0xff] %vm470, %v7074
        %7107 = vst.msk [vmem:[%s469 + $0x18] sm:$0xff] %vm470, %v7075
        %7108 = vst.msk [vmem:[%s469 + $0x20] sm:$0xff] %vm470, %v7076
        %7109 = vst.msk [vmem:[%s469 + $0x28] sm:$0xff] %vm470, %v7077
        %7110 = vst.msk [vmem:[%s469 + $0x30] sm:$0xff] %vm470, %v7078
        %7111 = vst.msk [vmem:[%s469 + $0x38] sm:$0xff] %vm470, %v7079
        %7112 = vst.msk [vmem:[%s469 + $0x40] sm:$0xff] %vm470, %v7080
        %7113 = vst.msk [vmem:[%s469 + $0x48] sm:$0xff] %vm470, %v7081
        %7114 = vst.msk [vmem:[%s469 + $0x50] sm:$0xff] %vm470, %v7082
        %7115 = vst.msk [vmem:[%s469 + $0x58] sm:$0xff] %vm470, %v7083
        %7116 = vst.msk [vmem:[%s469 + $0x60] sm:$0xff] %vm470, %v7084
        %7117 = vst.msk [vmem:[%s469 + $0x68] sm:$0xff] %vm470, %v7085
        %7118 = vst.msk [vmem:[%s469 + $0x70] sm:$0xff] %vm470, %v7086
        %7119 = vst.msk [vmem:[%s469 + $0x78] sm:$0xff] %vm470, %v7087
        %7120 = vst.msk [vmem:[%s469 + $0x80] sm:$0xff] %vm470, %v7088
        %7121 = vst.msk [vmem:[%s469 + $0x88] sm:$0xff] %vm470, %v7089
        %7122 = vst.msk [vmem:[%s469 + $0x90] sm:$0xff] %vm470, %v7090
        %7123 = vst.msk [vmem:[%s469 + $0x98] sm:$0xff] %vm470, %v7091
        %7124 = vst.msk [vmem:[%s469 + $0xa0] sm:$0xff] %vm470, %v7092
        %7125 = vst.msk [vmem:[%s469 + $0xa8] sm:$0xff] %vm470, %v7093
        %7126 = vst.msk [vmem:[%s469 + $0xb0] sm:$0xff] %vm470, %v7094
        %7127 = vst.msk [vmem:[%s469 + $0xb8] sm:$0xff] %vm470, %v7095
        %7128 = vst.msk [vmem:[%s469 + $0xc0] sm:$0xff] %vm470, %v7096
        %7129 = vst.msk [vmem:[%s469 + $0xc8] sm:$0xff] %vm470, %v7097
        %7130 = vst.msk [vmem:[%s469 + $0xd0] sm:$0xff] %vm470, %v7098
        %7131 = vst.msk [vmem:[%s469 + $0xd8] sm:$0xff] %vm470, %v7099
        %7132 = vst.msk [vmem:[%s469 + $0xe0] sm:$0xff] %vm470, %v7100
        %7133 = vst.msk [vmem:[%s469 + $0xe8] sm:$0xff] %vm470, %v7101
        %7134 = vst.msk [vmem:[%s469 + $0xf0] sm:$0xff] %vm470, %v7102
        %7135 = vst.msk [vmem:[%s469 + $0xf8] sm:$0xff] %vm470, %v7103
        %s7136 = sand.u32 %s275, 1
        %s7137 = scalar_lea.sflag [#allocation5], %s7136
        %s7138 = sand.u32 %s275, 1
        %s7139 = smul.addr %s7138, 256
        %s7140 = scalar_lea.vmem [#allocation14], %s7139
        // Predicated region
        $region89: #{tpu_custom_call.1} parent=63 // pred_check
          %p7141 = pneg %p285
        $region90: #{tpu_custom_call.1} parent=63 // pred_check_branch
          %7143 = sbr.rel (%p7141) target = $region92
        $region91: #{tpu_custom_call.1} parent=63 // pred_region
          %s7145 = ssub.s32 4096, 4096
          %7146 = vsyncadd %s7137, %s7145
          %s7147 = smul.addr %s31, 32
          %s7148 = smul.addr %s7147, 128
          %s7149 = scalar_lea.hbm %s11, %s7148
          %s7150 = sshll.u32 %s7140, 4
          %s7151 = int_to_ptr.vmem [resolvable:$true] %s7150
          %7156 = dma.vmem_to_hbm [thread:$0]  %s7151, 4096, %s7149, %s7137, 128, 128, 8
        $region92: #{tpu_custom_call.1} parent=63 // pred_fallthru
          _
      $region64: #{tpu_custom_call.1} parent=5 // pred_fallthru
        _
      %p7157 = scmp.le.s32.totalorder 2, %s26
      // Predicated region
      $region93: #{tpu_custom_call.1} parent=5 // pred_check
        %p7158 = pneg %p7157
      $region94: #{tpu_custom_call.1} parent=5 // pred_check_branch
        %7160 = sbr.rel (%p7158) target = $region96
      $region95: #{tpu_custom_call.1} parent=5 // pred_region
        %s7161 = ssub.s32 %s26, 2
        // Predicated region
        $region97: #{tpu_custom_call.1} parent=95 // pred_check
          %p7162 = pneg %p291
        $region98: #{tpu_custom_call.1} parent=95 // pred_check_branch
          %7164 = sbr.rel (%p7162) target = $region100
        $region99: #{tpu_custom_call.1} parent=95 // pred_region
          %s7165 = sand.u32 %s276, 1
          %s7166 = scalar_lea.sflag [#allocation5], %s7165
          %s7167 = sand.u32 %s276, 1
          %s7168 = smul.addr %s7167, 256
          %s7169 = scalar_lea.vmem [#allocation14], %s7168
          %7170 = dma.done %s7166, 4096
        $region100: #{tpu_custom_call.1} parent=95 // pred_fallthru
          _
      $region96: #{tpu_custom_call.1} parent=5 // pred_fallthru
        _
    $region6: #{tpu_custom_call.1} parent=1 // loop_footer
      %s30 = sadd.s32 1, %s26
    $region7: #{tpu_custom_call.1} parent=1 // loop_footer_branch
      %25 = sbr.rel target = $region3
    $region8: #{tpu_custom_call.1} parent=1 // loop_exit
      _
    %7171 = vsyncpa [#allocation4], 1
    %s7172 = scalar_lea.sflag [#allocation4], 1
    %7173 = vsyncpa %s7172, 1
    %7174 = vsyncpa [#allocation7], 1
    %7175 = vsyncpa [#allocation10], 1
    %7176 = vsyncpa [#allocation13], 1
    %7177 = vsyncpa [#allocation5], 1
    %s7178 = scalar_lea.sflag [#allocation5], 1
    %7179 = vsyncpa %s7178, 1

</llo_original>
